<compile_context>
chip_gen: v5e
topology: v5e:2x2
jax: 0.10.0
libtpu: 0.0.40
codegen_flags: <defaults>
</compile_context>

<pallas_src>
import numpy as np
import jax
import jax.numpy as jnp
from jax import lax
from jax.experimental import pallas as pl
from jax.experimental.pallas import tpu as pltpu

# ------------------------- configuration (small test shapes) ----------------
DIM = 16                       # channels
NUM_HEADS = 2
HEAD_DIM = DIM // NUM_HEADS
INPUT_RES = (8, 8, 8)          # (Z, H, W)
WINDOW_SIZE = 4
SHIFT_SIZE = 2                 # SW-MSA (shifted) branch exercised
MLP_RATIO = 4.0
MLP_HIDDEN = int(DIM * MLP_RATIO)
CPB_DIM = int(np.clip(np.prod(INPUT_RES) // 16, 256, 1024))
BATCH = 2
SEQ = int(np.prod(INPUT_RES))
N_WIN_TOK = WINDOW_SIZE ** 3                 # 64 tokens per window
N_WIN = SEQ // N_WIN_TOK                     # 8 windows per image
R_TOK = N_WIN * N_WIN_TOK                    # 512 windowed rows per image
TAIL_CHUNK = 128                             # rows per tail chunk (4 chunks)
LN_EPS = 1e-5
LEAKY_SLOPE = 0.01             # DEFAULT_ACT = leakyrelu
PH = lax.Precision.HIGHEST     # per-dot precision (no process-global config)

assert R_TOK % TAIL_CHUNK == 0


# ------------------------- glue: window helpers ------------------------------
def window_partition(x, ws):
    B, Z, H, W, C = x.shape
    x = x.reshape(B, Z // ws, ws, H // ws, ws, W // ws, ws, C)
    x = jnp.transpose(x, (0, 1, 3, 5, 2, 4, 6, 7))
    return x.reshape(-1, ws, ws, ws, C)


def window_reverse(windows, ws, Z, H, W):
    B = windows.shape[0] // (Z * H * W // ws ** 3)
    x = windows.reshape(B, Z // ws, H // ws, W // ws, ws, ws, ws, -1)
    x = jnp.transpose(x, (0, 1, 4, 2, 5, 3, 6, 7))
    return x.reshape(B, Z, H, W, -1)


def meshgrid_3d(*arrs):
    arrs = tuple(reversed(arrs))
    lens = [len(a) for a in arrs]
    dim = len(arrs)
    ans = []
    for i, arr in enumerate(arrs):
        slc = [1] * dim
        slc[i] = lens[i]
        arr2 = np.asarray(arr).reshape(slc)
        for j, sz in enumerate(lens):
            if j != i:
                arr2 = arr2.repeat(sz, axis=j)
        ans.append(arr2)
    return tuple(ans)


def build_rel_tables():
    ws = (WINDOW_SIZE,) * 3
    rcz = np.arange(-(ws[0] - 1), ws[0], dtype=np.float32)
    rch = np.arange(-(ws[1] - 1), ws[1], dtype=np.float32)
    rcw = np.arange(-(ws[2] - 1), ws[2], dtype=np.float32)
    table = np.stack(meshgrid_3d(rcz, rch, rcw), axis=0)
    table = np.transpose(table, (1, 2, 3, 0))[None].copy()   # (1, 2w-1, 2w-1, 2w-1, 3)
    table[..., 0] /= ws[0] - 1
    table[..., 1] /= ws[1] - 1   # channel 2 intentionally untouched: mirrors the source
    table *= 8.0
    table = np.sign(table) * np.log2(np.abs(table) + 1.0) / np.log2(8.0)

    cz, ch, cw = np.arange(ws[0]), np.arange(ws[1]), np.arange(ws[2])
    coords = np.stack(meshgrid_3d(cz, ch, cw), axis=0).astype(np.float32)
    cf = coords.reshape(3, -1)
    rel = cf[:, :, None] - cf[:, None, :]
    rel = np.transpose(rel, (1, 2, 0)).copy()
    rel[:, :, 0] += ws[0] - 1
    rel[:, :, 1] += ws[1] - 1
    rel[:, :, 2] += ws[2] - 1
    rel[:, :, 0] *= (2 * ws[1] - 1) * (2 * ws[2] - 1)
    rel[:, :, 1] *= 2 * ws[2] - 1
    rpi = rel.sum(-1).astype(np.int32)
    return table.astype(np.float32), rpi


def build_attn_mask():
    ws, ss = WINDOW_SIZE, SHIFT_SIZE
    Z, H, W = INPUT_RES
    nW = (Z // ws) * (H // ws) * (W // ws)
    if ss == 0:
        return np.zeros((nW, N_WIN_TOK, N_WIN_TOK), np.float32)
    img_mask = np.zeros((1, Z, H, W, 1), np.float32)
    slices = (slice(0, -ws), slice(-ws, -ss), slice(-ss, None))
    cnt = 0
    for z in slices:
        for h in slices:
            for w in slices:
                img_mask[:, z, h, w, :] = cnt
                cnt += 1
    mw = np.asarray(window_partition(jnp.asarray(img_mask), ws)).reshape(-1, ws ** 3)
    am = mw[:, None, :] - mw[:, :, None]
    return np.where(am != 0, -100.0, 0.0).astype(np.float32)


def compute_rel_pos_bias(p, rel_table, rel_index):
    # TODO(synk): cpb_mlp is tiny parameter-only bias generation -> kept in plain JAX.
    t = rel_table.reshape(-1, 3)
    h = jax.nn.relu(t @ p["cpb_w1"].T + p["cpb_b1"])
    tbl = h @ p["cpb_w2"].T                                   # (T, heads)
    rpb = tbl[rel_index.reshape(-1)]
    rpb = rpb.reshape(N_WIN_TOK, N_WIN_TOK, NUM_HEADS).transpose(2, 0, 1)
    return 16.0 * jax.nn.sigmoid(rpb)                         # (heads, N, N)


# ------------------------- one-time host-side weight prep --------------------
def prepare_fused_params(p):
    """Hoisted out of the jitted forward: fused Wqkv/bias, transposed weights,
    clamped exp(logit_scale). Layouts match the kernel's static lane offsets."""
    C, nH, Hd = DIM, NUM_HEADS, MLP_HIDDEN
    wqkv = p["qkv_w"].T                                           # (C, 3C): [Q | K | V]
    bqkv = jnp.concatenate([p["q_bias"], jnp.zeros((C,), jnp.float32),
                            p["v_bias"]]).reshape(1, 3 * C)       # k-bias is zero
    scale = jnp.exp(jnp.minimum(p["logit_scale"],
                                jnp.float32(np.log(1.0 / 0.01)))).reshape((nH,))
    return {
        "wqkv": wqkv, "bqkv": bqkv, "scale": scale,
        "wp": p["proj_w"].T, "bp": p["proj_b"].reshape(1, C),
        "g1": p["norm1_g"].reshape(1, C), "b1": p["norm1_b"].reshape(1, C),
        "w1": p["fc1_w"].T, "bf1": p["fc1_b"].reshape(1, Hd),
        "w2": p["fc2_w"].T, "bf2": p["fc2_b"].reshape(1, C),
        "g2": p["norm2_g"].reshape(1, C), "b2": p["norm2_b"].reshape(1, C),
    }


# ------------------------- Pallas kernel: fused attention + LN/MLP tail ------
def _layernorm(x, g, b):
    mu = jnp.mean(x, axis=-1, keepdims=True)
    var = jnp.mean((x - mu) ** 2, axis=-1, keepdims=True)
    return (x - mu) * lax.rsqrt(var + LN_EPS) * g + b


def _fused_block_kernel(x_ref,                      # (R, C)       windowed input / shortcut
                        wqkv_ref, bqkv_ref,         # (C, 3C), (1, 3C)
                        scale_ref,                  # SMEM (H,)    clamped exp(logit_scale)
                        rbias_ref,                  # (H, N, N)    rel-pos bias
                        mask_ref,                   # (nW, N, N)   shift mask
                        wp_ref, bp_ref,             # (C, C), (1, C)
                        g1_ref, b1_ref,             # (1, C) norm1
                        w1_ref, bf1_ref,            # (C, Hid), (1, Hid)
                        w2_ref, bf2_ref,            # (Hid, C), (1, C)
                        g2_ref, b2_ref,             # (1, C) norm2
                        o_ref,                      # (R, C)
                        qkv_s,                      # VMEM (R, 3C)
                        a_s):                       # VMEM (R, C)  attention output (pre proj-bias)
    N = N_WIN_TOK
    C = DIM
    hd = HEAD_DIM

    # 1) Fused QKV projection for ALL windows of this image: a single MXU pass.
    #    q/zero-k/v biases are pre-concatenated into bqkv on the host.
    qkv_s[...] = (jnp.dot(x_ref[...], wqkv_ref[...],
                          preferred_element_type=jnp.float32, precision=PH)
                  + bqkv_ref[...])

    # 2) Per-window cosine attention; per-head normalization on (64, 8) tiles,
    #    heads concatenated so the output projection is ONE dot per window.
    #    (Block-diagonal K/V head packing would halve score/PV passes on v6e;
    #    left out: relayout cost vs 2 heads of hd=8 is not clearly a win.)
    @pl.loop(0, N_WIN)
    def _window(w):
        lo = pl.multiple_of(w * N, N)
        maskw = mask_ref[w]                                       # (N, N)
        heads = []
        for h in range(NUM_HEADS):                                # static lane offsets
            qo, ko, vo = h * hd, C + h * hd, 2 * C + h * hd
            qh = qkv_s[pl.ds(lo, N), qo:qo + hd]                  # (N, hd)
            kh = qkv_s[pl.ds(lo, N), ko:ko + hd]
            vh = qkv_s[pl.ds(lo, N), vo:vo + hd]
            qn = qh * lax.rsqrt(jnp.maximum(jnp.sum(qh * qh, -1, keepdims=True), 1e-24))
            kn = kh * lax.rsqrt(jnp.maximum(jnp.sum(kh * kh, -1, keepdims=True), 1e-24))
            s = jnp.dot(qn, kn.T, preferred_element_type=jnp.float32, precision=PH)
            s = s * scale_ref[h] + rbias_ref[h] + maskw
            m = jnp.max(s, axis=-1, keepdims=True)
            e = jnp.exp(s - m)
            p = e * pl.reciprocal(jnp.sum(e, axis=-1, keepdims=True), approx=True)
            heads.append(jnp.dot(p, vh, preferred_element_type=jnp.float32, precision=PH))
        ov = jnp.concatenate(heads, axis=-1)                      # (N, C): heads side by side
        a_s[pl.ds(lo, N), :] = jnp.dot(ov, wp_ref[...],
                                       preferred_element_type=jnp.float32, precision=PH)

    # 3) Row-wise post-norm residual + MLP tail, chunked (128 rows) to bound
    #    live ranges; proj bias is folded into the chunk read of a_s.
    @pl.loop(0, R_TOK // TAIL_CHUNK)
    def _tail(c):
        ro = pl.multiple_of(c * TAIL_CHUNK, TAIL_CHUNK)
        xc = x_ref[pl.ds(ro, TAIL_CHUNK), :]                      # shortcut chunk
        ac = a_s[pl.ds(ro, TAIL_CHUNK), :] + bp_ref[...]          # + proj bias (folded)
        y = xc + _layernorm(ac, g1_ref[...], b1_ref[...])
        hid = jnp.dot(y, w1_ref[...],
                      preferred_element_type=jnp.float32, precision=PH) + bf1_ref[...]
        hid = jnp.where(hid >= 0, hid, LEAKY_SLOPE * hid)
        m2 = jnp.dot(hid, w2_ref[...],
                     preferred_element_type=jnp.float32, precision=PH) + bf2_ref[...]
        o_ref[pl.ds(ro, TAIL_CHUNK), :] = y + _layernorm(m2, g2_ref[...], b2_ref[...])


def swin_fused_pallas(xw_b, fp, rel_bias, mask):
    """xw_b: (B, nW*N, C) rolled+windowed input.
    rel_bias: (heads, N, N), mask: (nW, N, N) -- passed separately (smaller DMA)."""
    B, R, C = xw_b.shape
    N = N_WIN_TOK
    Hd = MLP_HIDDEN
    nH = NUM_HEADS
    assert R == R_TOK and C == DIM

    def c2(b): return (0, 0)
    def c3(b): return (0, 0, 0)

    in_specs = [
        pl.BlockSpec((None, R, C), lambda b: (b, 0, 0)),            # x (per image, squeezed)
        pl.BlockSpec((C, 3 * C), c2),                               # wqkv
        pl.BlockSpec((1, 3 * C), c2),                               # bqkv
        pl.BlockSpec(memory_space=pltpu.MemorySpace.SMEM),          # logit scale (scalars)
        pl.BlockSpec((nH, N, N), c3),                               # rel-pos bias
        pl.BlockSpec((N_WIN, N, N), c3),                            # shift mask
        pl.BlockSpec((C, C), c2),                                   # wp
        pl.BlockSpec((1, C), c2),                                   # bp
        pl.BlockSpec((1, C), c2),                                   # norm1 g
        pl.BlockSpec((1, C), c2),                                   # norm1 b
        pl.BlockSpec((C, Hd), c2),                                  # fc1 w
        pl.BlockSpec((1, Hd), c2),                                  # fc1 b
        pl.BlockSpec((Hd, C), c2),                                  # fc2 w
        pl.BlockSpec((1, C), c2),                                   # fc2 b
        pl.BlockSpec((1, C), c2),                                   # norm2 g
        pl.BlockSpec((1, C), c2),                                   # norm2 b
    ]

    return pl.pallas_call(
        _fused_block_kernel,
        out_shape=jax.ShapeDtypeStruct((B, R, C), jnp.float32),
        grid_spec=pltpu.PrefetchScalarGridSpec(
            num_scalar_prefetch=0,
            grid=(B,),                                              # one image per TC (B=2)
            in_specs=in_specs,
            out_specs=pl.BlockSpec((None, R, C), lambda b: (b, 0, 0)),
            scratch_shapes=[
                pltpu.VMEM((R, 3 * C), jnp.float32),                # fused qkv
                pltpu.VMEM((R, C), jnp.float32),                    # attention output
            ],
        ),
        compiler_params=pltpu.CompilerParams(dimension_semantics=("parallel",)),
    )(xw_b, fp["wqkv"], fp["bqkv"], fp["scale"], rel_bias, mask,
      fp["wp"], fp["bp"], fp["g1"], fp["b1"], fp["w1"], fp["bf1"],
      fp["w2"], fp["bf2"], fp["g2"], fp["b2"])


# ------------------------- pure-JAX reference (for sanity check) -------------
def window_attention_ref(xw, p, attn_bias):
    B_, N, C = xw.shape
    qkv_bias = jnp.concatenate([p["q_bias"], jnp.zeros_like(p["v_bias"]), p["v_bias"]])
    qkv = jnp.dot(xw, p["qkv_w"].T, precision=PH) + qkv_bias
    qkv = qkv.reshape(B_, N, 3, NUM_HEADS, HEAD_DIM).transpose(2, 0, 3, 1, 4)
    q, k, v = qkv[0], qkv[1], qkv[2]
    qn = q / jnp.maximum(jnp.linalg.norm(q, axis=-1, keepdims=True), 1e-12)
    kn = k / jnp.maximum(jnp.linalg.norm(k, axis=-1, keepdims=True), 1e-12)
    attn = jnp.einsum("bhnd,bhmd->bhnm", qn, kn, precision=PH)
    scale = jnp.exp(jnp.minimum(p["logit_scale"], jnp.float32(np.log(1.0 / 0.01))))
    attn = attn * scale[None]
    nW = attn_bias.shape[0]
    attn = attn + jnp.tile(attn_bias, (B_ // nW, 1, 1, 1))
    attn = jax.nn.softmax(attn, axis=-1)
    x = jnp.einsum("bhnm,bhmd->bhnd", attn, v,
                   precision=PH).transpose(0, 2, 1, 3).reshape(B_, N, C)
    return jnp.dot(x, p["proj_w"].T, precision=PH) + p["proj_b"]


def block_tail_ref(shortcut2d, attn2d, p):
    def ln(x, g, b):
        mu = jnp.mean(x, -1, keepdims=True)
        var = jnp.mean((x - mu) ** 2, -1, keepdims=True)
        return (x - mu) / jnp.sqrt(var + LN_EPS) * g + b
    x1 = shortcut2d + ln(attn2d, p["norm1_g"], p["norm1_b"])
    h = jnp.dot(x1, p["fc1_w"].T, precision=PH) + p["fc1_b"]
    h = jnp.where(h >= 0, h, LEAKY_SLOPE * h)
    m = jnp.dot(h, p["fc2_w"].T, precision=PH) + p["fc2_b"]
    return x1 + ln(m, p["norm2_g"], p["norm2_b"])


# ------------------------- full SwinTransformerBlock forward -----------------
def swin_block_forward_pallas(x, fused_params, rel_bias, mask):
    Z, H, W = INPUT_RES
    B, L, C = x.shape
    assert L == Z * H * W
    xv = x.reshape(B, Z, H, W, C)
    if SHIFT_SIZE > 0:
        xv = jnp.roll(xv, shift=(-SHIFT_SIZE,) * 3, axis=(1, 2, 3))
    xw_b = window_partition(xv, WINDOW_SIZE).reshape(B, R_TOK, C)
    # Fused attention + row-wise tail in windowed (permuted) order; the inverse
    # permutation (window_reverse + roll back) is applied once at the end.
    out_w = swin_fused_pallas(xw_b, fused_params, rel_bias, mask)
    out_w = out_w.reshape(-1, WINDOW_SIZE, WINDOW_SIZE, WINDOW_SIZE, C)
    out = window_reverse(out_w, WINDOW_SIZE, Z, H, W)
    if SHIFT_SIZE > 0:
        out = jnp.roll(out, shift=(SHIFT_SIZE,) * 3, axis=(1, 2, 3))
    return out.reshape(B, L, C)


def swin_block_forward_ref(x, params, attn_bias):
    Z, H, W = INPUT_RES
    B, L, C = x.shape
    shortcut = x
    xv = x.reshape(B, Z, H, W, C)
    if SHIFT_SIZE > 0:
        xv = jnp.roll(xv, shift=(-SHIFT_SIZE,) * 3, axis=(1, 2, 3))
    xw = window_partition(xv, WINDOW_SIZE).reshape(-1, N_WIN_TOK, C)
    aw = window_attention_ref(xw, params, attn_bias)
    aw = aw.reshape(-1, WINDOW_SIZE, WINDOW_SIZE, WINDOW_SIZE, C)
    sx = window_reverse(aw, WINDOW_SIZE, Z, H, W)
    if SHIFT_SIZE > 0:
        sx = jnp.roll(sx, shift=(SHIFT_SIZE,) * 3, axis=(1, 2, 3))
    attn_out = sx.reshape(B, L, C)
    out = block_tail_ref(shortcut.reshape(-1, C), attn_out.reshape(-1, C), params)
    return out.reshape(B, L, C)


# ------------------------- deterministic parameter init ----------------------
def init_params(key):
    ks = jax.random.split(key, 12)
    def w(k, shape, s=0.02):
        return s * jax.random.normal(k, shape, jnp.float32)
    return {
        "qkv_w": w(ks[0], (3 * DIM, DIM)),
        "q_bias": w(ks[1], (DIM,)),
        "v_bias": w(ks[2], (DIM,)),
        "logit_scale": jnp.log(10.0 * jnp.ones((NUM_HEADS, 1, 1), jnp.float32)),
        "cpb_w1": w(ks[3], (CPB_DIM, 3)),
        "cpb_b1": w(ks[4], (CPB_DIM,)),
        "cpb_w2": w(ks[5], (NUM_HEADS, CPB_DIM)),
        "proj_w": w(ks[6], (DIM, DIM)),
        "proj_b": w(ks[7], (DIM,)),
        "norm1_g": jnp.ones((DIM,), jnp.float32),
        "norm1_b": jnp.zeros((DIM,), jnp.float32),
        "fc1_w": w(ks[8], (MLP_HIDDEN, DIM)),
        "fc1_b": w(ks[9], (MLP_HIDDEN,)),
        "fc2_w": w(ks[10], (DIM, MLP_HIDDEN)),
        "fc2_b": w(ks[11], (DIM,)),
        "norm2_g": jnp.ones((DIM,), jnp.float32),
        "norm2_b": jnp.zeros((DIM,), jnp.float32),
    }


if __name__ == "__main__":
    key = jax.random.PRNGKey(0)
    kx, kp = jax.random.split(key)
    params = init_params(kp)
    x = jax.random.normal(kx, (BATCH, SEQ, DIM), jnp.float32)

    rel_table_np, rel_index_np = build_rel_tables()
    mask_np = build_attn_mask()
    rel_bias = compute_rel_pos_bias(params, jnp.asarray(rel_table_np),
                                    jnp.asarray(rel_index_np))          # (heads, N, N)
    mask = jnp.asarray(mask_np)                                          # (nW, N, N)
    attn_bias = rel_bias[None] + mask[:, None]                           # ref-only combined bias

    # One-time parameter preprocessing, hoisted out of the per-call forward.
    fused_params = prepare_fused_params(params)

    fwd_pallas = jax.jit(swin_block_forward_pallas)
    fwd_ref = jax.jit(swin_block_forward_ref)

    out = jax.block_until_ready(fwd_pallas(x, fused_params, rel_bias, mask))
    ref = jax.block_until_ready(fwd_ref(x, params, attn_bias))

    err = float(jnp.max(jnp.abs(out - ref)))
    assert out.shape == (BATCH, SEQ, DIM)
    assert err < 1e-2, f"pallas vs reference mismatch: {err}"
    print("KERNEL_OK")
</pallas_src>

<mosaic_0001>
module attributes {stable_mosaic.version = 11 : i64} {
  func.func @_fused_block_kernel(%arg0: i32, %arg1: memref<1x512x16xf32, #tpu.memory_space<vmem>>, %arg2: memref<16x48xf32, #tpu.memory_space<vmem>>, %arg3: memref<1x48xf32, #tpu.memory_space<vmem>>, %arg4: memref<2xf32, #tpu.memory_space<smem>>, %arg5: memref<2x64x64xf32, #tpu.memory_space<vmem>>, %arg6: memref<8x64x64xf32, #tpu.memory_space<vmem>>, %arg7: memref<16x16xf32, #tpu.memory_space<vmem>>, %arg8: memref<1x16xf32, #tpu.memory_space<vmem>>, %arg9: memref<1x16xf32, #tpu.memory_space<vmem>>, %arg10: memref<1x16xf32, #tpu.memory_space<vmem>>, %arg11: memref<16x64xf32, #tpu.memory_space<vmem>>, %arg12: memref<1x64xf32, #tpu.memory_space<vmem>>, %arg13: memref<64x16xf32, #tpu.memory_space<vmem>>, %arg14: memref<1x16xf32, #tpu.memory_space<vmem>>, %arg15: memref<1x16xf32, #tpu.memory_space<vmem>>, %arg16: memref<1x16xf32, #tpu.memory_space<vmem>>, %arg17: memref<1x512x16xf32, #tpu.memory_space<vmem>>, %arg18: memref<512x48xf32, #tpu.memory_space<vmem>>, %arg19: memref<512x16xf32, #tpu.memory_space<vmem>>) attributes {dimension_semantics = [#tpu.dimension_semantics<parallel>], iteration_bounds = array<i64: 2>, scalar_prefetch = 0 : i64, scratch_operands = 2 : i64, tpu.core_type = #tpu.core_type<tc>, window_params = [{transform_indices = @transform_0, window_bounds = array<i64: 1, 512, 16>}, {pipeline_mode = #tpu.pipeline_mode<synchronous>, transform_indices = @transform_1, window_bounds = array<i64: 16, 48>}, {pipeline_mode = #tpu.pipeline_mode<synchronous>, transform_indices = @transform_2, window_bounds = array<i64: 1, 48>}, {transform_indices = @transform_3, window_bounds = array<i64: 2>}, {pipeline_mode = #tpu.pipeline_mode<synchronous>, transform_indices = @transform_4, window_bounds = array<i64: 2, 64, 64>}, {pipeline_mode = #tpu.pipeline_mode<synchronous>, transform_indices = @transform_5, window_bounds = array<i64: 8, 64, 64>}, {pipeline_mode = #tpu.pipeline_mode<synchronous>, transform_indices = @transform_6, window_bounds = array<i64: 16, 16>}, {pipeline_mode = #tpu.pipeline_mode<synchronous>, transform_indices = @transform_7, window_bounds = array<i64: 1, 16>}, {pipeline_mode = #tpu.pipeline_mode<synchronous>, transform_indices = @transform_8, window_bounds = array<i64: 1, 16>}, {pipeline_mode = #tpu.pipeline_mode<synchronous>, transform_indices = @transform_9, window_bounds = array<i64: 1, 16>}, {pipeline_mode = #tpu.pipeline_mode<synchronous>, transform_indices = @transform_10, window_bounds = array<i64: 16, 64>}, {pipeline_mode = #tpu.pipeline_mode<synchronous>, transform_indices = @transform_11, window_bounds = array<i64: 1, 64>}, {pipeline_mode = #tpu.pipeline_mode<synchronous>, transform_indices = @transform_12, window_bounds = array<i64: 64, 16>}, {pipeline_mode = #tpu.pipeline_mode<synchronous>, transform_indices = @transform_13, window_bounds = array<i64: 1, 16>}, {pipeline_mode = #tpu.pipeline_mode<synchronous>, transform_indices = @transform_14, window_bounds = array<i64: 1, 16>}, {pipeline_mode = #tpu.pipeline_mode<synchronous>, transform_indices = @transform_15, window_bounds = array<i64: 1, 16>}, {transform_indices = @transform_16, window_bounds = array<i64: 1, 512, 16>}]} {
    %c0 = arith.constant 0 : index
    %c0_0 = arith.constant 0 : index
    %c0_1 = arith.constant 0 : index
    %0 = vector.load %arg1[%c0, %c0_0, %c0_1] : memref<1x512x16xf32, #tpu.memory_space<vmem>>, vector<1x512x16xf32>
    %1 = vector.shape_cast %0 : vector<1x512x16xf32> to vector<512x16xf32>
    %c0_2 = arith.constant 0 : index
    %c0_3 = arith.constant 0 : index
    %2 = vector.load %arg2[%c0_2, %c0_3] : memref<16x48xf32, #tpu.memory_space<vmem>>, vector<16x48xf32>
    %cst = arith.constant dense<0.000000e+00> : vector<512x48xf32>
    %3 = tpu.matmul %1, %2, %cst {dimension_numbers = #tpu.dot_dimension_numbers<[1], [0], [0], [1], [0, 0, 1, 1], [], []>, precision = #tpu.contract_precision<fp32>} : vector<512x16xf32>, vector<16x48xf32>, vector<512x48xf32> -> vector<512x48xf32>
    %c0_4 = arith.constant 0 : index
    %c0_5 = arith.constant 0 : index
    %4 = vector.load %arg3[%c0_4, %c0_5] : memref<1x48xf32, #tpu.memory_space<vmem>>, vector<1x48xf32>
    %5 = vector.broadcast %4 : vector<1x48xf32> to vector<512x48xf32>
    %6 = arith.addf %3, %5 : vector<512x48xf32>
    %c0_6 = arith.constant 0 : index
    %c0_7 = arith.constant 0 : index
    %7 = vector.load %arg18[%c0_6, %c0_7] : memref<512x48xf32, #tpu.memory_space<vmem>>, vector<512x48xf32>
    tpu.vector_store %arg18[%c0_6, %c0_7], %6 {strides = array<i32>} : memref<512x48xf32, #tpu.memory_space<vmem>>, vector<512x48xf32>,
    %c0_i32 = arith.constant 0 : i32
    %c8_i32 = arith.constant 8 : i32
    %8 = arith.addi %c0_i32, %c8_i32 : i32
    %c1_i32 = arith.constant 1 : i32
    scf.for %arg20 = %c0_i32 to %8 step %c1_i32  : i32 {
      %c1_i32_12 = arith.constant 1 : i32
      %10 = arith.muli %arg20, %c1_i32_12 : i32
      %c0_i32_13 = arith.constant 0 : i32
      %11 = arith.addi %c0_i32_13, %10 : i32
      %c64_i32 = arith.constant 64 : i32
      %12 = arith.muli %11, %c64_i32 : i32
      %13 = tpu.assume_multiple %12, 64 : i32
      %14 = arith.index_cast %11 : i32 to index
      %c0_14 = arith.constant 0 : index
      %c0_15 = arith.constant 0 : index
      %15 = vector.load %arg6[%14, %c0_14, %c0_15] : memref<8x64x64xf32, #tpu.memory_space<vmem>>, vector<1x64x64xf32>
      %16 = vector.shape_cast %15 : vector<1x64x64xf32> to vector<64x64xf32>
      %17 = arith.index_cast %13 : i32 to index
      %c0_16 = arith.constant 0 : index
      %18 = vector.load %arg18[%17, %c0_16] : memref<512x48xf32, #tpu.memory_space<vmem>>, vector<64x8xf32>
      %19 = arith.index_cast %13 : i32 to index
      %c16 = arith.constant 16 : index
      %20 = vector.load %arg18[%19, %c16] : memref<512x48xf32, #tpu.memory_space<vmem>>, vector<64x8xf32>
      %21 = arith.index_cast %13 : i32 to index
      %c32 = arith.constant 32 : index
      %22 = vector.load %arg18[%21, %c32] : memref<512x48xf32, #tpu.memory_space<vmem>>, vector<64x8xf32>
      %23 = arith.mulf %18, %18 : vector<64x8xf32>
      %cst_17 = arith.constant dense<0.000000e+00> : vector<64xf32>
      %24 = vector.multi_reduction <add>, %23, %cst_17 [1] : vector<64x8xf32> to vector<64xf32>
      %25 = vector.shape_cast %24 : vector<64xf32> to vector<64x1xf32>
      %cst_18 = arith.constant 1.000000e-24 : f32
      %26 = vector.broadcast %cst_18 : f32 to vector<64x1xf32>
      %27 = arith.maximumf %25, %26 : vector<64x1xf32>
      %28 = math.rsqrt %27 : vector<64x1xf32>
      %29 = vector.broadcast %28 : vector<64x1xf32> to vector<64x8xf32>
      %30 = arith.mulf %18, %29 : vector<64x8xf32>
      %31 = arith.mulf %20, %20 : vector<64x8xf32>
      %cst_19 = arith.constant dense<0.000000e+00> : vector<64xf32>
      %32 = vector.multi_reduction <add>, %31, %cst_19 [1] : vector<64x8xf32> to vector<64xf32>
      %33 = vector.shape_cast %32 : vector<64xf32> to vector<64x1xf32>
      %cst_20 = arith.constant 1.000000e-24 : f32
      %34 = vector.broadcast %cst_20 : f32 to vector<64x1xf32>
      %35 = arith.maximumf %33, %34 : vector<64x1xf32>
      %36 = math.rsqrt %35 : vector<64x1xf32>
      %37 = vector.broadcast %36 : vector<64x1xf32> to vector<64x8xf32>
      %38 = arith.mulf %20, %37 : vector<64x8xf32>
      %39 = tpu.transpose %38, [1, 0] : vector<64x8xf32> -> vector<8x64xf32>
      %cst_21 = arith.constant dense<0.000000e+00> : vector<64x64xf32>
      %40 = tpu.matmul %30, %39, %cst_21 {dimension_numbers = #tpu.dot_dimension_numbers<[1], [0], [0], [1], [0, 0, 1, 1], [], []>, precision = #tpu.contract_precision<fp32>} : vector<64x8xf32>, vector<8x64xf32>, vector<64x64xf32> -> vector<64x64xf32>
      %c0_22 = arith.constant 0 : index
      %41 = memref.load %arg4[%c0_22] : memref<2xf32, #tpu.memory_space<smem>>
      %42 = vector.broadcast %41 : f32 to vector<64x64xf32>
      %43 = arith.mulf %40, %42 : vector<64x64xf32>
      %c0_23 = arith.constant 0 : index
      %c0_24 = arith.constant 0 : index
      %c0_25 = arith.constant 0 : index
      %44 = vector.load %arg5[%c0_23, %c0_24, %c0_25] : memref<2x64x64xf32, #tpu.memory_space<vmem>>, vector<1x64x64xf32>
      %45 = vector.shape_cast %44 : vector<1x64x64xf32> to vector<64x64xf32>
      %46 = arith.addf %43, %45 : vector<64x64xf32>
      %47 = arith.addf %46, %16 : vector<64x64xf32>
      %cst_26 = arith.constant dense<0xFF800000> : vector<64xf32>
      %48 = vector.multi_reduction <maximumf>, %47, %cst_26 [1] : vector<64x64xf32> to vector<64xf32>
      %49 = vector.shape_cast %48 : vector<64xf32> to vector<64x1xf32>
      %50 = vector.broadcast %49 : vector<64x1xf32> to vector<64x64xf32>
      %51 = arith.subf %47, %50 : vector<64x64xf32>
      %52 = math.exp %51 : vector<64x64xf32>
      %cst_27 = arith.constant dense<0.000000e+00> : vector<64xf32>
      %53 = vector.multi_reduction <add>, %52, %cst_27 [1] : vector<64x64xf32> to vector<64xf32>
      %54 = vector.shape_cast %53 : vector<64xf32> to vector<64x1xf32>
      %55 = tpu.reciprocal %54 {approx = true} : vector<64x1xf32> -> vector<64x1xf32>
      %56 = vector.broadcast %55 : vector<64x1xf32> to vector<64x64xf32>
      %57 = arith.mulf %52, %56 : vector<64x64xf32>
      %cst_28 = arith.constant dense<0.000000e+00> : vector<64x8xf32>
      %58 = tpu.matmul %57, %22, %cst_28 {dimension_numbers = #tpu.dot_dimension_numbers<[1], [0], [0], [1], [0, 0, 1, 1], [], []>, precision = #tpu.contract_precision<fp32>} : vector<64x64xf32>, vector<64x8xf32>, vector<64x8xf32> -> vector<64x8xf32>
      %59 = arith.index_cast %13 : i32 to index
      %c8 = arith.constant 8 : index
      %60 = vector.load %arg18[%59, %c8] : memref<512x48xf32, #tpu.memory_space<vmem>>, vector<64x8xf32>
      %61 = arith.index_cast %13 : i32 to index
      %c24 = arith.constant 24 : index
      %62 = vector.load %arg18[%61, %c24] : memref<512x48xf32, #tpu.memory_space<vmem>>, vector<64x8xf32>
      %63 = arith.index_cast %13 : i32 to index
      %c40 = arith.constant 40 : index
      %64 = vector.load %arg18[%63, %c40] : memref<512x48xf32, #tpu.memory_space<vmem>>, vector<64x8xf32>
      %65 = arith.mulf %60, %60 : vector<64x8xf32>
      %cst_29 = arith.constant dense<0.000000e+00> : vector<64xf32>
      %66 = vector.multi_reduction <add>, %65, %cst_29 [1] : vector<64x8xf32> to vector<64xf32>
      %67 = vector.shape_cast %66 : vector<64xf32> to vector<64x1xf32>
      %cst_30 = arith.constant 1.000000e-24 : f32
      %68 = vector.broadcast %cst_30 : f32 to vector<64x1xf32>
      %69 = arith.maximumf %67, %68 : vector<64x1xf32>
      %70 = math.rsqrt %69 : vector<64x1xf32>
      %71 = vector.broadcast %70 : vector<64x1xf32> to vector<64x8xf32>
      %72 = arith.mulf %60, %71 : vector<64x8xf32>
      %73 = arith.mulf %62, %62 : vector<64x8xf32>
      %cst_31 = arith.constant dense<0.000000e+00> : vector<64xf32>
      %74 = vector.multi_reduction <add>, %73, %cst_31 [1] : vector<64x8xf32> to vector<64xf32>
      %75 = vector.shape_cast %74 : vector<64xf32> to vector<64x1xf32>
      %cst_32 = arith.constant 1.000000e-24 : f32
      %76 = vector.broadcast %cst_32 : f32 to vector<64x1xf32>
      %77 = arith.maximumf %75, %76 : vector<64x1xf32>
      %78 = math.rsqrt %77 : vector<64x1xf32>
      %79 = vector.broadcast %78 : vector<64x1xf32> to vector<64x8xf32>
      %80 = arith.mulf %62, %79 : vector<64x8xf32>
      %81 = tpu.transpose %80, [1, 0] : vector<64x8xf32> -> vector<8x64xf32>
      %cst_33 = arith.constant dense<0.000000e+00> : vector<64x64xf32>
      %82 = tpu.matmul %72, %81, %cst_33 {dimension_numbers = #tpu.dot_dimension_numbers<[1], [0], [0], [1], [0, 0, 1, 1], [], []>, precision = #tpu.contract_precision<fp32>} : vector<64x8xf32>, vector<8x64xf32>, vector<64x64xf32> -> vector<64x64xf32>
      %c1 = arith.constant 1 : index
      %83 = memref.load %arg4[%c1] : memref<2xf32, #tpu.memory_space<smem>>
      %84 = vector.broadcast %83 : f32 to vector<64x64xf32>
      %85 = arith.mulf %82, %84 : vector<64x64xf32>
      %c1_34 = arith.constant 1 : index
      %c0_35 = arith.constant 0 : index
      %c0_36 = arith.constant 0 : index
      %86 = vector.load %arg5[%c1_34, %c0_35, %c0_36] : memref<2x64x64xf32, #tpu.memory_space<vmem>>, vector<1x64x64xf32>
      %87 = vector.shape_cast %86 : vector<1x64x64xf32> to vector<64x64xf32>
      %88 = arith.addf %85, %87 : vector<64x64xf32>
      %89 = arith.addf %88, %16 : vector<64x64xf32>
      %cst_37 = arith.constant dense<0xFF800000> : vector<64xf32>
      %90 = vector.multi_reduction <maximumf>, %89, %cst_37 [1] : vector<64x64xf32> to vector<64xf32>
      %91 = vector.shape_cast %90 : vector<64xf32> to vector<64x1xf32>
      %92 = vector.broadcast %91 : vector<64x1xf32> to vector<64x64xf32>
      %93 = arith.subf %89, %92 : vector<64x64xf32>
      %94 = math.exp %93 : vector<64x64xf32>
      %cst_38 = arith.constant dense<0.000000e+00> : vector<64xf32>
      %95 = vector.multi_reduction <add>, %94, %cst_38 [1] : vector<64x64xf32> to vector<64xf32>
      %96 = vector.shape_cast %95 : vector<64xf32> to vector<64x1xf32>
      %97 = tpu.reciprocal %96 {approx = true} : vector<64x1xf32> -> vector<64x1xf32>
      %98 = vector.broadcast %97 : vector<64x1xf32> to vector<64x64xf32>
      %99 = arith.mulf %94, %98 : vector<64x64xf32>
      %cst_39 = arith.constant dense<0.000000e+00> : vector<64x8xf32>
      %100 = tpu.matmul %99, %64, %cst_39 {dimension_numbers = #tpu.dot_dimension_numbers<[1], [0], [0], [1], [0, 0, 1, 1], [], []>, precision = #tpu.contract_precision<fp32>} : vector<64x64xf32>, vector<64x8xf32>, vector<64x8xf32> -> vector<64x8xf32>
      %101 = tpu.concatenate %58, %100 in 1 : vector<64x8xf32>, vector<64x8xf32> -> vector<64x16xf32>
      %c0_40 = arith.constant 0 : index
      %c0_41 = arith.constant 0 : index
      %102 = vector.load %arg7[%c0_40, %c0_41] : memref<16x16xf32, #tpu.memory_space<vmem>>, vector<16x16xf32>
      %cst_42 = arith.constant dense<0.000000e+00> : vector<64x16xf32>
      %103 = tpu.matmul %101, %102, %cst_42 {dimension_numbers = #tpu.dot_dimension_numbers<[1], [0], [0], [1], [0, 0, 1, 1], [], []>, precision = #tpu.contract_precision<fp32>} : vector<64x16xf32>, vector<16x16xf32>, vector<64x16xf32> -> vector<64x16xf32>
      %104 = arith.index_cast %13 : i32 to index
      %c0_43 = arith.constant 0 : index
      %105 = vector.load %arg19[%104, %c0_43] : memref<512x16xf32, #tpu.memory_space<vmem>>, vector<64x16xf32>
      tpu.vector_store %arg19[%104, %c0_43], %103 {strides = array<i32>} : memref<512x16xf32, #tpu.memory_space<vmem>>, vector<64x16xf32>,
    }
    %c8_i32_8 = arith.constant 8 : i32
    %c0_i32_9 = arith.constant 0 : i32
    %c4_i32 = arith.constant 4 : i32
    %9 = arith.addi %c0_i32_9, %c4_i32 : i32
    %c1_i32_10 = arith.constant 1 : i32
    scf.for %arg20 = %c0_i32_9 to %9 step %c1_i32_10  : i32 {
      %c1_i32_12 = arith.constant 1 : i32
      %10 = arith.muli %arg20, %c1_i32_12 : i32
      %c0_i32_13 = arith.constant 0 : i32
      %11 = arith.addi %c0_i32_13, %10 : i32
      %c128_i32 = arith.constant 128 : i32
      %12 = arith.muli %11, %c128_i32 : i32
      %13 = tpu.assume_multiple %12, 128 : i32
      %c0_14 = arith.constant 0 : index
      %14 = arith.index_cast %13 : i32 to index
      %c0_15 = arith.constant 0 : index
      %15 = vector.load %arg1[%c0_14, %14, %c0_15] : memref<1x512x16xf32, #tpu.memory_space<vmem>>, vector<1x128x16xf32>
      %16 = vector.shape_cast %15 : vector<1x128x16xf32> to vector<128x16xf32>
      %17 = arith.index_cast %13 : i32 to index
      %c0_16 = arith.constant 0 : index
      %18 = vector.load %arg19[%17, %c0_16] : memref<512x16xf32, #tpu.memory_space<vmem>>, vector<128x16xf32>
      %c0_17 = arith.constant 0 : index
      %c0_18 = arith.constant 0 : index
      %19 = vector.load %arg8[%c0_17, %c0_18] : memref<1x16xf32, #tpu.memory_space<vmem>>, vector<1x16xf32>
      %20 = vector.broadcast %19 : vector<1x16xf32> to vector<128x16xf32>
      %21 = arith.addf %18, %20 : vector<128x16xf32>
      %c0_19 = arith.constant 0 : index
      %c0_20 = arith.constant 0 : index
      %22 = vector.load %arg9[%c0_19, %c0_20] : memref<1x16xf32, #tpu.memory_space<vmem>>, vector<1x16xf32>
      %c0_21 = arith.constant 0 : index
      %c0_22 = arith.constant 0 : index
      %23 = vector.load %arg10[%c0_21, %c0_22] : memref<1x16xf32, #tpu.memory_space<vmem>>, vector<1x16xf32>
      %cst_23 = arith.constant dense<0.000000e+00> : vector<128xf32>
      %24 = vector.multi_reduction <add>, %21, %cst_23 [1] : vector<128x16xf32> to vector<128xf32>
      %25 = vector.shape_cast %24 : vector<128xf32> to vector<128x1xf32>
      %cst_24 = arith.constant 1.600000e+01 : f32
      %26 = vector.broadcast %cst_24 : f32 to vector<128x1xf32>
      %27 = arith.divf %25, %26 : vector<128x1xf32>
      %28 = vector.broadcast %27 : vector<128x1xf32> to vector<128x16xf32>
      %29 = arith.subf %21, %28 : vector<128x16xf32>
      %30 = arith.mulf %29, %29 : vector<128x16xf32>
      %cst_25 = arith.constant dense<0.000000e+00> : vector<128xf32>
      %31 = vector.multi_reduction <add>, %30, %cst_25 [1] : vector<128x16xf32> to vector<128xf32>
      %32 = vector.shape_cast %31 : vector<128xf32> to vector<128x1xf32>
      %cst_26 = arith.constant 1.600000e+01 : f32
      %33 = vector.broadcast %cst_26 : f32 to vector<128x1xf32>
      %34 = arith.divf %32, %33 : vector<128x1xf32>
      %35 = vector.broadcast %27 : vector<128x1xf32> to vector<128x16xf32>
      %36 = arith.subf %21, %35 : vector<128x16xf32>
      %cst_27 = arith.constant 9.99999974E-6 : f32
      %37 = vector.broadcast %cst_27 : f32 to vector<128x1xf32>
      %38 = arith.addf %34, %37 : vector<128x1xf32>
      %39 = math.rsqrt %38 : vector<128x1xf32>
      %40 = vector.broadcast %39 : vector<128x1xf32> to vector<128x16xf32>
      %41 = arith.mulf %36, %40 : vector<128x16xf32>
      %42 = vector.broadcast %22 : vector<1x16xf32> to vector<128x16xf32>
      %43 = arith.mulf %41, %42 : vector<128x16xf32>
      %44 = vector.broadcast %23 : vector<1x16xf32> to vector<128x16xf32>
      %45 = arith.addf %43, %44 : vector<128x16xf32>
      %46 = arith.addf %16, %45 : vector<128x16xf32>
      %c0_28 = arith.constant 0 : index
      %c0_29 = arith.constant 0 : index
      %47 = vector.load %arg11[%c0_28, %c0_29] : memref<16x64xf32, #tpu.memory_space<vmem>>, vector<16x64xf32>
      %cst_30 = arith.constant dense<0.000000e+00> : vector<128x64xf32>
      %48 = tpu.matmul %46, %47, %cst_30 {dimension_numbers = #tpu.dot_dimension_numbers<[1], [0], [0], [1], [0, 0, 1, 1], [], []>, precision = #tpu.contract_precision<fp32>} : vector<128x16xf32>, vector<16x64xf32>, vector<128x64xf32> -> vector<128x64xf32>
      %c0_31 = arith.constant 0 : index
      %c0_32 = arith.constant 0 : index
      %49 = vector.load %arg12[%c0_31, %c0_32] : memref<1x64xf32, #tpu.memory_space<vmem>>, vector<1x64xf32>
      %50 = vector.broadcast %49 : vector<1x64xf32> to vector<128x64xf32>
      %51 = arith.addf %48, %50 : vector<128x64xf32>
      %cst_33 = arith.constant 0.000000e+00 : f32
      %52 = vector.broadcast %cst_33 : f32 to vector<128x64xf32>
      %53 = arith.cmpf oge, %51, %52 : vector<128x64xf32>
      %cst_34 = arith.constant 0.00999999977 : f32
      %54 = vector.broadcast %cst_34 : f32 to vector<128x64xf32>
      %55 = arith.mulf %54, %51 : vector<128x64xf32>
      %56 = arith.select %53, %51, %55 : vector<128x64xi1>, vector<128x64xf32>
      %c0_35 = arith.constant 0 : index
      %c0_36 = arith.constant 0 : index
      %57 = vector.load %arg13[%c0_35, %c0_36] : memref<64x16xf32, #tpu.memory_space<vmem>>, vector<64x16xf32>
      %cst_37 = arith.constant dense<0.000000e+00> : vector<128x16xf32>
      %58 = tpu.matmul %56, %57, %cst_37 {dimension_numbers = #tpu.dot_dimension_numbers<[1], [0], [0], [1], [0, 0, 1, 1], [], []>, precision = #tpu.contract_precision<fp32>} : vector<128x64xf32>, vector<64x16xf32>, vector<128x16xf32> -> vector<128x16xf32>
      %c0_38 = arith.constant 0 : index
      %c0_39 = arith.constant 0 : index
      %59 = vector.load %arg14[%c0_38, %c0_39] : memref<1x16xf32, #tpu.memory_space<vmem>>, vector<1x16xf32>
      %60 = vector.broadcast %59 : vector<1x16xf32> to vector<128x16xf32>
      %61 = arith.addf %58, %60 : vector<128x16xf32>
      %c0_40 = arith.constant 0 : index
      %c0_41 = arith.constant 0 : index
      %62 = vector.load %arg15[%c0_40, %c0_41] : memref<1x16xf32, #tpu.memory_space<vmem>>, vector<1x16xf32>
      %c0_42 = arith.constant 0 : index
      %c0_43 = arith.constant 0 : index
      %63 = vector.load %arg16[%c0_42, %c0_43] : memref<1x16xf32, #tpu.memory_space<vmem>>, vector<1x16xf32>
      %cst_44 = arith.constant dense<0.000000e+00> : vector<128xf32>
      %64 = vector.multi_reduction <add>, %61, %cst_44 [1] : vector<128x16xf32> to vector<128xf32>
      %65 = vector.shape_cast %64 : vector<128xf32> to vector<128x1xf32>
      %cst_45 = arith.constant 1.600000e+01 : f32
      %66 = vector.broadcast %cst_45 : f32 to vector<128x1xf32>
      %67 = arith.divf %65, %66 : vector<128x1xf32>
      %68 = vector.broadcast %67 : vector<128x1xf32> to vector<128x16xf32>
      %69 = arith.subf %61, %68 : vector<128x16xf32>
      %70 = arith.mulf %69, %69 : vector<128x16xf32>
      %cst_46 = arith.constant dense<0.000000e+00> : vector<128xf32>
      %71 = vector.multi_reduction <add>, %70, %cst_46 [1] : vector<128x16xf32> to vector<128xf32>
      %72 = vector.shape_cast %71 : vector<128xf32> to vector<128x1xf32>
      %cst_47 = arith.constant 1.600000e+01 : f32
      %73 = vector.broadcast %cst_47 : f32 to vector<128x1xf32>
      %74 = arith.divf %72, %73 : vector<128x1xf32>
      %75 = vector.broadcast %67 : vector<128x1xf32> to vector<128x16xf32>
      %76 = arith.subf %61, %75 : vector<128x16xf32>
      %cst_48 = arith.constant 9.99999974E-6 : f32
      %77 = vector.broadcast %cst_48 : f32 to vector<128x1xf32>
      %78 = arith.addf %74, %77 : vector<128x1xf32>
      %79 = math.rsqrt %78 : vector<128x1xf32>
      %80 = vector.broadcast %79 : vector<128x1xf32> to vector<128x16xf32>
      %81 = arith.mulf %76, %80 : vector<128x16xf32>
      %82 = vector.broadcast %62 : vector<1x16xf32> to vector<128x16xf32>
      %83 = arith.mulf %81, %82 : vector<128x16xf32>
      %84 = vector.broadcast %63 : vector<1x16xf32> to vector<128x16xf32>
      %85 = arith.addf %83, %84 : vector<128x16xf32>
      %86 = arith.addf %46, %85 : vector<128x16xf32>
      %c0_49 = arith.constant 0 : index
      %87 = arith.index_cast %13 : i32 to index
      %c0_50 = arith.constant 0 : index
      %88 = vector.load %arg17[%c0_49, %87, %c0_50] : memref<1x512x16xf32, #tpu.memory_space<vmem>>, vector<1x128x16xf32>
      %89 = vector.shape_cast %88 : vector<1x128x16xf32> to vector<128x16xf32>
      %90 = vector.shape_cast %86 : vector<128x16xf32> to vector<1x128x16xf32>
      tpu.vector_store %arg17[%c0_49, %87, %c0_50], %90 {strides = array<i32>} : memref<1x512x16xf32, #tpu.memory_space<vmem>>, vector<1x128x16xf32>,
    }
    %c4_i32_11 = arith.constant 4 : i32
    return
  }
  func.func @transform_0(%arg0: i32) -> (i32, i32, i32) {
    %c0_i32 = arith.constant 0 : i32
    %c0_i32_0 = arith.constant 0 : i32
    %c0_i32_1 = arith.constant 0 : i32
    return %arg0, %c0_i32, %c0_i32_0 : i32, i32, i32
  }
  func.func @transform_1(%arg0: i32) -> (i32, i32) {
    %c0_i32 = arith.constant 0 : i32
    %c0_i32_0 = arith.constant 0 : i32
    %c0_i32_1 = arith.constant 0 : i32
    return %c0_i32, %c0_i32_0 : i32, i32
  }
  func.func @transform_2(%arg0: i32) -> (i32, i32) {
    %c0_i32 = arith.constant 0 : i32
    %c0_i32_0 = arith.constant 0 : i32
    %c0_i32_1 = arith.constant 0 : i32
    return %c0_i32, %c0_i32_0 : i32, i32
  }
  func.func @transform_3(%arg0: i32) -> i32 {
    %c0_i32 = arith.constant 0 : i32
    %c0_i32_0 = arith.constant 0 : i32
    return %c0_i32 : i32
  }
  func.func @transform_4(%arg0: i32) -> (i32, i32, i32) {
    %c0_i32 = arith.constant 0 : i32
    %c0_i32_0 = arith.constant 0 : i32
    %c0_i32_1 = arith.constant 0 : i32
    %c0_i32_2 = arith.constant 0 : i32
    return %c0_i32, %c0_i32_0, %c0_i32_1 : i32, i32, i32
  }
  func.func @transform_5(%arg0: i32) -> (i32, i32, i32) {
    %c0_i32 = arith.constant 0 : i32
    %c0_i32_0 = arith.constant 0 : i32
    %c0_i32_1 = arith.constant 0 : i32
    %c0_i32_2 = arith.constant 0 : i32
    return %c0_i32, %c0_i32_0, %c0_i32_1 : i32, i32, i32
  }
  func.func @transform_6(%arg0: i32) -> (i32, i32) {
    %c0_i32 = arith.constant 0 : i32
    %c0_i32_0 = arith.constant 0 : i32
    %c0_i32_1 = arith.constant 0 : i32
    return %c0_i32, %c0_i32_0 : i32, i32
  }
  func.func @transform_7(%arg0: i32) -> (i32, i32) {
    %c0_i32 = arith.constant 0 : i32
    %c0_i32_0 = arith.constant 0 : i32
    %c0_i32_1 = arith.constant 0 : i32
    return %c0_i32, %c0_i32_0 : i32, i32
  }
  func.func @transform_8(%arg0: i32) -> (i32, i32) {
    %c0_i32 = arith.constant 0 : i32
    %c0_i32_0 = arith.constant 0 : i32
    %c0_i32_1 = arith.constant 0 : i32
    return %c0_i32, %c0_i32_0 : i32, i32
  }
  func.func @transform_9(%arg0: i32) -> (i32, i32) {
    %c0_i32 = arith.constant 0 : i32
    %c0_i32_0 = arith.constant 0 : i32
    %c0_i32_1 = arith.constant 0 : i32
    return %c0_i32, %c0_i32_0 : i32, i32
  }
  func.func @transform_10(%arg0: i32) -> (i32, i32) {
    %c0_i32 = arith.constant 0 : i32
    %c0_i32_0 = arith.constant 0 : i32
    %c0_i32_1 = arith.constant 0 : i32
    return %c0_i32, %c0_i32_0 : i32, i32
  }
  func.func @transform_11(%arg0: i32) -> (i32, i32) {
    %c0_i32 = arith.constant 0 : i32
    %c0_i32_0 = arith.constant 0 : i32
    %c0_i32_1 = arith.constant 0 : i32
    return %c0_i32, %c0_i32_0 : i32, i32
  }
  func.func @transform_12(%arg0: i32) -> (i32, i32) {
    %c0_i32 = arith.constant 0 : i32
    %c0_i32_0 = arith.constant 0 : i32
    %c0_i32_1 = arith.constant 0 : i32
    return %c0_i32, %c0_i32_0 : i32, i32
  }
  func.func @transform_13(%arg0: i32) -> (i32, i32) {
    %c0_i32 = arith.constant 0 : i32
    %c0_i32_0 = arith.constant 0 : i32
    %c0_i32_1 = arith.constant 0 : i32
    return %c0_i32, %c0_i32_0 : i32, i32
  }
  func.func @transform_14(%arg0: i32) -> (i32, i32) {
    %c0_i32 = arith.constant 0 : i32
    %c0_i32_0 = arith.constant 0 : i32
    %c0_i32_1 = arith.constant 0 : i32
    return %c0_i32, %c0_i32_0 : i32, i32
  }
  func.func @transform_15(%arg0: i32) -> (i32, i32) {
    %c0_i32 = arith.constant 0 : i32
    %c0_i32_0 = arith.constant 0 : i32
    %c0_i32_1 = arith.constant 0 : i32
    return %c0_i32, %c0_i32_0 : i32, i32
  }
  func.func @transform_16(%arg0: i32) -> (i32, i32, i32) {
    %c0_i32 = arith.constant 0 : i32
    %c0_i32_0 = arith.constant 0 : i32
    %c0_i32_1 = arith.constant 0 : i32
    return %arg0, %c0_i32, %c0_i32_0 : i32, i32, i32
  }
}

</mosaic_0001>

<llo_original>
// kernel: swin_block_forward_pallas.1
$region0: #{swin_block_forward_pallas.1}
  #allocation0 [shape = 'u32[]', space=smem, size = 0x4, offset = 0x4, fixed_abs, tag = 'smem constant byte address 0x4 - core index']
  #allocation1 [shape = 'u32[72,128]{1,0:T(1,128)}', space=vmem, size = 0x9000, scoped, tag = 'internal scratch']
  #allocation2 [shape = 'f32[512,48]{1,0:T(8,128)}', space=vmem, size = 0x40000, scoped, tag = 'scratch operand']
  #allocation3 [shape = 'f32[512,16]{1,0:T(8,128)}', space=vmem, size = 0x40000, scoped, tag = 'scratch operand']
  %s0 = inlined_call_operand.vmem [shape: f32[2,512,16], index: 0, kind: input, shape index: {}]
  %s1 = inlined_call_operand.vmem [shape: f32[16,48], index: 1, kind: input, shape index: {}]
  %s2 = inlined_call_operand.vmem [shape: f32[1,48], index: 2, kind: input, shape index: {}]
  %s3 = inlined_call_operand.vmem [shape: f32[2], index: 3, kind: input, shape index: {}]
  %s4 = inlined_call_operand.vmem [shape: f32[2,64,64], index: 4, kind: input, shape index: {}]
  %s5 = inlined_call_operand.vmem [shape: f32[8,64,64], index: 5, kind: input, shape index: {}]
  %s6 = inlined_call_operand.vmem [shape: f32[16,16], index: 6, kind: input, shape index: {}]
  %s7 = inlined_call_operand.vmem [shape: f32[1,16], index: 7, kind: input, shape index: {}]
  %s8 = inlined_call_operand.vmem [shape: f32[1,16], index: 8, kind: input, shape index: {}]
  %s9 = inlined_call_operand.vmem [shape: f32[1,16], index: 9, kind: input, shape index: {}]
  %s10 = inlined_call_operand.vmem [shape: f32[16,64], index: 10, kind: input, shape index: {}]
  %s11 = inlined_call_operand.vmem [shape: f32[1,64], index: 11, kind: input, shape index: {}]
  %s12 = inlined_call_operand.vmem [shape: f32[64,16], index: 12, kind: input, shape index: {}]
  %s13 = inlined_call_operand.vmem [shape: f32[1,16], index: 13, kind: input, shape index: {}]
  %s14 = inlined_call_operand.vmem [shape: f32[1,16], index: 14, kind: input, shape index: {}]
  %s15 = inlined_call_operand.vmem [shape: f32[1,16], index: 15, kind: input, shape index: {}]
  %s16 = inlined_call_operand.vmem [shape: f32[2,512,16], index: 16, kind: output, shape index: {}]
  %s17 = sld [smem:[#allocation0]]
  $region115: #{swin_block_forward_pallas.1} parent=0
    _
  %s19 = ssub.s32 1, %s17
  %s20 = scalar_select 0, %s19, %s17
  $region1: #{swin_block_forward_pallas.1} parent=0
    #allocation4 [shape = 'u8[512]{0}', space=smem, size = 0x200, scoped, tag = 'input window, operand 3, single buffered']
    #allocation5 [shape = 's32[2]{0}', space=sflag, size = 0x8, scoped, tag = 'scoped memory for swin_block_forward_pallas.1']
    %21 = vsyncpa [#allocation5], 0
    loop: start=0, step=1, limit=4
    $region2: #{swin_block_forward_pallas.1} parent=1 // loop_pre_header
      _
    $region3: #{swin_block_forward_pallas.1} parent=1 // loop_header
      %s23 = sphi 0, %s27
      %p24 = scmp.ge.s32.totalorder %s23, 4
      %s33 = sphi 0, %s35
      %s36 = sphi 0, %s33
      %s37 = sphi 0, %s36
      %s53 = sphi 0, %s37
      %s57 = sphi 0, %s57
      %s59 = sphi 0, %s57
      %s60 = sphi 0, %s59
      %s74 = sphi 0, %s60
      %s78 = sphi 0, %s78
      %s80 = sphi 0, %s78
      %s81 = sphi 0, %s80
      %s95 = sphi 0, %s81
      %s99 = sphi 0, %s99
      %s101 = sphi 0, %s99
      %s102 = sphi 0, %s101
      %s116 = sphi 0, %s102
      %s120 = sphi 0, %s120
      %s122 = sphi 0, %s120
      %s123 = sphi 0, %s122
      %s137 = sphi 0, %s123
      %s141 = sphi 0, %s141
      %s143 = sphi 0, %s141
      %s144 = sphi 0, %s143
      %s158 = sphi 0, %s144
      %s162 = sphi 0, %s162
      %s164 = sphi 0, %s162
      %s165 = sphi 0, %s164
      %s179 = sphi 0, %s165
      %s183 = sphi 0, %s183
      %s185 = sphi 0, %s183
      %s186 = sphi 0, %s185
      %s200 = sphi 0, %s186
      %s204 = sphi 0, %s204
      %s206 = sphi 0, %s204
      %s207 = sphi 0, %s206
      %s221 = sphi 0, %s207
      %s225 = sphi 0, %s225
      %s227 = sphi 0, %s225
      %s228 = sphi 0, %s227
      %s242 = sphi 0, %s228
      %s246 = sphi 0, %s246
      %s248 = sphi 0, %s246
      %s249 = sphi 0, %s248
      %s263 = sphi 0, %s249
      %s267 = sphi 0, %s267
      %s269 = sphi 0, %s267
      %s270 = sphi 0, %s269
      %s284 = sphi 0, %s270
      %s288 = sphi 0, %s288
      %s290 = sphi 0, %s288
      %s291 = sphi 0, %s290
      %s305 = sphi 0, %s291
      %s309 = sphi 0, %s309
      %s311 = sphi 0, %s309
      %s312 = sphi 0, %s311
      %s326 = sphi 0, %s312
      %s330 = sphi 0, %s330
      %s332 = sphi 0, %s330
      %s333 = sphi 0, %s332
      %s347 = sphi 0, %s333
      %s351 = sphi 0, %s351
      %s353 = sphi 0, %s351
      %s354 = sphi 0, %s353
      %s368 = sphi 0, %s354
      %s374 = sphi 0, %s376
      %s377 = sphi 0, %s374
      %s378 = sphi 0, %s377
      %s394 = sphi 0, %s378
    $region4: #{swin_block_forward_pallas.1} parent=1 // loop_header_branch
      %26 = sbr.rel (%p24) target = $region8
    $region5: #{swin_block_forward_pallas.1} parent=1 // loop_body
      %s28 = ssub.s32 %s23, 1
      %s29 = ssub.s32 %s23, 2
      %s30 = sadd.s32 %s23, 1
      %s31 = ssub.s32 %s23, %s30
      %p32 = scmp.eq.s32.totalorder %s31, 0
      %s34 = sadd.s32 %s33, 1
      %s35 = scalar_select %p32, %s33, %s34
      %p38 = pneg %p32
      %p39 = scmp.eq.s32.totalorder %s23, 1
      %p40 = por %p38, %p39
      %p41 = scmp.ne.s32.totalorder %s33, %s36
      %p42 = scmp.eq.s32.totalorder %s23, 0
      %p43 = por %p41, %p42
      %p44 = scmp.ne.s32.totalorder %s33, %s36
      %p45 = scmp.eq.s32.totalorder %s28, 1
      %p46 = por %p44, %p45
      %p47 = scmp.ne.s32.totalorder %s36, %s37
      %p48 = scmp.eq.s32.totalorder %s28, 0
      %p49 = por %p47, %p48
      %p50 = scmp.ne.s32.totalorder %s36, %s37
      %p51 = scmp.eq.s32.totalorder %s29, 1
      %p52 = por %p50, %p51
      %p54 = scmp.ne.s32.totalorder %s37, %s53
      %p55 = scmp.eq.s32.totalorder %s29, 0
      %p56 = por %p54, %p55
      %s58 = sadd.s32 %s57, 1
      %p61 = scmp.eq.s32.totalorder %s23, 1
      %p62 = scmp.ne.s32.totalorder %s57, %s59
      %p63 = scmp.eq.s32.totalorder %s23, 0
      %p64 = por %p62, %p63
      %p65 = scmp.ne.s32.totalorder %s57, %s59
      %p66 = scmp.eq.s32.totalorder %s28, 1
      %p67 = por %p65, %p66
      %p68 = scmp.ne.s32.totalorder %s59, %s60
      %p69 = scmp.eq.s32.totalorder %s28, 0
      %p70 = por %p68, %p69
      %p71 = scmp.ne.s32.totalorder %s59, %s60
      %p72 = scmp.eq.s32.totalorder %s29, 1
      %p73 = por %p71, %p72
      %p75 = scmp.ne.s32.totalorder %s60, %s74
      %p76 = scmp.eq.s32.totalorder %s29, 0
      %p77 = por %p75, %p76
      %s79 = sadd.s32 %s78, 1
      %p82 = scmp.eq.s32.totalorder %s23, 1
      %p83 = scmp.ne.s32.totalorder %s78, %s80
      %p84 = scmp.eq.s32.totalorder %s23, 0
      %p85 = por %p83, %p84
      %p86 = scmp.ne.s32.totalorder %s78, %s80
      %p87 = scmp.eq.s32.totalorder %s28, 1
      %p88 = por %p86, %p87
      %p89 = scmp.ne.s32.totalorder %s80, %s81
      %p90 = scmp.eq.s32.totalorder %s28, 0
      %p91 = por %p89, %p90
      %p92 = scmp.ne.s32.totalorder %s80, %s81
      %p93 = scmp.eq.s32.totalorder %s29, 1
      %p94 = por %p92, %p93
      %p96 = scmp.ne.s32.totalorder %s81, %s95
      %p97 = scmp.eq.s32.totalorder %s29, 0
      %p98 = por %p96, %p97
      %s100 = sadd.s32 %s99, 1
      %p103 = scmp.eq.s32.totalorder %s23, 1
      %p104 = scmp.ne.s32.totalorder %s99, %s101
      %p105 = scmp.eq.s32.totalorder %s23, 0
      %p106 = por %p104, %p105
      %p107 = scmp.ne.s32.totalorder %s99, %s101
      %p108 = scmp.eq.s32.totalorder %s28, 1
      %p109 = por %p107, %p108
      %p110 = scmp.ne.s32.totalorder %s101, %s102
      %p111 = scmp.eq.s32.totalorder %s28, 0
      %p112 = por %p110, %p111
      %p113 = scmp.ne.s32.totalorder %s101, %s102
      %p114 = scmp.eq.s32.totalorder %s29, 1
      %p115 = por %p113, %p114
      %p117 = scmp.ne.s32.totalorder %s102, %s116
      %p118 = scmp.eq.s32.totalorder %s29, 0
      %p119 = por %p117, %p118
      %s121 = sadd.s32 %s120, 1
      %p124 = scmp.eq.s32.totalorder %s23, 1
      %p125 = scmp.ne.s32.totalorder %s120, %s122
      %p126 = scmp.eq.s32.totalorder %s23, 0
      %p127 = por %p125, %p126
      %p128 = scmp.ne.s32.totalorder %s120, %s122
      %p129 = scmp.eq.s32.totalorder %s28, 1
      %p130 = por %p128, %p129
      %p131 = scmp.ne.s32.totalorder %s122, %s123
      %p132 = scmp.eq.s32.totalorder %s28, 0
      %p133 = por %p131, %p132
      %p134 = scmp.ne.s32.totalorder %s122, %s123
      %p135 = scmp.eq.s32.totalorder %s29, 1
      %p136 = por %p134, %p135
      %p138 = scmp.ne.s32.totalorder %s123, %s137
      %p139 = scmp.eq.s32.totalorder %s29, 0
      %p140 = por %p138, %p139
      %s142 = sadd.s32 %s141, 1
      %p145 = scmp.eq.s32.totalorder %s23, 1
      %p146 = scmp.ne.s32.totalorder %s141, %s143
      %p147 = scmp.eq.s32.totalorder %s23, 0
      %p148 = por %p146, %p147
      %p149 = scmp.ne.s32.totalorder %s141, %s143
      %p150 = scmp.eq.s32.totalorder %s28, 1
      %p151 = por %p149, %p150
      %p152 = scmp.ne.s32.totalorder %s143, %s144
      %p153 = scmp.eq.s32.totalorder %s28, 0
      %p154 = por %p152, %p153
      %p155 = scmp.ne.s32.totalorder %s143, %s144
      %p156 = scmp.eq.s32.totalorder %s29, 1
      %p157 = por %p155, %p156
      %p159 = scmp.ne.s32.totalorder %s144, %s158
      %p160 = scmp.eq.s32.totalorder %s29, 0
      %p161 = por %p159, %p160
      %s163 = sadd.s32 %s162, 1
      %p166 = scmp.eq.s32.totalorder %s23, 1
      %p167 = scmp.ne.s32.totalorder %s162, %s164
      %p168 = scmp.eq.s32.totalorder %s23, 0
      %p169 = por %p167, %p168
      %p170 = scmp.ne.s32.totalorder %s162, %s164
      %p171 = scmp.eq.s32.totalorder %s28, 1
      %p172 = por %p170, %p171
      %p173 = scmp.ne.s32.totalorder %s164, %s165
      %p174 = scmp.eq.s32.totalorder %s28, 0
      %p175 = por %p173, %p174
      %p176 = scmp.ne.s32.totalorder %s164, %s165
      %p177 = scmp.eq.s32.totalorder %s29, 1
      %p178 = por %p176, %p177
      %p180 = scmp.ne.s32.totalorder %s165, %s179
      %p181 = scmp.eq.s32.totalorder %s29, 0
      %p182 = por %p180, %p181
      %s184 = sadd.s32 %s183, 1
      %p187 = scmp.eq.s32.totalorder %s23, 1
      %p188 = scmp.ne.s32.totalorder %s183, %s185
      %p189 = scmp.eq.s32.totalorder %s23, 0
      %p190 = por %p188, %p189
      %p191 = scmp.ne.s32.totalorder %s183, %s185
      %p192 = scmp.eq.s32.totalorder %s28, 1
      %p193 = por %p191, %p192
      %p194 = scmp.ne.s32.totalorder %s185, %s186
      %p195 = scmp.eq.s32.totalorder %s28, 0
      %p196 = por %p194, %p195
      %p197 = scmp.ne.s32.totalorder %s185, %s186
      %p198 = scmp.eq.s32.totalorder %s29, 1
      %p199 = por %p197, %p198
      %p201 = scmp.ne.s32.totalorder %s186, %s200
      %p202 = scmp.eq.s32.totalorder %s29, 0
      %p203 = por %p201, %p202
      %s205 = sadd.s32 %s204, 1
      %p208 = scmp.eq.s32.totalorder %s23, 1
      %p209 = scmp.ne.s32.totalorder %s204, %s206
      %p210 = scmp.eq.s32.totalorder %s23, 0
      %p211 = por %p209, %p210
      %p212 = scmp.ne.s32.totalorder %s204, %s206
      %p213 = scmp.eq.s32.totalorder %s28, 1
      %p214 = por %p212, %p213
      %p215 = scmp.ne.s32.totalorder %s206, %s207
      %p216 = scmp.eq.s32.totalorder %s28, 0
      %p217 = por %p215, %p216
      %p218 = scmp.ne.s32.totalorder %s206, %s207
      %p219 = scmp.eq.s32.totalorder %s29, 1
      %p220 = por %p218, %p219
      %p222 = scmp.ne.s32.totalorder %s207, %s221
      %p223 = scmp.eq.s32.totalorder %s29, 0
      %p224 = por %p222, %p223
      %s226 = sadd.s32 %s225, 1
      %p229 = scmp.eq.s32.totalorder %s23, 1
      %p230 = scmp.ne.s32.totalorder %s225, %s227
      %p231 = scmp.eq.s32.totalorder %s23, 0
      %p232 = por %p230, %p231
      %p233 = scmp.ne.s32.totalorder %s225, %s227
      %p234 = scmp.eq.s32.totalorder %s28, 1
      %p235 = por %p233, %p234
      %p236 = scmp.ne.s32.totalorder %s227, %s228
      %p237 = scmp.eq.s32.totalorder %s28, 0
      %p238 = por %p236, %p237
      %p239 = scmp.ne.s32.totalorder %s227, %s228
      %p240 = scmp.eq.s32.totalorder %s29, 1
      %p241 = por %p239, %p240
      %p243 = scmp.ne.s32.totalorder %s228, %s242
      %p244 = scmp.eq.s32.totalorder %s29, 0
      %p245 = por %p243, %p244
      %s247 = sadd.s32 %s246, 1
      %p250 = scmp.eq.s32.totalorder %s23, 1
      %p251 = scmp.ne.s32.totalorder %s246, %s248
      %p252 = scmp.eq.s32.totalorder %s23, 0
      %p253 = por %p251, %p252
      %p254 = scmp.ne.s32.totalorder %s246, %s248
      %p255 = scmp.eq.s32.totalorder %s28, 1
      %p256 = por %p254, %p255
      %p257 = scmp.ne.s32.totalorder %s248, %s249
      %p258 = scmp.eq.s32.totalorder %s28, 0
      %p259 = por %p257, %p258
      %p260 = scmp.ne.s32.totalorder %s248, %s249
      %p261 = scmp.eq.s32.totalorder %s29, 1
      %p262 = por %p260, %p261
      %p264 = scmp.ne.s32.totalorder %s249, %s263
      %p265 = scmp.eq.s32.totalorder %s29, 0
      %p266 = por %p264, %p265
      %s268 = sadd.s32 %s267, 1
      %p271 = scmp.eq.s32.totalorder %s23, 1
      %p272 = scmp.ne.s32.totalorder %s267, %s269
      %p273 = scmp.eq.s32.totalorder %s23, 0
      %p274 = por %p272, %p273
      %p275 = scmp.ne.s32.totalorder %s267, %s269
      %p276 = scmp.eq.s32.totalorder %s28, 1
      %p277 = por %p275, %p276
      %p278 = scmp.ne.s32.totalorder %s269, %s270
      %p279 = scmp.eq.s32.totalorder %s28, 0
      %p280 = por %p278, %p279
      %p281 = scmp.ne.s32.totalorder %s269, %s270
      %p282 = scmp.eq.s32.totalorder %s29, 1
      %p283 = por %p281, %p282
      %p285 = scmp.ne.s32.totalorder %s270, %s284
      %p286 = scmp.eq.s32.totalorder %s29, 0
      %p287 = por %p285, %p286
      %s289 = sadd.s32 %s288, 1
      %p292 = scmp.eq.s32.totalorder %s23, 1
      %p293 = scmp.ne.s32.totalorder %s288, %s290
      %p294 = scmp.eq.s32.totalorder %s23, 0
      %p295 = por %p293, %p294
      %p296 = scmp.ne.s32.totalorder %s288, %s290
      %p297 = scmp.eq.s32.totalorder %s28, 1
      %p298 = por %p296, %p297
      %p299 = scmp.ne.s32.totalorder %s290, %s291
      %p300 = scmp.eq.s32.totalorder %s28, 0
      %p301 = por %p299, %p300
      %p302 = scmp.ne.s32.totalorder %s290, %s291
      %p303 = scmp.eq.s32.totalorder %s29, 1
      %p304 = por %p302, %p303
      %p306 = scmp.ne.s32.totalorder %s291, %s305
      %p307 = scmp.eq.s32.totalorder %s29, 0
      %p308 = por %p306, %p307
      %s310 = sadd.s32 %s309, 1
      %p313 = scmp.eq.s32.totalorder %s23, 1
      %p314 = scmp.ne.s32.totalorder %s309, %s311
      %p315 = scmp.eq.s32.totalorder %s23, 0
      %p316 = por %p314, %p315
      %p317 = scmp.ne.s32.totalorder %s309, %s311
      %p318 = scmp.eq.s32.totalorder %s28, 1
      %p319 = por %p317, %p318
      %p320 = scmp.ne.s32.totalorder %s311, %s312
      %p321 = scmp.eq.s32.totalorder %s28, 0
      %p322 = por %p320, %p321
      %p323 = scmp.ne.s32.totalorder %s311, %s312
      %p324 = scmp.eq.s32.totalorder %s29, 1
      %p325 = por %p323, %p324
      %p327 = scmp.ne.s32.totalorder %s312, %s326
      %p328 = scmp.eq.s32.totalorder %s29, 0
      %p329 = por %p327, %p328
      %s331 = sadd.s32 %s330, 1
      %p334 = scmp.eq.s32.totalorder %s23, 1
      %p335 = scmp.ne.s32.totalorder %s330, %s332
      %p336 = scmp.eq.s32.totalorder %s23, 0
      %p337 = por %p335, %p336
      %p338 = scmp.ne.s32.totalorder %s330, %s332
      %p339 = scmp.eq.s32.totalorder %s28, 1
      %p340 = por %p338, %p339
      %p341 = scmp.ne.s32.totalorder %s332, %s333
      %p342 = scmp.eq.s32.totalorder %s28, 0
      %p343 = por %p341, %p342
      %p344 = scmp.ne.s32.totalorder %s332, %s333
      %p345 = scmp.eq.s32.totalorder %s29, 1
      %p346 = por %p344, %p345
      %p348 = scmp.ne.s32.totalorder %s333, %s347
      %p349 = scmp.eq.s32.totalorder %s29, 0
      %p350 = por %p348, %p349
      %s352 = sadd.s32 %s351, 1
      %p355 = scmp.eq.s32.totalorder %s23, 1
      %p356 = scmp.ne.s32.totalorder %s351, %s353
      %p357 = scmp.eq.s32.totalorder %s23, 0
      %p358 = por %p356, %p357
      %p359 = scmp.ne.s32.totalorder %s351, %s353
      %p360 = scmp.eq.s32.totalorder %s28, 1
      %p361 = por %p359, %p360
      %p362 = scmp.ne.s32.totalorder %s353, %s354
      %p363 = scmp.eq.s32.totalorder %s28, 0
      %p364 = por %p362, %p363
      %p365 = scmp.ne.s32.totalorder %s353, %s354
      %p366 = scmp.eq.s32.totalorder %s29, 1
      %p367 = por %p365, %p366
      %p369 = scmp.ne.s32.totalorder %s354, %s368
      %p370 = scmp.eq.s32.totalorder %s29, 0
      %p371 = por %p369, %p370
      %s372 = ssub.s32 %s23, %s30
      %p373 = scmp.eq.s32.totalorder %s372, 0
      %s375 = sadd.s32 %s374, 1
      %s376 = scalar_select %p373, %s374, %s375
      %p379 = pneg %p373
      %p380 = scmp.eq.s32.totalorder %s23, 1
      %p381 = por %p379, %p380
      %p382 = scmp.ne.s32.totalorder %s374, %s377
      %p383 = scmp.eq.s32.totalorder %s23, 0
      %p384 = por %p382, %p383
      %p385 = scmp.ne.s32.totalorder %s374, %s377
      %p386 = scmp.eq.s32.totalorder %s28, 1
      %p387 = por %p385, %p386
      %p388 = scmp.ne.s32.totalorder %s377, %s378
      %p389 = scmp.eq.s32.totalorder %s28, 0
      %p390 = por %p388, %p389
      %p391 = scmp.ne.s32.totalorder %s377, %s378
      %p392 = scmp.eq.s32.totalorder %s29, 1
      %p393 = por %p391, %p392
      %p395 = scmp.ne.s32.totalorder %s378, %s394
      %p396 = scmp.eq.s32.totalorder %s29, 0
      %p397 = por %p395, %p396
      %p398 = scmp.le.s32.totalorder 1, %s23
      %p399 = scmp.lt.s32.totalorder %s23, 3
      %p400 = pnand %p398, %p399
      %p401 = pneg %p400
      // Predicated region
      $region9: #{swin_block_forward_pallas.1} parent=5 // pred_check
        _
      $region10: #{swin_block_forward_pallas.1} parent=5 // pred_check_branch
        %403 = sbr.rel (%p400) target = $region12
      $region11: #{swin_block_forward_pallas.1} parent=5 // pred_region
        %s404 = ssub.s32 %s23, 1
        // Predicated region
        $region13: #{swin_block_forward_pallas.1} parent=11 // pred_check
          %p405 = pneg %p70
        $region14: #{swin_block_forward_pallas.1} parent=11 // pred_check_branch
          %407 = sbr.rel (%p405) target = $region16
        $region15: #{swin_block_forward_pallas.1} parent=11 // pred_region
          _
        $region16: #{swin_block_forward_pallas.1} parent=11 // pred_fallthru
          _
        // Predicated region
        $region17: #{swin_block_forward_pallas.1} parent=11 // pred_check
          %p408 = pneg %p91
        $region18: #{swin_block_forward_pallas.1} parent=11 // pred_check_branch
          %410 = sbr.rel (%p408) target = $region20
        $region19: #{swin_block_forward_pallas.1} parent=11 // pred_region
          _
        $region20: #{swin_block_forward_pallas.1} parent=11 // pred_fallthru
          _
        // Predicated region
        $region21: #{swin_block_forward_pallas.1} parent=11 // pred_check
          %p411 = pneg %p112
        $region22: #{swin_block_forward_pallas.1} parent=11 // pred_check_branch
          %413 = sbr.rel (%p411) target = $region24
        $region23: #{swin_block_forward_pallas.1} parent=11 // pred_region
          %415 = vsyncadd [#allocation5], 0
          %s417 = sshll.u32 %s3, 4
          %s418 = int_to_ptr.vmem [resolvable:$true] %s417
          %420 = dma.vmem_to_smem %s418, 16, [#allocation4], [#allocation5]
        $region24: #{swin_block_forward_pallas.1} parent=11 // pred_fallthru
          _
        // Predicated region
        $region25: #{swin_block_forward_pallas.1} parent=11 // pred_check
          %p421 = pneg %p133
        $region26: #{swin_block_forward_pallas.1} parent=11 // pred_check_branch
          %423 = sbr.rel (%p421) target = $region28
        $region27: #{swin_block_forward_pallas.1} parent=11 // pred_region
          _
        $region28: #{swin_block_forward_pallas.1} parent=11 // pred_fallthru
          _
        // Predicated region
        $region29: #{swin_block_forward_pallas.1} parent=11 // pred_check
          %p424 = pneg %p154
        $region30: #{swin_block_forward_pallas.1} parent=11 // pred_check_branch
          %426 = sbr.rel (%p424) target = $region32
        $region31: #{swin_block_forward_pallas.1} parent=11 // pred_region
          _
        $region32: #{swin_block_forward_pallas.1} parent=11 // pred_fallthru
          _
        // Predicated region
        $region33: #{swin_block_forward_pallas.1} parent=11 // pred_check
          %p427 = pneg %p175
        $region34: #{swin_block_forward_pallas.1} parent=11 // pred_check_branch
          %429 = sbr.rel (%p427) target = $region36
        $region35: #{swin_block_forward_pallas.1} parent=11 // pred_region
          _
        $region36: #{swin_block_forward_pallas.1} parent=11 // pred_fallthru
          _
        // Predicated region
        $region37: #{swin_block_forward_pallas.1} parent=11 // pred_check
          %p430 = pneg %p196
        $region38: #{swin_block_forward_pallas.1} parent=11 // pred_check_branch
          %432 = sbr.rel (%p430) target = $region40
        $region39: #{swin_block_forward_pallas.1} parent=11 // pred_region
          _
        $region40: #{swin_block_forward_pallas.1} parent=11 // pred_fallthru
          _
        // Predicated region
        $region41: #{swin_block_forward_pallas.1} parent=11 // pred_check
          %p433 = pneg %p217
        $region42: #{swin_block_forward_pallas.1} parent=11 // pred_check_branch
          %435 = sbr.rel (%p433) target = $region44
        $region43: #{swin_block_forward_pallas.1} parent=11 // pred_region
          _
        $region44: #{swin_block_forward_pallas.1} parent=11 // pred_fallthru
          _
        // Predicated region
        $region45: #{swin_block_forward_pallas.1} parent=11 // pred_check
          %p436 = pneg %p238
        $region46: #{swin_block_forward_pallas.1} parent=11 // pred_check_branch
          %438 = sbr.rel (%p436) target = $region48
        $region47: #{swin_block_forward_pallas.1} parent=11 // pred_region
          _
        $region48: #{swin_block_forward_pallas.1} parent=11 // pred_fallthru
          _
        // Predicated region
        $region49: #{swin_block_forward_pallas.1} parent=11 // pred_check
          %p439 = pneg %p259
        $region50: #{swin_block_forward_pallas.1} parent=11 // pred_check_branch
          %441 = sbr.rel (%p439) target = $region52
        $region51: #{swin_block_forward_pallas.1} parent=11 // pred_region
          _
        $region52: #{swin_block_forward_pallas.1} parent=11 // pred_fallthru
          _
        // Predicated region
        $region53: #{swin_block_forward_pallas.1} parent=11 // pred_check
          %p442 = pneg %p280
        $region54: #{swin_block_forward_pallas.1} parent=11 // pred_check_branch
          %444 = sbr.rel (%p442) target = $region56
        $region55: #{swin_block_forward_pallas.1} parent=11 // pred_region
          _
        $region56: #{swin_block_forward_pallas.1} parent=11 // pred_fallthru
          _
        // Predicated region
        $region57: #{swin_block_forward_pallas.1} parent=11 // pred_check
          %p445 = pneg %p301
        $region58: #{swin_block_forward_pallas.1} parent=11 // pred_check_branch
          %447 = sbr.rel (%p445) target = $region60
        $region59: #{swin_block_forward_pallas.1} parent=11 // pred_region
          _
        $region60: #{swin_block_forward_pallas.1} parent=11 // pred_fallthru
          _
        // Predicated region
        $region61: #{swin_block_forward_pallas.1} parent=11 // pred_check
          %p448 = pneg %p322
        $region62: #{swin_block_forward_pallas.1} parent=11 // pred_check_branch
          %450 = sbr.rel (%p448) target = $region64
        $region63: #{swin_block_forward_pallas.1} parent=11 // pred_region
          _
        $region64: #{swin_block_forward_pallas.1} parent=11 // pred_fallthru
          _
        // Predicated region
        $region65: #{swin_block_forward_pallas.1} parent=11 // pred_check
          %p451 = pneg %p343
        $region66: #{swin_block_forward_pallas.1} parent=11 // pred_check_branch
          %453 = sbr.rel (%p451) target = $region68
        $region67: #{swin_block_forward_pallas.1} parent=11 // pred_region
          _
        $region68: #{swin_block_forward_pallas.1} parent=11 // pred_fallthru
          _
        // Predicated region
        $region69: #{swin_block_forward_pallas.1} parent=11 // pred_check
          %p454 = pneg %p364
        $region70: #{swin_block_forward_pallas.1} parent=11 // pred_check_branch
          %456 = sbr.rel (%p454) target = $region72
        $region71: #{swin_block_forward_pallas.1} parent=11 // pred_region
          _
        $region72: #{swin_block_forward_pallas.1} parent=11 // pred_fallthru
          _
      $region12: #{swin_block_forward_pallas.1} parent=5 // pred_fallthru
        _
      %p457 = scmp.lt.s32.totalorder %s23, 2
      // Predicated region
      $region73: #{swin_block_forward_pallas.1} parent=5 // pred_check
        %p458 = pneg %p457
      $region74: #{swin_block_forward_pallas.1} parent=5 // pred_check_branch
        %460 = sbr.rel (%p458) target = $region76
      $region75: #{swin_block_forward_pallas.1} parent=5 // pred_region
        // Predicated region
        $region77: #{swin_block_forward_pallas.1} parent=75 // pred_check
          %p461 = pneg %p43
        $region78: #{swin_block_forward_pallas.1} parent=75 // pred_check_branch
          %463 = sbr.rel (%p461) target = $region80
        $region79: #{swin_block_forward_pallas.1} parent=75 // pred_region
          %p464 = scmp.lt.s32.totalorder %s23, 1
          %s465 = scalar_select %p464, %s23, 1
          %s466 = smul.addr %s465, 64
          %s467 = smul.addr %s466, 8
          %s468 = scalar_lea.vmem %s0, %s467
        $region80: #{swin_block_forward_pallas.1} parent=75 // pred_fallthru
          _
      $region76: #{swin_block_forward_pallas.1} parent=5 // pred_fallthru
        _
      %p469 = scmp.le.s32.totalorder 1, %s23
      %p470 = scmp.lt.s32.totalorder %s23, 3
      %p471 = pnand %p469, %p470
      %p472 = pneg %p471
      // Predicated region
      $region81: #{swin_block_forward_pallas.1} parent=5 // pred_check
        _
      $region82: #{swin_block_forward_pallas.1} parent=5 // pred_check_branch
        %474 = sbr.rel (%p471) target = $region84
      $region83: #{swin_block_forward_pallas.1} parent=5 // pred_region
        %s475 = ssub.s32 %s23, 1
        // Predicated region
        $region85: #{swin_block_forward_pallas.1} parent=83 // pred_check
          %p476 = pneg %p112
        $region86: #{swin_block_forward_pallas.1} parent=83 // pred_check_branch
          %478 = sbr.rel (%p476) target = $region88
        $region87: #{swin_block_forward_pallas.1} parent=83 // pred_region
          %480 = dma.done [#allocation5], 16
        $region88: #{swin_block_forward_pallas.1} parent=83 // pred_fallthru
          _
        %481 = sfence
        %p482 = scmp.lt.s32.totalorder %s28, 1
        %s483 = scalar_select %p482, %s28, 1
        %s484 = smul.addr %s483, 64
        %s485 = smul.addr %s484, 8
        %s486 = scalar_lea.vmem %s0, %s485
        %p487 = pneg %p49
        %p488 = pneg %p46
        %p489 = pneg %p70
        %p490 = pneg %p67
        %p491 = pneg %p91
        %p492 = pneg %p88
        %p493 = pneg %p112
        %p494 = pneg %p109
        %p495 = pneg %p133
        %p496 = pneg %p130
        %p497 = pneg %p154
        %p498 = pneg %p151
        %p499 = pneg %p175
        %p500 = pneg %p172
        %p501 = pneg %p196
        %p502 = pneg %p193
        %p503 = pneg %p217
        %p504 = pneg %p214
        %p505 = pneg %p238
        %p506 = pneg %p235
        %p507 = pneg %p259
        %p508 = pneg %p256
        %p509 = pneg %p280
        %p510 = pneg %p277
        %p511 = pneg %p301
        %p512 = pneg %p298
        %p513 = pneg %p322
        %p514 = pneg %p319
        %p515 = pneg %p343
        %p516 = pneg %p340
        %p517 = pneg %p364
        %p518 = pneg %p361
        %p519 = pneg %p390
        %p520 = pneg %p387
        %p521 = scmp.lt.s32.totalorder %s28, 1
        %s522 = scalar_select %p521, %s28, 1
        %s523 = smul.addr %s522, 64
        %s524 = smul.addr %s523, 8
        %s525 = scalar_lea.vmem %s16, %s524
        %p526 = scmp.lt.s32.totalorder %s28, 1
        %s527 = scalar_select %p526, %s28, 1
        %s528 = smul.addr %s527, 64
        %s529 = smul.addr %s528, 8
        %s530 = scalar_lea.vmem %s0, %s529
        %p531 = scmp.lt.s32.totalorder %s28, 1
        %s532 = scalar_select %p531, %s28, 1
        %s533 = smul.addr %s532, 64
        %s534 = smul.addr %s533, 8
        %s535 = scalar_lea.vmem %s16, %s534
        %v536 = vld [vmem:[%s530] sm:$0xff]
        %v537 = vld [vmem:[%s530 + $0x8] sm:$0xff]
        %v538 = vld [vmem:[%s530 + $0x10] sm:$0xff]
        %v539 = vld [vmem:[%s530 + $0x18] sm:$0xff]
        %v540 = vld [vmem:[%s530 + $0x20] sm:$0xff]
        %v541 = vld [vmem:[%s530 + $0x28] sm:$0xff]
        %v542 = vld [vmem:[%s530 + $0x30] sm:$0xff]
        %v543 = vld [vmem:[%s530 + $0x38] sm:$0xff]
        %v544 = vld [vmem:[%s530 + $0x40] sm:$0xff]
        %v545 = vld [vmem:[%s530 + $0x48] sm:$0xff]
        %v546 = vld [vmem:[%s530 + $0x50] sm:$0xff]
        %v547 = vld [vmem:[%s530 + $0x58] sm:$0xff]
        %v548 = vld [vmem:[%s530 + $0x60] sm:$0xff]
        %v549 = vld [vmem:[%s530 + $0x68] sm:$0xff]
        %v550 = vld [vmem:[%s530 + $0x70] sm:$0xff]
        %v551 = vld [vmem:[%s530 + $0x78] sm:$0xff]
        %v552 = vld [vmem:[%s530 + $0x80] sm:$0xff]
        %v553 = vld [vmem:[%s530 + $0x88] sm:$0xff]
        %v554 = vld [vmem:[%s530 + $0x90] sm:$0xff]
        %v555 = vld [vmem:[%s530 + $0x98] sm:$0xff]
        %v556 = vld [vmem:[%s530 + $0xa0] sm:$0xff]
        %v557 = vld [vmem:[%s530 + $0xa8] sm:$0xff]
        %v558 = vld [vmem:[%s530 + $0xb0] sm:$0xff]
        %v559 = vld [vmem:[%s530 + $0xb8] sm:$0xff]
        %v560 = vld [vmem:[%s530 + $0xc0] sm:$0xff]
        %v561 = vld [vmem:[%s530 + $0xc8] sm:$0xff]
        %v562 = vld [vmem:[%s530 + $0xd0] sm:$0xff]
        %v563 = vld [vmem:[%s530 + $0xd8] sm:$0xff]
        %v564 = vld [vmem:[%s530 + $0xe0] sm:$0xff]
        %v565 = vld [vmem:[%s530 + $0xe8] sm:$0xff]
        %v566 = vld [vmem:[%s530 + $0xf0] sm:$0xff]
        %v567 = vld [vmem:[%s530 + $0xf8] sm:$0xff]
        %v568 = vld [vmem:[%s530 + $0x100] sm:$0xff]
        %v569 = vld [vmem:[%s530 + $0x108] sm:$0xff]
        %v570 = vld [vmem:[%s530 + $0x110] sm:$0xff]
        %v571 = vld [vmem:[%s530 + $0x118] sm:$0xff]
        %v572 = vld [vmem:[%s530 + $0x120] sm:$0xff]
        %v573 = vld [vmem:[%s530 + $0x128] sm:$0xff]
        %v574 = vld [vmem:[%s530 + $0x130] sm:$0xff]
        %v575 = vld [vmem:[%s530 + $0x138] sm:$0xff]
        %v576 = vld [vmem:[%s530 + $0x140] sm:$0xff]
        %v577 = vld [vmem:[%s530 + $0x148] sm:$0xff]
        %v578 = vld [vmem:[%s530 + $0x150] sm:$0xff]
        %v579 = vld [vmem:[%s530 + $0x158] sm:$0xff]
        %v580 = vld [vmem:[%s530 + $0x160] sm:$0xff]
        %v581 = vld [vmem:[%s530 + $0x168] sm:$0xff]
        %v582 = vld [vmem:[%s530 + $0x170] sm:$0xff]
        %v583 = vld [vmem:[%s530 + $0x178] sm:$0xff]
        %v584 = vld [vmem:[%s530 + $0x180] sm:$0xff]
        %v585 = vld [vmem:[%s530 + $0x188] sm:$0xff]
        %v586 = vld [vmem:[%s530 + $0x190] sm:$0xff]
        %v587 = vld [vmem:[%s530 + $0x198] sm:$0xff]
        %v588 = vld [vmem:[%s530 + $0x1a0] sm:$0xff]
        %v589 = vld [vmem:[%s530 + $0x1a8] sm:$0xff]
        %v590 = vld [vmem:[%s530 + $0x1b0] sm:$0xff]
        %v591 = vld [vmem:[%s530 + $0x1b8] sm:$0xff]
        %v592 = vld [vmem:[%s530 + $0x1c0] sm:$0xff]
        %v593 = vld [vmem:[%s530 + $0x1c8] sm:$0xff]
        %v594 = vld [vmem:[%s530 + $0x1d0] sm:$0xff]
        %v595 = vld [vmem:[%s530 + $0x1d8] sm:$0xff]
        %v596 = vld [vmem:[%s530 + $0x1e0] sm:$0xff]
        %v597 = vld [vmem:[%s530 + $0x1e8] sm:$0xff]
        %v598 = vld [vmem:[%s530 + $0x1f0] sm:$0xff]
        %v599 = vld [vmem:[%s530 + $0x1f8] sm:$0xff]
        %v600 = vld [vmem:[%s1] sm:$0xff]
        %v601 = vld [vmem:[%s1 + $0x8] sm:$0xff]
        %v602 = vld [vmem:[%s2] sm:$0x1]
        %v604 = vperm.slane %v602, 0
        %vm606 = vcmask 130048
        %v608 = vsel %vm606, %v536, 0
        %v611 = vsel %vm606, %v537, 0
        %v614 = vsel %vm606, %v538, 0
        %v617 = vsel %vm606, %v539, 0
        %v620 = vsel %vm606, %v540, 0
        %v623 = vsel %vm606, %v541, 0
        %v626 = vsel %vm606, %v542, 0
        %v629 = vsel %vm606, %v543, 0
        %v632 = vsel %vm606, %v544, 0
        %v635 = vsel %vm606, %v545, 0
        %v638 = vsel %vm606, %v546, 0
        %v641 = vsel %vm606, %v547, 0
        %v644 = vsel %vm606, %v548, 0
        %v647 = vsel %vm606, %v549, 0
        %v650 = vsel %vm606, %v550, 0
        %v653 = vsel %vm606, %v551, 0
        %v656 = vsel %vm606, %v552, 0
        %v659 = vsel %vm606, %v553, 0
        %v662 = vsel %vm606, %v554, 0
        %v665 = vsel %vm606, %v555, 0
        %v668 = vsel %vm606, %v556, 0
        %v671 = vsel %vm606, %v557, 0
        %v674 = vsel %vm606, %v558, 0
        %v677 = vsel %vm606, %v559, 0
        %v680 = vsel %vm606, %v560, 0
        %v683 = vsel %vm606, %v561, 0
        %v686 = vsel %vm606, %v562, 0
        %v689 = vsel %vm606, %v563, 0
        %v692 = vsel %vm606, %v564, 0
        %v695 = vsel %vm606, %v565, 0
        %v698 = vsel %vm606, %v566, 0
        %v701 = vsel %vm606, %v567, 0
        %v704 = vsel %vm606, %v568, 0
        %v707 = vsel %vm606, %v569, 0
        %v710 = vsel %vm606, %v570, 0
        %v713 = vsel %vm606, %v571, 0
        %v716 = vsel %vm606, %v572, 0
        %v719 = vsel %vm606, %v573, 0
        %v722 = vsel %vm606, %v574, 0
        %v725 = vsel %vm606, %v575, 0
        %v728 = vsel %vm606, %v576, 0
        %v731 = vsel %vm606, %v577, 0
        %v734 = vsel %vm606, %v578, 0
        %v737 = vsel %vm606, %v579, 0
        %v740 = vsel %vm606, %v580, 0
        %v743 = vsel %vm606, %v581, 0
        %v746 = vsel %vm606, %v582, 0
        %v749 = vsel %vm606, %v583, 0
        %v752 = vsel %vm606, %v584, 0
        %v755 = vsel %vm606, %v585, 0
        %v758 = vsel %vm606, %v586, 0
        %v761 = vsel %vm606, %v587, 0
        %v764 = vsel %vm606, %v588, 0
        %v767 = vsel %vm606, %v589, 0
        %v770 = vsel %vm606, %v590, 0
        %v773 = vsel %vm606, %v591, 0
        %v776 = vsel %vm606, %v592, 0
        %v779 = vsel %vm606, %v593, 0
        %v782 = vsel %vm606, %v594, 0
        %v785 = vsel %vm606, %v595, 0
        %v788 = vsel %vm606, %v596, 0
        %v791 = vsel %vm606, %v597, 0
        %v794 = vsel %vm606, %v598, 0
        %v797 = vsel %vm606, %v599, 0
        %799 = vmatpush.msra.mxu0 0.0
        %800 = vmatpush.msra.mxu0 0.0
        %801 = vmatpush.msra.mxu0 0.0
        %802 = vmatpush.msra.mxu0 0.0
        %803 = vmatpush.msra.mxu0 0.0
        %804 = vmatpush.msra.mxu0 0.0
        %805 = vmatpush.msra.mxu0 0.0
        %806 = vmatpush.msra.mxu0 0.0
        %807 = vmatpush.msra.mxu0 0.0
        %808 = vmatpush.msra.mxu0 0.0
        %809 = vmatpush.msra.mxu0 0.0
        %810 = vmatpush.msra.mxu0 0.0
        %811 = vmatpush.msra.mxu0 0.0
        %812 = vmatpush.msra.mxu0 0.0
        %v813 = vand.u32 %v601, 4294901760
        %814 = vmatpush.msra.mxu0 %v813
        %v815 = vand.u32 %v600, 4294901760
        %816 = vmatpush.msra.mxu0 %v815
        %v817 = vand.u32 %v608, 4294901760
        %v818 = vsub.f32 %v608, %v817
        %v819 = vand.u32 %v818, 4294901760
        %v820 = vsub.f32 %v818, %v819
        %v821 = vand.u32 %v820, 4294901760
        %822 = vmatmul.f32.gmra.mxu0 %v821
        %v823 = vpop.f32.mrf.mxu0
        %v824 = vadd.f32 %v604, %v823
        %v825 = vand.u32 %v611, 4294901760
        %v826 = vsub.f32 %v611, %v825
        %v827 = vand.u32 %v826, 4294901760
        %v828 = vsub.f32 %v826, %v827
        %v829 = vand.u32 %v828, 4294901760
        %830 = vmatmul.f32.gmra.mxu0 %v829
        %v831 = vpop.f32.mrf.mxu0
        %v832 = vadd.f32 %v604, %v831
        %v833 = vand.u32 %v614, 4294901760
        %v834 = vsub.f32 %v614, %v833
        %v835 = vand.u32 %v834, 4294901760
        %v836 = vsub.f32 %v834, %v835
        %v837 = vand.u32 %v836, 4294901760
        %838 = vmatmul.f32.gmra.mxu0 %v837
        %v839 = vpop.f32.mrf.mxu0
        %v840 = vadd.f32 %v604, %v839
        %v841 = vand.u32 %v617, 4294901760
        %v842 = vsub.f32 %v617, %v841
        %v843 = vand.u32 %v842, 4294901760
        %v844 = vsub.f32 %v842, %v843
        %v845 = vand.u32 %v844, 4294901760
        %846 = vmatmul.f32.gmra.mxu0 %v845
        %v847 = vpop.f32.mrf.mxu0
        %v848 = vadd.f32 %v604, %v847
        %v849 = vand.u32 %v620, 4294901760
        %v850 = vsub.f32 %v620, %v849
        %v851 = vand.u32 %v850, 4294901760
        %v852 = vsub.f32 %v850, %v851
        %v853 = vand.u32 %v852, 4294901760
        %854 = vmatmul.f32.gmra.mxu0 %v853
        %v855 = vpop.f32.mrf.mxu0
        %v856 = vadd.f32 %v604, %v855
        %v857 = vand.u32 %v623, 4294901760
        %v858 = vsub.f32 %v623, %v857
        %v859 = vand.u32 %v858, 4294901760
        %v860 = vsub.f32 %v858, %v859
        %v861 = vand.u32 %v860, 4294901760
        %862 = vmatmul.f32.gmra.mxu0 %v861
        %v863 = vpop.f32.mrf.mxu0
        %v864 = vadd.f32 %v604, %v863
        %v865 = vand.u32 %v626, 4294901760
        %v866 = vsub.f32 %v626, %v865
        %v867 = vand.u32 %v866, 4294901760
        %v868 = vsub.f32 %v866, %v867
        %v869 = vand.u32 %v868, 4294901760
        %870 = vmatmul.f32.gmra.mxu0 %v869
        %v871 = vpop.f32.mrf.mxu0
        %v872 = vadd.f32 %v604, %v871
        %v873 = vand.u32 %v629, 4294901760
        %v874 = vsub.f32 %v629, %v873
        %v875 = vand.u32 %v874, 4294901760
        %v876 = vsub.f32 %v874, %v875
        %v877 = vand.u32 %v876, 4294901760
        %878 = vmatmul.f32.gmra.mxu0 %v877
        %v879 = vpop.f32.mrf.mxu0
        %v880 = vadd.f32 %v604, %v879
        %v881 = vand.u32 %v632, 4294901760
        %v882 = vsub.f32 %v632, %v881
        %v883 = vand.u32 %v882, 4294901760
        %v884 = vsub.f32 %v882, %v883
        %v885 = vand.u32 %v884, 4294901760
        %886 = vmatmul.f32.gmra.mxu0 %v885
        %v887 = vpop.f32.mrf.mxu0
        %v888 = vadd.f32 %v604, %v887
        %v889 = vand.u32 %v635, 4294901760
        %v890 = vsub.f32 %v635, %v889
        %v891 = vand.u32 %v890, 4294901760
        %v892 = vsub.f32 %v890, %v891
        %v893 = vand.u32 %v892, 4294901760
        %894 = vmatmul.f32.gmra.mxu0 %v893
        %v895 = vpop.f32.mrf.mxu0
        %v896 = vadd.f32 %v604, %v895
        %v897 = vand.u32 %v638, 4294901760
        %v898 = vsub.f32 %v638, %v897
        %v899 = vand.u32 %v898, 4294901760
        %v900 = vsub.f32 %v898, %v899
        %v901 = vand.u32 %v900, 4294901760
        %902 = vmatmul.f32.gmra.mxu0 %v901
        %v903 = vpop.f32.mrf.mxu0
        %v904 = vadd.f32 %v604, %v903
        %v905 = vand.u32 %v641, 4294901760
        %v906 = vsub.f32 %v641, %v905
        %v907 = vand.u32 %v906, 4294901760
        %v908 = vsub.f32 %v906, %v907
        %v909 = vand.u32 %v908, 4294901760
        %910 = vmatmul.f32.gmra.mxu0 %v909
        %v911 = vpop.f32.mrf.mxu0
        %v912 = vadd.f32 %v604, %v911
        %v913 = vand.u32 %v644, 4294901760
        %v914 = vsub.f32 %v644, %v913
        %v915 = vand.u32 %v914, 4294901760
        %v916 = vsub.f32 %v914, %v915
        %v917 = vand.u32 %v916, 4294901760
        %918 = vmatmul.f32.gmra.mxu0 %v917
        %v919 = vpop.f32.mrf.mxu0
        %v920 = vadd.f32 %v604, %v919
        %v921 = vand.u32 %v647, 4294901760
        %v922 = vsub.f32 %v647, %v921
        %v923 = vand.u32 %v922, 4294901760
        %v924 = vsub.f32 %v922, %v923
        %v925 = vand.u32 %v924, 4294901760
        %926 = vmatmul.f32.gmra.mxu0 %v925
        %v927 = vpop.f32.mrf.mxu0
        %v928 = vadd.f32 %v604, %v927
        %v929 = vand.u32 %v650, 4294901760
        %v930 = vsub.f32 %v650, %v929
        %v931 = vand.u32 %v930, 4294901760
        %v932 = vsub.f32 %v930, %v931
        %v933 = vand.u32 %v932, 4294901760
        %934 = vmatmul.f32.gmra.mxu0 %v933
        %v935 = vpop.f32.mrf.mxu0
        %v936 = vadd.f32 %v604, %v935
        %v937 = vand.u32 %v653, 4294901760
        %v938 = vsub.f32 %v653, %v937
        %v939 = vand.u32 %v938, 4294901760
        %v940 = vsub.f32 %v938, %v939
        %v941 = vand.u32 %v940, 4294901760
        %942 = vmatmul.f32.gmra.mxu0 %v941
        %v943 = vpop.f32.mrf.mxu0
        %v944 = vadd.f32 %v604, %v943
        %v945 = vand.u32 %v656, 4294901760
        %v946 = vsub.f32 %v656, %v945
        %v947 = vand.u32 %v946, 4294901760
        %v948 = vsub.f32 %v946, %v947
        %v949 = vand.u32 %v948, 4294901760
        %950 = vmatmul.f32.gmra.mxu0 %v949
        %v951 = vpop.f32.mrf.mxu0
        %v952 = vadd.f32 %v604, %v951
        %v953 = vand.u32 %v659, 4294901760
        %v954 = vsub.f32 %v659, %v953
        %v955 = vand.u32 %v954, 4294901760
        %v956 = vsub.f32 %v954, %v955
        %v957 = vand.u32 %v956, 4294901760
        %958 = vmatmul.f32.gmra.mxu0 %v957
        %v959 = vpop.f32.mrf.mxu0
        %v960 = vadd.f32 %v604, %v959
        %v961 = vand.u32 %v662, 4294901760
        %v962 = vsub.f32 %v662, %v961
        %v963 = vand.u32 %v962, 4294901760
        %v964 = vsub.f32 %v962, %v963
        %v965 = vand.u32 %v964, 4294901760
        %966 = vmatmul.f32.gmra.mxu0 %v965
        %v967 = vpop.f32.mrf.mxu0
        %v968 = vadd.f32 %v604, %v967
        %v969 = vand.u32 %v665, 4294901760
        %v970 = vsub.f32 %v665, %v969
        %v971 = vand.u32 %v970, 4294901760
        %v972 = vsub.f32 %v970, %v971
        %v973 = vand.u32 %v972, 4294901760
        %974 = vmatmul.f32.gmra.mxu0 %v973
        %v975 = vpop.f32.mrf.mxu0
        %v976 = vadd.f32 %v604, %v975
        %v977 = vand.u32 %v668, 4294901760
        %v978 = vsub.f32 %v668, %v977
        %v979 = vand.u32 %v978, 4294901760
        %v980 = vsub.f32 %v978, %v979
        %v981 = vand.u32 %v980, 4294901760
        %982 = vmatmul.f32.gmra.mxu0 %v981
        %v983 = vpop.f32.mrf.mxu0
        %v984 = vadd.f32 %v604, %v983
        %v985 = vand.u32 %v671, 4294901760
        %v986 = vsub.f32 %v671, %v985
        %v987 = vand.u32 %v986, 4294901760
        %v988 = vsub.f32 %v986, %v987
        %v989 = vand.u32 %v988, 4294901760
        %990 = vmatmul.f32.gmra.mxu0 %v989
        %v991 = vpop.f32.mrf.mxu0
        %v992 = vadd.f32 %v604, %v991
        %v993 = vand.u32 %v674, 4294901760
        %v994 = vsub.f32 %v674, %v993
        %v995 = vand.u32 %v994, 4294901760
        %v996 = vsub.f32 %v994, %v995
        %v997 = vand.u32 %v996, 4294901760
        %998 = vmatmul.f32.gmra.mxu0 %v997
        %v999 = vpop.f32.mrf.mxu0
        %v1000 = vadd.f32 %v604, %v999
        %v1001 = vand.u32 %v677, 4294901760
        %v1002 = vsub.f32 %v677, %v1001
        %v1003 = vand.u32 %v1002, 4294901760
        %v1004 = vsub.f32 %v1002, %v1003
        %v1005 = vand.u32 %v1004, 4294901760
        %1006 = vmatmul.f32.gmra.mxu0 %v1005
        %v1007 = vpop.f32.mrf.mxu0
        %v1008 = vadd.f32 %v604, %v1007
        %v1009 = vand.u32 %v680, 4294901760
        %v1010 = vsub.f32 %v680, %v1009
        %v1011 = vand.u32 %v1010, 4294901760
        %v1012 = vsub.f32 %v1010, %v1011
        %v1013 = vand.u32 %v1012, 4294901760
        %1014 = vmatmul.f32.gmra.mxu0 %v1013
        %v1015 = vpop.f32.mrf.mxu0
        %v1016 = vadd.f32 %v604, %v1015
        %v1017 = vand.u32 %v683, 4294901760
        %v1018 = vsub.f32 %v683, %v1017
        %v1019 = vand.u32 %v1018, 4294901760
        %v1020 = vsub.f32 %v1018, %v1019
        %v1021 = vand.u32 %v1020, 4294901760
        %1022 = vmatmul.f32.gmra.mxu0 %v1021
        %v1023 = vpop.f32.mrf.mxu0
        %v1024 = vadd.f32 %v604, %v1023
        %v1025 = vand.u32 %v686, 4294901760
        %v1026 = vsub.f32 %v686, %v1025
        %v1027 = vand.u32 %v1026, 4294901760
        %v1028 = vsub.f32 %v1026, %v1027
        %v1029 = vand.u32 %v1028, 4294901760
        %1030 = vmatmul.f32.gmra.mxu0 %v1029
        %v1031 = vpop.f32.mrf.mxu0
        %v1032 = vadd.f32 %v604, %v1031
        %v1033 = vand.u32 %v689, 4294901760
        %v1034 = vsub.f32 %v689, %v1033
        %v1035 = vand.u32 %v1034, 4294901760
        %v1036 = vsub.f32 %v1034, %v1035
        %v1037 = vand.u32 %v1036, 4294901760
        %1038 = vmatmul.f32.gmra.mxu0 %v1037
        %v1039 = vpop.f32.mrf.mxu0
        %v1040 = vadd.f32 %v604, %v1039
        %v1041 = vand.u32 %v692, 4294901760
        %v1042 = vsub.f32 %v692, %v1041
        %v1043 = vand.u32 %v1042, 4294901760
        %v1044 = vsub.f32 %v1042, %v1043
        %v1045 = vand.u32 %v1044, 4294901760
        %1046 = vmatmul.f32.gmra.mxu0 %v1045
        %v1047 = vpop.f32.mrf.mxu0
        %v1048 = vadd.f32 %v604, %v1047
        %v1049 = vand.u32 %v695, 4294901760
        %v1050 = vsub.f32 %v695, %v1049
        %v1051 = vand.u32 %v1050, 4294901760
        %v1052 = vsub.f32 %v1050, %v1051
        %v1053 = vand.u32 %v1052, 4294901760
        %1054 = vmatmul.f32.gmra.mxu0 %v1053
        %v1055 = vpop.f32.mrf.mxu0
        %v1056 = vadd.f32 %v604, %v1055
        %v1057 = vand.u32 %v698, 4294901760
        %v1058 = vsub.f32 %v698, %v1057
        %v1059 = vand.u32 %v1058, 4294901760
        %v1060 = vsub.f32 %v1058, %v1059
        %v1061 = vand.u32 %v1060, 4294901760
        %1062 = vmatmul.f32.gmra.mxu0 %v1061
        %v1063 = vpop.f32.mrf.mxu0
        %v1064 = vadd.f32 %v604, %v1063
        %v1065 = vand.u32 %v701, 4294901760
        %v1066 = vsub.f32 %v701, %v1065
        %v1067 = vand.u32 %v1066, 4294901760
        %v1068 = vsub.f32 %v1066, %v1067
        %v1069 = vand.u32 %v1068, 4294901760
        %1070 = vmatmul.f32.gmra.mxu0 %v1069
        %v1071 = vpop.f32.mrf.mxu0
        %v1072 = vadd.f32 %v604, %v1071
        %v1073 = vand.u32 %v704, 4294901760
        %v1074 = vsub.f32 %v704, %v1073
        %v1075 = vand.u32 %v1074, 4294901760
        %v1076 = vsub.f32 %v1074, %v1075
        %v1077 = vand.u32 %v1076, 4294901760
        %1078 = vmatmul.f32.gmra.mxu0 %v1077
        %v1079 = vpop.f32.mrf.mxu0
        %v1080 = vadd.f32 %v604, %v1079
        %v1081 = vand.u32 %v707, 4294901760
        %v1082 = vsub.f32 %v707, %v1081
        %v1083 = vand.u32 %v1082, 4294901760
        %v1084 = vsub.f32 %v1082, %v1083
        %v1085 = vand.u32 %v1084, 4294901760
        %1086 = vmatmul.f32.gmra.mxu0 %v1085
        %v1087 = vpop.f32.mrf.mxu0
        %v1088 = vadd.f32 %v604, %v1087
        %v1089 = vand.u32 %v710, 4294901760
        %v1090 = vsub.f32 %v710, %v1089
        %v1091 = vand.u32 %v1090, 4294901760
        %v1092 = vsub.f32 %v1090, %v1091
        %v1093 = vand.u32 %v1092, 4294901760
        %1094 = vmatmul.f32.gmra.mxu0 %v1093
        %v1095 = vpop.f32.mrf.mxu0
        %v1096 = vadd.f32 %v604, %v1095
        %v1097 = vand.u32 %v713, 4294901760
        %v1098 = vsub.f32 %v713, %v1097
        %v1099 = vand.u32 %v1098, 4294901760
        %v1100 = vsub.f32 %v1098, %v1099
        %v1101 = vand.u32 %v1100, 4294901760
        %1102 = vmatmul.f32.gmra.mxu0 %v1101
        %v1103 = vpop.f32.mrf.mxu0
        %v1104 = vadd.f32 %v604, %v1103
        %v1105 = vand.u32 %v716, 4294901760
        %v1106 = vsub.f32 %v716, %v1105
        %v1107 = vand.u32 %v1106, 4294901760
        %v1108 = vsub.f32 %v1106, %v1107
        %v1109 = vand.u32 %v1108, 4294901760
        %1110 = vmatmul.f32.gmra.mxu0 %v1109
        %v1111 = vpop.f32.mrf.mxu0
        %v1112 = vadd.f32 %v604, %v1111
        %v1113 = vand.u32 %v719, 4294901760
        %v1114 = vsub.f32 %v719, %v1113
        %v1115 = vand.u32 %v1114, 4294901760
        %v1116 = vsub.f32 %v1114, %v1115
        %v1117 = vand.u32 %v1116, 4294901760
        %1118 = vmatmul.f32.gmra.mxu0 %v1117
        %v1119 = vpop.f32.mrf.mxu0
        %v1120 = vadd.f32 %v604, %v1119
        %v1121 = vand.u32 %v722, 4294901760
        %v1122 = vsub.f32 %v722, %v1121
        %v1123 = vand.u32 %v1122, 4294901760
        %v1124 = vsub.f32 %v1122, %v1123
        %v1125 = vand.u32 %v1124, 4294901760
        %1126 = vmatmul.f32.gmra.mxu0 %v1125
        %v1127 = vpop.f32.mrf.mxu0
        %v1128 = vadd.f32 %v604, %v1127
        %v1129 = vand.u32 %v725, 4294901760
        %v1130 = vsub.f32 %v725, %v1129
        %v1131 = vand.u32 %v1130, 4294901760
        %v1132 = vsub.f32 %v1130, %v1131
        %v1133 = vand.u32 %v1132, 4294901760
        %1134 = vmatmul.f32.gmra.mxu0 %v1133
        %v1135 = vpop.f32.mrf.mxu0
        %v1136 = vadd.f32 %v604, %v1135
        %v1137 = vand.u32 %v728, 4294901760
        %v1138 = vsub.f32 %v728, %v1137
        %v1139 = vand.u32 %v1138, 4294901760
        %v1140 = vsub.f32 %v1138, %v1139
        %v1141 = vand.u32 %v1140, 4294901760
        %1142 = vmatmul.f32.gmra.mxu0 %v1141
        %v1143 = vpop.f32.mrf.mxu0
        %v1144 = vadd.f32 %v604, %v1143
        %v1145 = vand.u32 %v731, 4294901760
        %v1146 = vsub.f32 %v731, %v1145
        %v1147 = vand.u32 %v1146, 4294901760
        %v1148 = vsub.f32 %v1146, %v1147
        %v1149 = vand.u32 %v1148, 4294901760
        %1150 = vmatmul.f32.gmra.mxu0 %v1149
        %v1151 = vpop.f32.mrf.mxu0
        %v1152 = vadd.f32 %v604, %v1151
        %v1153 = vand.u32 %v734, 4294901760
        %v1154 = vsub.f32 %v734, %v1153
        %v1155 = vand.u32 %v1154, 4294901760
        %v1156 = vsub.f32 %v1154, %v1155
        %v1157 = vand.u32 %v1156, 4294901760
        %1158 = vmatmul.f32.gmra.mxu0 %v1157
        %v1159 = vpop.f32.mrf.mxu0
        %v1160 = vadd.f32 %v604, %v1159
        %v1161 = vand.u32 %v737, 4294901760
        %v1162 = vsub.f32 %v737, %v1161
        %v1163 = vand.u32 %v1162, 4294901760
        %v1164 = vsub.f32 %v1162, %v1163
        %v1165 = vand.u32 %v1164, 4294901760
        %1166 = vmatmul.f32.gmra.mxu0 %v1165
        %v1167 = vpop.f32.mrf.mxu0
        %v1168 = vadd.f32 %v604, %v1167
        %v1169 = vand.u32 %v740, 4294901760
        %v1170 = vsub.f32 %v740, %v1169
        %v1171 = vand.u32 %v1170, 4294901760
        %v1172 = vsub.f32 %v1170, %v1171
        %v1173 = vand.u32 %v1172, 4294901760
        %1174 = vmatmul.f32.gmra.mxu0 %v1173
        %v1175 = vpop.f32.mrf.mxu0
        %v1176 = vadd.f32 %v604, %v1175
        %v1177 = vand.u32 %v743, 4294901760
        %v1178 = vsub.f32 %v743, %v1177
        %v1179 = vand.u32 %v1178, 4294901760
        %v1180 = vsub.f32 %v1178, %v1179
        %v1181 = vand.u32 %v1180, 4294901760
        %1182 = vmatmul.f32.gmra.mxu0 %v1181
        %v1183 = vpop.f32.mrf.mxu0
        %v1184 = vadd.f32 %v604, %v1183
        %v1185 = vand.u32 %v746, 4294901760
        %v1186 = vsub.f32 %v746, %v1185
        %v1187 = vand.u32 %v1186, 4294901760
        %v1188 = vsub.f32 %v1186, %v1187
        %v1189 = vand.u32 %v1188, 4294901760
        %1190 = vmatmul.f32.gmra.mxu0 %v1189
        %v1191 = vpop.f32.mrf.mxu0
        %v1192 = vadd.f32 %v604, %v1191
        %v1193 = vand.u32 %v749, 4294901760
        %v1194 = vsub.f32 %v749, %v1193
        %v1195 = vand.u32 %v1194, 4294901760
        %v1196 = vsub.f32 %v1194, %v1195
        %v1197 = vand.u32 %v1196, 4294901760
        %1198 = vmatmul.f32.gmra.mxu0 %v1197
        %v1199 = vpop.f32.mrf.mxu0
        %v1200 = vadd.f32 %v604, %v1199
        %v1201 = vand.u32 %v752, 4294901760
        %v1202 = vsub.f32 %v752, %v1201
        %v1203 = vand.u32 %v1202, 4294901760
        %v1204 = vsub.f32 %v1202, %v1203
        %v1205 = vand.u32 %v1204, 4294901760
        %1206 = vmatmul.f32.gmra.mxu0 %v1205
        %v1207 = vpop.f32.mrf.mxu0
        %v1208 = vadd.f32 %v604, %v1207
        %v1209 = vand.u32 %v755, 4294901760
        %v1210 = vsub.f32 %v755, %v1209
        %v1211 = vand.u32 %v1210, 4294901760
        %v1212 = vsub.f32 %v1210, %v1211
        %v1213 = vand.u32 %v1212, 4294901760
        %1214 = vmatmul.f32.gmra.mxu0 %v1213
        %v1215 = vpop.f32.mrf.mxu0
        %v1216 = vadd.f32 %v604, %v1215
        %v1217 = vand.u32 %v758, 4294901760
        %v1218 = vsub.f32 %v758, %v1217
        %v1219 = vand.u32 %v1218, 4294901760
        %v1220 = vsub.f32 %v1218, %v1219
        %v1221 = vand.u32 %v1220, 4294901760
        %1222 = vmatmul.f32.gmra.mxu0 %v1221
        %v1223 = vpop.f32.mrf.mxu0
        %v1224 = vadd.f32 %v604, %v1223
        %v1225 = vand.u32 %v761, 4294901760
        %v1226 = vsub.f32 %v761, %v1225
        %v1227 = vand.u32 %v1226, 4294901760
        %v1228 = vsub.f32 %v1226, %v1227
        %v1229 = vand.u32 %v1228, 4294901760
        %1230 = vmatmul.f32.gmra.mxu0 %v1229
        %v1231 = vpop.f32.mrf.mxu0
        %v1232 = vadd.f32 %v604, %v1231
        %v1233 = vand.u32 %v764, 4294901760
        %v1234 = vsub.f32 %v764, %v1233
        %v1235 = vand.u32 %v1234, 4294901760
        %v1236 = vsub.f32 %v1234, %v1235
        %v1237 = vand.u32 %v1236, 4294901760
        %1238 = vmatmul.f32.gmra.mxu0 %v1237
        %v1239 = vpop.f32.mrf.mxu0
        %v1240 = vadd.f32 %v604, %v1239
        %v1241 = vand.u32 %v767, 4294901760
        %v1242 = vsub.f32 %v767, %v1241
        %v1243 = vand.u32 %v1242, 4294901760
        %v1244 = vsub.f32 %v1242, %v1243
        %v1245 = vand.u32 %v1244, 4294901760
        %1246 = vmatmul.f32.gmra.mxu0 %v1245
        %v1247 = vpop.f32.mrf.mxu0
        %v1248 = vadd.f32 %v604, %v1247
        %v1249 = vand.u32 %v770, 4294901760
        %v1250 = vsub.f32 %v770, %v1249
        %v1251 = vand.u32 %v1250, 4294901760
        %v1252 = vsub.f32 %v1250, %v1251
        %v1253 = vand.u32 %v1252, 4294901760
        %1254 = vmatmul.f32.gmra.mxu0 %v1253
        %v1255 = vpop.f32.mrf.mxu0
        %v1256 = vadd.f32 %v604, %v1255
        %v1257 = vand.u32 %v773, 4294901760
        %v1258 = vsub.f32 %v773, %v1257
        %v1259 = vand.u32 %v1258, 4294901760
        %v1260 = vsub.f32 %v1258, %v1259
        %v1261 = vand.u32 %v1260, 4294901760
        %1262 = vmatmul.f32.gmra.mxu0 %v1261
        %v1263 = vpop.f32.mrf.mxu0
        %v1264 = vadd.f32 %v604, %v1263
        %v1265 = vand.u32 %v776, 4294901760
        %v1266 = vsub.f32 %v776, %v1265
        %v1267 = vand.u32 %v1266, 4294901760
        %v1268 = vsub.f32 %v1266, %v1267
        %v1269 = vand.u32 %v1268, 4294901760
        %1270 = vmatmul.f32.gmra.mxu0 %v1269
        %v1271 = vpop.f32.mrf.mxu0
        %v1272 = vadd.f32 %v604, %v1271
        %v1273 = vand.u32 %v779, 4294901760
        %v1274 = vsub.f32 %v779, %v1273
        %v1275 = vand.u32 %v1274, 4294901760
        %v1276 = vsub.f32 %v1274, %v1275
        %v1277 = vand.u32 %v1276, 4294901760
        %1278 = vmatmul.f32.gmra.mxu0 %v1277
        %v1279 = vpop.f32.mrf.mxu0
        %v1280 = vadd.f32 %v604, %v1279
        %v1281 = vand.u32 %v782, 4294901760
        %v1282 = vsub.f32 %v782, %v1281
        %v1283 = vand.u32 %v1282, 4294901760
        %v1284 = vsub.f32 %v1282, %v1283
        %v1285 = vand.u32 %v1284, 4294901760
        %1286 = vmatmul.f32.gmra.mxu0 %v1285
        %v1287 = vpop.f32.mrf.mxu0
        %v1288 = vadd.f32 %v604, %v1287
        %v1289 = vand.u32 %v785, 4294901760
        %v1290 = vsub.f32 %v785, %v1289
        %v1291 = vand.u32 %v1290, 4294901760
        %v1292 = vsub.f32 %v1290, %v1291
        %v1293 = vand.u32 %v1292, 4294901760
        %1294 = vmatmul.f32.gmra.mxu0 %v1293
        %v1295 = vpop.f32.mrf.mxu0
        %v1296 = vadd.f32 %v604, %v1295
        %v1297 = vand.u32 %v788, 4294901760
        %v1298 = vsub.f32 %v788, %v1297
        %v1299 = vand.u32 %v1298, 4294901760
        %v1300 = vsub.f32 %v1298, %v1299
        %v1301 = vand.u32 %v1300, 4294901760
        %1302 = vmatmul.f32.gmra.mxu0 %v1301
        %v1303 = vpop.f32.mrf.mxu0
        %v1304 = vadd.f32 %v604, %v1303
        %v1305 = vand.u32 %v791, 4294901760
        %v1306 = vsub.f32 %v791, %v1305
        %v1307 = vand.u32 %v1306, 4294901760
        %v1308 = vsub.f32 %v1306, %v1307
        %v1309 = vand.u32 %v1308, 4294901760
        %1310 = vmatmul.f32.gmra.mxu0 %v1309
        %v1311 = vpop.f32.mrf.mxu0
        %v1312 = vadd.f32 %v604, %v1311
        %v1313 = vand.u32 %v794, 4294901760
        %v1314 = vsub.f32 %v794, %v1313
        %v1315 = vand.u32 %v1314, 4294901760
        %v1316 = vsub.f32 %v1314, %v1315
        %v1317 = vand.u32 %v1316, 4294901760
        %1318 = vmatmul.f32.gmra.mxu0 %v1317
        %v1319 = vpop.f32.mrf.mxu0
        %v1320 = vadd.f32 %v604, %v1319
        %v1321 = vand.u32 %v797, 4294901760
        %v1322 = vsub.f32 %v797, %v1321
        %v1323 = vand.u32 %v1322, 4294901760
        %v1324 = vsub.f32 %v1322, %v1323
        %v1325 = vand.u32 %v1324, 4294901760
        %1326 = vmatmul.f32.gmra.mxu0 %v1325
        %v1327 = vpop.f32.mrf.mxu0
        %v1328 = vadd.f32 %v604, %v1327
        %1329 = vdwg.mxu0
        %1330 = vmatpush.msra.mxu0 0.0
        %1331 = vmatpush.msra.mxu0 0.0
        %1332 = vmatpush.msra.mxu0 0.0
        %1333 = vmatpush.msra.mxu0 0.0
        %1334 = vmatpush.msra.mxu0 0.0
        %1335 = vmatpush.msra.mxu0 0.0
        %1336 = vmatpush.msra.mxu0 0.0
        %1337 = vmatpush.msra.mxu0 0.0
        %1338 = vmatpush.msra.mxu0 0.0
        %1339 = vmatpush.msra.mxu0 0.0
        %1340 = vmatpush.msra.mxu0 0.0
        %1341 = vmatpush.msra.mxu0 0.0
        %1342 = vmatpush.msra.mxu0 0.0
        %1343 = vmatpush.msra.mxu0 0.0
        %v1344 = vand.u32 %v601, 4294901760
        %v1345 = vsub.f32 %v601, %v1344
        %v1346 = vand.u32 %v1345, 4294901760
        %v1347 = vsub.f32 %v1345, %v1346
        %v1348 = vand.u32 %v1347, 4294901760
        %1349 = vmatpush.msra.mxu0 %v1348
        %v1350 = vand.u32 %v600, 4294901760
        %v1351 = vsub.f32 %v600, %v1350
        %v1352 = vand.u32 %v1351, 4294901760
        %v1353 = vsub.f32 %v1351, %v1352
        %v1354 = vand.u32 %v1353, 4294901760
        %1355 = vmatpush.msra.mxu0 %v1354
        %v1356 = vand.u32 %v608, 4294901760
        %1357 = vmatmul.f32.gmra.mxu0 %v1356
        %v1358 = vpop.f32.mrf.mxu0
        %v1359 = vadd.f32 %v824, %v1358
        %v1360 = vand.u32 %v611, 4294901760
        %1361 = vmatmul.f32.gmra.mxu0 %v1360
        %v1362 = vpop.f32.mrf.mxu0
        %v1363 = vadd.f32 %v832, %v1362
        %v1364 = vand.u32 %v614, 4294901760
        %1365 = vmatmul.f32.gmra.mxu0 %v1364
        %v1366 = vpop.f32.mrf.mxu0
        %v1367 = vadd.f32 %v840, %v1366
        %v1368 = vand.u32 %v617, 4294901760
        %1369 = vmatmul.f32.gmra.mxu0 %v1368
        %v1370 = vpop.f32.mrf.mxu0
        %v1371 = vadd.f32 %v848, %v1370
        %v1372 = vand.u32 %v620, 4294901760
        %1373 = vmatmul.f32.gmra.mxu0 %v1372
        %v1374 = vpop.f32.mrf.mxu0
        %v1375 = vadd.f32 %v856, %v1374
        %v1376 = vand.u32 %v623, 4294901760
        %1377 = vmatmul.f32.gmra.mxu0 %v1376
        %v1378 = vpop.f32.mrf.mxu0
        %v1379 = vadd.f32 %v864, %v1378
        %v1380 = vand.u32 %v626, 4294901760
        %1381 = vmatmul.f32.gmra.mxu0 %v1380
        %v1382 = vpop.f32.mrf.mxu0
        %v1383 = vadd.f32 %v872, %v1382
        %v1384 = vand.u32 %v629, 4294901760
        %1385 = vmatmul.f32.gmra.mxu0 %v1384
        %v1386 = vpop.f32.mrf.mxu0
        %v1387 = vadd.f32 %v880, %v1386
        %v1388 = vand.u32 %v632, 4294901760
        %1389 = vmatmul.f32.gmra.mxu0 %v1388
        %v1390 = vpop.f32.mrf.mxu0
        %v1391 = vadd.f32 %v888, %v1390
        %v1392 = vand.u32 %v635, 4294901760
        %1393 = vmatmul.f32.gmra.mxu0 %v1392
        %v1394 = vpop.f32.mrf.mxu0
        %v1395 = vadd.f32 %v896, %v1394
        %v1396 = vand.u32 %v638, 4294901760
        %1397 = vmatmul.f32.gmra.mxu0 %v1396
        %v1398 = vpop.f32.mrf.mxu0
        %v1399 = vadd.f32 %v904, %v1398
        %v1400 = vand.u32 %v641, 4294901760
        %1401 = vmatmul.f32.gmra.mxu0 %v1400
        %v1402 = vpop.f32.mrf.mxu0
        %v1403 = vadd.f32 %v912, %v1402
        %v1404 = vand.u32 %v644, 4294901760
        %1405 = vmatmul.f32.gmra.mxu0 %v1404
        %v1406 = vpop.f32.mrf.mxu0
        %v1407 = vadd.f32 %v920, %v1406
        %v1408 = vand.u32 %v647, 4294901760
        %1409 = vmatmul.f32.gmra.mxu0 %v1408
        %v1410 = vpop.f32.mrf.mxu0
        %v1411 = vadd.f32 %v928, %v1410
        %v1412 = vand.u32 %v650, 4294901760
        %1413 = vmatmul.f32.gmra.mxu0 %v1412
        %v1414 = vpop.f32.mrf.mxu0
        %v1415 = vadd.f32 %v936, %v1414
        %v1416 = vand.u32 %v653, 4294901760
        %1417 = vmatmul.f32.gmra.mxu0 %v1416
        %v1418 = vpop.f32.mrf.mxu0
        %v1419 = vadd.f32 %v944, %v1418
        %v1420 = vand.u32 %v656, 4294901760
        %1421 = vmatmul.f32.gmra.mxu0 %v1420
        %v1422 = vpop.f32.mrf.mxu0
        %v1423 = vadd.f32 %v952, %v1422
        %v1424 = vand.u32 %v659, 4294901760
        %1425 = vmatmul.f32.gmra.mxu0 %v1424
        %v1426 = vpop.f32.mrf.mxu0
        %v1427 = vadd.f32 %v960, %v1426
        %v1428 = vand.u32 %v662, 4294901760
        %1429 = vmatmul.f32.gmra.mxu0 %v1428
        %v1430 = vpop.f32.mrf.mxu0
        %v1431 = vadd.f32 %v968, %v1430
        %v1432 = vand.u32 %v665, 4294901760
        %1433 = vmatmul.f32.gmra.mxu0 %v1432
        %v1434 = vpop.f32.mrf.mxu0
        %v1435 = vadd.f32 %v976, %v1434
        %v1436 = vand.u32 %v668, 4294901760
        %1437 = vmatmul.f32.gmra.mxu0 %v1436
        %v1438 = vpop.f32.mrf.mxu0
        %v1439 = vadd.f32 %v984, %v1438
        %v1440 = vand.u32 %v671, 4294901760
        %1441 = vmatmul.f32.gmra.mxu0 %v1440
        %v1442 = vpop.f32.mrf.mxu0
        %v1443 = vadd.f32 %v992, %v1442
        %v1444 = vand.u32 %v674, 4294901760
        %1445 = vmatmul.f32.gmra.mxu0 %v1444
        %v1446 = vpop.f32.mrf.mxu0
        %v1447 = vadd.f32 %v1000, %v1446
        %v1448 = vand.u32 %v677, 4294901760
        %1449 = vmatmul.f32.gmra.mxu0 %v1448
        %v1450 = vpop.f32.mrf.mxu0
        %v1451 = vadd.f32 %v1008, %v1450
        %v1452 = vand.u32 %v680, 4294901760
        %1453 = vmatmul.f32.gmra.mxu0 %v1452
        %v1454 = vpop.f32.mrf.mxu0
        %v1455 = vadd.f32 %v1016, %v1454
        %v1456 = vand.u32 %v683, 4294901760
        %1457 = vmatmul.f32.gmra.mxu0 %v1456
        %v1458 = vpop.f32.mrf.mxu0
        %v1459 = vadd.f32 %v1024, %v1458
        %v1460 = vand.u32 %v686, 4294901760
        %1461 = vmatmul.f32.gmra.mxu0 %v1460
        %v1462 = vpop.f32.mrf.mxu0
        %v1463 = vadd.f32 %v1032, %v1462
        %v1464 = vand.u32 %v689, 4294901760
        %1465 = vmatmul.f32.gmra.mxu0 %v1464
        %v1466 = vpop.f32.mrf.mxu0
        %v1467 = vadd.f32 %v1040, %v1466
        %v1468 = vand.u32 %v692, 4294901760
        %1469 = vmatmul.f32.gmra.mxu0 %v1468
        %v1470 = vpop.f32.mrf.mxu0
        %v1471 = vadd.f32 %v1048, %v1470
        %v1472 = vand.u32 %v695, 4294901760
        %1473 = vmatmul.f32.gmra.mxu0 %v1472
        %v1474 = vpop.f32.mrf.mxu0
        %v1475 = vadd.f32 %v1056, %v1474
        %v1476 = vand.u32 %v698, 4294901760
        %1477 = vmatmul.f32.gmra.mxu0 %v1476
        %v1478 = vpop.f32.mrf.mxu0
        %v1479 = vadd.f32 %v1064, %v1478
        %v1480 = vand.u32 %v701, 4294901760
        %1481 = vmatmul.f32.gmra.mxu0 %v1480
        %v1482 = vpop.f32.mrf.mxu0
        %v1483 = vadd.f32 %v1072, %v1482
        %v1484 = vand.u32 %v704, 4294901760
        %1485 = vmatmul.f32.gmra.mxu0 %v1484
        %v1486 = vpop.f32.mrf.mxu0
        %v1487 = vadd.f32 %v1080, %v1486
        %v1488 = vand.u32 %v707, 4294901760
        %1489 = vmatmul.f32.gmra.mxu0 %v1488
        %v1490 = vpop.f32.mrf.mxu0
        %v1491 = vadd.f32 %v1088, %v1490
        %v1492 = vand.u32 %v710, 4294901760
        %1493 = vmatmul.f32.gmra.mxu0 %v1492
        %v1494 = vpop.f32.mrf.mxu0
        %v1495 = vadd.f32 %v1096, %v1494
        %v1496 = vand.u32 %v713, 4294901760
        %1497 = vmatmul.f32.gmra.mxu0 %v1496
        %v1498 = vpop.f32.mrf.mxu0
        %v1499 = vadd.f32 %v1104, %v1498
        %v1500 = vand.u32 %v716, 4294901760
        %1501 = vmatmul.f32.gmra.mxu0 %v1500
        %v1502 = vpop.f32.mrf.mxu0
        %v1503 = vadd.f32 %v1112, %v1502
        %v1504 = vand.u32 %v719, 4294901760
        %1505 = vmatmul.f32.gmra.mxu0 %v1504
        %v1506 = vpop.f32.mrf.mxu0
        %v1507 = vadd.f32 %v1120, %v1506
        %v1508 = vand.u32 %v722, 4294901760
        %1509 = vmatmul.f32.gmra.mxu0 %v1508
        %v1510 = vpop.f32.mrf.mxu0
        %v1511 = vadd.f32 %v1128, %v1510
        %v1512 = vand.u32 %v725, 4294901760
        %1513 = vmatmul.f32.gmra.mxu0 %v1512
        %v1514 = vpop.f32.mrf.mxu0
        %v1515 = vadd.f32 %v1136, %v1514
        %v1516 = vand.u32 %v728, 4294901760
        %1517 = vmatmul.f32.gmra.mxu0 %v1516
        %v1518 = vpop.f32.mrf.mxu0
        %v1519 = vadd.f32 %v1144, %v1518
        %v1520 = vand.u32 %v731, 4294901760
        %1521 = vmatmul.f32.gmra.mxu0 %v1520
        %v1522 = vpop.f32.mrf.mxu0
        %v1523 = vadd.f32 %v1152, %v1522
        %v1524 = vand.u32 %v734, 4294901760
        %1525 = vmatmul.f32.gmra.mxu0 %v1524
        %v1526 = vpop.f32.mrf.mxu0
        %v1527 = vadd.f32 %v1160, %v1526
        %v1528 = vand.u32 %v737, 4294901760
        %1529 = vmatmul.f32.gmra.mxu0 %v1528
        %v1530 = vpop.f32.mrf.mxu0
        %v1531 = vadd.f32 %v1168, %v1530
        %v1532 = vand.u32 %v740, 4294901760
        %1533 = vmatmul.f32.gmra.mxu0 %v1532
        %v1534 = vpop.f32.mrf.mxu0
        %v1535 = vadd.f32 %v1176, %v1534
        %v1536 = vand.u32 %v743, 4294901760
        %1537 = vmatmul.f32.gmra.mxu0 %v1536
        %v1538 = vpop.f32.mrf.mxu0
        %v1539 = vadd.f32 %v1184, %v1538
        %v1540 = vand.u32 %v746, 4294901760
        %1541 = vmatmul.f32.gmra.mxu0 %v1540
        %v1542 = vpop.f32.mrf.mxu0
        %v1543 = vadd.f32 %v1192, %v1542
        %v1544 = vand.u32 %v749, 4294901760
        %1545 = vmatmul.f32.gmra.mxu0 %v1544
        %v1546 = vpop.f32.mrf.mxu0
        %v1547 = vadd.f32 %v1200, %v1546
        %v1548 = vand.u32 %v752, 4294901760
        %1549 = vmatmul.f32.gmra.mxu0 %v1548
        %v1550 = vpop.f32.mrf.mxu0
        %v1551 = vadd.f32 %v1208, %v1550
        %v1552 = vand.u32 %v755, 4294901760
        %1553 = vmatmul.f32.gmra.mxu0 %v1552
        %v1554 = vpop.f32.mrf.mxu0
        %v1555 = vadd.f32 %v1216, %v1554
        %v1556 = vand.u32 %v758, 4294901760
        %1557 = vmatmul.f32.gmra.mxu0 %v1556
        %v1558 = vpop.f32.mrf.mxu0
        %v1559 = vadd.f32 %v1224, %v1558
        %v1560 = vand.u32 %v761, 4294901760
        %1561 = vmatmul.f32.gmra.mxu0 %v1560
        %v1562 = vpop.f32.mrf.mxu0
        %v1563 = vadd.f32 %v1232, %v1562
        %v1564 = vand.u32 %v764, 4294901760
        %1565 = vmatmul.f32.gmra.mxu0 %v1564
        %v1566 = vpop.f32.mrf.mxu0
        %v1567 = vadd.f32 %v1240, %v1566
        %v1568 = vand.u32 %v767, 4294901760
        %1569 = vmatmul.f32.gmra.mxu0 %v1568
        %v1570 = vpop.f32.mrf.mxu0
        %v1571 = vadd.f32 %v1248, %v1570
        %v1572 = vand.u32 %v770, 4294901760
        %1573 = vmatmul.f32.gmra.mxu0 %v1572
        %v1574 = vpop.f32.mrf.mxu0
        %v1575 = vadd.f32 %v1256, %v1574
        %v1576 = vand.u32 %v773, 4294901760
        %1577 = vmatmul.f32.gmra.mxu0 %v1576
        %v1578 = vpop.f32.mrf.mxu0
        %v1579 = vadd.f32 %v1264, %v1578
        %v1580 = vand.u32 %v776, 4294901760
        %1581 = vmatmul.f32.gmra.mxu0 %v1580
        %v1582 = vpop.f32.mrf.mxu0
        %v1583 = vadd.f32 %v1272, %v1582
        %v1584 = vand.u32 %v779, 4294901760
        %1585 = vmatmul.f32.gmra.mxu0 %v1584
        %v1586 = vpop.f32.mrf.mxu0
        %v1587 = vadd.f32 %v1280, %v1586
        %v1588 = vand.u32 %v782, 4294901760
        %1589 = vmatmul.f32.gmra.mxu0 %v1588
        %v1590 = vpop.f32.mrf.mxu0
        %v1591 = vadd.f32 %v1288, %v1590
        %v1592 = vand.u32 %v785, 4294901760
        %1593 = vmatmul.f32.gmra.mxu0 %v1592
        %v1594 = vpop.f32.mrf.mxu0
        %v1595 = vadd.f32 %v1296, %v1594
        %v1596 = vand.u32 %v788, 4294901760
        %1597 = vmatmul.f32.gmra.mxu0 %v1596
        %v1598 = vpop.f32.mrf.mxu0
        %v1599 = vadd.f32 %v1304, %v1598
        %v1600 = vand.u32 %v791, 4294901760
        %1601 = vmatmul.f32.gmra.mxu0 %v1600
        %v1602 = vpop.f32.mrf.mxu0
        %v1603 = vadd.f32 %v1312, %v1602
        %v1604 = vand.u32 %v794, 4294901760
        %1605 = vmatmul.f32.gmra.mxu0 %v1604
        %v1606 = vpop.f32.mrf.mxu0
        %v1607 = vadd.f32 %v1320, %v1606
        %v1608 = vand.u32 %v797, 4294901760
        %1609 = vmatmul.f32.gmra.mxu0 %v1608
        %v1610 = vpop.f32.mrf.mxu0
        %v1611 = vadd.f32 %v1328, %v1610
        %1612 = vdwg.mxu0
        %1613 = vmatpush.msra.mxu0 0.0
        %1614 = vmatpush.msra.mxu0 0.0
        %1615 = vmatpush.msra.mxu0 0.0
        %1616 = vmatpush.msra.mxu0 0.0
        %1617 = vmatpush.msra.mxu0 0.0
        %1618 = vmatpush.msra.mxu0 0.0
        %1619 = vmatpush.msra.mxu0 0.0
        %1620 = vmatpush.msra.mxu0 0.0
        %1621 = vmatpush.msra.mxu0 0.0
        %1622 = vmatpush.msra.mxu0 0.0
        %1623 = vmatpush.msra.mxu0 0.0
        %1624 = vmatpush.msra.mxu0 0.0
        %1625 = vmatpush.msra.mxu0 0.0
        %1626 = vmatpush.msra.mxu0 0.0
        %v1627 = vand.u32 %v601, 4294901760
        %v1628 = vsub.f32 %v601, %v1627
        %1629 = vmatpush.msra.mxu0 %v1628
        %v1630 = vand.u32 %v600, 4294901760
        %v1631 = vsub.f32 %v600, %v1630
        %1632 = vmatpush.msra.mxu0 %v1631
        %v1633 = vand.u32 %v608, 4294901760
        %v1634 = vsub.f32 %v608, %v1633
        %1635 = vmatmul.f32.gmra.mxu0 %v1634
        %v1636 = vpop.f32.mrf.mxu0
        %v1637 = vadd.f32 %v1359, %v1636
        %v1638 = vand.u32 %v611, 4294901760
        %v1639 = vsub.f32 %v611, %v1638
        %1640 = vmatmul.f32.gmra.mxu0 %v1639
        %v1641 = vpop.f32.mrf.mxu0
        %v1642 = vadd.f32 %v1363, %v1641
        %v1643 = vand.u32 %v614, 4294901760
        %v1644 = vsub.f32 %v614, %v1643
        %1645 = vmatmul.f32.gmra.mxu0 %v1644
        %v1646 = vpop.f32.mrf.mxu0
        %v1647 = vadd.f32 %v1367, %v1646
        %v1648 = vand.u32 %v617, 4294901760
        %v1649 = vsub.f32 %v617, %v1648
        %1650 = vmatmul.f32.gmra.mxu0 %v1649
        %v1651 = vpop.f32.mrf.mxu0
        %v1652 = vadd.f32 %v1371, %v1651
        %v1653 = vand.u32 %v620, 4294901760
        %v1654 = vsub.f32 %v620, %v1653
        %1655 = vmatmul.f32.gmra.mxu0 %v1654
        %v1656 = vpop.f32.mrf.mxu0
        %v1657 = vadd.f32 %v1375, %v1656
        %v1658 = vand.u32 %v623, 4294901760
        %v1659 = vsub.f32 %v623, %v1658
        %1660 = vmatmul.f32.gmra.mxu0 %v1659
        %v1661 = vpop.f32.mrf.mxu0
        %v1662 = vadd.f32 %v1379, %v1661
        %v1663 = vand.u32 %v626, 4294901760
        %v1664 = vsub.f32 %v626, %v1663
        %1665 = vmatmul.f32.gmra.mxu0 %v1664
        %v1666 = vpop.f32.mrf.mxu0
        %v1667 = vadd.f32 %v1383, %v1666
        %v1668 = vand.u32 %v629, 4294901760
        %v1669 = vsub.f32 %v629, %v1668
        %1670 = vmatmul.f32.gmra.mxu0 %v1669
        %v1671 = vpop.f32.mrf.mxu0
        %v1672 = vadd.f32 %v1387, %v1671
        %v1673 = vand.u32 %v632, 4294901760
        %v1674 = vsub.f32 %v632, %v1673
        %1675 = vmatmul.f32.gmra.mxu0 %v1674
        %v1676 = vpop.f32.mrf.mxu0
        %v1677 = vadd.f32 %v1391, %v1676
        %v1678 = vand.u32 %v635, 4294901760
        %v1679 = vsub.f32 %v635, %v1678
        %1680 = vmatmul.f32.gmra.mxu0 %v1679
        %v1681 = vpop.f32.mrf.mxu0
        %v1682 = vadd.f32 %v1395, %v1681
        %v1683 = vand.u32 %v638, 4294901760
        %v1684 = vsub.f32 %v638, %v1683
        %1685 = vmatmul.f32.gmra.mxu0 %v1684
        %v1686 = vpop.f32.mrf.mxu0
        %v1687 = vadd.f32 %v1399, %v1686
        %v1688 = vand.u32 %v641, 4294901760
        %v1689 = vsub.f32 %v641, %v1688
        %1690 = vmatmul.f32.gmra.mxu0 %v1689
        %v1691 = vpop.f32.mrf.mxu0
        %v1692 = vadd.f32 %v1403, %v1691
        %v1693 = vand.u32 %v644, 4294901760
        %v1694 = vsub.f32 %v644, %v1693
        %1695 = vmatmul.f32.gmra.mxu0 %v1694
        %v1696 = vpop.f32.mrf.mxu0
        %v1697 = vadd.f32 %v1407, %v1696
        %v1698 = vand.u32 %v647, 4294901760
        %v1699 = vsub.f32 %v647, %v1698
        %1700 = vmatmul.f32.gmra.mxu0 %v1699
        %v1701 = vpop.f32.mrf.mxu0
        %v1702 = vadd.f32 %v1411, %v1701
        %v1703 = vand.u32 %v650, 4294901760
        %v1704 = vsub.f32 %v650, %v1703
        %1705 = vmatmul.f32.gmra.mxu0 %v1704
        %v1706 = vpop.f32.mrf.mxu0
        %v1707 = vadd.f32 %v1415, %v1706
        %v1708 = vand.u32 %v653, 4294901760
        %v1709 = vsub.f32 %v653, %v1708
        %1710 = vmatmul.f32.gmra.mxu0 %v1709
        %v1711 = vpop.f32.mrf.mxu0
        %v1712 = vadd.f32 %v1419, %v1711
        %v1713 = vand.u32 %v656, 4294901760
        %v1714 = vsub.f32 %v656, %v1713
        %1715 = vmatmul.f32.gmra.mxu0 %v1714
        %v1716 = vpop.f32.mrf.mxu0
        %v1717 = vadd.f32 %v1423, %v1716
        %v1718 = vand.u32 %v659, 4294901760
        %v1719 = vsub.f32 %v659, %v1718
        %1720 = vmatmul.f32.gmra.mxu0 %v1719
        %v1721 = vpop.f32.mrf.mxu0
        %v1722 = vadd.f32 %v1427, %v1721
        %v1723 = vand.u32 %v662, 4294901760
        %v1724 = vsub.f32 %v662, %v1723
        %1725 = vmatmul.f32.gmra.mxu0 %v1724
        %v1726 = vpop.f32.mrf.mxu0
        %v1727 = vadd.f32 %v1431, %v1726
        %v1728 = vand.u32 %v665, 4294901760
        %v1729 = vsub.f32 %v665, %v1728
        %1730 = vmatmul.f32.gmra.mxu0 %v1729
        %v1731 = vpop.f32.mrf.mxu0
        %v1732 = vadd.f32 %v1435, %v1731
        %v1733 = vand.u32 %v668, 4294901760
        %v1734 = vsub.f32 %v668, %v1733
        %1735 = vmatmul.f32.gmra.mxu0 %v1734
        %v1736 = vpop.f32.mrf.mxu0
        %v1737 = vadd.f32 %v1439, %v1736
        %v1738 = vand.u32 %v671, 4294901760
        %v1739 = vsub.f32 %v671, %v1738
        %1740 = vmatmul.f32.gmra.mxu0 %v1739
        %v1741 = vpop.f32.mrf.mxu0
        %v1742 = vadd.f32 %v1443, %v1741
        %v1743 = vand.u32 %v674, 4294901760
        %v1744 = vsub.f32 %v674, %v1743
        %1745 = vmatmul.f32.gmra.mxu0 %v1744
        %v1746 = vpop.f32.mrf.mxu0
        %v1747 = vadd.f32 %v1447, %v1746
        %v1748 = vand.u32 %v677, 4294901760
        %v1749 = vsub.f32 %v677, %v1748
        %1750 = vmatmul.f32.gmra.mxu0 %v1749
        %v1751 = vpop.f32.mrf.mxu0
        %v1752 = vadd.f32 %v1451, %v1751
        %v1753 = vand.u32 %v680, 4294901760
        %v1754 = vsub.f32 %v680, %v1753
        %1755 = vmatmul.f32.gmra.mxu0 %v1754
        %v1756 = vpop.f32.mrf.mxu0
        %v1757 = vadd.f32 %v1455, %v1756
        %v1758 = vand.u32 %v683, 4294901760
        %v1759 = vsub.f32 %v683, %v1758
        %1760 = vmatmul.f32.gmra.mxu0 %v1759
        %v1761 = vpop.f32.mrf.mxu0
        %v1762 = vadd.f32 %v1459, %v1761
        %v1763 = vand.u32 %v686, 4294901760
        %v1764 = vsub.f32 %v686, %v1763
        %1765 = vmatmul.f32.gmra.mxu0 %v1764
        %v1766 = vpop.f32.mrf.mxu0
        %v1767 = vadd.f32 %v1463, %v1766
        %v1768 = vand.u32 %v689, 4294901760
        %v1769 = vsub.f32 %v689, %v1768
        %1770 = vmatmul.f32.gmra.mxu0 %v1769
        %v1771 = vpop.f32.mrf.mxu0
        %v1772 = vadd.f32 %v1467, %v1771
        %v1773 = vand.u32 %v692, 4294901760
        %v1774 = vsub.f32 %v692, %v1773
        %1775 = vmatmul.f32.gmra.mxu0 %v1774
        %v1776 = vpop.f32.mrf.mxu0
        %v1777 = vadd.f32 %v1471, %v1776
        %v1778 = vand.u32 %v695, 4294901760
        %v1779 = vsub.f32 %v695, %v1778
        %1780 = vmatmul.f32.gmra.mxu0 %v1779
        %v1781 = vpop.f32.mrf.mxu0
        %v1782 = vadd.f32 %v1475, %v1781
        %v1783 = vand.u32 %v698, 4294901760
        %v1784 = vsub.f32 %v698, %v1783
        %1785 = vmatmul.f32.gmra.mxu0 %v1784
        %v1786 = vpop.f32.mrf.mxu0
        %v1787 = vadd.f32 %v1479, %v1786
        %v1788 = vand.u32 %v701, 4294901760
        %v1789 = vsub.f32 %v701, %v1788
        %1790 = vmatmul.f32.gmra.mxu0 %v1789
        %v1791 = vpop.f32.mrf.mxu0
        %v1792 = vadd.f32 %v1483, %v1791
        %v1793 = vand.u32 %v704, 4294901760
        %v1794 = vsub.f32 %v704, %v1793
        %1795 = vmatmul.f32.gmra.mxu0 %v1794
        %v1796 = vpop.f32.mrf.mxu0
        %v1797 = vadd.f32 %v1487, %v1796
        %v1798 = vand.u32 %v707, 4294901760
        %v1799 = vsub.f32 %v707, %v1798
        %1800 = vmatmul.f32.gmra.mxu0 %v1799
        %v1801 = vpop.f32.mrf.mxu0
        %v1802 = vadd.f32 %v1491, %v1801
        %v1803 = vand.u32 %v710, 4294901760
        %v1804 = vsub.f32 %v710, %v1803
        %1805 = vmatmul.f32.gmra.mxu0 %v1804
        %v1806 = vpop.f32.mrf.mxu0
        %v1807 = vadd.f32 %v1495, %v1806
        %v1808 = vand.u32 %v713, 4294901760
        %v1809 = vsub.f32 %v713, %v1808
        %1810 = vmatmul.f32.gmra.mxu0 %v1809
        %v1811 = vpop.f32.mrf.mxu0
        %v1812 = vadd.f32 %v1499, %v1811
        %v1813 = vand.u32 %v716, 4294901760
        %v1814 = vsub.f32 %v716, %v1813
        %1815 = vmatmul.f32.gmra.mxu0 %v1814
        %v1816 = vpop.f32.mrf.mxu0
        %v1817 = vadd.f32 %v1503, %v1816
        %v1818 = vand.u32 %v719, 4294901760
        %v1819 = vsub.f32 %v719, %v1818
        %1820 = vmatmul.f32.gmra.mxu0 %v1819
        %v1821 = vpop.f32.mrf.mxu0
        %v1822 = vadd.f32 %v1507, %v1821
        %v1823 = vand.u32 %v722, 4294901760
        %v1824 = vsub.f32 %v722, %v1823
        %1825 = vmatmul.f32.gmra.mxu0 %v1824
        %v1826 = vpop.f32.mrf.mxu0
        %v1827 = vadd.f32 %v1511, %v1826
        %v1828 = vand.u32 %v725, 4294901760
        %v1829 = vsub.f32 %v725, %v1828
        %1830 = vmatmul.f32.gmra.mxu0 %v1829
        %v1831 = vpop.f32.mrf.mxu0
        %v1832 = vadd.f32 %v1515, %v1831
        %v1833 = vand.u32 %v728, 4294901760
        %v1834 = vsub.f32 %v728, %v1833
        %1835 = vmatmul.f32.gmra.mxu0 %v1834
        %v1836 = vpop.f32.mrf.mxu0
        %v1837 = vadd.f32 %v1519, %v1836
        %v1838 = vand.u32 %v731, 4294901760
        %v1839 = vsub.f32 %v731, %v1838
        %1840 = vmatmul.f32.gmra.mxu0 %v1839
        %v1841 = vpop.f32.mrf.mxu0
        %v1842 = vadd.f32 %v1523, %v1841
        %v1843 = vand.u32 %v734, 4294901760
        %v1844 = vsub.f32 %v734, %v1843
        %1845 = vmatmul.f32.gmra.mxu0 %v1844
        %v1846 = vpop.f32.mrf.mxu0
        %v1847 = vadd.f32 %v1527, %v1846
        %v1848 = vand.u32 %v737, 4294901760
        %v1849 = vsub.f32 %v737, %v1848
        %1850 = vmatmul.f32.gmra.mxu0 %v1849
        %v1851 = vpop.f32.mrf.mxu0
        %v1852 = vadd.f32 %v1531, %v1851
        %v1853 = vand.u32 %v740, 4294901760
        %v1854 = vsub.f32 %v740, %v1853
        %1855 = vmatmul.f32.gmra.mxu0 %v1854
        %v1856 = vpop.f32.mrf.mxu0
        %v1857 = vadd.f32 %v1535, %v1856
        %v1858 = vand.u32 %v743, 4294901760
        %v1859 = vsub.f32 %v743, %v1858
        %1860 = vmatmul.f32.gmra.mxu0 %v1859
        %v1861 = vpop.f32.mrf.mxu0
        %v1862 = vadd.f32 %v1539, %v1861
        %v1863 = vand.u32 %v746, 4294901760
        %v1864 = vsub.f32 %v746, %v1863
        %1865 = vmatmul.f32.gmra.mxu0 %v1864
        %v1866 = vpop.f32.mrf.mxu0
        %v1867 = vadd.f32 %v1543, %v1866
        %v1868 = vand.u32 %v749, 4294901760
        %v1869 = vsub.f32 %v749, %v1868
        %1870 = vmatmul.f32.gmra.mxu0 %v1869
        %v1871 = vpop.f32.mrf.mxu0
        %v1872 = vadd.f32 %v1547, %v1871
        %v1873 = vand.u32 %v752, 4294901760
        %v1874 = vsub.f32 %v752, %v1873
        %1875 = vmatmul.f32.gmra.mxu0 %v1874
        %v1876 = vpop.f32.mrf.mxu0
        %v1877 = vadd.f32 %v1551, %v1876
        %v1878 = vand.u32 %v755, 4294901760
        %v1879 = vsub.f32 %v755, %v1878
        %1880 = vmatmul.f32.gmra.mxu0 %v1879
        %v1881 = vpop.f32.mrf.mxu0
        %v1882 = vadd.f32 %v1555, %v1881
        %v1883 = vand.u32 %v758, 4294901760
        %v1884 = vsub.f32 %v758, %v1883
        %1885 = vmatmul.f32.gmra.mxu0 %v1884
        %v1886 = vpop.f32.mrf.mxu0
        %v1887 = vadd.f32 %v1559, %v1886
        %v1888 = vand.u32 %v761, 4294901760
        %v1889 = vsub.f32 %v761, %v1888
        %1890 = vmatmul.f32.gmra.mxu0 %v1889
        %v1891 = vpop.f32.mrf.mxu0
        %v1892 = vadd.f32 %v1563, %v1891
        %v1893 = vand.u32 %v764, 4294901760
        %v1894 = vsub.f32 %v764, %v1893
        %1895 = vmatmul.f32.gmra.mxu0 %v1894
        %v1896 = vpop.f32.mrf.mxu0
        %v1897 = vadd.f32 %v1567, %v1896
        %v1898 = vand.u32 %v767, 4294901760
        %v1899 = vsub.f32 %v767, %v1898
        %1900 = vmatmul.f32.gmra.mxu0 %v1899
        %v1901 = vpop.f32.mrf.mxu0
        %v1902 = vadd.f32 %v1571, %v1901
        %v1903 = vand.u32 %v770, 4294901760
        %v1904 = vsub.f32 %v770, %v1903
        %1905 = vmatmul.f32.gmra.mxu0 %v1904
        %v1906 = vpop.f32.mrf.mxu0
        %v1907 = vadd.f32 %v1575, %v1906
        %v1908 = vand.u32 %v773, 4294901760
        %v1909 = vsub.f32 %v773, %v1908
        %1910 = vmatmul.f32.gmra.mxu0 %v1909
        %v1911 = vpop.f32.mrf.mxu0
        %v1912 = vadd.f32 %v1579, %v1911
        %v1913 = vand.u32 %v776, 4294901760
        %v1914 = vsub.f32 %v776, %v1913
        %1915 = vmatmul.f32.gmra.mxu0 %v1914
        %v1916 = vpop.f32.mrf.mxu0
        %v1917 = vadd.f32 %v1583, %v1916
        %v1918 = vand.u32 %v779, 4294901760
        %v1919 = vsub.f32 %v779, %v1918
        %1920 = vmatmul.f32.gmra.mxu0 %v1919
        %v1921 = vpop.f32.mrf.mxu0
        %v1922 = vadd.f32 %v1587, %v1921
        %v1923 = vand.u32 %v782, 4294901760
        %v1924 = vsub.f32 %v782, %v1923
        %1925 = vmatmul.f32.gmra.mxu0 %v1924
        %v1926 = vpop.f32.mrf.mxu0
        %v1927 = vadd.f32 %v1591, %v1926
        %v1928 = vand.u32 %v785, 4294901760
        %v1929 = vsub.f32 %v785, %v1928
        %1930 = vmatmul.f32.gmra.mxu0 %v1929
        %v1931 = vpop.f32.mrf.mxu0
        %v1932 = vadd.f32 %v1595, %v1931
        %v1933 = vand.u32 %v788, 4294901760
        %v1934 = vsub.f32 %v788, %v1933
        %1935 = vmatmul.f32.gmra.mxu0 %v1934
        %v1936 = vpop.f32.mrf.mxu0
        %v1937 = vadd.f32 %v1599, %v1936
        %v1938 = vand.u32 %v791, 4294901760
        %v1939 = vsub.f32 %v791, %v1938
        %1940 = vmatmul.f32.gmra.mxu0 %v1939
        %v1941 = vpop.f32.mrf.mxu0
        %v1942 = vadd.f32 %v1603, %v1941
        %v1943 = vand.u32 %v794, 4294901760
        %v1944 = vsub.f32 %v794, %v1943
        %1945 = vmatmul.f32.gmra.mxu0 %v1944
        %v1946 = vpop.f32.mrf.mxu0
        %v1947 = vadd.f32 %v1607, %v1946
        %v1948 = vand.u32 %v797, 4294901760
        %v1949 = vsub.f32 %v797, %v1948
        %1950 = vmatmul.f32.gmra.mxu0 %v1949
        %v1951 = vpop.f32.mrf.mxu0
        %v1952 = vadd.f32 %v1611, %v1951
        %1953 = vdwg.mxu0
        %1954 = vmatpush.msra.mxu0 0.0
        %1955 = vmatpush.msra.mxu0 0.0
        %1956 = vmatpush.msra.mxu0 0.0
        %1957 = vmatpush.msra.mxu0 0.0
        %1958 = vmatpush.msra.mxu0 0.0
        %1959 = vmatpush.msra.mxu0 0.0
        %1960 = vmatpush.msra.mxu0 0.0
        %1961 = vmatpush.msra.mxu0 0.0
        %1962 = vmatpush.msra.mxu0 0.0
        %1963 = vmatpush.msra.mxu0 0.0
        %1964 = vmatpush.msra.mxu0 0.0
        %1965 = vmatpush.msra.mxu0 0.0
        %1966 = vmatpush.msra.mxu0 0.0
        %1967 = vmatpush.msra.mxu0 0.0
        %v1968 = vand.u32 %v601, 4294901760
        %1969 = vmatpush.msra.mxu0 %v1968
        %v1970 = vand.u32 %v600, 4294901760
        %1971 = vmatpush.msra.mxu0 %v1970
        %v1972 = vand.u32 %v608, 4294901760
        %v1973 = vsub.f32 %v608, %v1972
        %v1974 = vand.u32 %v1973, 4294901760
        %1975 = vmatmul.f32.gmra.mxu0 %v1974
        %v1976 = vpop.f32.mrf.mxu0
        %v1977 = vadd.f32 %v1637, %v1976
        %v1978 = vand.u32 %v611, 4294901760
        %v1979 = vsub.f32 %v611, %v1978
        %v1980 = vand.u32 %v1979, 4294901760
        %1981 = vmatmul.f32.gmra.mxu0 %v1980
        %v1982 = vpop.f32.mrf.mxu0
        %v1983 = vadd.f32 %v1642, %v1982
        %v1984 = vand.u32 %v614, 4294901760
        %v1985 = vsub.f32 %v614, %v1984
        %v1986 = vand.u32 %v1985, 4294901760
        %1987 = vmatmul.f32.gmra.mxu0 %v1986
        %v1988 = vpop.f32.mrf.mxu0
        %v1989 = vadd.f32 %v1647, %v1988
        %v1990 = vand.u32 %v617, 4294901760
        %v1991 = vsub.f32 %v617, %v1990
        %v1992 = vand.u32 %v1991, 4294901760
        %1993 = vmatmul.f32.gmra.mxu0 %v1992
        %v1994 = vpop.f32.mrf.mxu0
        %v1995 = vadd.f32 %v1652, %v1994
        %v1996 = vand.u32 %v620, 4294901760
        %v1997 = vsub.f32 %v620, %v1996
        %v1998 = vand.u32 %v1997, 4294901760
        %1999 = vmatmul.f32.gmra.mxu0 %v1998
        %v2000 = vpop.f32.mrf.mxu0
        %v2001 = vadd.f32 %v1657, %v2000
        %v2002 = vand.u32 %v623, 4294901760
        %v2003 = vsub.f32 %v623, %v2002
        %v2004 = vand.u32 %v2003, 4294901760
        %2005 = vmatmul.f32.gmra.mxu0 %v2004
        %v2006 = vpop.f32.mrf.mxu0
        %v2007 = vadd.f32 %v1662, %v2006
        %v2008 = vand.u32 %v626, 4294901760
        %v2009 = vsub.f32 %v626, %v2008
        %v2010 = vand.u32 %v2009, 4294901760
        %2011 = vmatmul.f32.gmra.mxu0 %v2010
        %v2012 = vpop.f32.mrf.mxu0
        %v2013 = vadd.f32 %v1667, %v2012
        %v2014 = vand.u32 %v629, 4294901760
        %v2015 = vsub.f32 %v629, %v2014
        %v2016 = vand.u32 %v2015, 4294901760
        %2017 = vmatmul.f32.gmra.mxu0 %v2016
        %v2018 = vpop.f32.mrf.mxu0
        %v2019 = vadd.f32 %v1672, %v2018
        %v2020 = vand.u32 %v632, 4294901760
        %v2021 = vsub.f32 %v632, %v2020
        %v2022 = vand.u32 %v2021, 4294901760
        %2023 = vmatmul.f32.gmra.mxu0 %v2022
        %v2024 = vpop.f32.mrf.mxu0
        %v2025 = vadd.f32 %v1677, %v2024
        %v2026 = vand.u32 %v635, 4294901760
        %v2027 = vsub.f32 %v635, %v2026
        %v2028 = vand.u32 %v2027, 4294901760
        %2029 = vmatmul.f32.gmra.mxu0 %v2028
        %v2030 = vpop.f32.mrf.mxu0
        %v2031 = vadd.f32 %v1682, %v2030
        %v2032 = vand.u32 %v638, 4294901760
        %v2033 = vsub.f32 %v638, %v2032
        %v2034 = vand.u32 %v2033, 4294901760
        %2035 = vmatmul.f32.gmra.mxu0 %v2034
        %v2036 = vpop.f32.mrf.mxu0
        %v2037 = vadd.f32 %v1687, %v2036
        %v2038 = vand.u32 %v641, 4294901760
        %v2039 = vsub.f32 %v641, %v2038
        %v2040 = vand.u32 %v2039, 4294901760
        %2041 = vmatmul.f32.gmra.mxu0 %v2040
        %v2042 = vpop.f32.mrf.mxu0
        %v2043 = vadd.f32 %v1692, %v2042
        %v2044 = vand.u32 %v644, 4294901760
        %v2045 = vsub.f32 %v644, %v2044
        %v2046 = vand.u32 %v2045, 4294901760
        %2047 = vmatmul.f32.gmra.mxu0 %v2046
        %v2048 = vpop.f32.mrf.mxu0
        %v2049 = vadd.f32 %v1697, %v2048
        %v2050 = vand.u32 %v647, 4294901760
        %v2051 = vsub.f32 %v647, %v2050
        %v2052 = vand.u32 %v2051, 4294901760
        %2053 = vmatmul.f32.gmra.mxu0 %v2052
        %v2054 = vpop.f32.mrf.mxu0
        %v2055 = vadd.f32 %v1702, %v2054
        %v2056 = vand.u32 %v650, 4294901760
        %v2057 = vsub.f32 %v650, %v2056
        %v2058 = vand.u32 %v2057, 4294901760
        %2059 = vmatmul.f32.gmra.mxu0 %v2058
        %v2060 = vpop.f32.mrf.mxu0
        %v2061 = vadd.f32 %v1707, %v2060
        %v2062 = vand.u32 %v653, 4294901760
        %v2063 = vsub.f32 %v653, %v2062
        %v2064 = vand.u32 %v2063, 4294901760
        %2065 = vmatmul.f32.gmra.mxu0 %v2064
        %v2066 = vpop.f32.mrf.mxu0
        %v2067 = vadd.f32 %v1712, %v2066
        %v2068 = vand.u32 %v656, 4294901760
        %v2069 = vsub.f32 %v656, %v2068
        %v2070 = vand.u32 %v2069, 4294901760
        %2071 = vmatmul.f32.gmra.mxu0 %v2070
        %v2072 = vpop.f32.mrf.mxu0
        %v2073 = vadd.f32 %v1717, %v2072
        %v2074 = vand.u32 %v659, 4294901760
        %v2075 = vsub.f32 %v659, %v2074
        %v2076 = vand.u32 %v2075, 4294901760
        %2077 = vmatmul.f32.gmra.mxu0 %v2076
        %v2078 = vpop.f32.mrf.mxu0
        %v2079 = vadd.f32 %v1722, %v2078
        %v2080 = vand.u32 %v662, 4294901760
        %v2081 = vsub.f32 %v662, %v2080
        %v2082 = vand.u32 %v2081, 4294901760
        %2083 = vmatmul.f32.gmra.mxu0 %v2082
        %v2084 = vpop.f32.mrf.mxu0
        %v2085 = vadd.f32 %v1727, %v2084
        %v2086 = vand.u32 %v665, 4294901760
        %v2087 = vsub.f32 %v665, %v2086
        %v2088 = vand.u32 %v2087, 4294901760
        %2089 = vmatmul.f32.gmra.mxu0 %v2088
        %v2090 = vpop.f32.mrf.mxu0
        %v2091 = vadd.f32 %v1732, %v2090
        %v2092 = vand.u32 %v668, 4294901760
        %v2093 = vsub.f32 %v668, %v2092
        %v2094 = vand.u32 %v2093, 4294901760
        %2095 = vmatmul.f32.gmra.mxu0 %v2094
        %v2096 = vpop.f32.mrf.mxu0
        %v2097 = vadd.f32 %v1737, %v2096
        %v2098 = vand.u32 %v671, 4294901760
        %v2099 = vsub.f32 %v671, %v2098
        %v2100 = vand.u32 %v2099, 4294901760
        %2101 = vmatmul.f32.gmra.mxu0 %v2100
        %v2102 = vpop.f32.mrf.mxu0
        %v2103 = vadd.f32 %v1742, %v2102
        %v2104 = vand.u32 %v674, 4294901760
        %v2105 = vsub.f32 %v674, %v2104
        %v2106 = vand.u32 %v2105, 4294901760
        %2107 = vmatmul.f32.gmra.mxu0 %v2106
        %v2108 = vpop.f32.mrf.mxu0
        %v2109 = vadd.f32 %v1747, %v2108
        %v2110 = vand.u32 %v677, 4294901760
        %v2111 = vsub.f32 %v677, %v2110
        %v2112 = vand.u32 %v2111, 4294901760
        %2113 = vmatmul.f32.gmra.mxu0 %v2112
        %v2114 = vpop.f32.mrf.mxu0
        %v2115 = vadd.f32 %v1752, %v2114
        %v2116 = vand.u32 %v680, 4294901760
        %v2117 = vsub.f32 %v680, %v2116
        %v2118 = vand.u32 %v2117, 4294901760
        %2119 = vmatmul.f32.gmra.mxu0 %v2118
        %v2120 = vpop.f32.mrf.mxu0
        %v2121 = vadd.f32 %v1757, %v2120
        %v2122 = vand.u32 %v683, 4294901760
        %v2123 = vsub.f32 %v683, %v2122
        %v2124 = vand.u32 %v2123, 4294901760
        %2125 = vmatmul.f32.gmra.mxu0 %v2124
        %v2126 = vpop.f32.mrf.mxu0
        %v2127 = vadd.f32 %v1762, %v2126
        %v2128 = vand.u32 %v686, 4294901760
        %v2129 = vsub.f32 %v686, %v2128
        %v2130 = vand.u32 %v2129, 4294901760
        %2131 = vmatmul.f32.gmra.mxu0 %v2130
        %v2132 = vpop.f32.mrf.mxu0
        %v2133 = vadd.f32 %v1767, %v2132
        %v2134 = vand.u32 %v689, 4294901760
        %v2135 = vsub.f32 %v689, %v2134
        %v2136 = vand.u32 %v2135, 4294901760
        %2137 = vmatmul.f32.gmra.mxu0 %v2136
        %v2138 = vpop.f32.mrf.mxu0
        %v2139 = vadd.f32 %v1772, %v2138
        %v2140 = vand.u32 %v692, 4294901760
        %v2141 = vsub.f32 %v692, %v2140
        %v2142 = vand.u32 %v2141, 4294901760
        %2143 = vmatmul.f32.gmra.mxu0 %v2142
        %v2144 = vpop.f32.mrf.mxu0
        %v2145 = vadd.f32 %v1777, %v2144
        %v2146 = vand.u32 %v695, 4294901760
        %v2147 = vsub.f32 %v695, %v2146
        %v2148 = vand.u32 %v2147, 4294901760
        %2149 = vmatmul.f32.gmra.mxu0 %v2148
        %v2150 = vpop.f32.mrf.mxu0
        %v2151 = vadd.f32 %v1782, %v2150
        %v2152 = vand.u32 %v698, 4294901760
        %v2153 = vsub.f32 %v698, %v2152
        %v2154 = vand.u32 %v2153, 4294901760
        %2155 = vmatmul.f32.gmra.mxu0 %v2154
        %v2156 = vpop.f32.mrf.mxu0
        %v2157 = vadd.f32 %v1787, %v2156
        %v2158 = vand.u32 %v701, 4294901760
        %v2159 = vsub.f32 %v701, %v2158
        %v2160 = vand.u32 %v2159, 4294901760
        %2161 = vmatmul.f32.gmra.mxu0 %v2160
        %v2162 = vpop.f32.mrf.mxu0
        %v2163 = vadd.f32 %v1792, %v2162
        %v2164 = vand.u32 %v704, 4294901760
        %v2165 = vsub.f32 %v704, %v2164
        %v2166 = vand.u32 %v2165, 4294901760
        %2167 = vmatmul.f32.gmra.mxu0 %v2166
        %v2168 = vpop.f32.mrf.mxu0
        %v2169 = vadd.f32 %v1797, %v2168
        %v2170 = vand.u32 %v707, 4294901760
        %v2171 = vsub.f32 %v707, %v2170
        %v2172 = vand.u32 %v2171, 4294901760
        %2173 = vmatmul.f32.gmra.mxu0 %v2172
        %v2174 = vpop.f32.mrf.mxu0
        %v2175 = vadd.f32 %v1802, %v2174
        %v2176 = vand.u32 %v710, 4294901760
        %v2177 = vsub.f32 %v710, %v2176
        %v2178 = vand.u32 %v2177, 4294901760
        %2179 = vmatmul.f32.gmra.mxu0 %v2178
        %v2180 = vpop.f32.mrf.mxu0
        %v2181 = vadd.f32 %v1807, %v2180
        %v2182 = vand.u32 %v713, 4294901760
        %v2183 = vsub.f32 %v713, %v2182
        %v2184 = vand.u32 %v2183, 4294901760
        %2185 = vmatmul.f32.gmra.mxu0 %v2184
        %v2186 = vpop.f32.mrf.mxu0
        %v2187 = vadd.f32 %v1812, %v2186
        %v2188 = vand.u32 %v716, 4294901760
        %v2189 = vsub.f32 %v716, %v2188
        %v2190 = vand.u32 %v2189, 4294901760
        %2191 = vmatmul.f32.gmra.mxu0 %v2190
        %v2192 = vpop.f32.mrf.mxu0
        %v2193 = vadd.f32 %v1817, %v2192
        %v2194 = vand.u32 %v719, 4294901760
        %v2195 = vsub.f32 %v719, %v2194
        %v2196 = vand.u32 %v2195, 4294901760
        %2197 = vmatmul.f32.gmra.mxu0 %v2196
        %v2198 = vpop.f32.mrf.mxu0
        %v2199 = vadd.f32 %v1822, %v2198
        %v2200 = vand.u32 %v722, 4294901760
        %v2201 = vsub.f32 %v722, %v2200
        %v2202 = vand.u32 %v2201, 4294901760
        %2203 = vmatmul.f32.gmra.mxu0 %v2202
        %v2204 = vpop.f32.mrf.mxu0
        %v2205 = vadd.f32 %v1827, %v2204
        %v2206 = vand.u32 %v725, 4294901760
        %v2207 = vsub.f32 %v725, %v2206
        %v2208 = vand.u32 %v2207, 4294901760
        %2209 = vmatmul.f32.gmra.mxu0 %v2208
        %v2210 = vpop.f32.mrf.mxu0
        %v2211 = vadd.f32 %v1832, %v2210
        %v2212 = vand.u32 %v728, 4294901760
        %v2213 = vsub.f32 %v728, %v2212
        %v2214 = vand.u32 %v2213, 4294901760
        %2215 = vmatmul.f32.gmra.mxu0 %v2214
        %v2216 = vpop.f32.mrf.mxu0
        %v2217 = vadd.f32 %v1837, %v2216
        %v2218 = vand.u32 %v731, 4294901760
        %v2219 = vsub.f32 %v731, %v2218
        %v2220 = vand.u32 %v2219, 4294901760
        %2221 = vmatmul.f32.gmra.mxu0 %v2220
        %v2222 = vpop.f32.mrf.mxu0
        %v2223 = vadd.f32 %v1842, %v2222
        %v2224 = vand.u32 %v734, 4294901760
        %v2225 = vsub.f32 %v734, %v2224
        %v2226 = vand.u32 %v2225, 4294901760
        %2227 = vmatmul.f32.gmra.mxu0 %v2226
        %v2228 = vpop.f32.mrf.mxu0
        %v2229 = vadd.f32 %v1847, %v2228
        %v2230 = vand.u32 %v737, 4294901760
        %v2231 = vsub.f32 %v737, %v2230
        %v2232 = vand.u32 %v2231, 4294901760
        %2233 = vmatmul.f32.gmra.mxu0 %v2232
        %v2234 = vpop.f32.mrf.mxu0
        %v2235 = vadd.f32 %v1852, %v2234
        %v2236 = vand.u32 %v740, 4294901760
        %v2237 = vsub.f32 %v740, %v2236
        %v2238 = vand.u32 %v2237, 4294901760
        %2239 = vmatmul.f32.gmra.mxu0 %v2238
        %v2240 = vpop.f32.mrf.mxu0
        %v2241 = vadd.f32 %v1857, %v2240
        %v2242 = vand.u32 %v743, 4294901760
        %v2243 = vsub.f32 %v743, %v2242
        %v2244 = vand.u32 %v2243, 4294901760
        %2245 = vmatmul.f32.gmra.mxu0 %v2244
        %v2246 = vpop.f32.mrf.mxu0
        %v2247 = vadd.f32 %v1862, %v2246
        %v2248 = vand.u32 %v746, 4294901760
        %v2249 = vsub.f32 %v746, %v2248
        %v2250 = vand.u32 %v2249, 4294901760
        %2251 = vmatmul.f32.gmra.mxu0 %v2250
        %v2252 = vpop.f32.mrf.mxu0
        %v2253 = vadd.f32 %v1867, %v2252
        %v2254 = vand.u32 %v749, 4294901760
        %v2255 = vsub.f32 %v749, %v2254
        %v2256 = vand.u32 %v2255, 4294901760
        %2257 = vmatmul.f32.gmra.mxu0 %v2256
        %v2258 = vpop.f32.mrf.mxu0
        %v2259 = vadd.f32 %v1872, %v2258
        %v2260 = vand.u32 %v752, 4294901760
        %v2261 = vsub.f32 %v752, %v2260
        %v2262 = vand.u32 %v2261, 4294901760
        %2263 = vmatmul.f32.gmra.mxu0 %v2262
        %v2264 = vpop.f32.mrf.mxu0
        %v2265 = vadd.f32 %v1877, %v2264
        %v2266 = vand.u32 %v755, 4294901760
        %v2267 = vsub.f32 %v755, %v2266
        %v2268 = vand.u32 %v2267, 4294901760
        %2269 = vmatmul.f32.gmra.mxu0 %v2268
        %v2270 = vpop.f32.mrf.mxu0
        %v2271 = vadd.f32 %v1882, %v2270
        %v2272 = vand.u32 %v758, 4294901760
        %v2273 = vsub.f32 %v758, %v2272
        %v2274 = vand.u32 %v2273, 4294901760
        %2275 = vmatmul.f32.gmra.mxu0 %v2274
        %v2276 = vpop.f32.mrf.mxu0
        %v2277 = vadd.f32 %v1887, %v2276
        %v2278 = vand.u32 %v761, 4294901760
        %v2279 = vsub.f32 %v761, %v2278
        %v2280 = vand.u32 %v2279, 4294901760
        %2281 = vmatmul.f32.gmra.mxu0 %v2280
        %v2282 = vpop.f32.mrf.mxu0
        %v2283 = vadd.f32 %v1892, %v2282
        %v2284 = vand.u32 %v764, 4294901760
        %v2285 = vsub.f32 %v764, %v2284
        %v2286 = vand.u32 %v2285, 4294901760
        %2287 = vmatmul.f32.gmra.mxu0 %v2286
        %v2288 = vpop.f32.mrf.mxu0
        %v2289 = vadd.f32 %v1897, %v2288
        %v2290 = vand.u32 %v767, 4294901760
        %v2291 = vsub.f32 %v767, %v2290
        %v2292 = vand.u32 %v2291, 4294901760
        %2293 = vmatmul.f32.gmra.mxu0 %v2292
        %v2294 = vpop.f32.mrf.mxu0
        %v2295 = vadd.f32 %v1902, %v2294
        %v2296 = vand.u32 %v770, 4294901760
        %v2297 = vsub.f32 %v770, %v2296
        %v2298 = vand.u32 %v2297, 4294901760
        %2299 = vmatmul.f32.gmra.mxu0 %v2298
        %v2300 = vpop.f32.mrf.mxu0
        %v2301 = vadd.f32 %v1907, %v2300
        %v2302 = vand.u32 %v773, 4294901760
        %v2303 = vsub.f32 %v773, %v2302
        %v2304 = vand.u32 %v2303, 4294901760
        %2305 = vmatmul.f32.gmra.mxu0 %v2304
        %v2306 = vpop.f32.mrf.mxu0
        %v2307 = vadd.f32 %v1912, %v2306
        %v2308 = vand.u32 %v776, 4294901760
        %v2309 = vsub.f32 %v776, %v2308
        %v2310 = vand.u32 %v2309, 4294901760
        %2311 = vmatmul.f32.gmra.mxu0 %v2310
        %v2312 = vpop.f32.mrf.mxu0
        %v2313 = vadd.f32 %v1917, %v2312
        %v2314 = vand.u32 %v779, 4294901760
        %v2315 = vsub.f32 %v779, %v2314
        %v2316 = vand.u32 %v2315, 4294901760
        %2317 = vmatmul.f32.gmra.mxu0 %v2316
        %v2318 = vpop.f32.mrf.mxu0
        %v2319 = vadd.f32 %v1922, %v2318
        %v2320 = vand.u32 %v782, 4294901760
        %v2321 = vsub.f32 %v782, %v2320
        %v2322 = vand.u32 %v2321, 4294901760
        %2323 = vmatmul.f32.gmra.mxu0 %v2322
        %v2324 = vpop.f32.mrf.mxu0
        %v2325 = vadd.f32 %v1927, %v2324
        %v2326 = vand.u32 %v785, 4294901760
        %v2327 = vsub.f32 %v785, %v2326
        %v2328 = vand.u32 %v2327, 4294901760
        %2329 = vmatmul.f32.gmra.mxu0 %v2328
        %v2330 = vpop.f32.mrf.mxu0
        %v2331 = vadd.f32 %v1932, %v2330
        %v2332 = vand.u32 %v788, 4294901760
        %v2333 = vsub.f32 %v788, %v2332
        %v2334 = vand.u32 %v2333, 4294901760
        %2335 = vmatmul.f32.gmra.mxu0 %v2334
        %v2336 = vpop.f32.mrf.mxu0
        %v2337 = vadd.f32 %v1937, %v2336
        %v2338 = vand.u32 %v791, 4294901760
        %v2339 = vsub.f32 %v791, %v2338
        %v2340 = vand.u32 %v2339, 4294901760
        %2341 = vmatmul.f32.gmra.mxu0 %v2340
        %v2342 = vpop.f32.mrf.mxu0
        %v2343 = vadd.f32 %v1942, %v2342
        %v2344 = vand.u32 %v794, 4294901760
        %v2345 = vsub.f32 %v794, %v2344
        %v2346 = vand.u32 %v2345, 4294901760
        %2347 = vmatmul.f32.gmra.mxu0 %v2346
        %v2348 = vpop.f32.mrf.mxu0
        %v2349 = vadd.f32 %v1947, %v2348
        %v2350 = vand.u32 %v797, 4294901760
        %v2351 = vsub.f32 %v797, %v2350
        %v2352 = vand.u32 %v2351, 4294901760
        %2353 = vmatmul.f32.gmra.mxu0 %v2352
        %v2354 = vpop.f32.mrf.mxu0
        %v2355 = vadd.f32 %v1952, %v2354
        %2356 = vdwg.mxu0
        %2357 = vmatpush.msra.mxu0 0.0
        %2358 = vmatpush.msra.mxu0 0.0
        %2359 = vmatpush.msra.mxu0 0.0
        %2360 = vmatpush.msra.mxu0 0.0
        %2361 = vmatpush.msra.mxu0 0.0
        %2362 = vmatpush.msra.mxu0 0.0
        %2363 = vmatpush.msra.mxu0 0.0
        %2364 = vmatpush.msra.mxu0 0.0
        %2365 = vmatpush.msra.mxu0 0.0
        %2366 = vmatpush.msra.mxu0 0.0
        %2367 = vmatpush.msra.mxu0 0.0
        %2368 = vmatpush.msra.mxu0 0.0
        %2369 = vmatpush.msra.mxu0 0.0
        %2370 = vmatpush.msra.mxu0 0.0
        %v2371 = vand.u32 %v601, 4294901760
        %v2372 = vsub.f32 %v601, %v2371
        %v2373 = vand.u32 %v2372, 4294901760
        %2374 = vmatpush.msra.mxu0 %v2373
        %v2375 = vand.u32 %v600, 4294901760
        %v2376 = vsub.f32 %v600, %v2375
        %v2377 = vand.u32 %v2376, 4294901760
        %2378 = vmatpush.msra.mxu0 %v2377
        %v2379 = vand.u32 %v608, 4294901760
        %2380 = vmatmul.f32.gmra.mxu0 %v2379
        %v2381 = vpop.f32.mrf.mxu0
        %v2382 = vadd.f32 %v1977, %v2381
        %v2383 = vand.u32 %v611, 4294901760
        %2384 = vmatmul.f32.gmra.mxu0 %v2383
        %v2385 = vpop.f32.mrf.mxu0
        %v2386 = vadd.f32 %v1983, %v2385
        %v2387 = vand.u32 %v614, 4294901760
        %2388 = vmatmul.f32.gmra.mxu0 %v2387
        %v2389 = vpop.f32.mrf.mxu0
        %v2390 = vadd.f32 %v1989, %v2389
        %v2391 = vand.u32 %v617, 4294901760
        %2392 = vmatmul.f32.gmra.mxu0 %v2391
        %v2393 = vpop.f32.mrf.mxu0
        %v2394 = vadd.f32 %v1995, %v2393
        %v2395 = vand.u32 %v620, 4294901760
        %2396 = vmatmul.f32.gmra.mxu0 %v2395
        %v2397 = vpop.f32.mrf.mxu0
        %v2398 = vadd.f32 %v2001, %v2397
        %v2399 = vand.u32 %v623, 4294901760
        %2400 = vmatmul.f32.gmra.mxu0 %v2399
        %v2401 = vpop.f32.mrf.mxu0
        %v2402 = vadd.f32 %v2007, %v2401
        %v2403 = vand.u32 %v626, 4294901760
        %2404 = vmatmul.f32.gmra.mxu0 %v2403
        %v2405 = vpop.f32.mrf.mxu0
        %v2406 = vadd.f32 %v2013, %v2405
        %v2407 = vand.u32 %v629, 4294901760
        %2408 = vmatmul.f32.gmra.mxu0 %v2407
        %v2409 = vpop.f32.mrf.mxu0
        %v2410 = vadd.f32 %v2019, %v2409
        %v2411 = vand.u32 %v632, 4294901760
        %2412 = vmatmul.f32.gmra.mxu0 %v2411
        %v2413 = vpop.f32.mrf.mxu0
        %v2414 = vadd.f32 %v2025, %v2413
        %v2415 = vand.u32 %v635, 4294901760
        %2416 = vmatmul.f32.gmra.mxu0 %v2415
        %v2417 = vpop.f32.mrf.mxu0
        %v2418 = vadd.f32 %v2031, %v2417
        %v2419 = vand.u32 %v638, 4294901760
        %2420 = vmatmul.f32.gmra.mxu0 %v2419
        %v2421 = vpop.f32.mrf.mxu0
        %v2422 = vadd.f32 %v2037, %v2421
        %v2423 = vand.u32 %v641, 4294901760
        %2424 = vmatmul.f32.gmra.mxu0 %v2423
        %v2425 = vpop.f32.mrf.mxu0
        %v2426 = vadd.f32 %v2043, %v2425
        %v2427 = vand.u32 %v644, 4294901760
        %2428 = vmatmul.f32.gmra.mxu0 %v2427
        %v2429 = vpop.f32.mrf.mxu0
        %v2430 = vadd.f32 %v2049, %v2429
        %v2431 = vand.u32 %v647, 4294901760
        %2432 = vmatmul.f32.gmra.mxu0 %v2431
        %v2433 = vpop.f32.mrf.mxu0
        %v2434 = vadd.f32 %v2055, %v2433
        %v2435 = vand.u32 %v650, 4294901760
        %2436 = vmatmul.f32.gmra.mxu0 %v2435
        %v2437 = vpop.f32.mrf.mxu0
        %v2438 = vadd.f32 %v2061, %v2437
        %v2439 = vand.u32 %v653, 4294901760
        %2440 = vmatmul.f32.gmra.mxu0 %v2439
        %v2441 = vpop.f32.mrf.mxu0
        %v2442 = vadd.f32 %v2067, %v2441
        %v2443 = vand.u32 %v656, 4294901760
        %2444 = vmatmul.f32.gmra.mxu0 %v2443
        %v2445 = vpop.f32.mrf.mxu0
        %v2446 = vadd.f32 %v2073, %v2445
        %v2447 = vand.u32 %v659, 4294901760
        %2448 = vmatmul.f32.gmra.mxu0 %v2447
        %v2449 = vpop.f32.mrf.mxu0
        %v2450 = vadd.f32 %v2079, %v2449
        %v2451 = vand.u32 %v662, 4294901760
        %2452 = vmatmul.f32.gmra.mxu0 %v2451
        %v2453 = vpop.f32.mrf.mxu0
        %v2454 = vadd.f32 %v2085, %v2453
        %v2455 = vand.u32 %v665, 4294901760
        %2456 = vmatmul.f32.gmra.mxu0 %v2455
        %v2457 = vpop.f32.mrf.mxu0
        %v2458 = vadd.f32 %v2091, %v2457
        %v2459 = vand.u32 %v668, 4294901760
        %2460 = vmatmul.f32.gmra.mxu0 %v2459
        %v2461 = vpop.f32.mrf.mxu0
        %v2462 = vadd.f32 %v2097, %v2461
        %v2463 = vand.u32 %v671, 4294901760
        %2464 = vmatmul.f32.gmra.mxu0 %v2463
        %v2465 = vpop.f32.mrf.mxu0
        %v2466 = vadd.f32 %v2103, %v2465
        %v2467 = vand.u32 %v674, 4294901760
        %2468 = vmatmul.f32.gmra.mxu0 %v2467
        %v2469 = vpop.f32.mrf.mxu0
        %v2470 = vadd.f32 %v2109, %v2469
        %v2471 = vand.u32 %v677, 4294901760
        %2472 = vmatmul.f32.gmra.mxu0 %v2471
        %v2473 = vpop.f32.mrf.mxu0
        %v2474 = vadd.f32 %v2115, %v2473
        %v2475 = vand.u32 %v680, 4294901760
        %2476 = vmatmul.f32.gmra.mxu0 %v2475
        %v2477 = vpop.f32.mrf.mxu0
        %v2478 = vadd.f32 %v2121, %v2477
        %v2479 = vand.u32 %v683, 4294901760
        %2480 = vmatmul.f32.gmra.mxu0 %v2479
        %v2481 = vpop.f32.mrf.mxu0
        %v2482 = vadd.f32 %v2127, %v2481
        %v2483 = vand.u32 %v686, 4294901760
        %2484 = vmatmul.f32.gmra.mxu0 %v2483
        %v2485 = vpop.f32.mrf.mxu0
        %v2486 = vadd.f32 %v2133, %v2485
        %v2487 = vand.u32 %v689, 4294901760
        %2488 = vmatmul.f32.gmra.mxu0 %v2487
        %v2489 = vpop.f32.mrf.mxu0
        %v2490 = vadd.f32 %v2139, %v2489
        %v2491 = vand.u32 %v692, 4294901760
        %2492 = vmatmul.f32.gmra.mxu0 %v2491
        %v2493 = vpop.f32.mrf.mxu0
        %v2494 = vadd.f32 %v2145, %v2493
        %v2495 = vand.u32 %v695, 4294901760
        %2496 = vmatmul.f32.gmra.mxu0 %v2495
        %v2497 = vpop.f32.mrf.mxu0
        %v2498 = vadd.f32 %v2151, %v2497
        %v2499 = vand.u32 %v698, 4294901760
        %2500 = vmatmul.f32.gmra.mxu0 %v2499
        %v2501 = vpop.f32.mrf.mxu0
        %v2502 = vadd.f32 %v2157, %v2501
        %v2503 = vand.u32 %v701, 4294901760
        %2504 = vmatmul.f32.gmra.mxu0 %v2503
        %v2505 = vpop.f32.mrf.mxu0
        %v2506 = vadd.f32 %v2163, %v2505
        %v2507 = vand.u32 %v704, 4294901760
        %2508 = vmatmul.f32.gmra.mxu0 %v2507
        %v2509 = vpop.f32.mrf.mxu0
        %v2510 = vadd.f32 %v2169, %v2509
        %v2511 = vand.u32 %v707, 4294901760
        %2512 = vmatmul.f32.gmra.mxu0 %v2511
        %v2513 = vpop.f32.mrf.mxu0
        %v2514 = vadd.f32 %v2175, %v2513
        %v2515 = vand.u32 %v710, 4294901760
        %2516 = vmatmul.f32.gmra.mxu0 %v2515
        %v2517 = vpop.f32.mrf.mxu0
        %v2518 = vadd.f32 %v2181, %v2517
        %v2519 = vand.u32 %v713, 4294901760
        %2520 = vmatmul.f32.gmra.mxu0 %v2519
        %v2521 = vpop.f32.mrf.mxu0
        %v2522 = vadd.f32 %v2187, %v2521
        %v2523 = vand.u32 %v716, 4294901760
        %2524 = vmatmul.f32.gmra.mxu0 %v2523
        %v2525 = vpop.f32.mrf.mxu0
        %v2526 = vadd.f32 %v2193, %v2525
        %v2527 = vand.u32 %v719, 4294901760
        %2528 = vmatmul.f32.gmra.mxu0 %v2527
        %v2529 = vpop.f32.mrf.mxu0
        %v2530 = vadd.f32 %v2199, %v2529
        %v2531 = vand.u32 %v722, 4294901760
        %2532 = vmatmul.f32.gmra.mxu0 %v2531
        %v2533 = vpop.f32.mrf.mxu0
        %v2534 = vadd.f32 %v2205, %v2533
        %v2535 = vand.u32 %v725, 4294901760
        %2536 = vmatmul.f32.gmra.mxu0 %v2535
        %v2537 = vpop.f32.mrf.mxu0
        %v2538 = vadd.f32 %v2211, %v2537
        %v2539 = vand.u32 %v728, 4294901760
        %2540 = vmatmul.f32.gmra.mxu0 %v2539
        %v2541 = vpop.f32.mrf.mxu0
        %v2542 = vadd.f32 %v2217, %v2541
        %v2543 = vand.u32 %v731, 4294901760
        %2544 = vmatmul.f32.gmra.mxu0 %v2543
        %v2545 = vpop.f32.mrf.mxu0
        %v2546 = vadd.f32 %v2223, %v2545
        %v2547 = vand.u32 %v734, 4294901760
        %2548 = vmatmul.f32.gmra.mxu0 %v2547
        %v2549 = vpop.f32.mrf.mxu0
        %v2550 = vadd.f32 %v2229, %v2549
        %v2551 = vand.u32 %v737, 4294901760
        %2552 = vmatmul.f32.gmra.mxu0 %v2551
        %v2553 = vpop.f32.mrf.mxu0
        %v2554 = vadd.f32 %v2235, %v2553
        %v2555 = vand.u32 %v740, 4294901760
        %2556 = vmatmul.f32.gmra.mxu0 %v2555
        %v2557 = vpop.f32.mrf.mxu0
        %v2558 = vadd.f32 %v2241, %v2557
        %v2559 = vand.u32 %v743, 4294901760
        %2560 = vmatmul.f32.gmra.mxu0 %v2559
        %v2561 = vpop.f32.mrf.mxu0
        %v2562 = vadd.f32 %v2247, %v2561
        %v2563 = vand.u32 %v746, 4294901760
        %2564 = vmatmul.f32.gmra.mxu0 %v2563
        %v2565 = vpop.f32.mrf.mxu0
        %v2566 = vadd.f32 %v2253, %v2565
        %v2567 = vand.u32 %v749, 4294901760
        %2568 = vmatmul.f32.gmra.mxu0 %v2567
        %v2569 = vpop.f32.mrf.mxu0
        %v2570 = vadd.f32 %v2259, %v2569
        %v2571 = vand.u32 %v752, 4294901760
        %2572 = vmatmul.f32.gmra.mxu0 %v2571
        %v2573 = vpop.f32.mrf.mxu0
        %v2574 = vadd.f32 %v2265, %v2573
        %v2575 = vand.u32 %v755, 4294901760
        %2576 = vmatmul.f32.gmra.mxu0 %v2575
        %v2577 = vpop.f32.mrf.mxu0
        %v2578 = vadd.f32 %v2271, %v2577
        %v2579 = vand.u32 %v758, 4294901760
        %2580 = vmatmul.f32.gmra.mxu0 %v2579
        %v2581 = vpop.f32.mrf.mxu0
        %v2582 = vadd.f32 %v2277, %v2581
        %v2583 = vand.u32 %v761, 4294901760
        %2584 = vmatmul.f32.gmra.mxu0 %v2583
        %v2585 = vpop.f32.mrf.mxu0
        %v2586 = vadd.f32 %v2283, %v2585
        %v2587 = vand.u32 %v764, 4294901760
        %2588 = vmatmul.f32.gmra.mxu0 %v2587
        %v2589 = vpop.f32.mrf.mxu0
        %v2590 = vadd.f32 %v2289, %v2589
        %v2591 = vand.u32 %v767, 4294901760
        %2592 = vmatmul.f32.gmra.mxu0 %v2591
        %v2593 = vpop.f32.mrf.mxu0
        %v2594 = vadd.f32 %v2295, %v2593
        %v2595 = vand.u32 %v770, 4294901760
        %2596 = vmatmul.f32.gmra.mxu0 %v2595
        %v2597 = vpop.f32.mrf.mxu0
        %v2598 = vadd.f32 %v2301, %v2597
        %v2599 = vand.u32 %v773, 4294901760
        %2600 = vmatmul.f32.gmra.mxu0 %v2599
        %v2601 = vpop.f32.mrf.mxu0
        %v2602 = vadd.f32 %v2307, %v2601
        %v2603 = vand.u32 %v776, 4294901760
        %2604 = vmatmul.f32.gmra.mxu0 %v2603
        %v2605 = vpop.f32.mrf.mxu0
        %v2606 = vadd.f32 %v2313, %v2605
        %v2607 = vand.u32 %v779, 4294901760
        %2608 = vmatmul.f32.gmra.mxu0 %v2607
        %v2609 = vpop.f32.mrf.mxu0
        %v2610 = vadd.f32 %v2319, %v2609
        %v2611 = vand.u32 %v782, 4294901760
        %2612 = vmatmul.f32.gmra.mxu0 %v2611
        %v2613 = vpop.f32.mrf.mxu0
        %v2614 = vadd.f32 %v2325, %v2613
        %v2615 = vand.u32 %v785, 4294901760
        %2616 = vmatmul.f32.gmra.mxu0 %v2615
        %v2617 = vpop.f32.mrf.mxu0
        %v2618 = vadd.f32 %v2331, %v2617
        %v2619 = vand.u32 %v788, 4294901760
        %2620 = vmatmul.f32.gmra.mxu0 %v2619
        %v2621 = vpop.f32.mrf.mxu0
        %v2622 = vadd.f32 %v2337, %v2621
        %v2623 = vand.u32 %v791, 4294901760
        %2624 = vmatmul.f32.gmra.mxu0 %v2623
        %v2625 = vpop.f32.mrf.mxu0
        %v2626 = vadd.f32 %v2343, %v2625
        %v2627 = vand.u32 %v794, 4294901760
        %2628 = vmatmul.f32.gmra.mxu0 %v2627
        %v2629 = vpop.f32.mrf.mxu0
        %v2630 = vadd.f32 %v2349, %v2629
        %v2631 = vand.u32 %v797, 4294901760
        %2632 = vmatmul.f32.gmra.mxu0 %v2631
        %v2633 = vpop.f32.mrf.mxu0
        %v2634 = vadd.f32 %v2355, %v2633
        %2635 = vdwg.mxu0
        %2636 = vmatpush.msra.mxu0 0.0
        %2637 = vmatpush.msra.mxu0 0.0
        %2638 = vmatpush.msra.mxu0 0.0
        %2639 = vmatpush.msra.mxu0 0.0
        %2640 = vmatpush.msra.mxu0 0.0
        %2641 = vmatpush.msra.mxu0 0.0
        %2642 = vmatpush.msra.mxu0 0.0
        %2643 = vmatpush.msra.mxu0 0.0
        %2644 = vmatpush.msra.mxu0 0.0
        %2645 = vmatpush.msra.mxu0 0.0
        %2646 = vmatpush.msra.mxu0 0.0
        %2647 = vmatpush.msra.mxu0 0.0
        %2648 = vmatpush.msra.mxu0 0.0
        %2649 = vmatpush.msra.mxu0 0.0
        %v2650 = vand.u32 %v601, 4294901760
        %2651 = vmatpush.msra.mxu0 %v2650
        %v2652 = vand.u32 %v600, 4294901760
        %2653 = vmatpush.msra.mxu0 %v2652
        %v2654 = vand.u32 %v608, 4294901760
        %2655 = vmatmul.f32.gmra.mxu0 %v2654
        %v2656 = vpop.f32.mrf.mxu0
        %v2657 = vadd.f32 %v2382, %v2656
        %v2658 = vand.u32 %v611, 4294901760
        %2659 = vmatmul.f32.gmra.mxu0 %v2658
        %v2660 = vpop.f32.mrf.mxu0
        %v2661 = vadd.f32 %v2386, %v2660
        %v2662 = vand.u32 %v614, 4294901760
        %2663 = vmatmul.f32.gmra.mxu0 %v2662
        %v2664 = vpop.f32.mrf.mxu0
        %v2665 = vadd.f32 %v2390, %v2664
        %v2666 = vand.u32 %v617, 4294901760
        %2667 = vmatmul.f32.gmra.mxu0 %v2666
        %v2668 = vpop.f32.mrf.mxu0
        %v2669 = vadd.f32 %v2394, %v2668
        %v2670 = vand.u32 %v620, 4294901760
        %2671 = vmatmul.f32.gmra.mxu0 %v2670
        %v2672 = vpop.f32.mrf.mxu0
        %v2673 = vadd.f32 %v2398, %v2672
        %v2674 = vand.u32 %v623, 4294901760
        %2675 = vmatmul.f32.gmra.mxu0 %v2674
        %v2676 = vpop.f32.mrf.mxu0
        %v2677 = vadd.f32 %v2402, %v2676
        %v2678 = vand.u32 %v626, 4294901760
        %2679 = vmatmul.f32.gmra.mxu0 %v2678
        %v2680 = vpop.f32.mrf.mxu0
        %v2681 = vadd.f32 %v2406, %v2680
        %v2682 = vand.u32 %v629, 4294901760
        %2683 = vmatmul.f32.gmra.mxu0 %v2682
        %v2684 = vpop.f32.mrf.mxu0
        %v2685 = vadd.f32 %v2410, %v2684
        %v2686 = vand.u32 %v632, 4294901760
        %2687 = vmatmul.f32.gmra.mxu0 %v2686
        %v2688 = vpop.f32.mrf.mxu0
        %v2689 = vadd.f32 %v2414, %v2688
        %v2690 = vand.u32 %v635, 4294901760
        %2691 = vmatmul.f32.gmra.mxu0 %v2690
        %v2692 = vpop.f32.mrf.mxu0
        %v2693 = vadd.f32 %v2418, %v2692
        %v2694 = vand.u32 %v638, 4294901760
        %2695 = vmatmul.f32.gmra.mxu0 %v2694
        %v2696 = vpop.f32.mrf.mxu0
        %v2697 = vadd.f32 %v2422, %v2696
        %v2698 = vand.u32 %v641, 4294901760
        %2699 = vmatmul.f32.gmra.mxu0 %v2698
        %v2700 = vpop.f32.mrf.mxu0
        %v2701 = vadd.f32 %v2426, %v2700
        %v2702 = vand.u32 %v644, 4294901760
        %2703 = vmatmul.f32.gmra.mxu0 %v2702
        %v2704 = vpop.f32.mrf.mxu0
        %v2705 = vadd.f32 %v2430, %v2704
        %v2706 = vand.u32 %v647, 4294901760
        %2707 = vmatmul.f32.gmra.mxu0 %v2706
        %v2708 = vpop.f32.mrf.mxu0
        %v2709 = vadd.f32 %v2434, %v2708
        %v2710 = vand.u32 %v650, 4294901760
        %2711 = vmatmul.f32.gmra.mxu0 %v2710
        %v2712 = vpop.f32.mrf.mxu0
        %v2713 = vadd.f32 %v2438, %v2712
        %v2714 = vand.u32 %v653, 4294901760
        %2715 = vmatmul.f32.gmra.mxu0 %v2714
        %v2716 = vpop.f32.mrf.mxu0
        %v2717 = vadd.f32 %v2442, %v2716
        %v2718 = vand.u32 %v656, 4294901760
        %2719 = vmatmul.f32.gmra.mxu0 %v2718
        %v2720 = vpop.f32.mrf.mxu0
        %v2721 = vadd.f32 %v2446, %v2720
        %v2722 = vand.u32 %v659, 4294901760
        %2723 = vmatmul.f32.gmra.mxu0 %v2722
        %v2724 = vpop.f32.mrf.mxu0
        %v2725 = vadd.f32 %v2450, %v2724
        %v2726 = vand.u32 %v662, 4294901760
        %2727 = vmatmul.f32.gmra.mxu0 %v2726
        %v2728 = vpop.f32.mrf.mxu0
        %v2729 = vadd.f32 %v2454, %v2728
        %v2730 = vand.u32 %v665, 4294901760
        %2731 = vmatmul.f32.gmra.mxu0 %v2730
        %v2732 = vpop.f32.mrf.mxu0
        %v2733 = vadd.f32 %v2458, %v2732
        %v2734 = vand.u32 %v668, 4294901760
        %2735 = vmatmul.f32.gmra.mxu0 %v2734
        %v2736 = vpop.f32.mrf.mxu0
        %v2737 = vadd.f32 %v2462, %v2736
        %v2738 = vand.u32 %v671, 4294901760
        %2739 = vmatmul.f32.gmra.mxu0 %v2738
        %v2740 = vpop.f32.mrf.mxu0
        %v2741 = vadd.f32 %v2466, %v2740
        %v2742 = vand.u32 %v674, 4294901760
        %2743 = vmatmul.f32.gmra.mxu0 %v2742
        %v2744 = vpop.f32.mrf.mxu0
        %v2745 = vadd.f32 %v2470, %v2744
        %v2746 = vand.u32 %v677, 4294901760
        %2747 = vmatmul.f32.gmra.mxu0 %v2746
        %v2748 = vpop.f32.mrf.mxu0
        %v2749 = vadd.f32 %v2474, %v2748
        %v2750 = vand.u32 %v680, 4294901760
        %2751 = vmatmul.f32.gmra.mxu0 %v2750
        %v2752 = vpop.f32.mrf.mxu0
        %v2753 = vadd.f32 %v2478, %v2752
        %v2754 = vand.u32 %v683, 4294901760
        %2755 = vmatmul.f32.gmra.mxu0 %v2754
        %v2756 = vpop.f32.mrf.mxu0
        %v2757 = vadd.f32 %v2482, %v2756
        %v2758 = vand.u32 %v686, 4294901760
        %2759 = vmatmul.f32.gmra.mxu0 %v2758
        %v2760 = vpop.f32.mrf.mxu0
        %v2761 = vadd.f32 %v2486, %v2760
        %v2762 = vand.u32 %v689, 4294901760
        %2763 = vmatmul.f32.gmra.mxu0 %v2762
        %v2764 = vpop.f32.mrf.mxu0
        %v2765 = vadd.f32 %v2490, %v2764
        %v2766 = vand.u32 %v692, 4294901760
        %2767 = vmatmul.f32.gmra.mxu0 %v2766
        %v2768 = vpop.f32.mrf.mxu0
        %v2769 = vadd.f32 %v2494, %v2768
        %v2770 = vand.u32 %v695, 4294901760
        %2771 = vmatmul.f32.gmra.mxu0 %v2770
        %v2772 = vpop.f32.mrf.mxu0
        %v2773 = vadd.f32 %v2498, %v2772
        %v2774 = vand.u32 %v698, 4294901760
        %2775 = vmatmul.f32.gmra.mxu0 %v2774
        %v2776 = vpop.f32.mrf.mxu0
        %v2777 = vadd.f32 %v2502, %v2776
        %v2778 = vand.u32 %v701, 4294901760
        %2779 = vmatmul.f32.gmra.mxu0 %v2778
        %v2780 = vpop.f32.mrf.mxu0
        %v2781 = vadd.f32 %v2506, %v2780
        %v2782 = vand.u32 %v704, 4294901760
        %2783 = vmatmul.f32.gmra.mxu0 %v2782
        %v2784 = vpop.f32.mrf.mxu0
        %v2785 = vadd.f32 %v2510, %v2784
        %v2786 = vand.u32 %v707, 4294901760
        %2787 = vmatmul.f32.gmra.mxu0 %v2786
        %v2788 = vpop.f32.mrf.mxu0
        %v2789 = vadd.f32 %v2514, %v2788
        %v2790 = vand.u32 %v710, 4294901760
        %2791 = vmatmul.f32.gmra.mxu0 %v2790
        %v2792 = vpop.f32.mrf.mxu0
        %v2793 = vadd.f32 %v2518, %v2792
        %v2794 = vand.u32 %v713, 4294901760
        %2795 = vmatmul.f32.gmra.mxu0 %v2794
        %v2796 = vpop.f32.mrf.mxu0
        %v2797 = vadd.f32 %v2522, %v2796
        %v2798 = vand.u32 %v716, 4294901760
        %2799 = vmatmul.f32.gmra.mxu0 %v2798
        %v2800 = vpop.f32.mrf.mxu0
        %v2801 = vadd.f32 %v2526, %v2800
        %v2802 = vand.u32 %v719, 4294901760
        %2803 = vmatmul.f32.gmra.mxu0 %v2802
        %v2804 = vpop.f32.mrf.mxu0
        %v2805 = vadd.f32 %v2530, %v2804
        %v2806 = vand.u32 %v722, 4294901760
        %2807 = vmatmul.f32.gmra.mxu0 %v2806
        %v2808 = vpop.f32.mrf.mxu0
        %v2809 = vadd.f32 %v2534, %v2808
        %v2810 = vand.u32 %v725, 4294901760
        %2811 = vmatmul.f32.gmra.mxu0 %v2810
        %v2812 = vpop.f32.mrf.mxu0
        %v2813 = vadd.f32 %v2538, %v2812
        %v2814 = vand.u32 %v728, 4294901760
        %2815 = vmatmul.f32.gmra.mxu0 %v2814
        %v2816 = vpop.f32.mrf.mxu0
        %v2817 = vadd.f32 %v2542, %v2816
        %v2818 = vand.u32 %v731, 4294901760
        %2819 = vmatmul.f32.gmra.mxu0 %v2818
        %v2820 = vpop.f32.mrf.mxu0
        %v2821 = vadd.f32 %v2546, %v2820
        %v2822 = vand.u32 %v734, 4294901760
        %2823 = vmatmul.f32.gmra.mxu0 %v2822
        %v2824 = vpop.f32.mrf.mxu0
        %v2825 = vadd.f32 %v2550, %v2824
        %v2826 = vand.u32 %v737, 4294901760
        %2827 = vmatmul.f32.gmra.mxu0 %v2826
        %v2828 = vpop.f32.mrf.mxu0
        %v2829 = vadd.f32 %v2554, %v2828
        %v2830 = vand.u32 %v740, 4294901760
        %2831 = vmatmul.f32.gmra.mxu0 %v2830
        %v2832 = vpop.f32.mrf.mxu0
        %v2833 = vadd.f32 %v2558, %v2832
        %v2834 = vand.u32 %v743, 4294901760
        %2835 = vmatmul.f32.gmra.mxu0 %v2834
        %v2836 = vpop.f32.mrf.mxu0
        %v2837 = vadd.f32 %v2562, %v2836
        %v2838 = vand.u32 %v746, 4294901760
        %2839 = vmatmul.f32.gmra.mxu0 %v2838
        %v2840 = vpop.f32.mrf.mxu0
        %v2841 = vadd.f32 %v2566, %v2840
        %v2842 = vand.u32 %v749, 4294901760
        %2843 = vmatmul.f32.gmra.mxu0 %v2842
        %v2844 = vpop.f32.mrf.mxu0
        %v2845 = vadd.f32 %v2570, %v2844
        %v2846 = vand.u32 %v752, 4294901760
        %2847 = vmatmul.f32.gmra.mxu0 %v2846
        %v2848 = vpop.f32.mrf.mxu0
        %v2849 = vadd.f32 %v2574, %v2848
        %v2850 = vand.u32 %v755, 4294901760
        %2851 = vmatmul.f32.gmra.mxu0 %v2850
        %v2852 = vpop.f32.mrf.mxu0
        %v2853 = vadd.f32 %v2578, %v2852
        %v2854 = vand.u32 %v758, 4294901760
        %2855 = vmatmul.f32.gmra.mxu0 %v2854
        %v2856 = vpop.f32.mrf.mxu0
        %v2857 = vadd.f32 %v2582, %v2856
        %v2858 = vand.u32 %v761, 4294901760
        %2859 = vmatmul.f32.gmra.mxu0 %v2858
        %v2860 = vpop.f32.mrf.mxu0
        %v2861 = vadd.f32 %v2586, %v2860
        %v2862 = vand.u32 %v764, 4294901760
        %2863 = vmatmul.f32.gmra.mxu0 %v2862
        %v2864 = vpop.f32.mrf.mxu0
        %v2865 = vadd.f32 %v2590, %v2864
        %v2866 = vand.u32 %v767, 4294901760
        %2867 = vmatmul.f32.gmra.mxu0 %v2866
        %v2868 = vpop.f32.mrf.mxu0
        %v2869 = vadd.f32 %v2594, %v2868
        %v2870 = vand.u32 %v770, 4294901760
        %2871 = vmatmul.f32.gmra.mxu0 %v2870
        %v2872 = vpop.f32.mrf.mxu0
        %v2873 = vadd.f32 %v2598, %v2872
        %v2874 = vand.u32 %v773, 4294901760
        %2875 = vmatmul.f32.gmra.mxu0 %v2874
        %v2876 = vpop.f32.mrf.mxu0
        %v2877 = vadd.f32 %v2602, %v2876
        %v2878 = vand.u32 %v776, 4294901760
        %2879 = vmatmul.f32.gmra.mxu0 %v2878
        %v2880 = vpop.f32.mrf.mxu0
        %v2881 = vadd.f32 %v2606, %v2880
        %v2882 = vand.u32 %v779, 4294901760
        %2883 = vmatmul.f32.gmra.mxu0 %v2882
        %v2884 = vpop.f32.mrf.mxu0
        %v2885 = vadd.f32 %v2610, %v2884
        %v2886 = vand.u32 %v782, 4294901760
        %2887 = vmatmul.f32.gmra.mxu0 %v2886
        %v2888 = vpop.f32.mrf.mxu0
        %v2889 = vadd.f32 %v2614, %v2888
        %v2890 = vand.u32 %v785, 4294901760
        %2891 = vmatmul.f32.gmra.mxu0 %v2890
        %v2892 = vpop.f32.mrf.mxu0
        %v2893 = vadd.f32 %v2618, %v2892
        %v2894 = vand.u32 %v788, 4294901760
        %2895 = vmatmul.f32.gmra.mxu0 %v2894
        %v2896 = vpop.f32.mrf.mxu0
        %v2897 = vadd.f32 %v2622, %v2896
        %v2898 = vand.u32 %v791, 4294901760
        %2899 = vmatmul.f32.gmra.mxu0 %v2898
        %v2900 = vpop.f32.mrf.mxu0
        %v2901 = vadd.f32 %v2626, %v2900
        %v2902 = vand.u32 %v794, 4294901760
        %2903 = vmatmul.f32.gmra.mxu0 %v2902
        %v2904 = vpop.f32.mrf.mxu0
        %v2905 = vadd.f32 %v2630, %v2904
        %v2906 = vand.u32 %v797, 4294901760
        %2907 = vmatmul.f32.gmra.mxu0 %v2906
        %v2908 = vpop.f32.mrf.mxu0
        %v2909 = vadd.f32 %v2634, %v2908
        %2910 = vdwg.mxu0
        %vm2911 = vcmask 392192
        %2912 = vst.msk [vmem:[#allocation2] sm:$0xff] %vm2911, %v2657
        %2913 = vst.msk [vmem:[#allocation2 + $0x8] sm:$0xff] %vm2911, %v2661
        %2914 = vst.msk [vmem:[#allocation2 + $0x10] sm:$0xff] %vm2911, %v2665
        %2915 = vst.msk [vmem:[#allocation2 + $0x18] sm:$0xff] %vm2911, %v2669
        %2916 = vst.msk [vmem:[#allocation2 + $0x20] sm:$0xff] %vm2911, %v2673
        %2917 = vst.msk [vmem:[#allocation2 + $0x28] sm:$0xff] %vm2911, %v2677
        %2918 = vst.msk [vmem:[#allocation2 + $0x30] sm:$0xff] %vm2911, %v2681
        %2919 = vst.msk [vmem:[#allocation2 + $0x38] sm:$0xff] %vm2911, %v2685
        %2920 = vst.msk [vmem:[#allocation2 + $0x40] sm:$0xff] %vm2911, %v2689
        %2921 = vst.msk [vmem:[#allocation2 + $0x48] sm:$0xff] %vm2911, %v2693
        %2922 = vst.msk [vmem:[#allocation2 + $0x50] sm:$0xff] %vm2911, %v2697
        %2923 = vst.msk [vmem:[#allocation2 + $0x58] sm:$0xff] %vm2911, %v2701
        %2924 = vst.msk [vmem:[#allocation2 + $0x60] sm:$0xff] %vm2911, %v2705
        %2925 = vst.msk [vmem:[#allocation2 + $0x68] sm:$0xff] %vm2911, %v2709
        %2926 = vst.msk [vmem:[#allocation2 + $0x70] sm:$0xff] %vm2911, %v2713
        %2927 = vst.msk [vmem:[#allocation2 + $0x78] sm:$0xff] %vm2911, %v2717
        %2928 = vst.msk [vmem:[#allocation2 + $0x80] sm:$0xff] %vm2911, %v2721
        %2929 = vst.msk [vmem:[#allocation2 + $0x88] sm:$0xff] %vm2911, %v2725
        %2930 = vst.msk [vmem:[#allocation2 + $0x90] sm:$0xff] %vm2911, %v2729
        %2931 = vst.msk [vmem:[#allocation2 + $0x98] sm:$0xff] %vm2911, %v2733
        %2932 = vst.msk [vmem:[#allocation2 + $0xa0] sm:$0xff] %vm2911, %v2737
        %2933 = vst.msk [vmem:[#allocation2 + $0xa8] sm:$0xff] %vm2911, %v2741
        %2934 = vst.msk [vmem:[#allocation2 + $0xb0] sm:$0xff] %vm2911, %v2745
        %2935 = vst.msk [vmem:[#allocation2 + $0xb8] sm:$0xff] %vm2911, %v2749
        %2936 = vst.msk [vmem:[#allocation2 + $0xc0] sm:$0xff] %vm2911, %v2753
        %2937 = vst.msk [vmem:[#allocation2 + $0xc8] sm:$0xff] %vm2911, %v2757
        %2938 = vst.msk [vmem:[#allocation2 + $0xd0] sm:$0xff] %vm2911, %v2761
        %2939 = vst.msk [vmem:[#allocation2 + $0xd8] sm:$0xff] %vm2911, %v2765
        %2940 = vst.msk [vmem:[#allocation2 + $0xe0] sm:$0xff] %vm2911, %v2769
        %2941 = vst.msk [vmem:[#allocation2 + $0xe8] sm:$0xff] %vm2911, %v2773
        %2942 = vst.msk [vmem:[#allocation2 + $0xf0] sm:$0xff] %vm2911, %v2777
        %2943 = vst.msk [vmem:[#allocation2 + $0xf8] sm:$0xff] %vm2911, %v2781
        %2944 = vst.msk [vmem:[#allocation2 + $0x100] sm:$0xff] %vm2911, %v2785
        %2945 = vst.msk [vmem:[#allocation2 + $0x108] sm:$0xff] %vm2911, %v2789
        %2946 = vst.msk [vmem:[#allocation2 + $0x110] sm:$0xff] %vm2911, %v2793
        %2947 = vst.msk [vmem:[#allocation2 + $0x118] sm:$0xff] %vm2911, %v2797
        %2948 = vst.msk [vmem:[#allocation2 + $0x120] sm:$0xff] %vm2911, %v2801
        %2949 = vst.msk [vmem:[#allocation2 + $0x128] sm:$0xff] %vm2911, %v2805
        %2950 = vst.msk [vmem:[#allocation2 + $0x130] sm:$0xff] %vm2911, %v2809
        %2951 = vst.msk [vmem:[#allocation2 + $0x138] sm:$0xff] %vm2911, %v2813
        %2952 = vst.msk [vmem:[#allocation2 + $0x140] sm:$0xff] %vm2911, %v2817
        %2953 = vst.msk [vmem:[#allocation2 + $0x148] sm:$0xff] %vm2911, %v2821
        %2954 = vst.msk [vmem:[#allocation2 + $0x150] sm:$0xff] %vm2911, %v2825
        %2955 = vst.msk [vmem:[#allocation2 + $0x158] sm:$0xff] %vm2911, %v2829
        %2956 = vst.msk [vmem:[#allocation2 + $0x160] sm:$0xff] %vm2911, %v2833
        %2957 = vst.msk [vmem:[#allocation2 + $0x168] sm:$0xff] %vm2911, %v2837
        %2958 = vst.msk [vmem:[#allocation2 + $0x170] sm:$0xff] %vm2911, %v2841
        %2959 = vst.msk [vmem:[#allocation2 + $0x178] sm:$0xff] %vm2911, %v2845
        %2960 = vst.msk [vmem:[#allocation2 + $0x180] sm:$0xff] %vm2911, %v2849
        %2961 = vst.msk [vmem:[#allocation2 + $0x188] sm:$0xff] %vm2911, %v2853
        %2962 = vst.msk [vmem:[#allocation2 + $0x190] sm:$0xff] %vm2911, %v2857
        %2963 = vst.msk [vmem:[#allocation2 + $0x198] sm:$0xff] %vm2911, %v2861
        %2964 = vst.msk [vmem:[#allocation2 + $0x1a0] sm:$0xff] %vm2911, %v2865
        %2965 = vst.msk [vmem:[#allocation2 + $0x1a8] sm:$0xff] %vm2911, %v2869
        %2966 = vst.msk [vmem:[#allocation2 + $0x1b0] sm:$0xff] %vm2911, %v2873
        %2967 = vst.msk [vmem:[#allocation2 + $0x1b8] sm:$0xff] %vm2911, %v2877
        %2968 = vst.msk [vmem:[#allocation2 + $0x1c0] sm:$0xff] %vm2911, %v2881
        %2969 = vst.msk [vmem:[#allocation2 + $0x1c8] sm:$0xff] %vm2911, %v2885
        %2970 = vst.msk [vmem:[#allocation2 + $0x1d0] sm:$0xff] %vm2911, %v2889
        %2971 = vst.msk [vmem:[#allocation2 + $0x1d8] sm:$0xff] %vm2911, %v2893
        %2972 = vst.msk [vmem:[#allocation2 + $0x1e0] sm:$0xff] %vm2911, %v2897
        %2973 = vst.msk [vmem:[#allocation2 + $0x1e8] sm:$0xff] %vm2911, %v2901
        %2974 = vst.msk [vmem:[#allocation2 + $0x1f0] sm:$0xff] %vm2911, %v2905
        %2975 = vst.msk [vmem:[#allocation2 + $0x1f8] sm:$0xff] %vm2911, %v2909
        loop: start=0, step=1, limit=8
        $region89: #{swin_block_forward_pallas.1} parent=83 // loop_pre_header
          _
        $region90: #{swin_block_forward_pallas.1} parent=83 // loop_header
          %s2977 = sphi 0, %s2981
          %p2978 = scmp.ge.s32.totalorder %s2977, 8
        $region91: #{swin_block_forward_pallas.1} parent=83 // loop_header_branch
          %2980 = sbr.rel (%p2978) target = $region95
        $region92: #{swin_block_forward_pallas.1} parent=83 // loop_body
          %s2982 = smul.u32 %s2977, 64
          %s2983 = scalar_lea.vmem %s5, %s2982
          %v2984 = vld [vmem:[%s2983] sm:$0xff]
          %v2985 = vld [vmem:[%s2983 + $0x8] sm:$0xff]
          %v2986 = vld [vmem:[%s2983 + $0x10] sm:$0xff]
          %v2987 = vld [vmem:[%s2983 + $0x18] sm:$0xff]
          %v2988 = vld [vmem:[%s2983 + $0x20] sm:$0xff]
          %v2989 = vld [vmem:[%s2983 + $0x28] sm:$0xff]
          %v2990 = vld [vmem:[%s2983 + $0x30] sm:$0xff]
          %v2991 = vld [vmem:[%s2983 + $0x38] sm:$0xff]
          %s2992 = scalar_lea.vmem [#allocation2], %s2982
          %v2993 = vld [vmem:[%s2992] sm:$0xff]
          %v2994 = vld [vmem:[%s2992 + $0x8] sm:$0xff]
          %v2995 = vld [vmem:[%s2992 + $0x10] sm:$0xff]
          %v2996 = vld [vmem:[%s2992 + $0x18] sm:$0xff]
          %v2997 = vld [vmem:[%s2992 + $0x20] sm:$0xff]
          %v2998 = vld [vmem:[%s2992 + $0x28] sm:$0xff]
          %v2999 = vld [vmem:[%s2992 + $0x30] sm:$0xff]
          %v3000 = vld [vmem:[%s2992 + $0x38] sm:$0xff]
          %v3001 = vmul.f32 %v2993, %v2993
          %v3002 = vmul.f32 %v2994, %v2994
          %v3003 = vmul.f32 %v2995, %v2995
          %v3004 = vmul.f32 %v2996, %v2996
          %v3005 = vmul.f32 %v2997, %v2997
          %v3006 = vmul.f32 %v2998, %v2998
          %v3007 = vmul.f32 %v2999, %v2999
          %v3008 = vmul.f32 %v3000, %v3000
          %vm3009 = vcmask 64512
          %v3010 = vsel %vm3009, %v3001, 0.0
          %3011 = vadd.xlane.f32.xlu0 %v3010
          %v3012 = vpop.xlane.xlu0 %3011
          %v3013 = vsel %vm3009, %v3002, 0.0
          %3014 = vadd.xlane.f32.xlu0 %v3013
          %v3015 = vpop.xlane.xlu0 %3014
          %v3016 = vsel %vm3009, %v3003, 0.0
          %3017 = vadd.xlane.f32.xlu0 %v3016
          %v3018 = vpop.xlane.xlu0 %3017
          %v3019 = vsel %vm3009, %v3004, 0.0
          %3020 = vadd.xlane.f32.xlu0 %v3019
          %v3021 = vpop.xlane.xlu0 %3020
          %v3022 = vsel %vm3009, %v3005, 0.0
          %3023 = vadd.xlane.f32.xlu0 %v3022
          %v3024 = vpop.xlane.xlu0 %3023
          %v3025 = vsel %vm3009, %v3006, 0.0
          %3026 = vadd.xlane.f32.xlu0 %v3025
          %v3027 = vpop.xlane.xlu0 %3026
          %v3028 = vsel %vm3009, %v3007, 0.0
          %3029 = vadd.xlane.f32.xlu0 %v3028
          %v3030 = vpop.xlane.xlu0 %3029
          %v3031 = vsel %vm3009, %v3008, 0.0
          %3032 = vadd.xlane.f32.xlu0 %v3031
          %v3033 = vpop.xlane.xlu0 %3032
          %v3034 = vmax.f32 %v3012, 1e-24
          %v3035 = vmax.f32 %v3015, 1e-24
          %v3036 = vmax.f32 %v3018, 1e-24
          %v3037 = vmax.f32 %v3021, 1e-24
          %v3038 = vmax.f32 %v3024, 1e-24
          %v3039 = vmax.f32 %v3027, 1e-24
          %v3040 = vmax.f32 %v3030, 1e-24
          %v3041 = vmax.f32 %v3033, 1e-24
          %v3042 = vrsqrt.pop %v3034
          %v3043 = vmul.f32 %v3042, %v3034
          %v3044 = vmul.f32 %v3043, %v3042
          %v3045 = vmul.f32 0.5, %v3044
          %v3046 = vsub.f32 1.5, %v3045
          %v3047 = vmul.f32 %v3042, %v3046
          %vm3048 = vweird.f32 %v3034
          %vm3049 = vweird.f32 %v3042
          %vm3050 = vmor %vm3048, %vm3049
          %v3051 = vsel %vm3050, %v3042, %v3047
          %v3052 = vrsqrt.pop %v3035
          %v3053 = vmul.f32 %v3052, %v3035
          %v3054 = vmul.f32 %v3053, %v3052
          %v3055 = vmul.f32 0.5, %v3054
          %v3056 = vsub.f32 1.5, %v3055
          %v3057 = vmul.f32 %v3052, %v3056
          %vm3058 = vweird.f32 %v3035
          %vm3059 = vweird.f32 %v3052
          %vm3060 = vmor %vm3058, %vm3059
          %v3061 = vsel %vm3060, %v3052, %v3057
          %v3062 = vrsqrt.pop %v3036
          %v3063 = vmul.f32 %v3062, %v3036
          %v3064 = vmul.f32 %v3063, %v3062
          %v3065 = vmul.f32 0.5, %v3064
          %v3066 = vsub.f32 1.5, %v3065
          %v3067 = vmul.f32 %v3062, %v3066
          %vm3068 = vweird.f32 %v3036
          %vm3069 = vweird.f32 %v3062
          %vm3070 = vmor %vm3068, %vm3069
          %v3071 = vsel %vm3070, %v3062, %v3067
          %v3072 = vrsqrt.pop %v3037
          %v3073 = vmul.f32 %v3072, %v3037
          %v3074 = vmul.f32 %v3073, %v3072
          %v3075 = vmul.f32 0.5, %v3074
          %v3076 = vsub.f32 1.5, %v3075
          %v3077 = vmul.f32 %v3072, %v3076
          %vm3078 = vweird.f32 %v3037
          %vm3079 = vweird.f32 %v3072
          %vm3080 = vmor %vm3078, %vm3079
          %v3081 = vsel %vm3080, %v3072, %v3077
          %v3082 = vrsqrt.pop %v3038
          %v3083 = vmul.f32 %v3082, %v3038
          %v3084 = vmul.f32 %v3083, %v3082
          %v3085 = vmul.f32 0.5, %v3084
          %v3086 = vsub.f32 1.5, %v3085
          %v3087 = vmul.f32 %v3082, %v3086
          %vm3088 = vweird.f32 %v3038
          %vm3089 = vweird.f32 %v3082
          %vm3090 = vmor %vm3088, %vm3089
          %v3091 = vsel %vm3090, %v3082, %v3087
          %v3092 = vrsqrt.pop %v3039
          %v3093 = vmul.f32 %v3092, %v3039
          %v3094 = vmul.f32 %v3093, %v3092
          %v3095 = vmul.f32 0.5, %v3094
          %v3096 = vsub.f32 1.5, %v3095
          %v3097 = vmul.f32 %v3092, %v3096
          %vm3098 = vweird.f32 %v3039
          %vm3099 = vweird.f32 %v3092
          %vm3100 = vmor %vm3098, %vm3099
          %v3101 = vsel %vm3100, %v3092, %v3097
          %v3102 = vrsqrt.pop %v3040
          %v3103 = vmul.f32 %v3102, %v3040
          %v3104 = vmul.f32 %v3103, %v3102
          %v3105 = vmul.f32 0.5, %v3104
          %v3106 = vsub.f32 1.5, %v3105
          %v3107 = vmul.f32 %v3102, %v3106
          %vm3108 = vweird.f32 %v3040
          %vm3109 = vweird.f32 %v3102
          %vm3110 = vmor %vm3108, %vm3109
          %v3111 = vsel %vm3110, %v3102, %v3107
          %v3112 = vrsqrt.pop %v3041
          %v3113 = vmul.f32 %v3112, %v3041
          %v3114 = vmul.f32 %v3113, %v3112
          %v3115 = vmul.f32 0.5, %v3114
          %v3116 = vsub.f32 1.5, %v3115
          %v3117 = vmul.f32 %v3112, %v3116
          %vm3118 = vweird.f32 %v3041
          %vm3119 = vweird.f32 %v3112
          %vm3120 = vmor %vm3118, %vm3119
          %v3121 = vsel %vm3120, %v3112, %v3117
          %v3122 = vmul.f32 %v2993, %v3051
          %v3123 = vmul.f32 %v2994, %v3061
          %v3124 = vmul.f32 %v2995, %v3071
          %v3125 = vmul.f32 %v2996, %v3081
          %v3126 = vmul.f32 %v2997, %v3091
          %v3127 = vmul.f32 %v2998, %v3101
          %v3128 = vmul.f32 %v2999, %v3111
          %v3129 = vmul.f32 %v3000, %v3121
          %3138 = vrot.lane.b32.xlu0 %v3001, 112
          %v3139 = vpop.permute.xlu0 %3138
          %3140 = vrot.lane.b32.xlu0 %v3002, 112
          %v3141 = vpop.permute.xlu0 %3140
          %3142 = vrot.lane.b32.xlu0 %v3003, 112
          %v3143 = vpop.permute.xlu0 %3142
          %3144 = vrot.lane.b32.xlu0 %v3004, 112
          %v3145 = vpop.permute.xlu0 %3144
          %3146 = vrot.lane.b32.xlu0 %v3005, 112
          %v3147 = vpop.permute.xlu0 %3146
          %3148 = vrot.lane.b32.xlu0 %v3006, 112
          %v3149 = vpop.permute.xlu0 %3148
          %3150 = vrot.lane.b32.xlu0 %v3007, 112
          %v3151 = vpop.permute.xlu0 %3150
          %3152 = vrot.lane.b32.xlu0 %v3008, 112
          %v3153 = vpop.permute.xlu0 %3152
          %v3162 = vsel %vm3009, %v3139, 0.0
          %3163 = vadd.xlane.f32.xlu0 %v3162
          %v3164 = vpop.xlane.xlu0 %3163
          %v3165 = vsel %vm3009, %v3141, 0.0
          %3166 = vadd.xlane.f32.xlu0 %v3165
          %v3167 = vpop.xlane.xlu0 %3166
          %v3168 = vsel %vm3009, %v3143, 0.0
          %3169 = vadd.xlane.f32.xlu0 %v3168
          %v3170 = vpop.xlane.xlu0 %3169
          %v3171 = vsel %vm3009, %v3145, 0.0
          %3172 = vadd.xlane.f32.xlu0 %v3171
          %v3173 = vpop.xlane.xlu0 %3172
          %v3174 = vsel %vm3009, %v3147, 0.0
          %3175 = vadd.xlane.f32.xlu0 %v3174
          %v3176 = vpop.xlane.xlu0 %3175
          %v3177 = vsel %vm3009, %v3149, 0.0
          %3178 = vadd.xlane.f32.xlu0 %v3177
          %v3179 = vpop.xlane.xlu0 %3178
          %v3180 = vsel %vm3009, %v3151, 0.0
          %3181 = vadd.xlane.f32.xlu0 %v3180
          %v3182 = vpop.xlane.xlu0 %3181
          %v3183 = vsel %vm3009, %v3153, 0.0
          %3184 = vadd.xlane.f32.xlu0 %v3183
          %v3185 = vpop.xlane.xlu0 %3184
          %v3186 = vmax.f32 %v3164, 1e-24
          %v3187 = vmax.f32 %v3167, 1e-24
          %v3188 = vmax.f32 %v3170, 1e-24
          %v3189 = vmax.f32 %v3173, 1e-24
          %v3190 = vmax.f32 %v3176, 1e-24
          %v3191 = vmax.f32 %v3179, 1e-24
          %v3192 = vmax.f32 %v3182, 1e-24
          %v3193 = vmax.f32 %v3185, 1e-24
          %v3194 = vrsqrt.pop %v3186
          %v3195 = vmul.f32 %v3194, %v3186
          %v3196 = vmul.f32 %v3195, %v3194
          %v3197 = vmul.f32 0.5, %v3196
          %v3198 = vsub.f32 1.5, %v3197
          %v3199 = vmul.f32 %v3194, %v3198
          %vm3200 = vweird.f32 %v3186
          %vm3201 = vweird.f32 %v3194
          %vm3202 = vmor %vm3200, %vm3201
          %v3203 = vsel %vm3202, %v3194, %v3199
          %v3204 = vrsqrt.pop %v3187
          %v3205 = vmul.f32 %v3204, %v3187
          %v3206 = vmul.f32 %v3205, %v3204
          %v3207 = vmul.f32 0.5, %v3206
          %v3208 = vsub.f32 1.5, %v3207
          %v3209 = vmul.f32 %v3204, %v3208
          %vm3210 = vweird.f32 %v3187
          %vm3211 = vweird.f32 %v3204
          %vm3212 = vmor %vm3210, %vm3211
          %v3213 = vsel %vm3212, %v3204, %v3209
          %v3214 = vrsqrt.pop %v3188
          %v3215 = vmul.f32 %v3214, %v3188
          %v3216 = vmul.f32 %v3215, %v3214
          %v3217 = vmul.f32 0.5, %v3216
          %v3218 = vsub.f32 1.5, %v3217
          %v3219 = vmul.f32 %v3214, %v3218
          %vm3220 = vweird.f32 %v3188
          %vm3221 = vweird.f32 %v3214
          %vm3222 = vmor %vm3220, %vm3221
          %v3223 = vsel %vm3222, %v3214, %v3219
          %v3224 = vrsqrt.pop %v3189
          %v3225 = vmul.f32 %v3224, %v3189
          %v3226 = vmul.f32 %v3225, %v3224
          %v3227 = vmul.f32 0.5, %v3226
          %v3228 = vsub.f32 1.5, %v3227
          %v3229 = vmul.f32 %v3224, %v3228
          %vm3230 = vweird.f32 %v3189
          %vm3231 = vweird.f32 %v3224
          %vm3232 = vmor %vm3230, %vm3231
          %v3233 = vsel %vm3232, %v3224, %v3229
          %v3234 = vrsqrt.pop %v3190
          %v3235 = vmul.f32 %v3234, %v3190
          %v3236 = vmul.f32 %v3235, %v3234
          %v3237 = vmul.f32 0.5, %v3236
          %v3238 = vsub.f32 1.5, %v3237
          %v3239 = vmul.f32 %v3234, %v3238
          %vm3240 = vweird.f32 %v3190
          %vm3241 = vweird.f32 %v3234
          %vm3242 = vmor %vm3240, %vm3241
          %v3243 = vsel %vm3242, %v3234, %v3239
          %v3244 = vrsqrt.pop %v3191
          %v3245 = vmul.f32 %v3244, %v3191
          %v3246 = vmul.f32 %v3245, %v3244
          %v3247 = vmul.f32 0.5, %v3246
          %v3248 = vsub.f32 1.5, %v3247
          %v3249 = vmul.f32 %v3244, %v3248
          %vm3250 = vweird.f32 %v3191
          %vm3251 = vweird.f32 %v3244
          %vm3252 = vmor %vm3250, %vm3251
          %v3253 = vsel %vm3252, %v3244, %v3249
          %v3254 = vrsqrt.pop %v3192
          %v3255 = vmul.f32 %v3254, %v3192
          %v3256 = vmul.f32 %v3255, %v3254
          %v3257 = vmul.f32 0.5, %v3256
          %v3258 = vsub.f32 1.5, %v3257
          %v3259 = vmul.f32 %v3254, %v3258
          %vm3260 = vweird.f32 %v3192
          %vm3261 = vweird.f32 %v3254
          %vm3262 = vmor %vm3260, %vm3261
          %v3263 = vsel %vm3262, %v3254, %v3259
          %v3264 = vrsqrt.pop %v3193
          %v3265 = vmul.f32 %v3264, %v3193
          %v3266 = vmul.f32 %v3265, %v3264
          %v3267 = vmul.f32 0.5, %v3266
          %v3268 = vsub.f32 1.5, %v3267
          %v3269 = vmul.f32 %v3264, %v3268
          %vm3270 = vweird.f32 %v3193
          %vm3271 = vweird.f32 %v3264
          %vm3272 = vmor %vm3270, %vm3271
          %v3273 = vsel %vm3272, %v3264, %v3269
          %v3274 = vmul.f32 %v2993, %v3203
          %v3275 = vmul.f32 %v2994, %v3213
          %v3276 = vmul.f32 %v2995, %v3223
          %v3277 = vmul.f32 %v2996, %v3233
          %v3278 = vmul.f32 %v2997, %v3243
          %v3279 = vmul.f32 %v2998, %v3253
          %v3280 = vmul.f32 %v2999, %v3263
          %v3281 = vmul.f32 %v3000, %v3273
          %3290 = vrot.lane.b32.xlu0 %v3274, 112
          %v3291 = vpop.permute.xlu0 %3290
          %3292 = vrot.lane.b32.xlu0 %v3275, 112
          %v3293 = vpop.permute.xlu0 %3292
          %3294 = vrot.lane.b32.xlu0 %v3276, 112
          %v3295 = vpop.permute.xlu0 %3294
          %3296 = vrot.lane.b32.xlu0 %v3277, 112
          %v3297 = vpop.permute.xlu0 %3296
          %3298 = vrot.lane.b32.xlu0 %v3278, 112
          %v3299 = vpop.permute.xlu0 %3298
          %3300 = vrot.lane.b32.xlu0 %v3279, 112
          %v3301 = vpop.permute.xlu0 %3300
          %3302 = vrot.lane.b32.xlu0 %v3280, 112
          %v3303 = vpop.permute.xlu0 %3302
          %3304 = vrot.lane.b32.xlu0 %v3281, 112
          %v3305 = vpop.permute.xlu0 %3304
          %v3307 = vsel %vm3009, %v3122, 0
          %v3310 = vsel %vm3009, %v3123, 0
          %v3313 = vsel %vm3009, %v3124, 0
          %v3316 = vsel %vm3009, %v3125, 0
          %v3319 = vsel %vm3009, %v3126, 0
          %v3322 = vsel %vm3009, %v3127, 0
          %v3325 = vsel %vm3009, %v3128, 0
          %v3328 = vsel %vm3009, %v3129, 0
          %v3330 = vsel %vm3009, %v3291, 0
          %v3332 = vsel %vm3009, %v3293, 0
          %v3334 = vsel %vm3009, %v3295, 0
          %v3336 = vsel %vm3009, %v3297, 0
          %v3338 = vsel %vm3009, %v3299, 0
          %v3340 = vsel %vm3009, %v3301, 0
          %v3342 = vsel %vm3009, %v3303, 0
          %v3344 = vsel %vm3009, %v3305, 0
          %3346 = vmatpush.xpose.msra.mxu0 0.0
          %3347 = vmatpush.xpose.msra.mxu0 0.0
          %3348 = vmatpush.xpose.msra.mxu0 0.0
          %3349 = vmatpush.xpose.msra.mxu0 0.0
          %3350 = vmatpush.xpose.msra.mxu0 0.0
          %3351 = vmatpush.xpose.msra.mxu0 0.0
          %3352 = vmatpush.xpose.msra.mxu0 0.0
          %3353 = vmatpush.xpose.msra.mxu0 0.0
          %v3354 = vand.u32 %v3344, 4294901760
          %3355 = vmatpush.xpose.msra.mxu0 %v3354
          %v3356 = vand.u32 %v3342, 4294901760
          %3357 = vmatpush.xpose.msra.mxu0 %v3356
          %v3358 = vand.u32 %v3340, 4294901760
          %3359 = vmatpush.xpose.msra.mxu0 %v3358
          %v3360 = vand.u32 %v3338, 4294901760
          %3361 = vmatpush.xpose.msra.mxu0 %v3360
          %v3362 = vand.u32 %v3336, 4294901760
          %3363 = vmatpush.xpose.msra.mxu0 %v3362
          %v3364 = vand.u32 %v3334, 4294901760
          %3365 = vmatpush.xpose.msra.mxu0 %v3364
          %v3366 = vand.u32 %v3332, 4294901760
          %3367 = vmatpush.xpose.msra.mxu0 %v3366
          %v3368 = vand.u32 %v3330, 4294901760
          %3369 = vmatpush.xpose.msra.mxu0 %v3368
          %v3370 = vand.u32 %v3307, 4294901760
          %v3371 = vsub.f32 %v3307, %v3370
          %v3372 = vand.u32 %v3371, 4294901760
          %v3373 = vsub.f32 %v3371, %v3372
          %v3374 = vand.u32 %v3373, 4294901760
          %3375 = vmatmul.f32.gmra.mxu0 %v3374
          %v3376 = vpop.f32.mrf.mxu0
          %v3377 = vadd.f32 0.0, %v3376
          %v3378 = vand.u32 %v3310, 4294901760
          %v3379 = vsub.f32 %v3310, %v3378
          %v3380 = vand.u32 %v3379, 4294901760
          %v3381 = vsub.f32 %v3379, %v3380
          %v3382 = vand.u32 %v3381, 4294901760
          %3383 = vmatmul.f32.gmra.mxu0 %v3382
          %v3384 = vpop.f32.mrf.mxu0
          %v3385 = vadd.f32 0.0, %v3384
          %v3386 = vand.u32 %v3313, 4294901760
          %v3387 = vsub.f32 %v3313, %v3386
          %v3388 = vand.u32 %v3387, 4294901760
          %v3389 = vsub.f32 %v3387, %v3388
          %v3390 = vand.u32 %v3389, 4294901760
          %3391 = vmatmul.f32.gmra.mxu0 %v3390
          %v3392 = vpop.f32.mrf.mxu0
          %v3393 = vadd.f32 0.0, %v3392
          %v3394 = vand.u32 %v3316, 4294901760
          %v3395 = vsub.f32 %v3316, %v3394
          %v3396 = vand.u32 %v3395, 4294901760
          %v3397 = vsub.f32 %v3395, %v3396
          %v3398 = vand.u32 %v3397, 4294901760
          %3399 = vmatmul.f32.gmra.mxu0 %v3398
          %v3400 = vpop.f32.mrf.mxu0
          %v3401 = vadd.f32 0.0, %v3400
          %v3402 = vand.u32 %v3319, 4294901760
          %v3403 = vsub.f32 %v3319, %v3402
          %v3404 = vand.u32 %v3403, 4294901760
          %v3405 = vsub.f32 %v3403, %v3404
          %v3406 = vand.u32 %v3405, 4294901760
          %3407 = vmatmul.f32.gmra.mxu0 %v3406
          %v3408 = vpop.f32.mrf.mxu0
          %v3409 = vadd.f32 0.0, %v3408
          %v3410 = vand.u32 %v3322, 4294901760
          %v3411 = vsub.f32 %v3322, %v3410
          %v3412 = vand.u32 %v3411, 4294901760
          %v3413 = vsub.f32 %v3411, %v3412
          %v3414 = vand.u32 %v3413, 4294901760
          %3415 = vmatmul.f32.gmra.mxu0 %v3414
          %v3416 = vpop.f32.mrf.mxu0
          %v3417 = vadd.f32 0.0, %v3416
          %v3418 = vand.u32 %v3325, 4294901760
          %v3419 = vsub.f32 %v3325, %v3418
          %v3420 = vand.u32 %v3419, 4294901760
          %v3421 = vsub.f32 %v3419, %v3420
          %v3422 = vand.u32 %v3421, 4294901760
          %3423 = vmatmul.f32.gmra.mxu0 %v3422
          %v3424 = vpop.f32.mrf.mxu0
          %v3425 = vadd.f32 0.0, %v3424
          %v3426 = vand.u32 %v3328, 4294901760
          %v3427 = vsub.f32 %v3328, %v3426
          %v3428 = vand.u32 %v3427, 4294901760
          %v3429 = vsub.f32 %v3427, %v3428
          %v3430 = vand.u32 %v3429, 4294901760
          %3431 = vmatmul.f32.gmra.mxu0 %v3430
          %v3432 = vpop.f32.mrf.mxu0
          %v3433 = vadd.f32 0.0, %v3432
          %3434 = vdwg.mxu0
          %3435 = vmatpush.xpose.msra.mxu0 0.0
          %3436 = vmatpush.xpose.msra.mxu0 0.0
          %3437 = vmatpush.xpose.msra.mxu0 0.0
          %3438 = vmatpush.xpose.msra.mxu0 0.0
          %3439 = vmatpush.xpose.msra.mxu0 0.0
          %3440 = vmatpush.xpose.msra.mxu0 0.0
          %3441 = vmatpush.xpose.msra.mxu0 0.0
          %3442 = vmatpush.xpose.msra.mxu0 0.0
          %v3443 = vand.u32 %v3344, 4294901760
          %v3444 = vsub.f32 %v3344, %v3443
          %v3445 = vand.u32 %v3444, 4294901760
          %v3446 = vsub.f32 %v3444, %v3445
          %v3447 = vand.u32 %v3446, 4294901760
          %3448 = vmatpush.xpose.msra.mxu0 %v3447
          %v3449 = vand.u32 %v3342, 4294901760
          %v3450 = vsub.f32 %v3342, %v3449
          %v3451 = vand.u32 %v3450, 4294901760
          %v3452 = vsub.f32 %v3450, %v3451
          %v3453 = vand.u32 %v3452, 4294901760
          %3454 = vmatpush.xpose.msra.mxu0 %v3453
          %v3455 = vand.u32 %v3340, 4294901760
          %v3456 = vsub.f32 %v3340, %v3455
          %v3457 = vand.u32 %v3456, 4294901760
          %v3458 = vsub.f32 %v3456, %v3457
          %v3459 = vand.u32 %v3458, 4294901760
          %3460 = vmatpush.xpose.msra.mxu0 %v3459
          %v3461 = vand.u32 %v3338, 4294901760
          %v3462 = vsub.f32 %v3338, %v3461
          %v3463 = vand.u32 %v3462, 4294901760
          %v3464 = vsub.f32 %v3462, %v3463
          %v3465 = vand.u32 %v3464, 4294901760
          %3466 = vmatpush.xpose.msra.mxu0 %v3465
          %v3467 = vand.u32 %v3336, 4294901760
          %v3468 = vsub.f32 %v3336, %v3467
          %v3469 = vand.u32 %v3468, 4294901760
          %v3470 = vsub.f32 %v3468, %v3469
          %v3471 = vand.u32 %v3470, 4294901760
          %3472 = vmatpush.xpose.msra.mxu0 %v3471
          %v3473 = vand.u32 %v3334, 4294901760
          %v3474 = vsub.f32 %v3334, %v3473
          %v3475 = vand.u32 %v3474, 4294901760
          %v3476 = vsub.f32 %v3474, %v3475
          %v3477 = vand.u32 %v3476, 4294901760
          %3478 = vmatpush.xpose.msra.mxu0 %v3477
          %v3479 = vand.u32 %v3332, 4294901760
          %v3480 = vsub.f32 %v3332, %v3479
          %v3481 = vand.u32 %v3480, 4294901760
          %v3482 = vsub.f32 %v3480, %v3481
          %v3483 = vand.u32 %v3482, 4294901760
          %3484 = vmatpush.xpose.msra.mxu0 %v3483
          %v3485 = vand.u32 %v3330, 4294901760
          %v3486 = vsub.f32 %v3330, %v3485
          %v3487 = vand.u32 %v3486, 4294901760
          %v3488 = vsub.f32 %v3486, %v3487
          %v3489 = vand.u32 %v3488, 4294901760
          %3490 = vmatpush.xpose.msra.mxu0 %v3489
          %v3491 = vand.u32 %v3307, 4294901760
          %3492 = vmatmul.f32.gmra.mxu0 %v3491
          %v3493 = vpop.f32.mrf.mxu0
          %v3494 = vadd.f32 %v3377, %v3493
          %v3495 = vand.u32 %v3310, 4294901760
          %3496 = vmatmul.f32.gmra.mxu0 %v3495
          %v3497 = vpop.f32.mrf.mxu0
          %v3498 = vadd.f32 %v3385, %v3497
          %v3499 = vand.u32 %v3313, 4294901760
          %3500 = vmatmul.f32.gmra.mxu0 %v3499
          %v3501 = vpop.f32.mrf.mxu0
          %v3502 = vadd.f32 %v3393, %v3501
          %v3503 = vand.u32 %v3316, 4294901760
          %3504 = vmatmul.f32.gmra.mxu0 %v3503
          %v3505 = vpop.f32.mrf.mxu0
          %v3506 = vadd.f32 %v3401, %v3505
          %v3507 = vand.u32 %v3319, 4294901760
          %3508 = vmatmul.f32.gmra.mxu0 %v3507
          %v3509 = vpop.f32.mrf.mxu0
          %v3510 = vadd.f32 %v3409, %v3509
          %v3511 = vand.u32 %v3322, 4294901760
          %3512 = vmatmul.f32.gmra.mxu0 %v3511
          %v3513 = vpop.f32.mrf.mxu0
          %v3514 = vadd.f32 %v3417, %v3513
          %v3515 = vand.u32 %v3325, 4294901760
          %3516 = vmatmul.f32.gmra.mxu0 %v3515
          %v3517 = vpop.f32.mrf.mxu0
          %v3518 = vadd.f32 %v3425, %v3517
          %v3519 = vand.u32 %v3328, 4294901760
          %3520 = vmatmul.f32.gmra.mxu0 %v3519
          %v3521 = vpop.f32.mrf.mxu0
          %v3522 = vadd.f32 %v3433, %v3521
          %3523 = vdwg.mxu0
          %3524 = vmatpush.xpose.msra.mxu0 0.0
          %3525 = vmatpush.xpose.msra.mxu0 0.0
          %3526 = vmatpush.xpose.msra.mxu0 0.0
          %3527 = vmatpush.xpose.msra.mxu0 0.0
          %3528 = vmatpush.xpose.msra.mxu0 0.0
          %3529 = vmatpush.xpose.msra.mxu0 0.0
          %3530 = vmatpush.xpose.msra.mxu0 0.0
          %3531 = vmatpush.xpose.msra.mxu0 0.0
          %v3532 = vand.u32 %v3344, 4294901760
          %v3533 = vsub.f32 %v3344, %v3532
          %3534 = vmatpush.xpose.msra.mxu0 %v3533
          %v3535 = vand.u32 %v3342, 4294901760
          %v3536 = vsub.f32 %v3342, %v3535
          %3537 = vmatpush.xpose.msra.mxu0 %v3536
          %v3538 = vand.u32 %v3340, 4294901760
          %v3539 = vsub.f32 %v3340, %v3538
          %3540 = vmatpush.xpose.msra.mxu0 %v3539
          %v3541 = vand.u32 %v3338, 4294901760
          %v3542 = vsub.f32 %v3338, %v3541
          %3543 = vmatpush.xpose.msra.mxu0 %v3542
          %v3544 = vand.u32 %v3336, 4294901760
          %v3545 = vsub.f32 %v3336, %v3544
          %3546 = vmatpush.xpose.msra.mxu0 %v3545
          %v3547 = vand.u32 %v3334, 4294901760
          %v3548 = vsub.f32 %v3334, %v3547
          %3549 = vmatpush.xpose.msra.mxu0 %v3548
          %v3550 = vand.u32 %v3332, 4294901760
          %v3551 = vsub.f32 %v3332, %v3550
          %3552 = vmatpush.xpose.msra.mxu0 %v3551
          %v3553 = vand.u32 %v3330, 4294901760
          %v3554 = vsub.f32 %v3330, %v3553
          %3555 = vmatpush.xpose.msra.mxu0 %v3554
          %v3556 = vand.u32 %v3307, 4294901760
          %v3557 = vsub.f32 %v3307, %v3556
          %3558 = vmatmul.f32.gmra.mxu0 %v3557
          %v3559 = vpop.f32.mrf.mxu0
          %v3560 = vadd.f32 %v3494, %v3559
          %v3561 = vand.u32 %v3310, 4294901760
          %v3562 = vsub.f32 %v3310, %v3561
          %3563 = vmatmul.f32.gmra.mxu0 %v3562
          %v3564 = vpop.f32.mrf.mxu0
          %v3565 = vadd.f32 %v3498, %v3564
          %v3566 = vand.u32 %v3313, 4294901760
          %v3567 = vsub.f32 %v3313, %v3566
          %3568 = vmatmul.f32.gmra.mxu0 %v3567
          %v3569 = vpop.f32.mrf.mxu0
          %v3570 = vadd.f32 %v3502, %v3569
          %v3571 = vand.u32 %v3316, 4294901760
          %v3572 = vsub.f32 %v3316, %v3571
          %3573 = vmatmul.f32.gmra.mxu0 %v3572
          %v3574 = vpop.f32.mrf.mxu0
          %v3575 = vadd.f32 %v3506, %v3574
          %v3576 = vand.u32 %v3319, 4294901760
          %v3577 = vsub.f32 %v3319, %v3576
          %3578 = vmatmul.f32.gmra.mxu0 %v3577
          %v3579 = vpop.f32.mrf.mxu0
          %v3580 = vadd.f32 %v3510, %v3579
          %v3581 = vand.u32 %v3322, 4294901760
          %v3582 = vsub.f32 %v3322, %v3581
          %3583 = vmatmul.f32.gmra.mxu0 %v3582
          %v3584 = vpop.f32.mrf.mxu0
          %v3585 = vadd.f32 %v3514, %v3584
          %v3586 = vand.u32 %v3325, 4294901760
          %v3587 = vsub.f32 %v3325, %v3586
          %3588 = vmatmul.f32.gmra.mxu0 %v3587
          %v3589 = vpop.f32.mrf.mxu0
          %v3590 = vadd.f32 %v3518, %v3589
          %v3591 = vand.u32 %v3328, 4294901760
          %v3592 = vsub.f32 %v3328, %v3591
          %3593 = vmatmul.f32.gmra.mxu0 %v3592
          %v3594 = vpop.f32.mrf.mxu0
          %v3595 = vadd.f32 %v3522, %v3594
          %3596 = vdwg.mxu0
          %3597 = vmatpush.xpose.msra.mxu0 0.0
          %3598 = vmatpush.xpose.msra.mxu0 0.0
          %3599 = vmatpush.xpose.msra.mxu0 0.0
          %3600 = vmatpush.xpose.msra.mxu0 0.0
          %3601 = vmatpush.xpose.msra.mxu0 0.0
          %3602 = vmatpush.xpose.msra.mxu0 0.0
          %3603 = vmatpush.xpose.msra.mxu0 0.0
          %3604 = vmatpush.xpose.msra.mxu0 0.0
          %v3605 = vand.u32 %v3344, 4294901760
          %3606 = vmatpush.xpose.msra.mxu0 %v3605
          %v3607 = vand.u32 %v3342, 4294901760
          %3608 = vmatpush.xpose.msra.mxu0 %v3607
          %v3609 = vand.u32 %v3340, 4294901760
          %3610 = vmatpush.xpose.msra.mxu0 %v3609
          %v3611 = vand.u32 %v3338, 4294901760
          %3612 = vmatpush.xpose.msra.mxu0 %v3611
          %v3613 = vand.u32 %v3336, 4294901760
          %3614 = vmatpush.xpose.msra.mxu0 %v3613
          %v3615 = vand.u32 %v3334, 4294901760
          %3616 = vmatpush.xpose.msra.mxu0 %v3615
          %v3617 = vand.u32 %v3332, 4294901760
          %3618 = vmatpush.xpose.msra.mxu0 %v3617
          %v3619 = vand.u32 %v3330, 4294901760
          %3620 = vmatpush.xpose.msra.mxu0 %v3619
          %v3621 = vand.u32 %v3307, 4294901760
          %v3622 = vsub.f32 %v3307, %v3621
          %v3623 = vand.u32 %v3622, 4294901760
          %3624 = vmatmul.f32.gmra.mxu0 %v3623
          %v3625 = vpop.f32.mrf.mxu0
          %v3626 = vadd.f32 %v3560, %v3625
          %v3627 = vand.u32 %v3310, 4294901760
          %v3628 = vsub.f32 %v3310, %v3627
          %v3629 = vand.u32 %v3628, 4294901760
          %3630 = vmatmul.f32.gmra.mxu0 %v3629
          %v3631 = vpop.f32.mrf.mxu0
          %v3632 = vadd.f32 %v3565, %v3631
          %v3633 = vand.u32 %v3313, 4294901760
          %v3634 = vsub.f32 %v3313, %v3633
          %v3635 = vand.u32 %v3634, 4294901760
          %3636 = vmatmul.f32.gmra.mxu0 %v3635
          %v3637 = vpop.f32.mrf.mxu0
          %v3638 = vadd.f32 %v3570, %v3637
          %v3639 = vand.u32 %v3316, 4294901760
          %v3640 = vsub.f32 %v3316, %v3639
          %v3641 = vand.u32 %v3640, 4294901760
          %3642 = vmatmul.f32.gmra.mxu0 %v3641
          %v3643 = vpop.f32.mrf.mxu0
          %v3644 = vadd.f32 %v3575, %v3643
          %v3645 = vand.u32 %v3319, 4294901760
          %v3646 = vsub.f32 %v3319, %v3645
          %v3647 = vand.u32 %v3646, 4294901760
          %3648 = vmatmul.f32.gmra.mxu0 %v3647
          %v3649 = vpop.f32.mrf.mxu0
          %v3650 = vadd.f32 %v3580, %v3649
          %v3651 = vand.u32 %v3322, 4294901760
          %v3652 = vsub.f32 %v3322, %v3651
          %v3653 = vand.u32 %v3652, 4294901760
          %3654 = vmatmul.f32.gmra.mxu0 %v3653
          %v3655 = vpop.f32.mrf.mxu0
          %v3656 = vadd.f32 %v3585, %v3655
          %v3657 = vand.u32 %v3325, 4294901760
          %v3658 = vsub.f32 %v3325, %v3657
          %v3659 = vand.u32 %v3658, 4294901760
          %3660 = vmatmul.f32.gmra.mxu0 %v3659
          %v3661 = vpop.f32.mrf.mxu0
          %v3662 = vadd.f32 %v3590, %v3661
          %v3663 = vand.u32 %v3328, 4294901760
          %v3664 = vsub.f32 %v3328, %v3663
          %v3665 = vand.u32 %v3664, 4294901760
          %3666 = vmatmul.f32.gmra.mxu0 %v3665
          %v3667 = vpop.f32.mrf.mxu0
          %v3668 = vadd.f32 %v3595, %v3667
          %3669 = vdwg.mxu0
          %3670 = vmatpush.xpose.msra.mxu0 0.0
          %3671 = vmatpush.xpose.msra.mxu0 0.0
          %3672 = vmatpush.xpose.msra.mxu0 0.0
          %3673 = vmatpush.xpose.msra.mxu0 0.0
          %3674 = vmatpush.xpose.msra.mxu0 0.0
          %3675 = vmatpush.xpose.msra.mxu0 0.0
          %3676 = vmatpush.xpose.msra.mxu0 0.0
          %3677 = vmatpush.xpose.msra.mxu0 0.0
          %v3678 = vand.u32 %v3344, 4294901760
          %v3679 = vsub.f32 %v3344, %v3678
          %v3680 = vand.u32 %v3679, 4294901760
          %3681 = vmatpush.xpose.msra.mxu0 %v3680
          %v3682 = vand.u32 %v3342, 4294901760
          %v3683 = vsub.f32 %v3342, %v3682
          %v3684 = vand.u32 %v3683, 4294901760
          %3685 = vmatpush.xpose.msra.mxu0 %v3684
          %v3686 = vand.u32 %v3340, 4294901760
          %v3687 = vsub.f32 %v3340, %v3686
          %v3688 = vand.u32 %v3687, 4294901760
          %3689 = vmatpush.xpose.msra.mxu0 %v3688
          %v3690 = vand.u32 %v3338, 4294901760
          %v3691 = vsub.f32 %v3338, %v3690
          %v3692 = vand.u32 %v3691, 4294901760
          %3693 = vmatpush.xpose.msra.mxu0 %v3692
          %v3694 = vand.u32 %v3336, 4294901760
          %v3695 = vsub.f32 %v3336, %v3694
          %v3696 = vand.u32 %v3695, 4294901760
          %3697 = vmatpush.xpose.msra.mxu0 %v3696
          %v3698 = vand.u32 %v3334, 4294901760
          %v3699 = vsub.f32 %v3334, %v3698
          %v3700 = vand.u32 %v3699, 4294901760
          %3701 = vmatpush.xpose.msra.mxu0 %v3700
          %v3702 = vand.u32 %v3332, 4294901760
          %v3703 = vsub.f32 %v3332, %v3702
          %v3704 = vand.u32 %v3703, 4294901760
          %3705 = vmatpush.xpose.msra.mxu0 %v3704
          %v3706 = vand.u32 %v3330, 4294901760
          %v3707 = vsub.f32 %v3330, %v3706
          %v3708 = vand.u32 %v3707, 4294901760
          %3709 = vmatpush.xpose.msra.mxu0 %v3708
          %v3710 = vand.u32 %v3307, 4294901760
          %3711 = vmatmul.f32.gmra.mxu0 %v3710
          %v3712 = vpop.f32.mrf.mxu0
          %v3713 = vadd.f32 %v3626, %v3712
          %v3714 = vand.u32 %v3310, 4294901760
          %3715 = vmatmul.f32.gmra.mxu0 %v3714
          %v3716 = vpop.f32.mrf.mxu0
          %v3717 = vadd.f32 %v3632, %v3716
          %v3718 = vand.u32 %v3313, 4294901760
          %3719 = vmatmul.f32.gmra.mxu0 %v3718
          %v3720 = vpop.f32.mrf.mxu0
          %v3721 = vadd.f32 %v3638, %v3720
          %v3722 = vand.u32 %v3316, 4294901760
          %3723 = vmatmul.f32.gmra.mxu0 %v3722
          %v3724 = vpop.f32.mrf.mxu0
          %v3725 = vadd.f32 %v3644, %v3724
          %v3726 = vand.u32 %v3319, 4294901760
          %3727 = vmatmul.f32.gmra.mxu0 %v3726
          %v3728 = vpop.f32.mrf.mxu0
          %v3729 = vadd.f32 %v3650, %v3728
          %v3730 = vand.u32 %v3322, 4294901760
          %3731 = vmatmul.f32.gmra.mxu0 %v3730
          %v3732 = vpop.f32.mrf.mxu0
          %v3733 = vadd.f32 %v3656, %v3732
          %v3734 = vand.u32 %v3325, 4294901760
          %3735 = vmatmul.f32.gmra.mxu0 %v3734
          %v3736 = vpop.f32.mrf.mxu0
          %v3737 = vadd.f32 %v3662, %v3736
          %v3738 = vand.u32 %v3328, 4294901760
          %3739 = vmatmul.f32.gmra.mxu0 %v3738
          %v3740 = vpop.f32.mrf.mxu0
          %v3741 = vadd.f32 %v3668, %v3740
          %3742 = vdwg.mxu0
          %3743 = vmatpush.xpose.msra.mxu0 0.0
          %3744 = vmatpush.xpose.msra.mxu0 0.0
          %3745 = vmatpush.xpose.msra.mxu0 0.0
          %3746 = vmatpush.xpose.msra.mxu0 0.0
          %3747 = vmatpush.xpose.msra.mxu0 0.0
          %3748 = vmatpush.xpose.msra.mxu0 0.0
          %3749 = vmatpush.xpose.msra.mxu0 0.0
          %3750 = vmatpush.xpose.msra.mxu0 0.0
          %v3751 = vand.u32 %v3344, 4294901760
          %3752 = vmatpush.xpose.msra.mxu0 %v3751
          %v3753 = vand.u32 %v3342, 4294901760
          %3754 = vmatpush.xpose.msra.mxu0 %v3753
          %v3755 = vand.u32 %v3340, 4294901760
          %3756 = vmatpush.xpose.msra.mxu0 %v3755
          %v3757 = vand.u32 %v3338, 4294901760
          %3758 = vmatpush.xpose.msra.mxu0 %v3757
          %v3759 = vand.u32 %v3336, 4294901760
          %3760 = vmatpush.xpose.msra.mxu0 %v3759
          %v3761 = vand.u32 %v3334, 4294901760
          %3762 = vmatpush.xpose.msra.mxu0 %v3761
          %v3763 = vand.u32 %v3332, 4294901760
          %3764 = vmatpush.xpose.msra.mxu0 %v3763
          %v3765 = vand.u32 %v3330, 4294901760
          %3766 = vmatpush.xpose.msra.mxu0 %v3765
          %v3767 = vand.u32 %v3307, 4294901760
          %3768 = vmatmul.f32.gmra.mxu0 %v3767
          %v3769 = vpop.f32.mrf.mxu0
          %v3770 = vadd.f32 %v3713, %v3769
          %v3771 = vand.u32 %v3310, 4294901760
          %3772 = vmatmul.f32.gmra.mxu0 %v3771
          %v3773 = vpop.f32.mrf.mxu0
          %v3774 = vadd.f32 %v3717, %v3773
          %v3775 = vand.u32 %v3313, 4294901760
          %3776 = vmatmul.f32.gmra.mxu0 %v3775
          %v3777 = vpop.f32.mrf.mxu0
          %v3778 = vadd.f32 %v3721, %v3777
          %v3779 = vand.u32 %v3316, 4294901760
          %3780 = vmatmul.f32.gmra.mxu0 %v3779
          %v3781 = vpop.f32.mrf.mxu0
          %v3782 = vadd.f32 %v3725, %v3781
          %v3783 = vand.u32 %v3319, 4294901760
          %3784 = vmatmul.f32.gmra.mxu0 %v3783
          %v3785 = vpop.f32.mrf.mxu0
          %v3786 = vadd.f32 %v3729, %v3785
          %v3787 = vand.u32 %v3322, 4294901760
          %3788 = vmatmul.f32.gmra.mxu0 %v3787
          %v3789 = vpop.f32.mrf.mxu0
          %v3790 = vadd.f32 %v3733, %v3789
          %v3791 = vand.u32 %v3325, 4294901760
          %3792 = vmatmul.f32.gmra.mxu0 %v3791
          %v3793 = vpop.f32.mrf.mxu0
          %v3794 = vadd.f32 %v3737, %v3793
          %v3795 = vand.u32 %v3328, 4294901760
          %3796 = vmatmul.f32.gmra.mxu0 %v3795
          %v3797 = vpop.f32.mrf.mxu0
          %v3798 = vadd.f32 %v3741, %v3797
          %3799 = vdwg.mxu0
          %s3800 = sld [smem:[#allocation4]]
          %v3801 = vstv %s3800
          %v3802 = vmul.f32 %v3770, %v3801
          %v3803 = vmul.f32 %v3774, %v3801
          %v3804 = vmul.f32 %v3778, %v3801
          %v3805 = vmul.f32 %v3782, %v3801
          %v3806 = vmul.f32 %v3786, %v3801
          %v3807 = vmul.f32 %v3790, %v3801
          %v3808 = vmul.f32 %v3794, %v3801
          %v3809 = vmul.f32 %v3798, %v3801
          %v3810 = vld [vmem:[%s4] sm:$0xff]
          %v3811 = vld [vmem:[%s4 + $0x8] sm:$0xff]
          %v3812 = vld [vmem:[%s4 + $0x10] sm:$0xff]
          %v3813 = vld [vmem:[%s4 + $0x18] sm:$0xff]
          %v3814 = vld [vmem:[%s4 + $0x20] sm:$0xff]
          %v3815 = vld [vmem:[%s4 + $0x28] sm:$0xff]
          %v3816 = vld [vmem:[%s4 + $0x30] sm:$0xff]
          %v3817 = vld [vmem:[%s4 + $0x38] sm:$0xff]
          %v3818 = vadd.f32 %v3802, %v3810
          %v3819 = vadd.f32 %v3803, %v3811
          %v3820 = vadd.f32 %v3804, %v3812
          %v3821 = vadd.f32 %v3805, %v3813
          %v3822 = vadd.f32 %v3806, %v3814
          %v3823 = vadd.f32 %v3807, %v3815
          %v3824 = vadd.f32 %v3808, %v3816
          %v3825 = vadd.f32 %v3809, %v3817
          %v3826 = vadd.f32 %v3818, %v2984
          %v3827 = vadd.f32 %v3819, %v2985
          %v3828 = vadd.f32 %v3820, %v2986
          %v3829 = vadd.f32 %v3821, %v2987
          %v3830 = vadd.f32 %v3822, %v2988
          %v3831 = vadd.f32 %v3823, %v2989
          %v3832 = vadd.f32 %v3824, %v2990
          %v3833 = vadd.f32 %v3825, %v2991
          %vm3834 = vcmask 523264
          %v3835 = vsel %vm3834, %v3826, -inf
          %3836 = vmax.xlane.f32.xlu0 %v3835
          %v3837 = vpop.xlane.xlu0 %3836
          %v3838 = vsel %vm3834, %v3827, -inf
          %3839 = vmax.xlane.f32.xlu0 %v3838
          %v3840 = vpop.xlane.xlu0 %3839
          %v3841 = vsel %vm3834, %v3828, -inf
          %3842 = vmax.xlane.f32.xlu0 %v3841
          %v3843 = vpop.xlane.xlu0 %3842
          %v3844 = vsel %vm3834, %v3829, -inf
          %3845 = vmax.xlane.f32.xlu0 %v3844
          %v3846 = vpop.xlane.xlu0 %3845
          %v3847 = vsel %vm3834, %v3830, -inf
          %3848 = vmax.xlane.f32.xlu0 %v3847
          %v3849 = vpop.xlane.xlu0 %3848
          %v3850 = vsel %vm3834, %v3831, -inf
          %3851 = vmax.xlane.f32.xlu0 %v3850
          %v3852 = vpop.xlane.xlu0 %3851
          %v3853 = vsel %vm3834, %v3832, -inf
          %3854 = vmax.xlane.f32.xlu0 %v3853
          %v3855 = vpop.xlane.xlu0 %3854
          %v3856 = vsel %vm3834, %v3833, -inf
          %3857 = vmax.xlane.f32.xlu0 %v3856
          %v3858 = vpop.xlane.xlu0 %3857
          %v3859 = vsub.f32 %v3826, %v3837
          %v3860 = vsub.f32 %v3827, %v3840
          %v3861 = vsub.f32 %v3828, %v3843
          %v3862 = vsub.f32 %v3829, %v3846
          %v3863 = vsub.f32 %v3830, %v3849
          %v3864 = vsub.f32 %v3831, %v3852
          %v3865 = vsub.f32 %v3832, %v3855
          %v3866 = vsub.f32 %v3833, %v3858
          %v3867 = vmul.f32 %v3859, 1.442695
          %v3868 = vpow.pop %v3867
          %v3869 = vmul.f32 %v3860, 1.442695
          %v3870 = vpow.pop %v3869
          %v3871 = vmul.f32 %v3861, 1.442695
          %v3872 = vpow.pop %v3871
          %v3873 = vmul.f32 %v3862, 1.442695
          %v3874 = vpow.pop %v3873
          %v3875 = vmul.f32 %v3863, 1.442695
          %v3876 = vpow.pop %v3875
          %v3877 = vmul.f32 %v3864, 1.442695
          %v3878 = vpow.pop %v3877
          %v3879 = vmul.f32 %v3865, 1.442695
          %v3880 = vpow.pop %v3879
          %v3881 = vmul.f32 %v3866, 1.442695
          %v3882 = vpow.pop %v3881
          %v3883 = vsel %vm3834, %v3868, 0.0
          %3884 = vadd.xlane.f32.xlu0 %v3883
          %v3885 = vpop.xlane.xlu0 %3884
          %v3886 = vsel %vm3834, %v3870, 0.0
          %3887 = vadd.xlane.f32.xlu0 %v3886
          %v3888 = vpop.xlane.xlu0 %3887
          %v3889 = vsel %vm3834, %v3872, 0.0
          %3890 = vadd.xlane.f32.xlu0 %v3889
          %v3891 = vpop.xlane.xlu0 %3890
          %v3892 = vsel %vm3834, %v3874, 0.0
          %3893 = vadd.xlane.f32.xlu0 %v3892
          %v3894 = vpop.xlane.xlu0 %3893
          %v3895 = vsel %vm3834, %v3876, 0.0
          %3896 = vadd.xlane.f32.xlu0 %v3895
          %v3897 = vpop.xlane.xlu0 %3896
          %v3898 = vsel %vm3834, %v3878, 0.0
          %3899 = vadd.xlane.f32.xlu0 %v3898
          %v3900 = vpop.xlane.xlu0 %3899
          %v3901 = vsel %vm3834, %v3880, 0.0
          %3902 = vadd.xlane.f32.xlu0 %v3901
          %v3903 = vpop.xlane.xlu0 %3902
          %v3904 = vsel %vm3834, %v3882, 0.0
          %3905 = vadd.xlane.f32.xlu0 %v3904
          %v3906 = vpop.xlane.xlu0 %3905
          %v3907 = vrcp.pop %v3885
          %v3908 = vrcp.pop %v3888
          %v3909 = vrcp.pop %v3891
          %v3910 = vrcp.pop %v3894
          %v3911 = vrcp.pop %v3897
          %v3912 = vrcp.pop %v3900
          %v3913 = vrcp.pop %v3903
          %v3914 = vrcp.pop %v3906
          %v3915 = vmul.f32 %v3868, %v3907
          %v3916 = vmul.f32 %v3870, %v3908
          %v3917 = vmul.f32 %v3872, %v3909
          %v3918 = vmul.f32 %v3874, %v3910
          %v3919 = vmul.f32 %v3876, %v3911
          %v3920 = vmul.f32 %v3878, %v3912
          %v3921 = vmul.f32 %v3880, %v3913
          %v3922 = vmul.f32 %v3882, %v3914
          %3931 = vrot.lane.b32.xlu0 %v2993, 96
          %v3932 = vpop.permute.xlu0 %3931
          %3933 = vrot.lane.b32.xlu0 %v2994, 96
          %v3934 = vpop.permute.xlu0 %3933
          %3935 = vrot.lane.b32.xlu0 %v2995, 96
          %v3936 = vpop.permute.xlu0 %3935
          %3937 = vrot.lane.b32.xlu0 %v2996, 96
          %v3938 = vpop.permute.xlu0 %3937
          %3939 = vrot.lane.b32.xlu0 %v2997, 96
          %v3940 = vpop.permute.xlu0 %3939
          %3941 = vrot.lane.b32.xlu0 %v2998, 96
          %v3942 = vpop.permute.xlu0 %3941
          %3943 = vrot.lane.b32.xlu0 %v2999, 96
          %v3944 = vpop.permute.xlu0 %3943
          %3945 = vrot.lane.b32.xlu0 %v3000, 96
          %v3946 = vpop.permute.xlu0 %3945
          %v3956 = vsel %vm3834, %v3915, 0
          %v3959 = vsel %vm3834, %v3916, 0
          %v3962 = vsel %vm3834, %v3917, 0
          %v3965 = vsel %vm3834, %v3918, 0
          %v3968 = vsel %vm3834, %v3919, 0
          %v3971 = vsel %vm3834, %v3920, 0
          %v3974 = vsel %vm3834, %v3921, 0
          %v3977 = vsel %vm3834, %v3922, 0
          %3979 = vmatpush.msra.mxu0 0.0
          %3980 = vmatpush.msra.mxu0 0.0
          %3981 = vmatpush.msra.mxu0 0.0
          %3982 = vmatpush.msra.mxu0 0.0
          %3983 = vmatpush.msra.mxu0 0.0
          %3984 = vmatpush.msra.mxu0 0.0
          %3985 = vmatpush.msra.mxu0 0.0
          %3986 = vmatpush.msra.mxu0 0.0
          %v3987 = vand.u32 %v3946, 4294901760
          %3988 = vmatpush.msra.mxu0 %v3987
          %v3989 = vand.u32 %v3944, 4294901760
          %3990 = vmatpush.msra.mxu0 %v3989
          %v3991 = vand.u32 %v3942, 4294901760
          %3992 = vmatpush.msra.mxu0 %v3991
          %v3993 = vand.u32 %v3940, 4294901760
          %3994 = vmatpush.msra.mxu0 %v3993
          %v3995 = vand.u32 %v3938, 4294901760
          %3996 = vmatpush.msra.mxu0 %v3995
          %v3997 = vand.u32 %v3936, 4294901760
          %3998 = vmatpush.msra.mxu0 %v3997
          %v3999 = vand.u32 %v3934, 4294901760
          %4000 = vmatpush.msra.mxu0 %v3999
          %v4001 = vand.u32 %v3932, 4294901760
          %4002 = vmatpush.msra.mxu0 %v4001
          %v4003 = vand.u32 %v3956, 4294901760
          %v4004 = vsub.f32 %v3956, %v4003
          %v4005 = vand.u32 %v4004, 4294901760
          %v4006 = vsub.f32 %v4004, %v4005
          %v4007 = vand.u32 %v4006, 4294901760
          %4008 = vmatmul.f32.gmra.mxu0 %v4007
          %v4009 = vpop.f32.mrf.mxu0
          %v4010 = vadd.f32 0.0, %v4009
          %v4011 = vand.u32 %v3959, 4294901760
          %v4012 = vsub.f32 %v3959, %v4011
          %v4013 = vand.u32 %v4012, 4294901760
          %v4014 = vsub.f32 %v4012, %v4013
          %v4015 = vand.u32 %v4014, 4294901760
          %4016 = vmatmul.f32.gmra.mxu0 %v4015
          %v4017 = vpop.f32.mrf.mxu0
          %v4018 = vadd.f32 0.0, %v4017
          %v4019 = vand.u32 %v3962, 4294901760
          %v4020 = vsub.f32 %v3962, %v4019
          %v4021 = vand.u32 %v4020, 4294901760
          %v4022 = vsub.f32 %v4020, %v4021
          %v4023 = vand.u32 %v4022, 4294901760
          %4024 = vmatmul.f32.gmra.mxu0 %v4023
          %v4025 = vpop.f32.mrf.mxu0
          %v4026 = vadd.f32 0.0, %v4025
          %v4027 = vand.u32 %v3965, 4294901760
          %v4028 = vsub.f32 %v3965, %v4027
          %v4029 = vand.u32 %v4028, 4294901760
          %v4030 = vsub.f32 %v4028, %v4029
          %v4031 = vand.u32 %v4030, 4294901760
          %4032 = vmatmul.f32.gmra.mxu0 %v4031
          %v4033 = vpop.f32.mrf.mxu0
          %v4034 = vadd.f32 0.0, %v4033
          %v4035 = vand.u32 %v3968, 4294901760
          %v4036 = vsub.f32 %v3968, %v4035
          %v4037 = vand.u32 %v4036, 4294901760
          %v4038 = vsub.f32 %v4036, %v4037
          %v4039 = vand.u32 %v4038, 4294901760
          %4040 = vmatmul.f32.gmra.mxu0 %v4039
          %v4041 = vpop.f32.mrf.mxu0
          %v4042 = vadd.f32 0.0, %v4041
          %v4043 = vand.u32 %v3971, 4294901760
          %v4044 = vsub.f32 %v3971, %v4043
          %v4045 = vand.u32 %v4044, 4294901760
          %v4046 = vsub.f32 %v4044, %v4045
          %v4047 = vand.u32 %v4046, 4294901760
          %4048 = vmatmul.f32.gmra.mxu0 %v4047
          %v4049 = vpop.f32.mrf.mxu0
          %v4050 = vadd.f32 0.0, %v4049
          %v4051 = vand.u32 %v3974, 4294901760
          %v4052 = vsub.f32 %v3974, %v4051
          %v4053 = vand.u32 %v4052, 4294901760
          %v4054 = vsub.f32 %v4052, %v4053
          %v4055 = vand.u32 %v4054, 4294901760
          %4056 = vmatmul.f32.gmra.mxu0 %v4055
          %v4057 = vpop.f32.mrf.mxu0
          %v4058 = vadd.f32 0.0, %v4057
          %v4059 = vand.u32 %v3977, 4294901760
          %v4060 = vsub.f32 %v3977, %v4059
          %v4061 = vand.u32 %v4060, 4294901760
          %v4062 = vsub.f32 %v4060, %v4061
          %v4063 = vand.u32 %v4062, 4294901760
          %4064 = vmatmul.f32.gmra.mxu0 %v4063
          %v4065 = vpop.f32.mrf.mxu0
          %v4066 = vadd.f32 0.0, %v4065
          %4067 = vdwg.mxu0
          %4068 = vmatpush.msra.mxu0 0.0
          %4069 = vmatpush.msra.mxu0 0.0
          %4070 = vmatpush.msra.mxu0 0.0
          %4071 = vmatpush.msra.mxu0 0.0
          %4072 = vmatpush.msra.mxu0 0.0
          %4073 = vmatpush.msra.mxu0 0.0
          %4074 = vmatpush.msra.mxu0 0.0
          %4075 = vmatpush.msra.mxu0 0.0
          %v4076 = vand.u32 %v3946, 4294901760
          %v4077 = vsub.f32 %v3946, %v4076
          %v4078 = vand.u32 %v4077, 4294901760
          %v4079 = vsub.f32 %v4077, %v4078
          %v4080 = vand.u32 %v4079, 4294901760
          %4081 = vmatpush.msra.mxu0 %v4080
          %v4082 = vand.u32 %v3944, 4294901760
          %v4083 = vsub.f32 %v3944, %v4082
          %v4084 = vand.u32 %v4083, 4294901760
          %v4085 = vsub.f32 %v4083, %v4084
          %v4086 = vand.u32 %v4085, 4294901760
          %4087 = vmatpush.msra.mxu0 %v4086
          %v4088 = vand.u32 %v3942, 4294901760
          %v4089 = vsub.f32 %v3942, %v4088
          %v4090 = vand.u32 %v4089, 4294901760
          %v4091 = vsub.f32 %v4089, %v4090
          %v4092 = vand.u32 %v4091, 4294901760
          %4093 = vmatpush.msra.mxu0 %v4092
          %v4094 = vand.u32 %v3940, 4294901760
          %v4095 = vsub.f32 %v3940, %v4094
          %v4096 = vand.u32 %v4095, 4294901760
          %v4097 = vsub.f32 %v4095, %v4096
          %v4098 = vand.u32 %v4097, 4294901760
          %4099 = vmatpush.msra.mxu0 %v4098
          %v4100 = vand.u32 %v3938, 4294901760
          %v4101 = vsub.f32 %v3938, %v4100
          %v4102 = vand.u32 %v4101, 4294901760
          %v4103 = vsub.f32 %v4101, %v4102
          %v4104 = vand.u32 %v4103, 4294901760
          %4105 = vmatpush.msra.mxu0 %v4104
          %v4106 = vand.u32 %v3936, 4294901760
          %v4107 = vsub.f32 %v3936, %v4106
          %v4108 = vand.u32 %v4107, 4294901760
          %v4109 = vsub.f32 %v4107, %v4108
          %v4110 = vand.u32 %v4109, 4294901760
          %4111 = vmatpush.msra.mxu0 %v4110
          %v4112 = vand.u32 %v3934, 4294901760
          %v4113 = vsub.f32 %v3934, %v4112
          %v4114 = vand.u32 %v4113, 4294901760
          %v4115 = vsub.f32 %v4113, %v4114
          %v4116 = vand.u32 %v4115, 4294901760
          %4117 = vmatpush.msra.mxu0 %v4116
          %v4118 = vand.u32 %v3932, 4294901760
          %v4119 = vsub.f32 %v3932, %v4118
          %v4120 = vand.u32 %v4119, 4294901760
          %v4121 = vsub.f32 %v4119, %v4120
          %v4122 = vand.u32 %v4121, 4294901760
          %4123 = vmatpush.msra.mxu0 %v4122
          %v4124 = vand.u32 %v3956, 4294901760
          %4125 = vmatmul.f32.gmra.mxu0 %v4124
          %v4126 = vpop.f32.mrf.mxu0
          %v4127 = vadd.f32 %v4010, %v4126
          %v4128 = vand.u32 %v3959, 4294901760
          %4129 = vmatmul.f32.gmra.mxu0 %v4128
          %v4130 = vpop.f32.mrf.mxu0
          %v4131 = vadd.f32 %v4018, %v4130
          %v4132 = vand.u32 %v3962, 4294901760
          %4133 = vmatmul.f32.gmra.mxu0 %v4132
          %v4134 = vpop.f32.mrf.mxu0
          %v4135 = vadd.f32 %v4026, %v4134
          %v4136 = vand.u32 %v3965, 4294901760
          %4137 = vmatmul.f32.gmra.mxu0 %v4136
          %v4138 = vpop.f32.mrf.mxu0
          %v4139 = vadd.f32 %v4034, %v4138
          %v4140 = vand.u32 %v3968, 4294901760
          %4141 = vmatmul.f32.gmra.mxu0 %v4140
          %v4142 = vpop.f32.mrf.mxu0
          %v4143 = vadd.f32 %v4042, %v4142
          %v4144 = vand.u32 %v3971, 4294901760
          %4145 = vmatmul.f32.gmra.mxu0 %v4144
          %v4146 = vpop.f32.mrf.mxu0
          %v4147 = vadd.f32 %v4050, %v4146
          %v4148 = vand.u32 %v3974, 4294901760
          %4149 = vmatmul.f32.gmra.mxu0 %v4148
          %v4150 = vpop.f32.mrf.mxu0
          %v4151 = vadd.f32 %v4058, %v4150
          %v4152 = vand.u32 %v3977, 4294901760
          %4153 = vmatmul.f32.gmra.mxu0 %v4152
          %v4154 = vpop.f32.mrf.mxu0
          %v4155 = vadd.f32 %v4066, %v4154
          %4156 = vdwg.mxu0
          %4157 = vmatpush.msra.mxu0 0.0
          %4158 = vmatpush.msra.mxu0 0.0
          %4159 = vmatpush.msra.mxu0 0.0
          %4160 = vmatpush.msra.mxu0 0.0
          %4161 = vmatpush.msra.mxu0 0.0
          %4162 = vmatpush.msra.mxu0 0.0
          %4163 = vmatpush.msra.mxu0 0.0
          %4164 = vmatpush.msra.mxu0 0.0
          %v4165 = vand.u32 %v3946, 4294901760
          %v4166 = vsub.f32 %v3946, %v4165
          %4167 = vmatpush.msra.mxu0 %v4166
          %v4168 = vand.u32 %v3944, 4294901760
          %v4169 = vsub.f32 %v3944, %v4168
          %4170 = vmatpush.msra.mxu0 %v4169
          %v4171 = vand.u32 %v3942, 4294901760
          %v4172 = vsub.f32 %v3942, %v4171
          %4173 = vmatpush.msra.mxu0 %v4172
          %v4174 = vand.u32 %v3940, 4294901760
          %v4175 = vsub.f32 %v3940, %v4174
          %4176 = vmatpush.msra.mxu0 %v4175
          %v4177 = vand.u32 %v3938, 4294901760
          %v4178 = vsub.f32 %v3938, %v4177
          %4179 = vmatpush.msra.mxu0 %v4178
          %v4180 = vand.u32 %v3936, 4294901760
          %v4181 = vsub.f32 %v3936, %v4180
          %4182 = vmatpush.msra.mxu0 %v4181
          %v4183 = vand.u32 %v3934, 4294901760
          %v4184 = vsub.f32 %v3934, %v4183
          %4185 = vmatpush.msra.mxu0 %v4184
          %v4186 = vand.u32 %v3932, 4294901760
          %v4187 = vsub.f32 %v3932, %v4186
          %4188 = vmatpush.msra.mxu0 %v4187
          %v4189 = vand.u32 %v3956, 4294901760
          %v4190 = vsub.f32 %v3956, %v4189
          %4191 = vmatmul.f32.gmra.mxu0 %v4190
          %v4192 = vpop.f32.mrf.mxu0
          %v4193 = vadd.f32 %v4127, %v4192
          %v4194 = vand.u32 %v3959, 4294901760
          %v4195 = vsub.f32 %v3959, %v4194
          %4196 = vmatmul.f32.gmra.mxu0 %v4195
          %v4197 = vpop.f32.mrf.mxu0
          %v4198 = vadd.f32 %v4131, %v4197
          %v4199 = vand.u32 %v3962, 4294901760
          %v4200 = vsub.f32 %v3962, %v4199
          %4201 = vmatmul.f32.gmra.mxu0 %v4200
          %v4202 = vpop.f32.mrf.mxu0
          %v4203 = vadd.f32 %v4135, %v4202
          %v4204 = vand.u32 %v3965, 4294901760
          %v4205 = vsub.f32 %v3965, %v4204
          %4206 = vmatmul.f32.gmra.mxu0 %v4205
          %v4207 = vpop.f32.mrf.mxu0
          %v4208 = vadd.f32 %v4139, %v4207
          %v4209 = vand.u32 %v3968, 4294901760
          %v4210 = vsub.f32 %v3968, %v4209
          %4211 = vmatmul.f32.gmra.mxu0 %v4210
          %v4212 = vpop.f32.mrf.mxu0
          %v4213 = vadd.f32 %v4143, %v4212
          %v4214 = vand.u32 %v3971, 4294901760
          %v4215 = vsub.f32 %v3971, %v4214
          %4216 = vmatmul.f32.gmra.mxu0 %v4215
          %v4217 = vpop.f32.mrf.mxu0
          %v4218 = vadd.f32 %v4147, %v4217
          %v4219 = vand.u32 %v3974, 4294901760
          %v4220 = vsub.f32 %v3974, %v4219
          %4221 = vmatmul.f32.gmra.mxu0 %v4220
          %v4222 = vpop.f32.mrf.mxu0
          %v4223 = vadd.f32 %v4151, %v4222
          %v4224 = vand.u32 %v3977, 4294901760
          %v4225 = vsub.f32 %v3977, %v4224
          %4226 = vmatmul.f32.gmra.mxu0 %v4225
          %v4227 = vpop.f32.mrf.mxu0
          %v4228 = vadd.f32 %v4155, %v4227
          %4229 = vdwg.mxu0
          %4230 = vmatpush.msra.mxu0 0.0
          %4231 = vmatpush.msra.mxu0 0.0
          %4232 = vmatpush.msra.mxu0 0.0
          %4233 = vmatpush.msra.mxu0 0.0
          %4234 = vmatpush.msra.mxu0 0.0
          %4235 = vmatpush.msra.mxu0 0.0
          %4236 = vmatpush.msra.mxu0 0.0
          %4237 = vmatpush.msra.mxu0 0.0
          %v4238 = vand.u32 %v3946, 4294901760
          %4239 = vmatpush.msra.mxu0 %v4238
          %v4240 = vand.u32 %v3944, 4294901760
          %4241 = vmatpush.msra.mxu0 %v4240
          %v4242 = vand.u32 %v3942, 4294901760
          %4243 = vmatpush.msra.mxu0 %v4242
          %v4244 = vand.u32 %v3940, 4294901760
          %4245 = vmatpush.msra.mxu0 %v4244
          %v4246 = vand.u32 %v3938, 4294901760
          %4247 = vmatpush.msra.mxu0 %v4246
          %v4248 = vand.u32 %v3936, 4294901760
          %4249 = vmatpush.msra.mxu0 %v4248
          %v4250 = vand.u32 %v3934, 4294901760
          %4251 = vmatpush.msra.mxu0 %v4250
          %v4252 = vand.u32 %v3932, 4294901760
          %4253 = vmatpush.msra.mxu0 %v4252
          %v4254 = vand.u32 %v3956, 4294901760
          %v4255 = vsub.f32 %v3956, %v4254
          %v4256 = vand.u32 %v4255, 4294901760
          %4257 = vmatmul.f32.gmra.mxu0 %v4256
          %v4258 = vpop.f32.mrf.mxu0
          %v4259 = vadd.f32 %v4193, %v4258
          %v4260 = vand.u32 %v3959, 4294901760
          %v4261 = vsub.f32 %v3959, %v4260
          %v4262 = vand.u32 %v4261, 4294901760
          %4263 = vmatmul.f32.gmra.mxu0 %v4262
          %v4264 = vpop.f32.mrf.mxu0
          %v4265 = vadd.f32 %v4198, %v4264
          %v4266 = vand.u32 %v3962, 4294901760
          %v4267 = vsub.f32 %v3962, %v4266
          %v4268 = vand.u32 %v4267, 4294901760
          %4269 = vmatmul.f32.gmra.mxu0 %v4268
          %v4270 = vpop.f32.mrf.mxu0
          %v4271 = vadd.f32 %v4203, %v4270
          %v4272 = vand.u32 %v3965, 4294901760
          %v4273 = vsub.f32 %v3965, %v4272
          %v4274 = vand.u32 %v4273, 4294901760
          %4275 = vmatmul.f32.gmra.mxu0 %v4274
          %v4276 = vpop.f32.mrf.mxu0
          %v4277 = vadd.f32 %v4208, %v4276
          %v4278 = vand.u32 %v3968, 4294901760
          %v4279 = vsub.f32 %v3968, %v4278
          %v4280 = vand.u32 %v4279, 4294901760
          %4281 = vmatmul.f32.gmra.mxu0 %v4280
          %v4282 = vpop.f32.mrf.mxu0
          %v4283 = vadd.f32 %v4213, %v4282
          %v4284 = vand.u32 %v3971, 4294901760
          %v4285 = vsub.f32 %v3971, %v4284
          %v4286 = vand.u32 %v4285, 4294901760
          %4287 = vmatmul.f32.gmra.mxu0 %v4286
          %v4288 = vpop.f32.mrf.mxu0
          %v4289 = vadd.f32 %v4218, %v4288
          %v4290 = vand.u32 %v3974, 4294901760
          %v4291 = vsub.f32 %v3974, %v4290
          %v4292 = vand.u32 %v4291, 4294901760
          %4293 = vmatmul.f32.gmra.mxu0 %v4292
          %v4294 = vpop.f32.mrf.mxu0
          %v4295 = vadd.f32 %v4223, %v4294
          %v4296 = vand.u32 %v3977, 4294901760
          %v4297 = vsub.f32 %v3977, %v4296
          %v4298 = vand.u32 %v4297, 4294901760
          %4299 = vmatmul.f32.gmra.mxu0 %v4298
          %v4300 = vpop.f32.mrf.mxu0
          %v4301 = vadd.f32 %v4228, %v4300
          %4302 = vdwg.mxu0
          %4303 = vmatpush.msra.mxu0 0.0
          %4304 = vmatpush.msra.mxu0 0.0
          %4305 = vmatpush.msra.mxu0 0.0
          %4306 = vmatpush.msra.mxu0 0.0
          %4307 = vmatpush.msra.mxu0 0.0
          %4308 = vmatpush.msra.mxu0 0.0
          %4309 = vmatpush.msra.mxu0 0.0
          %4310 = vmatpush.msra.mxu0 0.0
          %v4311 = vand.u32 %v3946, 4294901760
          %v4312 = vsub.f32 %v3946, %v4311
          %v4313 = vand.u32 %v4312, 4294901760
          %4314 = vmatpush.msra.mxu0 %v4313
          %v4315 = vand.u32 %v3944, 4294901760
          %v4316 = vsub.f32 %v3944, %v4315
          %v4317 = vand.u32 %v4316, 4294901760
          %4318 = vmatpush.msra.mxu0 %v4317
          %v4319 = vand.u32 %v3942, 4294901760
          %v4320 = vsub.f32 %v3942, %v4319
          %v4321 = vand.u32 %v4320, 4294901760
          %4322 = vmatpush.msra.mxu0 %v4321
          %v4323 = vand.u32 %v3940, 4294901760
          %v4324 = vsub.f32 %v3940, %v4323
          %v4325 = vand.u32 %v4324, 4294901760
          %4326 = vmatpush.msra.mxu0 %v4325
          %v4327 = vand.u32 %v3938, 4294901760
          %v4328 = vsub.f32 %v3938, %v4327
          %v4329 = vand.u32 %v4328, 4294901760
          %4330 = vmatpush.msra.mxu0 %v4329
          %v4331 = vand.u32 %v3936, 4294901760
          %v4332 = vsub.f32 %v3936, %v4331
          %v4333 = vand.u32 %v4332, 4294901760
          %4334 = vmatpush.msra.mxu0 %v4333
          %v4335 = vand.u32 %v3934, 4294901760
          %v4336 = vsub.f32 %v3934, %v4335
          %v4337 = vand.u32 %v4336, 4294901760
          %4338 = vmatpush.msra.mxu0 %v4337
          %v4339 = vand.u32 %v3932, 4294901760
          %v4340 = vsub.f32 %v3932, %v4339
          %v4341 = vand.u32 %v4340, 4294901760
          %4342 = vmatpush.msra.mxu0 %v4341
          %v4343 = vand.u32 %v3956, 4294901760
          %4344 = vmatmul.f32.gmra.mxu0 %v4343
          %v4345 = vpop.f32.mrf.mxu0
          %v4346 = vadd.f32 %v4259, %v4345
          %v4347 = vand.u32 %v3959, 4294901760
          %4348 = vmatmul.f32.gmra.mxu0 %v4347
          %v4349 = vpop.f32.mrf.mxu0
          %v4350 = vadd.f32 %v4265, %v4349
          %v4351 = vand.u32 %v3962, 4294901760
          %4352 = vmatmul.f32.gmra.mxu0 %v4351
          %v4353 = vpop.f32.mrf.mxu0
          %v4354 = vadd.f32 %v4271, %v4353
          %v4355 = vand.u32 %v3965, 4294901760
          %4356 = vmatmul.f32.gmra.mxu0 %v4355
          %v4357 = vpop.f32.mrf.mxu0
          %v4358 = vadd.f32 %v4277, %v4357
          %v4359 = vand.u32 %v3968, 4294901760
          %4360 = vmatmul.f32.gmra.mxu0 %v4359
          %v4361 = vpop.f32.mrf.mxu0
          %v4362 = vadd.f32 %v4283, %v4361
          %v4363 = vand.u32 %v3971, 4294901760
          %4364 = vmatmul.f32.gmra.mxu0 %v4363
          %v4365 = vpop.f32.mrf.mxu0
          %v4366 = vadd.f32 %v4289, %v4365
          %v4367 = vand.u32 %v3974, 4294901760
          %4368 = vmatmul.f32.gmra.mxu0 %v4367
          %v4369 = vpop.f32.mrf.mxu0
          %v4370 = vadd.f32 %v4295, %v4369
          %v4371 = vand.u32 %v3977, 4294901760
          %4372 = vmatmul.f32.gmra.mxu0 %v4371
          %v4373 = vpop.f32.mrf.mxu0
          %v4374 = vadd.f32 %v4301, %v4373
          %4375 = vdwg.mxu0
          %4376 = vmatpush.msra.mxu0 0.0
          %4377 = vmatpush.msra.mxu0 0.0
          %4378 = vmatpush.msra.mxu0 0.0
          %4379 = vmatpush.msra.mxu0 0.0
          %4380 = vmatpush.msra.mxu0 0.0
          %4381 = vmatpush.msra.mxu0 0.0
          %4382 = vmatpush.msra.mxu0 0.0
          %4383 = vmatpush.msra.mxu0 0.0
          %v4384 = vand.u32 %v3946, 4294901760
          %4385 = vmatpush.msra.mxu0 %v4384
          %v4386 = vand.u32 %v3944, 4294901760
          %4387 = vmatpush.msra.mxu0 %v4386
          %v4388 = vand.u32 %v3942, 4294901760
          %4389 = vmatpush.msra.mxu0 %v4388
          %v4390 = vand.u32 %v3940, 4294901760
          %4391 = vmatpush.msra.mxu0 %v4390
          %v4392 = vand.u32 %v3938, 4294901760
          %4393 = vmatpush.msra.mxu0 %v4392
          %v4394 = vand.u32 %v3936, 4294901760
          %4395 = vmatpush.msra.mxu0 %v4394
          %v4396 = vand.u32 %v3934, 4294901760
          %4397 = vmatpush.msra.mxu0 %v4396
          %v4398 = vand.u32 %v3932, 4294901760
          %4399 = vmatpush.msra.mxu0 %v4398
          %v4400 = vand.u32 %v3956, 4294901760
          %4401 = vmatmul.f32.gmra.mxu0 %v4400
          %v4402 = vpop.f32.mrf.mxu0
          %v4403 = vadd.f32 %v4346, %v4402
          %v4404 = vand.u32 %v3959, 4294901760
          %4405 = vmatmul.f32.gmra.mxu0 %v4404
          %v4406 = vpop.f32.mrf.mxu0
          %v4407 = vadd.f32 %v4350, %v4406
          %v4408 = vand.u32 %v3962, 4294901760
          %4409 = vmatmul.f32.gmra.mxu0 %v4408
          %v4410 = vpop.f32.mrf.mxu0
          %v4411 = vadd.f32 %v4354, %v4410
          %v4412 = vand.u32 %v3965, 4294901760
          %4413 = vmatmul.f32.gmra.mxu0 %v4412
          %v4414 = vpop.f32.mrf.mxu0
          %v4415 = vadd.f32 %v4358, %v4414
          %v4416 = vand.u32 %v3968, 4294901760
          %4417 = vmatmul.f32.gmra.mxu0 %v4416
          %v4418 = vpop.f32.mrf.mxu0
          %v4419 = vadd.f32 %v4362, %v4418
          %v4420 = vand.u32 %v3971, 4294901760
          %4421 = vmatmul.f32.gmra.mxu0 %v4420
          %v4422 = vpop.f32.mrf.mxu0
          %v4423 = vadd.f32 %v4366, %v4422
          %v4424 = vand.u32 %v3974, 4294901760
          %4425 = vmatmul.f32.gmra.mxu0 %v4424
          %v4426 = vpop.f32.mrf.mxu0
          %v4427 = vadd.f32 %v4370, %v4426
          %v4428 = vand.u32 %v3977, 4294901760
          %4429 = vmatmul.f32.gmra.mxu0 %v4428
          %v4430 = vpop.f32.mrf.mxu0
          %v4431 = vadd.f32 %v4374, %v4430
          %4432 = vdwg.mxu0
          %4433 = vrot.lane.b32.xlu0 %v3001, 120
          %v4434 = vpop.permute.xlu0 %4433
          %4435 = vrot.lane.b32.xlu0 %v3002, 120
          %v4436 = vpop.permute.xlu0 %4435
          %4437 = vrot.lane.b32.xlu0 %v3003, 120
          %v4438 = vpop.permute.xlu0 %4437
          %4439 = vrot.lane.b32.xlu0 %v3004, 120
          %v4440 = vpop.permute.xlu0 %4439
          %4441 = vrot.lane.b32.xlu0 %v3005, 120
          %v4442 = vpop.permute.xlu0 %4441
          %4443 = vrot.lane.b32.xlu0 %v3006, 120
          %v4444 = vpop.permute.xlu0 %4443
          %4445 = vrot.lane.b32.xlu0 %v3007, 120
          %v4446 = vpop.permute.xlu0 %4445
          %4447 = vrot.lane.b32.xlu0 %v3008, 120
          %v4448 = vpop.permute.xlu0 %4447
          %v4457 = vsel %vm3009, %v4434, 0.0
          %4458 = vadd.xlane.f32.xlu0 %v4457
          %v4459 = vpop.xlane.xlu0 %4458
          %v4460 = vsel %vm3009, %v4436, 0.0
          %4461 = vadd.xlane.f32.xlu0 %v4460
          %v4462 = vpop.xlane.xlu0 %4461
          %v4463 = vsel %vm3009, %v4438, 0.0
          %4464 = vadd.xlane.f32.xlu0 %v4463
          %v4465 = vpop.xlane.xlu0 %4464
          %v4466 = vsel %vm3009, %v4440, 0.0
          %4467 = vadd.xlane.f32.xlu0 %v4466
          %v4468 = vpop.xlane.xlu0 %4467
          %v4469 = vsel %vm3009, %v4442, 0.0
          %4470 = vadd.xlane.f32.xlu0 %v4469
          %v4471 = vpop.xlane.xlu0 %4470
          %v4472 = vsel %vm3009, %v4444, 0.0
          %4473 = vadd.xlane.f32.xlu0 %v4472
          %v4474 = vpop.xlane.xlu0 %4473
          %v4475 = vsel %vm3009, %v4446, 0.0
          %4476 = vadd.xlane.f32.xlu0 %v4475
          %v4477 = vpop.xlane.xlu0 %4476
          %v4478 = vsel %vm3009, %v4448, 0.0
          %4479 = vadd.xlane.f32.xlu0 %v4478
          %v4480 = vpop.xlane.xlu0 %4479
          %v4481 = vmax.f32 %v4459, 1e-24
          %v4482 = vmax.f32 %v4462, 1e-24
          %v4483 = vmax.f32 %v4465, 1e-24
          %v4484 = vmax.f32 %v4468, 1e-24
          %v4485 = vmax.f32 %v4471, 1e-24
          %v4486 = vmax.f32 %v4474, 1e-24
          %v4487 = vmax.f32 %v4477, 1e-24
          %v4488 = vmax.f32 %v4480, 1e-24
          %v4489 = vrsqrt.pop %v4481
          %v4490 = vmul.f32 %v4489, %v4481
          %v4491 = vmul.f32 %v4490, %v4489
          %v4492 = vmul.f32 0.5, %v4491
          %v4493 = vsub.f32 1.5, %v4492
          %v4494 = vmul.f32 %v4489, %v4493
          %vm4495 = vweird.f32 %v4481
          %vm4496 = vweird.f32 %v4489
          %vm4497 = vmor %vm4495, %vm4496
          %v4498 = vsel %vm4497, %v4489, %v4494
          %v4499 = vrsqrt.pop %v4482
          %v4500 = vmul.f32 %v4499, %v4482
          %v4501 = vmul.f32 %v4500, %v4499
          %v4502 = vmul.f32 0.5, %v4501
          %v4503 = vsub.f32 1.5, %v4502
          %v4504 = vmul.f32 %v4499, %v4503
          %vm4505 = vweird.f32 %v4482
          %vm4506 = vweird.f32 %v4499
          %vm4507 = vmor %vm4505, %vm4506
          %v4508 = vsel %vm4507, %v4499, %v4504
          %v4509 = vrsqrt.pop %v4483
          %v4510 = vmul.f32 %v4509, %v4483
          %v4511 = vmul.f32 %v4510, %v4509
          %v4512 = vmul.f32 0.5, %v4511
          %v4513 = vsub.f32 1.5, %v4512
          %v4514 = vmul.f32 %v4509, %v4513
          %vm4515 = vweird.f32 %v4483
          %vm4516 = vweird.f32 %v4509
          %vm4517 = vmor %vm4515, %vm4516
          %v4518 = vsel %vm4517, %v4509, %v4514
          %v4519 = vrsqrt.pop %v4484
          %v4520 = vmul.f32 %v4519, %v4484
          %v4521 = vmul.f32 %v4520, %v4519
          %v4522 = vmul.f32 0.5, %v4521
          %v4523 = vsub.f32 1.5, %v4522
          %v4524 = vmul.f32 %v4519, %v4523
          %vm4525 = vweird.f32 %v4484
          %vm4526 = vweird.f32 %v4519
          %vm4527 = vmor %vm4525, %vm4526
          %v4528 = vsel %vm4527, %v4519, %v4524
          %v4529 = vrsqrt.pop %v4485
          %v4530 = vmul.f32 %v4529, %v4485
          %v4531 = vmul.f32 %v4530, %v4529
          %v4532 = vmul.f32 0.5, %v4531
          %v4533 = vsub.f32 1.5, %v4532
          %v4534 = vmul.f32 %v4529, %v4533
          %vm4535 = vweird.f32 %v4485
          %vm4536 = vweird.f32 %v4529
          %vm4537 = vmor %vm4535, %vm4536
          %v4538 = vsel %vm4537, %v4529, %v4534
          %v4539 = vrsqrt.pop %v4486
          %v4540 = vmul.f32 %v4539, %v4486
          %v4541 = vmul.f32 %v4540, %v4539
          %v4542 = vmul.f32 0.5, %v4541
          %v4543 = vsub.f32 1.5, %v4542
          %v4544 = vmul.f32 %v4539, %v4543
          %vm4545 = vweird.f32 %v4486
          %vm4546 = vweird.f32 %v4539
          %vm4547 = vmor %vm4545, %vm4546
          %v4548 = vsel %vm4547, %v4539, %v4544
          %v4549 = vrsqrt.pop %v4487
          %v4550 = vmul.f32 %v4549, %v4487
          %v4551 = vmul.f32 %v4550, %v4549
          %v4552 = vmul.f32 0.5, %v4551
          %v4553 = vsub.f32 1.5, %v4552
          %v4554 = vmul.f32 %v4549, %v4553
          %vm4555 = vweird.f32 %v4487
          %vm4556 = vweird.f32 %v4549
          %vm4557 = vmor %vm4555, %vm4556
          %v4558 = vsel %vm4557, %v4549, %v4554
          %v4559 = vrsqrt.pop %v4488
          %v4560 = vmul.f32 %v4559, %v4488
          %v4561 = vmul.f32 %v4560, %v4559
          %v4562 = vmul.f32 0.5, %v4561
          %v4563 = vsub.f32 1.5, %v4562
          %v4564 = vmul.f32 %v4559, %v4563
          %vm4565 = vweird.f32 %v4488
          %vm4566 = vweird.f32 %v4559
          %vm4567 = vmor %vm4565, %vm4566
          %v4568 = vsel %vm4567, %v4559, %v4564
          %v4569 = vmul.f32 %v2993, %v4498
          %v4570 = vmul.f32 %v2994, %v4508
          %v4571 = vmul.f32 %v2995, %v4518
          %v4572 = vmul.f32 %v2996, %v4528
          %v4573 = vmul.f32 %v2997, %v4538
          %v4574 = vmul.f32 %v2998, %v4548
          %v4575 = vmul.f32 %v2999, %v4558
          %v4576 = vmul.f32 %v3000, %v4568
          %4577 = vrot.lane.b32.xlu0 %v3001, 104
          %v4578 = vpop.permute.xlu0 %4577
          %4579 = vrot.lane.b32.xlu0 %v3002, 104
          %v4580 = vpop.permute.xlu0 %4579
          %4581 = vrot.lane.b32.xlu0 %v3003, 104
          %v4582 = vpop.permute.xlu0 %4581
          %4583 = vrot.lane.b32.xlu0 %v3004, 104
          %v4584 = vpop.permute.xlu0 %4583
          %4585 = vrot.lane.b32.xlu0 %v3005, 104
          %v4586 = vpop.permute.xlu0 %4585
          %4587 = vrot.lane.b32.xlu0 %v3006, 104
          %v4588 = vpop.permute.xlu0 %4587
          %4589 = vrot.lane.b32.xlu0 %v3007, 104
          %v4590 = vpop.permute.xlu0 %4589
          %4591 = vrot.lane.b32.xlu0 %v3008, 104
          %v4592 = vpop.permute.xlu0 %4591
          %v4601 = vsel %vm3009, %v4578, 0.0
          %4602 = vadd.xlane.f32.xlu0 %v4601
          %v4603 = vpop.xlane.xlu0 %4602
          %v4604 = vsel %vm3009, %v4580, 0.0
          %4605 = vadd.xlane.f32.xlu0 %v4604
          %v4606 = vpop.xlane.xlu0 %4605
          %v4607 = vsel %vm3009, %v4582, 0.0
          %4608 = vadd.xlane.f32.xlu0 %v4607
          %v4609 = vpop.xlane.xlu0 %4608
          %v4610 = vsel %vm3009, %v4584, 0.0
          %4611 = vadd.xlane.f32.xlu0 %v4610
          %v4612 = vpop.xlane.xlu0 %4611
          %v4613 = vsel %vm3009, %v4586, 0.0
          %4614 = vadd.xlane.f32.xlu0 %v4613
          %v4615 = vpop.xlane.xlu0 %4614
          %v4616 = vsel %vm3009, %v4588, 0.0
          %4617 = vadd.xlane.f32.xlu0 %v4616
          %v4618 = vpop.xlane.xlu0 %4617
          %v4619 = vsel %vm3009, %v4590, 0.0
          %4620 = vadd.xlane.f32.xlu0 %v4619
          %v4621 = vpop.xlane.xlu0 %4620
          %v4622 = vsel %vm3009, %v4592, 0.0
          %4623 = vadd.xlane.f32.xlu0 %v4622
          %v4624 = vpop.xlane.xlu0 %4623
          %v4625 = vmax.f32 %v4603, 1e-24
          %v4626 = vmax.f32 %v4606, 1e-24
          %v4627 = vmax.f32 %v4609, 1e-24
          %v4628 = vmax.f32 %v4612, 1e-24
          %v4629 = vmax.f32 %v4615, 1e-24
          %v4630 = vmax.f32 %v4618, 1e-24
          %v4631 = vmax.f32 %v4621, 1e-24
          %v4632 = vmax.f32 %v4624, 1e-24
          %v4633 = vrsqrt.pop %v4625
          %v4634 = vmul.f32 %v4633, %v4625
          %v4635 = vmul.f32 %v4634, %v4633
          %v4636 = vmul.f32 0.5, %v4635
          %v4637 = vsub.f32 1.5, %v4636
          %v4638 = vmul.f32 %v4633, %v4637
          %vm4639 = vweird.f32 %v4625
          %vm4640 = vweird.f32 %v4633
          %vm4641 = vmor %vm4639, %vm4640
          %v4642 = vsel %vm4641, %v4633, %v4638
          %v4643 = vrsqrt.pop %v4626
          %v4644 = vmul.f32 %v4643, %v4626
          %v4645 = vmul.f32 %v4644, %v4643
          %v4646 = vmul.f32 0.5, %v4645
          %v4647 = vsub.f32 1.5, %v4646
          %v4648 = vmul.f32 %v4643, %v4647
          %vm4649 = vweird.f32 %v4626
          %vm4650 = vweird.f32 %v4643
          %vm4651 = vmor %vm4649, %vm4650
          %v4652 = vsel %vm4651, %v4643, %v4648
          %v4653 = vrsqrt.pop %v4627
          %v4654 = vmul.f32 %v4653, %v4627
          %v4655 = vmul.f32 %v4654, %v4653
          %v4656 = vmul.f32 0.5, %v4655
          %v4657 = vsub.f32 1.5, %v4656
          %v4658 = vmul.f32 %v4653, %v4657
          %vm4659 = vweird.f32 %v4627
          %vm4660 = vweird.f32 %v4653
          %vm4661 = vmor %vm4659, %vm4660
          %v4662 = vsel %vm4661, %v4653, %v4658
          %v4663 = vrsqrt.pop %v4628
          %v4664 = vmul.f32 %v4663, %v4628
          %v4665 = vmul.f32 %v4664, %v4663
          %v4666 = vmul.f32 0.5, %v4665
          %v4667 = vsub.f32 1.5, %v4666
          %v4668 = vmul.f32 %v4663, %v4667
          %vm4669 = vweird.f32 %v4628
          %vm4670 = vweird.f32 %v4663
          %vm4671 = vmor %vm4669, %vm4670
          %v4672 = vsel %vm4671, %v4663, %v4668
          %v4673 = vrsqrt.pop %v4629
          %v4674 = vmul.f32 %v4673, %v4629
          %v4675 = vmul.f32 %v4674, %v4673
          %v4676 = vmul.f32 0.5, %v4675
          %v4677 = vsub.f32 1.5, %v4676
          %v4678 = vmul.f32 %v4673, %v4677
          %vm4679 = vweird.f32 %v4629
          %vm4680 = vweird.f32 %v4673
          %vm4681 = vmor %vm4679, %vm4680
          %v4682 = vsel %vm4681, %v4673, %v4678
          %v4683 = vrsqrt.pop %v4630
          %v4684 = vmul.f32 %v4683, %v4630
          %v4685 = vmul.f32 %v4684, %v4683
          %v4686 = vmul.f32 0.5, %v4685
          %v4687 = vsub.f32 1.5, %v4686
          %v4688 = vmul.f32 %v4683, %v4687
          %vm4689 = vweird.f32 %v4630
          %vm4690 = vweird.f32 %v4683
          %vm4691 = vmor %vm4689, %vm4690
          %v4692 = vsel %vm4691, %v4683, %v4688
          %v4693 = vrsqrt.pop %v4631
          %v4694 = vmul.f32 %v4693, %v4631
          %v4695 = vmul.f32 %v4694, %v4693
          %v4696 = vmul.f32 0.5, %v4695
          %v4697 = vsub.f32 1.5, %v4696
          %v4698 = vmul.f32 %v4693, %v4697
          %vm4699 = vweird.f32 %v4631
          %vm4700 = vweird.f32 %v4693
          %vm4701 = vmor %vm4699, %vm4700
          %v4702 = vsel %vm4701, %v4693, %v4698
          %v4703 = vrsqrt.pop %v4632
          %v4704 = vmul.f32 %v4703, %v4632
          %v4705 = vmul.f32 %v4704, %v4703
          %v4706 = vmul.f32 0.5, %v4705
          %v4707 = vsub.f32 1.5, %v4706
          %v4708 = vmul.f32 %v4703, %v4707
          %vm4709 = vweird.f32 %v4632
          %vm4710 = vweird.f32 %v4703
          %vm4711 = vmor %vm4709, %vm4710
          %v4712 = vsel %vm4711, %v4703, %v4708
          %v4713 = vmul.f32 %v2993, %v4642
          %v4714 = vmul.f32 %v2994, %v4652
          %v4715 = vmul.f32 %v2995, %v4662
          %v4716 = vmul.f32 %v2996, %v4672
          %v4717 = vmul.f32 %v2997, %v4682
          %v4718 = vmul.f32 %v2998, %v4692
          %v4719 = vmul.f32 %v2999, %v4702
          %v4720 = vmul.f32 %v3000, %v4712
          %4729 = vrot.lane.b32.xlu0 %v4569, 120
          %v4730 = vpop.permute.xlu0 %4729
          %4731 = vrot.lane.b32.xlu0 %v4570, 120
          %v4732 = vpop.permute.xlu0 %4731
          %4733 = vrot.lane.b32.xlu0 %v4571, 120
          %v4734 = vpop.permute.xlu0 %4733
          %4735 = vrot.lane.b32.xlu0 %v4572, 120
          %v4736 = vpop.permute.xlu0 %4735
          %4737 = vrot.lane.b32.xlu0 %v4573, 120
          %v4738 = vpop.permute.xlu0 %4737
          %4739 = vrot.lane.b32.xlu0 %v4574, 120
          %v4740 = vpop.permute.xlu0 %4739
          %4741 = vrot.lane.b32.xlu0 %v4575, 120
          %v4742 = vpop.permute.xlu0 %4741
          %4743 = vrot.lane.b32.xlu0 %v4576, 120
          %v4744 = vpop.permute.xlu0 %4743
          %4753 = vrot.lane.b32.xlu0 %v4713, 104
          %v4754 = vpop.permute.xlu0 %4753
          %4755 = vrot.lane.b32.xlu0 %v4714, 104
          %v4756 = vpop.permute.xlu0 %4755
          %4757 = vrot.lane.b32.xlu0 %v4715, 104
          %v4758 = vpop.permute.xlu0 %4757
          %4759 = vrot.lane.b32.xlu0 %v4716, 104
          %v4760 = vpop.permute.xlu0 %4759
          %4761 = vrot.lane.b32.xlu0 %v4717, 104
          %v4762 = vpop.permute.xlu0 %4761
          %4763 = vrot.lane.b32.xlu0 %v4718, 104
          %v4764 = vpop.permute.xlu0 %4763
          %4765 = vrot.lane.b32.xlu0 %v4719, 104
          %v4766 = vpop.permute.xlu0 %4765
          %4767 = vrot.lane.b32.xlu0 %v4720, 104
          %v4768 = vpop.permute.xlu0 %4767
          %v4769 = vsel %vm3009, %v4730, 0
          %v4771 = vsel %vm3009, %v4732, 0
          %v4773 = vsel %vm3009, %v4734, 0
          %v4775 = vsel %vm3009, %v4736, 0
          %v4777 = vsel %vm3009, %v4738, 0
          %v4779 = vsel %vm3009, %v4740, 0
          %v4781 = vsel %vm3009, %v4742, 0
          %v4783 = vsel %vm3009, %v4744, 0
          %v4785 = vsel %vm3009, %v4754, 0
          %v4787 = vsel %vm3009, %v4756, 0
          %v4789 = vsel %vm3009, %v4758, 0
          %v4791 = vsel %vm3009, %v4760, 0
          %v4793 = vsel %vm3009, %v4762, 0
          %v4795 = vsel %vm3009, %v4764, 0
          %v4797 = vsel %vm3009, %v4766, 0
          %v4799 = vsel %vm3009, %v4768, 0
          %4801 = vmatpush.xpose.msra.mxu0 0.0
          %4802 = vmatpush.xpose.msra.mxu0 0.0
          %4803 = vmatpush.xpose.msra.mxu0 0.0
          %4804 = vmatpush.xpose.msra.mxu0 0.0
          %4805 = vmatpush.xpose.msra.mxu0 0.0
          %4806 = vmatpush.xpose.msra.mxu0 0.0
          %4807 = vmatpush.xpose.msra.mxu0 0.0
          %4808 = vmatpush.xpose.msra.mxu0 0.0
          %v4809 = vand.u32 %v4799, 4294901760
          %4810 = vmatpush.xpose.msra.mxu0 %v4809
          %v4811 = vand.u32 %v4797, 4294901760
          %4812 = vmatpush.xpose.msra.mxu0 %v4811
          %v4813 = vand.u32 %v4795, 4294901760
          %4814 = vmatpush.xpose.msra.mxu0 %v4813
          %v4815 = vand.u32 %v4793, 4294901760
          %4816 = vmatpush.xpose.msra.mxu0 %v4815
          %v4817 = vand.u32 %v4791, 4294901760
          %4818 = vmatpush.xpose.msra.mxu0 %v4817
          %v4819 = vand.u32 %v4789, 4294901760
          %4820 = vmatpush.xpose.msra.mxu0 %v4819
          %v4821 = vand.u32 %v4787, 4294901760
          %4822 = vmatpush.xpose.msra.mxu0 %v4821
          %v4823 = vand.u32 %v4785, 4294901760
          %4824 = vmatpush.xpose.msra.mxu0 %v4823
          %v4825 = vand.u32 %v4769, 4294901760
          %v4826 = vsub.f32 %v4769, %v4825
          %v4827 = vand.u32 %v4826, 4294901760
          %v4828 = vsub.f32 %v4826, %v4827
          %v4829 = vand.u32 %v4828, 4294901760
          %4830 = vmatmul.f32.gmra.mxu0 %v4829
          %v4831 = vpop.f32.mrf.mxu0
          %v4832 = vadd.f32 0.0, %v4831
          %v4833 = vand.u32 %v4771, 4294901760
          %v4834 = vsub.f32 %v4771, %v4833
          %v4835 = vand.u32 %v4834, 4294901760
          %v4836 = vsub.f32 %v4834, %v4835
          %v4837 = vand.u32 %v4836, 4294901760
          %4838 = vmatmul.f32.gmra.mxu0 %v4837
          %v4839 = vpop.f32.mrf.mxu0
          %v4840 = vadd.f32 0.0, %v4839
          %v4841 = vand.u32 %v4773, 4294901760
          %v4842 = vsub.f32 %v4773, %v4841
          %v4843 = vand.u32 %v4842, 4294901760
          %v4844 = vsub.f32 %v4842, %v4843
          %v4845 = vand.u32 %v4844, 4294901760
          %4846 = vmatmul.f32.gmra.mxu0 %v4845
          %v4847 = vpop.f32.mrf.mxu0
          %v4848 = vadd.f32 0.0, %v4847
          %v4849 = vand.u32 %v4775, 4294901760
          %v4850 = vsub.f32 %v4775, %v4849
          %v4851 = vand.u32 %v4850, 4294901760
          %v4852 = vsub.f32 %v4850, %v4851
          %v4853 = vand.u32 %v4852, 4294901760
          %4854 = vmatmul.f32.gmra.mxu0 %v4853
          %v4855 = vpop.f32.mrf.mxu0
          %v4856 = vadd.f32 0.0, %v4855
          %v4857 = vand.u32 %v4777, 4294901760
          %v4858 = vsub.f32 %v4777, %v4857
          %v4859 = vand.u32 %v4858, 4294901760
          %v4860 = vsub.f32 %v4858, %v4859
          %v4861 = vand.u32 %v4860, 4294901760
          %4862 = vmatmul.f32.gmra.mxu0 %v4861
          %v4863 = vpop.f32.mrf.mxu0
          %v4864 = vadd.f32 0.0, %v4863
          %v4865 = vand.u32 %v4779, 4294901760
          %v4866 = vsub.f32 %v4779, %v4865
          %v4867 = vand.u32 %v4866, 4294901760
          %v4868 = vsub.f32 %v4866, %v4867
          %v4869 = vand.u32 %v4868, 4294901760
          %4870 = vmatmul.f32.gmra.mxu0 %v4869
          %v4871 = vpop.f32.mrf.mxu0
          %v4872 = vadd.f32 0.0, %v4871
          %v4873 = vand.u32 %v4781, 4294901760
          %v4874 = vsub.f32 %v4781, %v4873
          %v4875 = vand.u32 %v4874, 4294901760
          %v4876 = vsub.f32 %v4874, %v4875
          %v4877 = vand.u32 %v4876, 4294901760
          %4878 = vmatmul.f32.gmra.mxu0 %v4877
          %v4879 = vpop.f32.mrf.mxu0
          %v4880 = vadd.f32 0.0, %v4879
          %v4881 = vand.u32 %v4783, 4294901760
          %v4882 = vsub.f32 %v4783, %v4881
          %v4883 = vand.u32 %v4882, 4294901760
          %v4884 = vsub.f32 %v4882, %v4883
          %v4885 = vand.u32 %v4884, 4294901760
          %4886 = vmatmul.f32.gmra.mxu0 %v4885
          %v4887 = vpop.f32.mrf.mxu0
          %v4888 = vadd.f32 0.0, %v4887
          %4889 = vdwg.mxu0
          %4890 = vmatpush.xpose.msra.mxu0 0.0
          %4891 = vmatpush.xpose.msra.mxu0 0.0
          %4892 = vmatpush.xpose.msra.mxu0 0.0
          %4893 = vmatpush.xpose.msra.mxu0 0.0
          %4894 = vmatpush.xpose.msra.mxu0 0.0
          %4895 = vmatpush.xpose.msra.mxu0 0.0
          %4896 = vmatpush.xpose.msra.mxu0 0.0
          %4897 = vmatpush.xpose.msra.mxu0 0.0
          %v4898 = vand.u32 %v4799, 4294901760
          %v4899 = vsub.f32 %v4799, %v4898
          %v4900 = vand.u32 %v4899, 4294901760
          %v4901 = vsub.f32 %v4899, %v4900
          %v4902 = vand.u32 %v4901, 4294901760
          %4903 = vmatpush.xpose.msra.mxu0 %v4902
          %v4904 = vand.u32 %v4797, 4294901760
          %v4905 = vsub.f32 %v4797, %v4904
          %v4906 = vand.u32 %v4905, 4294901760
          %v4907 = vsub.f32 %v4905, %v4906
          %v4908 = vand.u32 %v4907, 4294901760
          %4909 = vmatpush.xpose.msra.mxu0 %v4908
          %v4910 = vand.u32 %v4795, 4294901760
          %v4911 = vsub.f32 %v4795, %v4910
          %v4912 = vand.u32 %v4911, 4294901760
          %v4913 = vsub.f32 %v4911, %v4912
          %v4914 = vand.u32 %v4913, 4294901760
          %4915 = vmatpush.xpose.msra.mxu0 %v4914
          %v4916 = vand.u32 %v4793, 4294901760
          %v4917 = vsub.f32 %v4793, %v4916
          %v4918 = vand.u32 %v4917, 4294901760
          %v4919 = vsub.f32 %v4917, %v4918
          %v4920 = vand.u32 %v4919, 4294901760
          %4921 = vmatpush.xpose.msra.mxu0 %v4920
          %v4922 = vand.u32 %v4791, 4294901760
          %v4923 = vsub.f32 %v4791, %v4922
          %v4924 = vand.u32 %v4923, 4294901760
          %v4925 = vsub.f32 %v4923, %v4924
          %v4926 = vand.u32 %v4925, 4294901760
          %4927 = vmatpush.xpose.msra.mxu0 %v4926
          %v4928 = vand.u32 %v4789, 4294901760
          %v4929 = vsub.f32 %v4789, %v4928
          %v4930 = vand.u32 %v4929, 4294901760
          %v4931 = vsub.f32 %v4929, %v4930
          %v4932 = vand.u32 %v4931, 4294901760
          %4933 = vmatpush.xpose.msra.mxu0 %v4932
          %v4934 = vand.u32 %v4787, 4294901760
          %v4935 = vsub.f32 %v4787, %v4934
          %v4936 = vand.u32 %v4935, 4294901760
          %v4937 = vsub.f32 %v4935, %v4936
          %v4938 = vand.u32 %v4937, 4294901760
          %4939 = vmatpush.xpose.msra.mxu0 %v4938
          %v4940 = vand.u32 %v4785, 4294901760
          %v4941 = vsub.f32 %v4785, %v4940
          %v4942 = vand.u32 %v4941, 4294901760
          %v4943 = vsub.f32 %v4941, %v4942
          %v4944 = vand.u32 %v4943, 4294901760
          %4945 = vmatpush.xpose.msra.mxu0 %v4944
          %v4946 = vand.u32 %v4769, 4294901760
          %4947 = vmatmul.f32.gmra.mxu0 %v4946
          %v4948 = vpop.f32.mrf.mxu0
          %v4949 = vadd.f32 %v4832, %v4948
          %v4950 = vand.u32 %v4771, 4294901760
          %4951 = vmatmul.f32.gmra.mxu0 %v4950
          %v4952 = vpop.f32.mrf.mxu0
          %v4953 = vadd.f32 %v4840, %v4952
          %v4954 = vand.u32 %v4773, 4294901760
          %4955 = vmatmul.f32.gmra.mxu0 %v4954
          %v4956 = vpop.f32.mrf.mxu0
          %v4957 = vadd.f32 %v4848, %v4956
          %v4958 = vand.u32 %v4775, 4294901760
          %4959 = vmatmul.f32.gmra.mxu0 %v4958
          %v4960 = vpop.f32.mrf.mxu0
          %v4961 = vadd.f32 %v4856, %v4960
          %v4962 = vand.u32 %v4777, 4294901760
          %4963 = vmatmul.f32.gmra.mxu0 %v4962
          %v4964 = vpop.f32.mrf.mxu0
          %v4965 = vadd.f32 %v4864, %v4964
          %v4966 = vand.u32 %v4779, 4294901760
          %4967 = vmatmul.f32.gmra.mxu0 %v4966
          %v4968 = vpop.f32.mrf.mxu0
          %v4969 = vadd.f32 %v4872, %v4968
          %v4970 = vand.u32 %v4781, 4294901760
          %4971 = vmatmul.f32.gmra.mxu0 %v4970
          %v4972 = vpop.f32.mrf.mxu0
          %v4973 = vadd.f32 %v4880, %v4972
          %v4974 = vand.u32 %v4783, 4294901760
          %4975 = vmatmul.f32.gmra.mxu0 %v4974
          %v4976 = vpop.f32.mrf.mxu0
          %v4977 = vadd.f32 %v4888, %v4976
          %4978 = vdwg.mxu0
          %4979 = vmatpush.xpose.msra.mxu0 0.0
          %4980 = vmatpush.xpose.msra.mxu0 0.0
          %4981 = vmatpush.xpose.msra.mxu0 0.0
          %4982 = vmatpush.xpose.msra.mxu0 0.0
          %4983 = vmatpush.xpose.msra.mxu0 0.0
          %4984 = vmatpush.xpose.msra.mxu0 0.0
          %4985 = vmatpush.xpose.msra.mxu0 0.0
          %4986 = vmatpush.xpose.msra.mxu0 0.0
          %v4987 = vand.u32 %v4799, 4294901760
          %v4988 = vsub.f32 %v4799, %v4987
          %4989 = vmatpush.xpose.msra.mxu0 %v4988
          %v4990 = vand.u32 %v4797, 4294901760
          %v4991 = vsub.f32 %v4797, %v4990
          %4992 = vmatpush.xpose.msra.mxu0 %v4991
          %v4993 = vand.u32 %v4795, 4294901760
          %v4994 = vsub.f32 %v4795, %v4993
          %4995 = vmatpush.xpose.msra.mxu0 %v4994
          %v4996 = vand.u32 %v4793, 4294901760
          %v4997 = vsub.f32 %v4793, %v4996
          %4998 = vmatpush.xpose.msra.mxu0 %v4997
          %v4999 = vand.u32 %v4791, 4294901760
          %v5000 = vsub.f32 %v4791, %v4999
          %5001 = vmatpush.xpose.msra.mxu0 %v5000
          %v5002 = vand.u32 %v4789, 4294901760
          %v5003 = vsub.f32 %v4789, %v5002
          %5004 = vmatpush.xpose.msra.mxu0 %v5003
          %v5005 = vand.u32 %v4787, 4294901760
          %v5006 = vsub.f32 %v4787, %v5005
          %5007 = vmatpush.xpose.msra.mxu0 %v5006
          %v5008 = vand.u32 %v4785, 4294901760
          %v5009 = vsub.f32 %v4785, %v5008
          %5010 = vmatpush.xpose.msra.mxu0 %v5009
          %v5011 = vand.u32 %v4769, 4294901760
          %v5012 = vsub.f32 %v4769, %v5011
          %5013 = vmatmul.f32.gmra.mxu0 %v5012
          %v5014 = vpop.f32.mrf.mxu0
          %v5015 = vadd.f32 %v4949, %v5014
          %v5016 = vand.u32 %v4771, 4294901760
          %v5017 = vsub.f32 %v4771, %v5016
          %5018 = vmatmul.f32.gmra.mxu0 %v5017
          %v5019 = vpop.f32.mrf.mxu0
          %v5020 = vadd.f32 %v4953, %v5019
          %v5021 = vand.u32 %v4773, 4294901760
          %v5022 = vsub.f32 %v4773, %v5021
          %5023 = vmatmul.f32.gmra.mxu0 %v5022
          %v5024 = vpop.f32.mrf.mxu0
          %v5025 = vadd.f32 %v4957, %v5024
          %v5026 = vand.u32 %v4775, 4294901760
          %v5027 = vsub.f32 %v4775, %v5026
          %5028 = vmatmul.f32.gmra.mxu0 %v5027
          %v5029 = vpop.f32.mrf.mxu0
          %v5030 = vadd.f32 %v4961, %v5029
          %v5031 = vand.u32 %v4777, 4294901760
          %v5032 = vsub.f32 %v4777, %v5031
          %5033 = vmatmul.f32.gmra.mxu0 %v5032
          %v5034 = vpop.f32.mrf.mxu0
          %v5035 = vadd.f32 %v4965, %v5034
          %v5036 = vand.u32 %v4779, 4294901760
          %v5037 = vsub.f32 %v4779, %v5036
          %5038 = vmatmul.f32.gmra.mxu0 %v5037
          %v5039 = vpop.f32.mrf.mxu0
          %v5040 = vadd.f32 %v4969, %v5039
          %v5041 = vand.u32 %v4781, 4294901760
          %v5042 = vsub.f32 %v4781, %v5041
          %5043 = vmatmul.f32.gmra.mxu0 %v5042
          %v5044 = vpop.f32.mrf.mxu0
          %v5045 = vadd.f32 %v4973, %v5044
          %v5046 = vand.u32 %v4783, 4294901760
          %v5047 = vsub.f32 %v4783, %v5046
          %5048 = vmatmul.f32.gmra.mxu0 %v5047
          %v5049 = vpop.f32.mrf.mxu0
          %v5050 = vadd.f32 %v4977, %v5049
          %5051 = vdwg.mxu0
          %5052 = vmatpush.xpose.msra.mxu0 0.0
          %5053 = vmatpush.xpose.msra.mxu0 0.0
          %5054 = vmatpush.xpose.msra.mxu0 0.0
          %5055 = vmatpush.xpose.msra.mxu0 0.0
          %5056 = vmatpush.xpose.msra.mxu0 0.0
          %5057 = vmatpush.xpose.msra.mxu0 0.0
          %5058 = vmatpush.xpose.msra.mxu0 0.0
          %5059 = vmatpush.xpose.msra.mxu0 0.0
          %v5060 = vand.u32 %v4799, 4294901760
          %5061 = vmatpush.xpose.msra.mxu0 %v5060
          %v5062 = vand.u32 %v4797, 4294901760
          %5063 = vmatpush.xpose.msra.mxu0 %v5062
          %v5064 = vand.u32 %v4795, 4294901760
          %5065 = vmatpush.xpose.msra.mxu0 %v5064
          %v5066 = vand.u32 %v4793, 4294901760
          %5067 = vmatpush.xpose.msra.mxu0 %v5066
          %v5068 = vand.u32 %v4791, 4294901760
          %5069 = vmatpush.xpose.msra.mxu0 %v5068
          %v5070 = vand.u32 %v4789, 4294901760
          %5071 = vmatpush.xpose.msra.mxu0 %v5070
          %v5072 = vand.u32 %v4787, 4294901760
          %5073 = vmatpush.xpose.msra.mxu0 %v5072
          %v5074 = vand.u32 %v4785, 4294901760
          %5075 = vmatpush.xpose.msra.mxu0 %v5074
          %v5076 = vand.u32 %v4769, 4294901760
          %v5077 = vsub.f32 %v4769, %v5076
          %v5078 = vand.u32 %v5077, 4294901760
          %5079 = vmatmul.f32.gmra.mxu0 %v5078
          %v5080 = vpop.f32.mrf.mxu0
          %v5081 = vadd.f32 %v5015, %v5080
          %v5082 = vand.u32 %v4771, 4294901760
          %v5083 = vsub.f32 %v4771, %v5082
          %v5084 = vand.u32 %v5083, 4294901760
          %5085 = vmatmul.f32.gmra.mxu0 %v5084
          %v5086 = vpop.f32.mrf.mxu0
          %v5087 = vadd.f32 %v5020, %v5086
          %v5088 = vand.u32 %v4773, 4294901760
          %v5089 = vsub.f32 %v4773, %v5088
          %v5090 = vand.u32 %v5089, 4294901760
          %5091 = vmatmul.f32.gmra.mxu0 %v5090
          %v5092 = vpop.f32.mrf.mxu0
          %v5093 = vadd.f32 %v5025, %v5092
          %v5094 = vand.u32 %v4775, 4294901760
          %v5095 = vsub.f32 %v4775, %v5094
          %v5096 = vand.u32 %v5095, 4294901760
          %5097 = vmatmul.f32.gmra.mxu0 %v5096
          %v5098 = vpop.f32.mrf.mxu0
          %v5099 = vadd.f32 %v5030, %v5098
          %v5100 = vand.u32 %v4777, 4294901760
          %v5101 = vsub.f32 %v4777, %v5100
          %v5102 = vand.u32 %v5101, 4294901760
          %5103 = vmatmul.f32.gmra.mxu0 %v5102
          %v5104 = vpop.f32.mrf.mxu0
          %v5105 = vadd.f32 %v5035, %v5104
          %v5106 = vand.u32 %v4779, 4294901760
          %v5107 = vsub.f32 %v4779, %v5106
          %v5108 = vand.u32 %v5107, 4294901760
          %5109 = vmatmul.f32.gmra.mxu0 %v5108
          %v5110 = vpop.f32.mrf.mxu0
          %v5111 = vadd.f32 %v5040, %v5110
          %v5112 = vand.u32 %v4781, 4294901760
          %v5113 = vsub.f32 %v4781, %v5112
          %v5114 = vand.u32 %v5113, 4294901760
          %5115 = vmatmul.f32.gmra.mxu0 %v5114
          %v5116 = vpop.f32.mrf.mxu0
          %v5117 = vadd.f32 %v5045, %v5116
          %v5118 = vand.u32 %v4783, 4294901760
          %v5119 = vsub.f32 %v4783, %v5118
          %v5120 = vand.u32 %v5119, 4294901760
          %5121 = vmatmul.f32.gmra.mxu0 %v5120
          %v5122 = vpop.f32.mrf.mxu0
          %v5123 = vadd.f32 %v5050, %v5122
          %5124 = vdwg.mxu0
          %5125 = vmatpush.xpose.msra.mxu0 0.0
          %5126 = vmatpush.xpose.msra.mxu0 0.0
          %5127 = vmatpush.xpose.msra.mxu0 0.0
          %5128 = vmatpush.xpose.msra.mxu0 0.0
          %5129 = vmatpush.xpose.msra.mxu0 0.0
          %5130 = vmatpush.xpose.msra.mxu0 0.0
          %5131 = vmatpush.xpose.msra.mxu0 0.0
          %5132 = vmatpush.xpose.msra.mxu0 0.0
          %v5133 = vand.u32 %v4799, 4294901760
          %v5134 = vsub.f32 %v4799, %v5133
          %v5135 = vand.u32 %v5134, 4294901760
          %5136 = vmatpush.xpose.msra.mxu0 %v5135
          %v5137 = vand.u32 %v4797, 4294901760
          %v5138 = vsub.f32 %v4797, %v5137
          %v5139 = vand.u32 %v5138, 4294901760
          %5140 = vmatpush.xpose.msra.mxu0 %v5139
          %v5141 = vand.u32 %v4795, 4294901760
          %v5142 = vsub.f32 %v4795, %v5141
          %v5143 = vand.u32 %v5142, 4294901760
          %5144 = vmatpush.xpose.msra.mxu0 %v5143
          %v5145 = vand.u32 %v4793, 4294901760
          %v5146 = vsub.f32 %v4793, %v5145
          %v5147 = vand.u32 %v5146, 4294901760
          %5148 = vmatpush.xpose.msra.mxu0 %v5147
          %v5149 = vand.u32 %v4791, 4294901760
          %v5150 = vsub.f32 %v4791, %v5149
          %v5151 = vand.u32 %v5150, 4294901760
          %5152 = vmatpush.xpose.msra.mxu0 %v5151
          %v5153 = vand.u32 %v4789, 4294901760
          %v5154 = vsub.f32 %v4789, %v5153
          %v5155 = vand.u32 %v5154, 4294901760
          %5156 = vmatpush.xpose.msra.mxu0 %v5155
          %v5157 = vand.u32 %v4787, 4294901760
          %v5158 = vsub.f32 %v4787, %v5157
          %v5159 = vand.u32 %v5158, 4294901760
          %5160 = vmatpush.xpose.msra.mxu0 %v5159
          %v5161 = vand.u32 %v4785, 4294901760
          %v5162 = vsub.f32 %v4785, %v5161
          %v5163 = vand.u32 %v5162, 4294901760
          %5164 = vmatpush.xpose.msra.mxu0 %v5163
          %v5165 = vand.u32 %v4769, 4294901760
          %5166 = vmatmul.f32.gmra.mxu0 %v5165
          %v5167 = vpop.f32.mrf.mxu0
          %v5168 = vadd.f32 %v5081, %v5167
          %v5169 = vand.u32 %v4771, 4294901760
          %5170 = vmatmul.f32.gmra.mxu0 %v5169
          %v5171 = vpop.f32.mrf.mxu0
          %v5172 = vadd.f32 %v5087, %v5171
          %v5173 = vand.u32 %v4773, 4294901760
          %5174 = vmatmul.f32.gmra.mxu0 %v5173
          %v5175 = vpop.f32.mrf.mxu0
          %v5176 = vadd.f32 %v5093, %v5175
          %v5177 = vand.u32 %v4775, 4294901760
          %5178 = vmatmul.f32.gmra.mxu0 %v5177
          %v5179 = vpop.f32.mrf.mxu0
          %v5180 = vadd.f32 %v5099, %v5179
          %v5181 = vand.u32 %v4777, 4294901760
          %5182 = vmatmul.f32.gmra.mxu0 %v5181
          %v5183 = vpop.f32.mrf.mxu0
          %v5184 = vadd.f32 %v5105, %v5183
          %v5185 = vand.u32 %v4779, 4294901760
          %5186 = vmatmul.f32.gmra.mxu0 %v5185
          %v5187 = vpop.f32.mrf.mxu0
          %v5188 = vadd.f32 %v5111, %v5187
          %v5189 = vand.u32 %v4781, 4294901760
          %5190 = vmatmul.f32.gmra.mxu0 %v5189
          %v5191 = vpop.f32.mrf.mxu0
          %v5192 = vadd.f32 %v5117, %v5191
          %v5193 = vand.u32 %v4783, 4294901760
          %5194 = vmatmul.f32.gmra.mxu0 %v5193
          %v5195 = vpop.f32.mrf.mxu0
          %v5196 = vadd.f32 %v5123, %v5195
          %5197 = vdwg.mxu0
          %5198 = vmatpush.xpose.msra.mxu0 0.0
          %5199 = vmatpush.xpose.msra.mxu0 0.0
          %5200 = vmatpush.xpose.msra.mxu0 0.0
          %5201 = vmatpush.xpose.msra.mxu0 0.0
          %5202 = vmatpush.xpose.msra.mxu0 0.0
          %5203 = vmatpush.xpose.msra.mxu0 0.0
          %5204 = vmatpush.xpose.msra.mxu0 0.0
          %5205 = vmatpush.xpose.msra.mxu0 0.0
          %v5206 = vand.u32 %v4799, 4294901760
          %5207 = vmatpush.xpose.msra.mxu0 %v5206
          %v5208 = vand.u32 %v4797, 4294901760
          %5209 = vmatpush.xpose.msra.mxu0 %v5208
          %v5210 = vand.u32 %v4795, 4294901760
          %5211 = vmatpush.xpose.msra.mxu0 %v5210
          %v5212 = vand.u32 %v4793, 4294901760
          %5213 = vmatpush.xpose.msra.mxu0 %v5212
          %v5214 = vand.u32 %v4791, 4294901760
          %5215 = vmatpush.xpose.msra.mxu0 %v5214
          %v5216 = vand.u32 %v4789, 4294901760
          %5217 = vmatpush.xpose.msra.mxu0 %v5216
          %v5218 = vand.u32 %v4787, 4294901760
          %5219 = vmatpush.xpose.msra.mxu0 %v5218
          %v5220 = vand.u32 %v4785, 4294901760
          %5221 = vmatpush.xpose.msra.mxu0 %v5220
          %v5222 = vand.u32 %v4769, 4294901760
          %5223 = vmatmul.f32.gmra.mxu0 %v5222
          %v5224 = vpop.f32.mrf.mxu0
          %v5225 = vadd.f32 %v5168, %v5224
          %v5226 = vand.u32 %v4771, 4294901760
          %5227 = vmatmul.f32.gmra.mxu0 %v5226
          %v5228 = vpop.f32.mrf.mxu0
          %v5229 = vadd.f32 %v5172, %v5228
          %v5230 = vand.u32 %v4773, 4294901760
          %5231 = vmatmul.f32.gmra.mxu0 %v5230
          %v5232 = vpop.f32.mrf.mxu0
          %v5233 = vadd.f32 %v5176, %v5232
          %v5234 = vand.u32 %v4775, 4294901760
          %5235 = vmatmul.f32.gmra.mxu0 %v5234
          %v5236 = vpop.f32.mrf.mxu0
          %v5237 = vadd.f32 %v5180, %v5236
          %v5238 = vand.u32 %v4777, 4294901760
          %5239 = vmatmul.f32.gmra.mxu0 %v5238
          %v5240 = vpop.f32.mrf.mxu0
          %v5241 = vadd.f32 %v5184, %v5240
          %v5242 = vand.u32 %v4779, 4294901760
          %5243 = vmatmul.f32.gmra.mxu0 %v5242
          %v5244 = vpop.f32.mrf.mxu0
          %v5245 = vadd.f32 %v5188, %v5244
          %v5246 = vand.u32 %v4781, 4294901760
          %5247 = vmatmul.f32.gmra.mxu0 %v5246
          %v5248 = vpop.f32.mrf.mxu0
          %v5249 = vadd.f32 %v5192, %v5248
          %v5250 = vand.u32 %v4783, 4294901760
          %5251 = vmatmul.f32.gmra.mxu0 %v5250
          %v5252 = vpop.f32.mrf.mxu0
          %v5253 = vadd.f32 %v5196, %v5252
          %5254 = vdwg.mxu0
          %s5255 = sld [smem:[#allocation4 + $0x1]]
          %v5256 = vstv %s5255
          %v5257 = vmul.f32 %v5225, %v5256
          %v5258 = vmul.f32 %v5229, %v5256
          %v5259 = vmul.f32 %v5233, %v5256
          %v5260 = vmul.f32 %v5237, %v5256
          %v5261 = vmul.f32 %v5241, %v5256
          %v5262 = vmul.f32 %v5245, %v5256
          %v5263 = vmul.f32 %v5249, %v5256
          %v5264 = vmul.f32 %v5253, %v5256
          %s5265 = scalar_lea.vmem %s4, 64
          %v5266 = vld [vmem:[%s5265] sm:$0xff]
          %v5267 = vld [vmem:[%s5265 + $0x8] sm:$0xff]
          %v5268 = vld [vmem:[%s5265 + $0x10] sm:$0xff]
          %v5269 = vld [vmem:[%s5265 + $0x18] sm:$0xff]
          %v5270 = vld [vmem:[%s5265 + $0x20] sm:$0xff]
          %v5271 = vld [vmem:[%s5265 + $0x28] sm:$0xff]
          %v5272 = vld [vmem:[%s5265 + $0x30] sm:$0xff]
          %v5273 = vld [vmem:[%s5265 + $0x38] sm:$0xff]
          %v5274 = vadd.f32 %v5257, %v5266
          %v5275 = vadd.f32 %v5258, %v5267
          %v5276 = vadd.f32 %v5259, %v5268
          %v5277 = vadd.f32 %v5260, %v5269
          %v5278 = vadd.f32 %v5261, %v5270
          %v5279 = vadd.f32 %v5262, %v5271
          %v5280 = vadd.f32 %v5263, %v5272
          %v5281 = vadd.f32 %v5264, %v5273
          %v5282 = vadd.f32 %v5274, %v2984
          %v5283 = vadd.f32 %v5275, %v2985
          %v5284 = vadd.f32 %v5276, %v2986
          %v5285 = vadd.f32 %v5277, %v2987
          %v5286 = vadd.f32 %v5278, %v2988
          %v5287 = vadd.f32 %v5279, %v2989
          %v5288 = vadd.f32 %v5280, %v2990
          %v5289 = vadd.f32 %v5281, %v2991
          %v5290 = vsel %vm3834, %v5282, -inf
          %5291 = vmax.xlane.f32.xlu0 %v5290
          %v5292 = vpop.xlane.xlu0 %5291
          %v5293 = vsel %vm3834, %v5283, -inf
          %5294 = vmax.xlane.f32.xlu0 %v5293
          %v5295 = vpop.xlane.xlu0 %5294
          %v5296 = vsel %vm3834, %v5284, -inf
          %5297 = vmax.xlane.f32.xlu0 %v5296
          %v5298 = vpop.xlane.xlu0 %5297
          %v5299 = vsel %vm3834, %v5285, -inf
          %5300 = vmax.xlane.f32.xlu0 %v5299
          %v5301 = vpop.xlane.xlu0 %5300
          %v5302 = vsel %vm3834, %v5286, -inf
          %5303 = vmax.xlane.f32.xlu0 %v5302
          %v5304 = vpop.xlane.xlu0 %5303
          %v5305 = vsel %vm3834, %v5287, -inf
          %5306 = vmax.xlane.f32.xlu0 %v5305
          %v5307 = vpop.xlane.xlu0 %5306
          %v5308 = vsel %vm3834, %v5288, -inf
          %5309 = vmax.xlane.f32.xlu0 %v5308
          %v5310 = vpop.xlane.xlu0 %5309
          %v5311 = vsel %vm3834, %v5289, -inf
          %5312 = vmax.xlane.f32.xlu0 %v5311
          %v5313 = vpop.xlane.xlu0 %5312
          %v5314 = vsub.f32 %v5282, %v5292
          %v5315 = vsub.f32 %v5283, %v5295
          %v5316 = vsub.f32 %v5284, %v5298
          %v5317 = vsub.f32 %v5285, %v5301
          %v5318 = vsub.f32 %v5286, %v5304
          %v5319 = vsub.f32 %v5287, %v5307
          %v5320 = vsub.f32 %v5288, %v5310
          %v5321 = vsub.f32 %v5289, %v5313
          %v5322 = vmul.f32 %v5314, 1.442695
          %v5323 = vpow.pop %v5322
          %v5324 = vmul.f32 %v5315, 1.442695
          %v5325 = vpow.pop %v5324
          %v5326 = vmul.f32 %v5316, 1.442695
          %v5327 = vpow.pop %v5326
          %v5328 = vmul.f32 %v5317, 1.442695
          %v5329 = vpow.pop %v5328
          %v5330 = vmul.f32 %v5318, 1.442695
          %v5331 = vpow.pop %v5330
          %v5332 = vmul.f32 %v5319, 1.442695
          %v5333 = vpow.pop %v5332
          %v5334 = vmul.f32 %v5320, 1.442695
          %v5335 = vpow.pop %v5334
          %v5336 = vmul.f32 %v5321, 1.442695
          %v5337 = vpow.pop %v5336
          %v5338 = vsel %vm3834, %v5323, 0.0
          %5339 = vadd.xlane.f32.xlu0 %v5338
          %v5340 = vpop.xlane.xlu0 %5339
          %v5341 = vsel %vm3834, %v5325, 0.0
          %5342 = vadd.xlane.f32.xlu0 %v5341
          %v5343 = vpop.xlane.xlu0 %5342
          %v5344 = vsel %vm3834, %v5327, 0.0
          %5345 = vadd.xlane.f32.xlu0 %v5344
          %v5346 = vpop.xlane.xlu0 %5345
          %v5347 = vsel %vm3834, %v5329, 0.0
          %5348 = vadd.xlane.f32.xlu0 %v5347
          %v5349 = vpop.xlane.xlu0 %5348
          %v5350 = vsel %vm3834, %v5331, 0.0
          %5351 = vadd.xlane.f32.xlu0 %v5350
          %v5352 = vpop.xlane.xlu0 %5351
          %v5353 = vsel %vm3834, %v5333, 0.0
          %5354 = vadd.xlane.f32.xlu0 %v5353
          %v5355 = vpop.xlane.xlu0 %5354
          %v5356 = vsel %vm3834, %v5335, 0.0
          %5357 = vadd.xlane.f32.xlu0 %v5356
          %v5358 = vpop.xlane.xlu0 %5357
          %v5359 = vsel %vm3834, %v5337, 0.0
          %5360 = vadd.xlane.f32.xlu0 %v5359
          %v5361 = vpop.xlane.xlu0 %5360
          %v5362 = vrcp.pop %v5340
          %v5363 = vrcp.pop %v5343
          %v5364 = vrcp.pop %v5346
          %v5365 = vrcp.pop %v5349
          %v5366 = vrcp.pop %v5352
          %v5367 = vrcp.pop %v5355
          %v5368 = vrcp.pop %v5358
          %v5369 = vrcp.pop %v5361
          %v5370 = vmul.f32 %v5323, %v5362
          %v5371 = vmul.f32 %v5325, %v5363
          %v5372 = vmul.f32 %v5327, %v5364
          %v5373 = vmul.f32 %v5329, %v5365
          %v5374 = vmul.f32 %v5331, %v5366
          %v5375 = vmul.f32 %v5333, %v5367
          %v5376 = vmul.f32 %v5335, %v5368
          %v5377 = vmul.f32 %v5337, %v5369
          %5378 = vrot.lane.b32.xlu0 %v2993, 88
          %v5379 = vpop.permute.xlu0 %5378
          %5380 = vrot.lane.b32.xlu0 %v2994, 88
          %v5381 = vpop.permute.xlu0 %5380
          %5382 = vrot.lane.b32.xlu0 %v2995, 88
          %v5383 = vpop.permute.xlu0 %5382
          %5384 = vrot.lane.b32.xlu0 %v2996, 88
          %v5385 = vpop.permute.xlu0 %5384
          %5386 = vrot.lane.b32.xlu0 %v2997, 88
          %v5387 = vpop.permute.xlu0 %5386
          %5388 = vrot.lane.b32.xlu0 %v2998, 88
          %v5389 = vpop.permute.xlu0 %5388
          %5390 = vrot.lane.b32.xlu0 %v2999, 88
          %v5391 = vpop.permute.xlu0 %5390
          %5392 = vrot.lane.b32.xlu0 %v3000, 88
          %v5393 = vpop.permute.xlu0 %5392
          %v5403 = vsel %vm3834, %v5370, 0
          %v5406 = vsel %vm3834, %v5371, 0
          %v5409 = vsel %vm3834, %v5372, 0
          %v5412 = vsel %vm3834, %v5373, 0
          %v5415 = vsel %vm3834, %v5374, 0
          %v5418 = vsel %vm3834, %v5375, 0
          %v5421 = vsel %vm3834, %v5376, 0
          %v5424 = vsel %vm3834, %v5377, 0
          %5426 = vmatpush.msra.mxu0 0.0
          %5427 = vmatpush.msra.mxu0 0.0
          %5428 = vmatpush.msra.mxu0 0.0
          %5429 = vmatpush.msra.mxu0 0.0
          %5430 = vmatpush.msra.mxu0 0.0
          %5431 = vmatpush.msra.mxu0 0.0
          %5432 = vmatpush.msra.mxu0 0.0
          %5433 = vmatpush.msra.mxu0 0.0
          %v5434 = vand.u32 %v5393, 4294901760
          %5435 = vmatpush.msra.mxu0 %v5434
          %v5436 = vand.u32 %v5391, 4294901760
          %5437 = vmatpush.msra.mxu0 %v5436
          %v5438 = vand.u32 %v5389, 4294901760
          %5439 = vmatpush.msra.mxu0 %v5438
          %v5440 = vand.u32 %v5387, 4294901760
          %5441 = vmatpush.msra.mxu0 %v5440
          %v5442 = vand.u32 %v5385, 4294901760
          %5443 = vmatpush.msra.mxu0 %v5442
          %v5444 = vand.u32 %v5383, 4294901760
          %5445 = vmatpush.msra.mxu0 %v5444
          %v5446 = vand.u32 %v5381, 4294901760
          %5447 = vmatpush.msra.mxu0 %v5446
          %v5448 = vand.u32 %v5379, 4294901760
          %5449 = vmatpush.msra.mxu0 %v5448
          %v5450 = vand.u32 %v5403, 4294901760
          %v5451 = vsub.f32 %v5403, %v5450
          %v5452 = vand.u32 %v5451, 4294901760
          %v5453 = vsub.f32 %v5451, %v5452
          %v5454 = vand.u32 %v5453, 4294901760
          %5455 = vmatmul.f32.gmra.mxu0 %v5454
          %v5456 = vpop.f32.mrf.mxu0
          %v5457 = vadd.f32 0.0, %v5456
          %v5458 = vand.u32 %v5406, 4294901760
          %v5459 = vsub.f32 %v5406, %v5458
          %v5460 = vand.u32 %v5459, 4294901760
          %v5461 = vsub.f32 %v5459, %v5460
          %v5462 = vand.u32 %v5461, 4294901760
          %5463 = vmatmul.f32.gmra.mxu0 %v5462
          %v5464 = vpop.f32.mrf.mxu0
          %v5465 = vadd.f32 0.0, %v5464
          %v5466 = vand.u32 %v5409, 4294901760
          %v5467 = vsub.f32 %v5409, %v5466
          %v5468 = vand.u32 %v5467, 4294901760
          %v5469 = vsub.f32 %v5467, %v5468
          %v5470 = vand.u32 %v5469, 4294901760
          %5471 = vmatmul.f32.gmra.mxu0 %v5470
          %v5472 = vpop.f32.mrf.mxu0
          %v5473 = vadd.f32 0.0, %v5472
          %v5474 = vand.u32 %v5412, 4294901760
          %v5475 = vsub.f32 %v5412, %v5474
          %v5476 = vand.u32 %v5475, 4294901760
          %v5477 = vsub.f32 %v5475, %v5476
          %v5478 = vand.u32 %v5477, 4294901760
          %5479 = vmatmul.f32.gmra.mxu0 %v5478
          %v5480 = vpop.f32.mrf.mxu0
          %v5481 = vadd.f32 0.0, %v5480
          %v5482 = vand.u32 %v5415, 4294901760
          %v5483 = vsub.f32 %v5415, %v5482
          %v5484 = vand.u32 %v5483, 4294901760
          %v5485 = vsub.f32 %v5483, %v5484
          %v5486 = vand.u32 %v5485, 4294901760
          %5487 = vmatmul.f32.gmra.mxu0 %v5486
          %v5488 = vpop.f32.mrf.mxu0
          %v5489 = vadd.f32 0.0, %v5488
          %v5490 = vand.u32 %v5418, 4294901760
          %v5491 = vsub.f32 %v5418, %v5490
          %v5492 = vand.u32 %v5491, 4294901760
          %v5493 = vsub.f32 %v5491, %v5492
          %v5494 = vand.u32 %v5493, 4294901760
          %5495 = vmatmul.f32.gmra.mxu0 %v5494
          %v5496 = vpop.f32.mrf.mxu0
          %v5497 = vadd.f32 0.0, %v5496
          %v5498 = vand.u32 %v5421, 4294901760
          %v5499 = vsub.f32 %v5421, %v5498
          %v5500 = vand.u32 %v5499, 4294901760
          %v5501 = vsub.f32 %v5499, %v5500
          %v5502 = vand.u32 %v5501, 4294901760
          %5503 = vmatmul.f32.gmra.mxu0 %v5502
          %v5504 = vpop.f32.mrf.mxu0
          %v5505 = vadd.f32 0.0, %v5504
          %v5506 = vand.u32 %v5424, 4294901760
          %v5507 = vsub.f32 %v5424, %v5506
          %v5508 = vand.u32 %v5507, 4294901760
          %v5509 = vsub.f32 %v5507, %v5508
          %v5510 = vand.u32 %v5509, 4294901760
          %5511 = vmatmul.f32.gmra.mxu0 %v5510
          %v5512 = vpop.f32.mrf.mxu0
          %v5513 = vadd.f32 0.0, %v5512
          %5514 = vdwg.mxu0
          %5515 = vmatpush.msra.mxu0 0.0
          %5516 = vmatpush.msra.mxu0 0.0
          %5517 = vmatpush.msra.mxu0 0.0
          %5518 = vmatpush.msra.mxu0 0.0
          %5519 = vmatpush.msra.mxu0 0.0
          %5520 = vmatpush.msra.mxu0 0.0
          %5521 = vmatpush.msra.mxu0 0.0
          %5522 = vmatpush.msra.mxu0 0.0
          %v5523 = vand.u32 %v5393, 4294901760
          %v5524 = vsub.f32 %v5393, %v5523
          %v5525 = vand.u32 %v5524, 4294901760
          %v5526 = vsub.f32 %v5524, %v5525
          %v5527 = vand.u32 %v5526, 4294901760
          %5528 = vmatpush.msra.mxu0 %v5527
          %v5529 = vand.u32 %v5391, 4294901760
          %v5530 = vsub.f32 %v5391, %v5529
          %v5531 = vand.u32 %v5530, 4294901760
          %v5532 = vsub.f32 %v5530, %v5531
          %v5533 = vand.u32 %v5532, 4294901760
          %5534 = vmatpush.msra.mxu0 %v5533
          %v5535 = vand.u32 %v5389, 4294901760
          %v5536 = vsub.f32 %v5389, %v5535
          %v5537 = vand.u32 %v5536, 4294901760
          %v5538 = vsub.f32 %v5536, %v5537
          %v5539 = vand.u32 %v5538, 4294901760
          %5540 = vmatpush.msra.mxu0 %v5539
          %v5541 = vand.u32 %v5387, 4294901760
          %v5542 = vsub.f32 %v5387, %v5541
          %v5543 = vand.u32 %v5542, 4294901760
          %v5544 = vsub.f32 %v5542, %v5543
          %v5545 = vand.u32 %v5544, 4294901760
          %5546 = vmatpush.msra.mxu0 %v5545
          %v5547 = vand.u32 %v5385, 4294901760
          %v5548 = vsub.f32 %v5385, %v5547
          %v5549 = vand.u32 %v5548, 4294901760
          %v5550 = vsub.f32 %v5548, %v5549
          %v5551 = vand.u32 %v5550, 4294901760
          %5552 = vmatpush.msra.mxu0 %v5551
          %v5553 = vand.u32 %v5383, 4294901760
          %v5554 = vsub.f32 %v5383, %v5553
          %v5555 = vand.u32 %v5554, 4294901760
          %v5556 = vsub.f32 %v5554, %v5555
          %v5557 = vand.u32 %v5556, 4294901760
          %5558 = vmatpush.msra.mxu0 %v5557
          %v5559 = vand.u32 %v5381, 4294901760
          %v5560 = vsub.f32 %v5381, %v5559
          %v5561 = vand.u32 %v5560, 4294901760
          %v5562 = vsub.f32 %v5560, %v5561
          %v5563 = vand.u32 %v5562, 4294901760
          %5564 = vmatpush.msra.mxu0 %v5563
          %v5565 = vand.u32 %v5379, 4294901760
          %v5566 = vsub.f32 %v5379, %v5565
          %v5567 = vand.u32 %v5566, 4294901760
          %v5568 = vsub.f32 %v5566, %v5567
          %v5569 = vand.u32 %v5568, 4294901760
          %5570 = vmatpush.msra.mxu0 %v5569
          %v5571 = vand.u32 %v5403, 4294901760
          %5572 = vmatmul.f32.gmra.mxu0 %v5571
          %v5573 = vpop.f32.mrf.mxu0
          %v5574 = vadd.f32 %v5457, %v5573
          %v5575 = vand.u32 %v5406, 4294901760
          %5576 = vmatmul.f32.gmra.mxu0 %v5575
          %v5577 = vpop.f32.mrf.mxu0
          %v5578 = vadd.f32 %v5465, %v5577
          %v5579 = vand.u32 %v5409, 4294901760
          %5580 = vmatmul.f32.gmra.mxu0 %v5579
          %v5581 = vpop.f32.mrf.mxu0
          %v5582 = vadd.f32 %v5473, %v5581
          %v5583 = vand.u32 %v5412, 4294901760
          %5584 = vmatmul.f32.gmra.mxu0 %v5583
          %v5585 = vpop.f32.mrf.mxu0
          %v5586 = vadd.f32 %v5481, %v5585
          %v5587 = vand.u32 %v5415, 4294901760
          %5588 = vmatmul.f32.gmra.mxu0 %v5587
          %v5589 = vpop.f32.mrf.mxu0
          %v5590 = vadd.f32 %v5489, %v5589
          %v5591 = vand.u32 %v5418, 4294901760
          %5592 = vmatmul.f32.gmra.mxu0 %v5591
          %v5593 = vpop.f32.mrf.mxu0
          %v5594 = vadd.f32 %v5497, %v5593
          %v5595 = vand.u32 %v5421, 4294901760
          %5596 = vmatmul.f32.gmra.mxu0 %v5595
          %v5597 = vpop.f32.mrf.mxu0
          %v5598 = vadd.f32 %v5505, %v5597
          %v5599 = vand.u32 %v5424, 4294901760
          %5600 = vmatmul.f32.gmra.mxu0 %v5599
          %v5601 = vpop.f32.mrf.mxu0
          %v5602 = vadd.f32 %v5513, %v5601
          %5603 = vdwg.mxu0
          %5604 = vmatpush.msra.mxu0 0.0
          %5605 = vmatpush.msra.mxu0 0.0
          %5606 = vmatpush.msra.mxu0 0.0
          %5607 = vmatpush.msra.mxu0 0.0
          %5608 = vmatpush.msra.mxu0 0.0
          %5609 = vmatpush.msra.mxu0 0.0
          %5610 = vmatpush.msra.mxu0 0.0
          %5611 = vmatpush.msra.mxu0 0.0
          %v5612 = vand.u32 %v5393, 4294901760
          %v5613 = vsub.f32 %v5393, %v5612
          %5614 = vmatpush.msra.mxu0 %v5613
          %v5615 = vand.u32 %v5391, 4294901760
          %v5616 = vsub.f32 %v5391, %v5615
          %5617 = vmatpush.msra.mxu0 %v5616
          %v5618 = vand.u32 %v5389, 4294901760
          %v5619 = vsub.f32 %v5389, %v5618
          %5620 = vmatpush.msra.mxu0 %v5619
          %v5621 = vand.u32 %v5387, 4294901760
          %v5622 = vsub.f32 %v5387, %v5621
          %5623 = vmatpush.msra.mxu0 %v5622
          %v5624 = vand.u32 %v5385, 4294901760
          %v5625 = vsub.f32 %v5385, %v5624
          %5626 = vmatpush.msra.mxu0 %v5625
          %v5627 = vand.u32 %v5383, 4294901760
          %v5628 = vsub.f32 %v5383, %v5627
          %5629 = vmatpush.msra.mxu0 %v5628
          %v5630 = vand.u32 %v5381, 4294901760
          %v5631 = vsub.f32 %v5381, %v5630
          %5632 = vmatpush.msra.mxu0 %v5631
          %v5633 = vand.u32 %v5379, 4294901760
          %v5634 = vsub.f32 %v5379, %v5633
          %5635 = vmatpush.msra.mxu0 %v5634
          %v5636 = vand.u32 %v5403, 4294901760
          %v5637 = vsub.f32 %v5403, %v5636
          %5638 = vmatmul.f32.gmra.mxu0 %v5637
          %v5639 = vpop.f32.mrf.mxu0
          %v5640 = vadd.f32 %v5574, %v5639
          %v5641 = vand.u32 %v5406, 4294901760
          %v5642 = vsub.f32 %v5406, %v5641
          %5643 = vmatmul.f32.gmra.mxu0 %v5642
          %v5644 = vpop.f32.mrf.mxu0
          %v5645 = vadd.f32 %v5578, %v5644
          %v5646 = vand.u32 %v5409, 4294901760
          %v5647 = vsub.f32 %v5409, %v5646
          %5648 = vmatmul.f32.gmra.mxu0 %v5647
          %v5649 = vpop.f32.mrf.mxu0
          %v5650 = vadd.f32 %v5582, %v5649
          %v5651 = vand.u32 %v5412, 4294901760
          %v5652 = vsub.f32 %v5412, %v5651
          %5653 = vmatmul.f32.gmra.mxu0 %v5652
          %v5654 = vpop.f32.mrf.mxu0
          %v5655 = vadd.f32 %v5586, %v5654
          %v5656 = vand.u32 %v5415, 4294901760
          %v5657 = vsub.f32 %v5415, %v5656
          %5658 = vmatmul.f32.gmra.mxu0 %v5657
          %v5659 = vpop.f32.mrf.mxu0
          %v5660 = vadd.f32 %v5590, %v5659
          %v5661 = vand.u32 %v5418, 4294901760
          %v5662 = vsub.f32 %v5418, %v5661
          %5663 = vmatmul.f32.gmra.mxu0 %v5662
          %v5664 = vpop.f32.mrf.mxu0
          %v5665 = vadd.f32 %v5594, %v5664
          %v5666 = vand.u32 %v5421, 4294901760
          %v5667 = vsub.f32 %v5421, %v5666
          %5668 = vmatmul.f32.gmra.mxu0 %v5667
          %v5669 = vpop.f32.mrf.mxu0
          %v5670 = vadd.f32 %v5598, %v5669
          %v5671 = vand.u32 %v5424, 4294901760
          %v5672 = vsub.f32 %v5424, %v5671
          %5673 = vmatmul.f32.gmra.mxu0 %v5672
          %v5674 = vpop.f32.mrf.mxu0
          %v5675 = vadd.f32 %v5602, %v5674
          %5676 = vdwg.mxu0
          %5677 = vmatpush.msra.mxu0 0.0
          %5678 = vmatpush.msra.mxu0 0.0
          %5679 = vmatpush.msra.mxu0 0.0
          %5680 = vmatpush.msra.mxu0 0.0
          %5681 = vmatpush.msra.mxu0 0.0
          %5682 = vmatpush.msra.mxu0 0.0
          %5683 = vmatpush.msra.mxu0 0.0
          %5684 = vmatpush.msra.mxu0 0.0
          %v5685 = vand.u32 %v5393, 4294901760
          %5686 = vmatpush.msra.mxu0 %v5685
          %v5687 = vand.u32 %v5391, 4294901760
          %5688 = vmatpush.msra.mxu0 %v5687
          %v5689 = vand.u32 %v5389, 4294901760
          %5690 = vmatpush.msra.mxu0 %v5689
          %v5691 = vand.u32 %v5387, 4294901760
          %5692 = vmatpush.msra.mxu0 %v5691
          %v5693 = vand.u32 %v5385, 4294901760
          %5694 = vmatpush.msra.mxu0 %v5693
          %v5695 = vand.u32 %v5383, 4294901760
          %5696 = vmatpush.msra.mxu0 %v5695
          %v5697 = vand.u32 %v5381, 4294901760
          %5698 = vmatpush.msra.mxu0 %v5697
          %v5699 = vand.u32 %v5379, 4294901760
          %5700 = vmatpush.msra.mxu0 %v5699
          %v5701 = vand.u32 %v5403, 4294901760
          %v5702 = vsub.f32 %v5403, %v5701
          %v5703 = vand.u32 %v5702, 4294901760
          %5704 = vmatmul.f32.gmra.mxu0 %v5703
          %v5705 = vpop.f32.mrf.mxu0
          %v5706 = vadd.f32 %v5640, %v5705
          %v5707 = vand.u32 %v5406, 4294901760
          %v5708 = vsub.f32 %v5406, %v5707
          %v5709 = vand.u32 %v5708, 4294901760
          %5710 = vmatmul.f32.gmra.mxu0 %v5709
          %v5711 = vpop.f32.mrf.mxu0
          %v5712 = vadd.f32 %v5645, %v5711
          %v5713 = vand.u32 %v5409, 4294901760
          %v5714 = vsub.f32 %v5409, %v5713
          %v5715 = vand.u32 %v5714, 4294901760
          %5716 = vmatmul.f32.gmra.mxu0 %v5715
          %v5717 = vpop.f32.mrf.mxu0
          %v5718 = vadd.f32 %v5650, %v5717
          %v5719 = vand.u32 %v5412, 4294901760
          %v5720 = vsub.f32 %v5412, %v5719
          %v5721 = vand.u32 %v5720, 4294901760
          %5722 = vmatmul.f32.gmra.mxu0 %v5721
          %v5723 = vpop.f32.mrf.mxu0
          %v5724 = vadd.f32 %v5655, %v5723
          %v5725 = vand.u32 %v5415, 4294901760
          %v5726 = vsub.f32 %v5415, %v5725
          %v5727 = vand.u32 %v5726, 4294901760
          %5728 = vmatmul.f32.gmra.mxu0 %v5727
          %v5729 = vpop.f32.mrf.mxu0
          %v5730 = vadd.f32 %v5660, %v5729
          %v5731 = vand.u32 %v5418, 4294901760
          %v5732 = vsub.f32 %v5418, %v5731
          %v5733 = vand.u32 %v5732, 4294901760
          %5734 = vmatmul.f32.gmra.mxu0 %v5733
          %v5735 = vpop.f32.mrf.mxu0
          %v5736 = vadd.f32 %v5665, %v5735
          %v5737 = vand.u32 %v5421, 4294901760
          %v5738 = vsub.f32 %v5421, %v5737
          %v5739 = vand.u32 %v5738, 4294901760
          %5740 = vmatmul.f32.gmra.mxu0 %v5739
          %v5741 = vpop.f32.mrf.mxu0
          %v5742 = vadd.f32 %v5670, %v5741
          %v5743 = vand.u32 %v5424, 4294901760
          %v5744 = vsub.f32 %v5424, %v5743
          %v5745 = vand.u32 %v5744, 4294901760
          %5746 = vmatmul.f32.gmra.mxu0 %v5745
          %v5747 = vpop.f32.mrf.mxu0
          %v5748 = vadd.f32 %v5675, %v5747
          %5749 = vdwg.mxu0
          %5750 = vmatpush.msra.mxu0 0.0
          %5751 = vmatpush.msra.mxu0 0.0
          %5752 = vmatpush.msra.mxu0 0.0
          %5753 = vmatpush.msra.mxu0 0.0
          %5754 = vmatpush.msra.mxu0 0.0
          %5755 = vmatpush.msra.mxu0 0.0
          %5756 = vmatpush.msra.mxu0 0.0
          %5757 = vmatpush.msra.mxu0 0.0
          %v5758 = vand.u32 %v5393, 4294901760
          %v5759 = vsub.f32 %v5393, %v5758
          %v5760 = vand.u32 %v5759, 4294901760
          %5761 = vmatpush.msra.mxu0 %v5760
          %v5762 = vand.u32 %v5391, 4294901760
          %v5763 = vsub.f32 %v5391, %v5762
          %v5764 = vand.u32 %v5763, 4294901760
          %5765 = vmatpush.msra.mxu0 %v5764
          %v5766 = vand.u32 %v5389, 4294901760
          %v5767 = vsub.f32 %v5389, %v5766
          %v5768 = vand.u32 %v5767, 4294901760
          %5769 = vmatpush.msra.mxu0 %v5768
          %v5770 = vand.u32 %v5387, 4294901760
          %v5771 = vsub.f32 %v5387, %v5770
          %v5772 = vand.u32 %v5771, 4294901760
          %5773 = vmatpush.msra.mxu0 %v5772
          %v5774 = vand.u32 %v5385, 4294901760
          %v5775 = vsub.f32 %v5385, %v5774
          %v5776 = vand.u32 %v5775, 4294901760
          %5777 = vmatpush.msra.mxu0 %v5776
          %v5778 = vand.u32 %v5383, 4294901760
          %v5779 = vsub.f32 %v5383, %v5778
          %v5780 = vand.u32 %v5779, 4294901760
          %5781 = vmatpush.msra.mxu0 %v5780
          %v5782 = vand.u32 %v5381, 4294901760
          %v5783 = vsub.f32 %v5381, %v5782
          %v5784 = vand.u32 %v5783, 4294901760
          %5785 = vmatpush.msra.mxu0 %v5784
          %v5786 = vand.u32 %v5379, 4294901760
          %v5787 = vsub.f32 %v5379, %v5786
          %v5788 = vand.u32 %v5787, 4294901760
          %5789 = vmatpush.msra.mxu0 %v5788
          %v5790 = vand.u32 %v5403, 4294901760
          %5791 = vmatmul.f32.gmra.mxu0 %v5790
          %v5792 = vpop.f32.mrf.mxu0
          %v5793 = vadd.f32 %v5706, %v5792
          %v5794 = vand.u32 %v5406, 4294901760
          %5795 = vmatmul.f32.gmra.mxu0 %v5794
          %v5796 = vpop.f32.mrf.mxu0
          %v5797 = vadd.f32 %v5712, %v5796
          %v5798 = vand.u32 %v5409, 4294901760
          %5799 = vmatmul.f32.gmra.mxu0 %v5798
          %v5800 = vpop.f32.mrf.mxu0
          %v5801 = vadd.f32 %v5718, %v5800
          %v5802 = vand.u32 %v5412, 4294901760
          %5803 = vmatmul.f32.gmra.mxu0 %v5802
          %v5804 = vpop.f32.mrf.mxu0
          %v5805 = vadd.f32 %v5724, %v5804
          %v5806 = vand.u32 %v5415, 4294901760
          %5807 = vmatmul.f32.gmra.mxu0 %v5806
          %v5808 = vpop.f32.mrf.mxu0
          %v5809 = vadd.f32 %v5730, %v5808
          %v5810 = vand.u32 %v5418, 4294901760
          %5811 = vmatmul.f32.gmra.mxu0 %v5810
          %v5812 = vpop.f32.mrf.mxu0
          %v5813 = vadd.f32 %v5736, %v5812
          %v5814 = vand.u32 %v5421, 4294901760
          %5815 = vmatmul.f32.gmra.mxu0 %v5814
          %v5816 = vpop.f32.mrf.mxu0
          %v5817 = vadd.f32 %v5742, %v5816
          %v5818 = vand.u32 %v5424, 4294901760
          %5819 = vmatmul.f32.gmra.mxu0 %v5818
          %v5820 = vpop.f32.mrf.mxu0
          %v5821 = vadd.f32 %v5748, %v5820
          %5822 = vdwg.mxu0
          %5823 = vmatpush.msra.mxu0 0.0
          %5824 = vmatpush.msra.mxu0 0.0
          %5825 = vmatpush.msra.mxu0 0.0
          %5826 = vmatpush.msra.mxu0 0.0
          %5827 = vmatpush.msra.mxu0 0.0
          %5828 = vmatpush.msra.mxu0 0.0
          %5829 = vmatpush.msra.mxu0 0.0
          %5830 = vmatpush.msra.mxu0 0.0
          %v5831 = vand.u32 %v5393, 4294901760
          %5832 = vmatpush.msra.mxu0 %v5831
          %v5833 = vand.u32 %v5391, 4294901760
          %5834 = vmatpush.msra.mxu0 %v5833
          %v5835 = vand.u32 %v5389, 4294901760
          %5836 = vmatpush.msra.mxu0 %v5835
          %v5837 = vand.u32 %v5387, 4294901760
          %5838 = vmatpush.msra.mxu0 %v5837
          %v5839 = vand.u32 %v5385, 4294901760
          %5840 = vmatpush.msra.mxu0 %v5839
          %v5841 = vand.u32 %v5383, 4294901760
          %5842 = vmatpush.msra.mxu0 %v5841
          %v5843 = vand.u32 %v5381, 4294901760
          %5844 = vmatpush.msra.mxu0 %v5843
          %v5845 = vand.u32 %v5379, 4294901760
          %5846 = vmatpush.msra.mxu0 %v5845
          %v5847 = vand.u32 %v5403, 4294901760
          %5848 = vmatmul.f32.gmra.mxu0 %v5847
          %v5849 = vpop.f32.mrf.mxu0
          %v5850 = vadd.f32 %v5793, %v5849
          %v5851 = vand.u32 %v5406, 4294901760
          %5852 = vmatmul.f32.gmra.mxu0 %v5851
          %v5853 = vpop.f32.mrf.mxu0
          %v5854 = vadd.f32 %v5797, %v5853
          %v5855 = vand.u32 %v5409, 4294901760
          %5856 = vmatmul.f32.gmra.mxu0 %v5855
          %v5857 = vpop.f32.mrf.mxu0
          %v5858 = vadd.f32 %v5801, %v5857
          %v5859 = vand.u32 %v5412, 4294901760
          %5860 = vmatmul.f32.gmra.mxu0 %v5859
          %v5861 = vpop.f32.mrf.mxu0
          %v5862 = vadd.f32 %v5805, %v5861
          %v5863 = vand.u32 %v5415, 4294901760
          %5864 = vmatmul.f32.gmra.mxu0 %v5863
          %v5865 = vpop.f32.mrf.mxu0
          %v5866 = vadd.f32 %v5809, %v5865
          %v5867 = vand.u32 %v5418, 4294901760
          %5868 = vmatmul.f32.gmra.mxu0 %v5867
          %v5869 = vpop.f32.mrf.mxu0
          %v5870 = vadd.f32 %v5813, %v5869
          %v5871 = vand.u32 %v5421, 4294901760
          %5872 = vmatmul.f32.gmra.mxu0 %v5871
          %v5873 = vpop.f32.mrf.mxu0
          %v5874 = vadd.f32 %v5817, %v5873
          %v5875 = vand.u32 %v5424, 4294901760
          %5876 = vmatmul.f32.gmra.mxu0 %v5875
          %v5877 = vpop.f32.mrf.mxu0
          %v5878 = vadd.f32 %v5821, %v5877
          %5879 = vdwg.mxu0
          %5888 = vrot.lane.b32.xlu0 %v5850, 8
          %v5889 = vpop.permute.xlu0 %5888
          %5890 = vrot.lane.b32.xlu0 %v5854, 8
          %v5891 = vpop.permute.xlu0 %5890
          %5892 = vrot.lane.b32.xlu0 %v5858, 8
          %v5893 = vpop.permute.xlu0 %5892
          %5894 = vrot.lane.b32.xlu0 %v5862, 8
          %v5895 = vpop.permute.xlu0 %5894
          %5896 = vrot.lane.b32.xlu0 %v5866, 8
          %v5897 = vpop.permute.xlu0 %5896
          %5898 = vrot.lane.b32.xlu0 %v5870, 8
          %v5899 = vpop.permute.xlu0 %5898
          %5900 = vrot.lane.b32.xlu0 %v5874, 8
          %v5901 = vpop.permute.xlu0 %5900
          %5902 = vrot.lane.b32.xlu0 %v5878, 8
          %v5903 = vpop.permute.xlu0 %5902
          %v5912 = vsel %vm3009, %v4403, %v5889
          %v5913 = vsel %vm3009, %v4407, %v5891
          %v5914 = vsel %vm3009, %v4411, %v5893
          %v5915 = vsel %vm3009, %v4415, %v5895
          %v5916 = vsel %vm3009, %v4419, %v5897
          %v5917 = vsel %vm3009, %v4423, %v5899
          %v5918 = vsel %vm3009, %v4427, %v5901
          %v5919 = vsel %vm3009, %v4431, %v5903
          %v5920 = vld [vmem:[%s6] sm:$0xff]
          %v5921 = vld [vmem:[%s6 + $0x8] sm:$0xff]
          %v5923 = vsel %vm606, %v5912, 0
          %v5926 = vsel %vm606, %v5913, 0
          %v5929 = vsel %vm606, %v5914, 0
          %v5932 = vsel %vm606, %v5915, 0
          %v5935 = vsel %vm606, %v5916, 0
          %v5938 = vsel %vm606, %v5917, 0
          %v5941 = vsel %vm606, %v5918, 0
          %v5944 = vsel %vm606, %v5919, 0
          %5946 = vmatpush.msra.mxu0 0.0
          %5947 = vmatpush.msra.mxu0 0.0
          %5948 = vmatpush.msra.mxu0 0.0
          %5949 = vmatpush.msra.mxu0 0.0
          %5950 = vmatpush.msra.mxu0 0.0
          %5951 = vmatpush.msra.mxu0 0.0
          %5952 = vmatpush.msra.mxu0 0.0
          %5953 = vmatpush.msra.mxu0 0.0
          %5954 = vmatpush.msra.mxu0 0.0
          %5955 = vmatpush.msra.mxu0 0.0
          %5956 = vmatpush.msra.mxu0 0.0
          %5957 = vmatpush.msra.mxu0 0.0
          %5958 = vmatpush.msra.mxu0 0.0
          %5959 = vmatpush.msra.mxu0 0.0
          %v5960 = vand.u32 %v5921, 4294901760
          %5961 = vmatpush.msra.mxu0 %v5960
          %v5962 = vand.u32 %v5920, 4294901760
          %5963 = vmatpush.msra.mxu0 %v5962
          %v5964 = vand.u32 %v5923, 4294901760
          %v5965 = vsub.f32 %v5923, %v5964
          %v5966 = vand.u32 %v5965, 4294901760
          %v5967 = vsub.f32 %v5965, %v5966
          %v5968 = vand.u32 %v5967, 4294901760
          %5969 = vmatmul.f32.gmra.mxu0 %v5968
          %v5970 = vpop.f32.mrf.mxu0
          %v5971 = vadd.f32 0.0, %v5970
          %v5972 = vand.u32 %v5926, 4294901760
          %v5973 = vsub.f32 %v5926, %v5972
          %v5974 = vand.u32 %v5973, 4294901760
          %v5975 = vsub.f32 %v5973, %v5974
          %v5976 = vand.u32 %v5975, 4294901760
          %5977 = vmatmul.f32.gmra.mxu0 %v5976
          %v5978 = vpop.f32.mrf.mxu0
          %v5979 = vadd.f32 0.0, %v5978
          %v5980 = vand.u32 %v5929, 4294901760
          %v5981 = vsub.f32 %v5929, %v5980
          %v5982 = vand.u32 %v5981, 4294901760
          %v5983 = vsub.f32 %v5981, %v5982
          %v5984 = vand.u32 %v5983, 4294901760
          %5985 = vmatmul.f32.gmra.mxu0 %v5984
          %v5986 = vpop.f32.mrf.mxu0
          %v5987 = vadd.f32 0.0, %v5986
          %v5988 = vand.u32 %v5932, 4294901760
          %v5989 = vsub.f32 %v5932, %v5988
          %v5990 = vand.u32 %v5989, 4294901760
          %v5991 = vsub.f32 %v5989, %v5990
          %v5992 = vand.u32 %v5991, 4294901760
          %5993 = vmatmul.f32.gmra.mxu0 %v5992
          %v5994 = vpop.f32.mrf.mxu0
          %v5995 = vadd.f32 0.0, %v5994
          %v5996 = vand.u32 %v5935, 4294901760
          %v5997 = vsub.f32 %v5935, %v5996
          %v5998 = vand.u32 %v5997, 4294901760
          %v5999 = vsub.f32 %v5997, %v5998
          %v6000 = vand.u32 %v5999, 4294901760
          %6001 = vmatmul.f32.gmra.mxu0 %v6000
          %v6002 = vpop.f32.mrf.mxu0
          %v6003 = vadd.f32 0.0, %v6002
          %v6004 = vand.u32 %v5938, 4294901760
          %v6005 = vsub.f32 %v5938, %v6004
          %v6006 = vand.u32 %v6005, 4294901760
          %v6007 = vsub.f32 %v6005, %v6006
          %v6008 = vand.u32 %v6007, 4294901760
          %6009 = vmatmul.f32.gmra.mxu0 %v6008
          %v6010 = vpop.f32.mrf.mxu0
          %v6011 = vadd.f32 0.0, %v6010
          %v6012 = vand.u32 %v5941, 4294901760
          %v6013 = vsub.f32 %v5941, %v6012
          %v6014 = vand.u32 %v6013, 4294901760
          %v6015 = vsub.f32 %v6013, %v6014
          %v6016 = vand.u32 %v6015, 4294901760
          %6017 = vmatmul.f32.gmra.mxu0 %v6016
          %v6018 = vpop.f32.mrf.mxu0
          %v6019 = vadd.f32 0.0, %v6018
          %v6020 = vand.u32 %v5944, 4294901760
          %v6021 = vsub.f32 %v5944, %v6020
          %v6022 = vand.u32 %v6021, 4294901760
          %v6023 = vsub.f32 %v6021, %v6022
          %v6024 = vand.u32 %v6023, 4294901760
          %6025 = vmatmul.f32.gmra.mxu0 %v6024
          %v6026 = vpop.f32.mrf.mxu0
          %v6027 = vadd.f32 0.0, %v6026
          %6028 = vdwg.mxu0
          %6029 = vmatpush.msra.mxu0 0.0
          %6030 = vmatpush.msra.mxu0 0.0
          %6031 = vmatpush.msra.mxu0 0.0
          %6032 = vmatpush.msra.mxu0 0.0
          %6033 = vmatpush.msra.mxu0 0.0
          %6034 = vmatpush.msra.mxu0 0.0
          %6035 = vmatpush.msra.mxu0 0.0
          %6036 = vmatpush.msra.mxu0 0.0
          %6037 = vmatpush.msra.mxu0 0.0
          %6038 = vmatpush.msra.mxu0 0.0
          %6039 = vmatpush.msra.mxu0 0.0
          %6040 = vmatpush.msra.mxu0 0.0
          %6041 = vmatpush.msra.mxu0 0.0
          %6042 = vmatpush.msra.mxu0 0.0
          %v6043 = vand.u32 %v5921, 4294901760
          %v6044 = vsub.f32 %v5921, %v6043
          %v6045 = vand.u32 %v6044, 4294901760
          %v6046 = vsub.f32 %v6044, %v6045
          %v6047 = vand.u32 %v6046, 4294901760
          %6048 = vmatpush.msra.mxu0 %v6047
          %v6049 = vand.u32 %v5920, 4294901760
          %v6050 = vsub.f32 %v5920, %v6049
          %v6051 = vand.u32 %v6050, 4294901760
          %v6052 = vsub.f32 %v6050, %v6051
          %v6053 = vand.u32 %v6052, 4294901760
          %6054 = vmatpush.msra.mxu0 %v6053
          %v6055 = vand.u32 %v5923, 4294901760
          %6056 = vmatmul.f32.gmra.mxu0 %v6055
          %v6057 = vpop.f32.mrf.mxu0
          %v6058 = vadd.f32 %v5971, %v6057
          %v6059 = vand.u32 %v5926, 4294901760
          %6060 = vmatmul.f32.gmra.mxu0 %v6059
          %v6061 = vpop.f32.mrf.mxu0
          %v6062 = vadd.f32 %v5979, %v6061
          %v6063 = vand.u32 %v5929, 4294901760
          %6064 = vmatmul.f32.gmra.mxu0 %v6063
          %v6065 = vpop.f32.mrf.mxu0
          %v6066 = vadd.f32 %v5987, %v6065
          %v6067 = vand.u32 %v5932, 4294901760
          %6068 = vmatmul.f32.gmra.mxu0 %v6067
          %v6069 = vpop.f32.mrf.mxu0
          %v6070 = vadd.f32 %v5995, %v6069
          %v6071 = vand.u32 %v5935, 4294901760
          %6072 = vmatmul.f32.gmra.mxu0 %v6071
          %v6073 = vpop.f32.mrf.mxu0
          %v6074 = vadd.f32 %v6003, %v6073
          %v6075 = vand.u32 %v5938, 4294901760
          %6076 = vmatmul.f32.gmra.mxu0 %v6075
          %v6077 = vpop.f32.mrf.mxu0
          %v6078 = vadd.f32 %v6011, %v6077
          %v6079 = vand.u32 %v5941, 4294901760
          %6080 = vmatmul.f32.gmra.mxu0 %v6079
          %v6081 = vpop.f32.mrf.mxu0
          %v6082 = vadd.f32 %v6019, %v6081
          %v6083 = vand.u32 %v5944, 4294901760
          %6084 = vmatmul.f32.gmra.mxu0 %v6083
          %v6085 = vpop.f32.mrf.mxu0
          %v6086 = vadd.f32 %v6027, %v6085
          %6087 = vdwg.mxu0
          %6088 = vmatpush.msra.mxu0 0.0
          %6089 = vmatpush.msra.mxu0 0.0
          %6090 = vmatpush.msra.mxu0 0.0
          %6091 = vmatpush.msra.mxu0 0.0
          %6092 = vmatpush.msra.mxu0 0.0
          %6093 = vmatpush.msra.mxu0 0.0
          %6094 = vmatpush.msra.mxu0 0.0
          %6095 = vmatpush.msra.mxu0 0.0
          %6096 = vmatpush.msra.mxu0 0.0
          %6097 = vmatpush.msra.mxu0 0.0
          %6098 = vmatpush.msra.mxu0 0.0
          %6099 = vmatpush.msra.mxu0 0.0
          %6100 = vmatpush.msra.mxu0 0.0
          %6101 = vmatpush.msra.mxu0 0.0
          %v6102 = vand.u32 %v5921, 4294901760
          %v6103 = vsub.f32 %v5921, %v6102
          %6104 = vmatpush.msra.mxu0 %v6103
          %v6105 = vand.u32 %v5920, 4294901760
          %v6106 = vsub.f32 %v5920, %v6105
          %6107 = vmatpush.msra.mxu0 %v6106
          %v6108 = vand.u32 %v5923, 4294901760
          %v6109 = vsub.f32 %v5923, %v6108
          %6110 = vmatmul.f32.gmra.mxu0 %v6109
          %v6111 = vpop.f32.mrf.mxu0
          %v6112 = vadd.f32 %v6058, %v6111
          %v6113 = vand.u32 %v5926, 4294901760
          %v6114 = vsub.f32 %v5926, %v6113
          %6115 = vmatmul.f32.gmra.mxu0 %v6114
          %v6116 = vpop.f32.mrf.mxu0
          %v6117 = vadd.f32 %v6062, %v6116
          %v6118 = vand.u32 %v5929, 4294901760
          %v6119 = vsub.f32 %v5929, %v6118
          %6120 = vmatmul.f32.gmra.mxu0 %v6119
          %v6121 = vpop.f32.mrf.mxu0
          %v6122 = vadd.f32 %v6066, %v6121
          %v6123 = vand.u32 %v5932, 4294901760
          %v6124 = vsub.f32 %v5932, %v6123
          %6125 = vmatmul.f32.gmra.mxu0 %v6124
          %v6126 = vpop.f32.mrf.mxu0
          %v6127 = vadd.f32 %v6070, %v6126
          %v6128 = vand.u32 %v5935, 4294901760
          %v6129 = vsub.f32 %v5935, %v6128
          %6130 = vmatmul.f32.gmra.mxu0 %v6129
          %v6131 = vpop.f32.mrf.mxu0
          %v6132 = vadd.f32 %v6074, %v6131
          %v6133 = vand.u32 %v5938, 4294901760
          %v6134 = vsub.f32 %v5938, %v6133
          %6135 = vmatmul.f32.gmra.mxu0 %v6134
          %v6136 = vpop.f32.mrf.mxu0
          %v6137 = vadd.f32 %v6078, %v6136
          %v6138 = vand.u32 %v5941, 4294901760
          %v6139 = vsub.f32 %v5941, %v6138
          %6140 = vmatmul.f32.gmra.mxu0 %v6139
          %v6141 = vpop.f32.mrf.mxu0
          %v6142 = vadd.f32 %v6082, %v6141
          %v6143 = vand.u32 %v5944, 4294901760
          %v6144 = vsub.f32 %v5944, %v6143
          %6145 = vmatmul.f32.gmra.mxu0 %v6144
          %v6146 = vpop.f32.mrf.mxu0
          %v6147 = vadd.f32 %v6086, %v6146
          %6148 = vdwg.mxu0
          %6149 = vmatpush.msra.mxu0 0.0
          %6150 = vmatpush.msra.mxu0 0.0
          %6151 = vmatpush.msra.mxu0 0.0
          %6152 = vmatpush.msra.mxu0 0.0
          %6153 = vmatpush.msra.mxu0 0.0
          %6154 = vmatpush.msra.mxu0 0.0
          %6155 = vmatpush.msra.mxu0 0.0
          %6156 = vmatpush.msra.mxu0 0.0
          %6157 = vmatpush.msra.mxu0 0.0
          %6158 = vmatpush.msra.mxu0 0.0
          %6159 = vmatpush.msra.mxu0 0.0
          %6160 = vmatpush.msra.mxu0 0.0
          %6161 = vmatpush.msra.mxu0 0.0
          %6162 = vmatpush.msra.mxu0 0.0
          %v6163 = vand.u32 %v5921, 4294901760
          %6164 = vmatpush.msra.mxu0 %v6163
          %v6165 = vand.u32 %v5920, 4294901760
          %6166 = vmatpush.msra.mxu0 %v6165
          %v6167 = vand.u32 %v5923, 4294901760
          %v6168 = vsub.f32 %v5923, %v6167
          %v6169 = vand.u32 %v6168, 4294901760
          %6170 = vmatmul.f32.gmra.mxu0 %v6169
          %v6171 = vpop.f32.mrf.mxu0
          %v6172 = vadd.f32 %v6112, %v6171
          %v6173 = vand.u32 %v5926, 4294901760
          %v6174 = vsub.f32 %v5926, %v6173
          %v6175 = vand.u32 %v6174, 4294901760
          %6176 = vmatmul.f32.gmra.mxu0 %v6175
          %v6177 = vpop.f32.mrf.mxu0
          %v6178 = vadd.f32 %v6117, %v6177
          %v6179 = vand.u32 %v5929, 4294901760
          %v6180 = vsub.f32 %v5929, %v6179
          %v6181 = vand.u32 %v6180, 4294901760
          %6182 = vmatmul.f32.gmra.mxu0 %v6181
          %v6183 = vpop.f32.mrf.mxu0
          %v6184 = vadd.f32 %v6122, %v6183
          %v6185 = vand.u32 %v5932, 4294901760
          %v6186 = vsub.f32 %v5932, %v6185
          %v6187 = vand.u32 %v6186, 4294901760
          %6188 = vmatmul.f32.gmra.mxu0 %v6187
          %v6189 = vpop.f32.mrf.mxu0
          %v6190 = vadd.f32 %v6127, %v6189
          %v6191 = vand.u32 %v5935, 4294901760
          %v6192 = vsub.f32 %v5935, %v6191
          %v6193 = vand.u32 %v6192, 4294901760
          %6194 = vmatmul.f32.gmra.mxu0 %v6193
          %v6195 = vpop.f32.mrf.mxu0
          %v6196 = vadd.f32 %v6132, %v6195
          %v6197 = vand.u32 %v5938, 4294901760
          %v6198 = vsub.f32 %v5938, %v6197
          %v6199 = vand.u32 %v6198, 4294901760
          %6200 = vmatmul.f32.gmra.mxu0 %v6199
          %v6201 = vpop.f32.mrf.mxu0
          %v6202 = vadd.f32 %v6137, %v6201
          %v6203 = vand.u32 %v5941, 4294901760
          %v6204 = vsub.f32 %v5941, %v6203
          %v6205 = vand.u32 %v6204, 4294901760
          %6206 = vmatmul.f32.gmra.mxu0 %v6205
          %v6207 = vpop.f32.mrf.mxu0
          %v6208 = vadd.f32 %v6142, %v6207
          %v6209 = vand.u32 %v5944, 4294901760
          %v6210 = vsub.f32 %v5944, %v6209
          %v6211 = vand.u32 %v6210, 4294901760
          %6212 = vmatmul.f32.gmra.mxu0 %v6211
          %v6213 = vpop.f32.mrf.mxu0
          %v6214 = vadd.f32 %v6147, %v6213
          %6215 = vdwg.mxu0
          %6216 = vmatpush.msra.mxu0 0.0
          %6217 = vmatpush.msra.mxu0 0.0
          %6218 = vmatpush.msra.mxu0 0.0
          %6219 = vmatpush.msra.mxu0 0.0
          %6220 = vmatpush.msra.mxu0 0.0
          %6221 = vmatpush.msra.mxu0 0.0
          %6222 = vmatpush.msra.mxu0 0.0
          %6223 = vmatpush.msra.mxu0 0.0
          %6224 = vmatpush.msra.mxu0 0.0
          %6225 = vmatpush.msra.mxu0 0.0
          %6226 = vmatpush.msra.mxu0 0.0
          %6227 = vmatpush.msra.mxu0 0.0
          %6228 = vmatpush.msra.mxu0 0.0
          %6229 = vmatpush.msra.mxu0 0.0
          %v6230 = vand.u32 %v5921, 4294901760
          %v6231 = vsub.f32 %v5921, %v6230
          %v6232 = vand.u32 %v6231, 4294901760
          %6233 = vmatpush.msra.mxu0 %v6232
          %v6234 = vand.u32 %v5920, 4294901760
          %v6235 = vsub.f32 %v5920, %v6234
          %v6236 = vand.u32 %v6235, 4294901760
          %6237 = vmatpush.msra.mxu0 %v6236
          %v6238 = vand.u32 %v5923, 4294901760
          %6239 = vmatmul.f32.gmra.mxu0 %v6238
          %v6240 = vpop.f32.mrf.mxu0
          %v6241 = vadd.f32 %v6172, %v6240
          %v6242 = vand.u32 %v5926, 4294901760
          %6243 = vmatmul.f32.gmra.mxu0 %v6242
          %v6244 = vpop.f32.mrf.mxu0
          %v6245 = vadd.f32 %v6178, %v6244
          %v6246 = vand.u32 %v5929, 4294901760
          %6247 = vmatmul.f32.gmra.mxu0 %v6246
          %v6248 = vpop.f32.mrf.mxu0
          %v6249 = vadd.f32 %v6184, %v6248
          %v6250 = vand.u32 %v5932, 4294901760
          %6251 = vmatmul.f32.gmra.mxu0 %v6250
          %v6252 = vpop.f32.mrf.mxu0
          %v6253 = vadd.f32 %v6190, %v6252
          %v6254 = vand.u32 %v5935, 4294901760
          %6255 = vmatmul.f32.gmra.mxu0 %v6254
          %v6256 = vpop.f32.mrf.mxu0
          %v6257 = vadd.f32 %v6196, %v6256
          %v6258 = vand.u32 %v5938, 4294901760
          %6259 = vmatmul.f32.gmra.mxu0 %v6258
          %v6260 = vpop.f32.mrf.mxu0
          %v6261 = vadd.f32 %v6202, %v6260
          %v6262 = vand.u32 %v5941, 4294901760
          %6263 = vmatmul.f32.gmra.mxu0 %v6262
          %v6264 = vpop.f32.mrf.mxu0
          %v6265 = vadd.f32 %v6208, %v6264
          %v6266 = vand.u32 %v5944, 4294901760
          %6267 = vmatmul.f32.gmra.mxu0 %v6266
          %v6268 = vpop.f32.mrf.mxu0
          %v6269 = vadd.f32 %v6214, %v6268
          %6270 = vdwg.mxu0
          %6271 = vmatpush.msra.mxu0 0.0
          %6272 = vmatpush.msra.mxu0 0.0
          %6273 = vmatpush.msra.mxu0 0.0
          %6274 = vmatpush.msra.mxu0 0.0
          %6275 = vmatpush.msra.mxu0 0.0
          %6276 = vmatpush.msra.mxu0 0.0
          %6277 = vmatpush.msra.mxu0 0.0
          %6278 = vmatpush.msra.mxu0 0.0
          %6279 = vmatpush.msra.mxu0 0.0
          %6280 = vmatpush.msra.mxu0 0.0
          %6281 = vmatpush.msra.mxu0 0.0
          %6282 = vmatpush.msra.mxu0 0.0
          %6283 = vmatpush.msra.mxu0 0.0
          %6284 = vmatpush.msra.mxu0 0.0
          %v6285 = vand.u32 %v5921, 4294901760
          %6286 = vmatpush.msra.mxu0 %v6285
          %v6287 = vand.u32 %v5920, 4294901760
          %6288 = vmatpush.msra.mxu0 %v6287
          %v6289 = vand.u32 %v5923, 4294901760
          %6290 = vmatmul.f32.gmra.mxu0 %v6289
          %v6291 = vpop.f32.mrf.mxu0
          %v6292 = vadd.f32 %v6241, %v6291
          %v6293 = vand.u32 %v5926, 4294901760
          %6294 = vmatmul.f32.gmra.mxu0 %v6293
          %v6295 = vpop.f32.mrf.mxu0
          %v6296 = vadd.f32 %v6245, %v6295
          %v6297 = vand.u32 %v5929, 4294901760
          %6298 = vmatmul.f32.gmra.mxu0 %v6297
          %v6299 = vpop.f32.mrf.mxu0
          %v6300 = vadd.f32 %v6249, %v6299
          %v6301 = vand.u32 %v5932, 4294901760
          %6302 = vmatmul.f32.gmra.mxu0 %v6301
          %v6303 = vpop.f32.mrf.mxu0
          %v6304 = vadd.f32 %v6253, %v6303
          %v6305 = vand.u32 %v5935, 4294901760
          %6306 = vmatmul.f32.gmra.mxu0 %v6305
          %v6307 = vpop.f32.mrf.mxu0
          %v6308 = vadd.f32 %v6257, %v6307
          %v6309 = vand.u32 %v5938, 4294901760
          %6310 = vmatmul.f32.gmra.mxu0 %v6309
          %v6311 = vpop.f32.mrf.mxu0
          %v6312 = vadd.f32 %v6261, %v6311
          %v6313 = vand.u32 %v5941, 4294901760
          %6314 = vmatmul.f32.gmra.mxu0 %v6313
          %v6315 = vpop.f32.mrf.mxu0
          %v6316 = vadd.f32 %v6265, %v6315
          %v6317 = vand.u32 %v5944, 4294901760
          %6318 = vmatmul.f32.gmra.mxu0 %v6317
          %v6319 = vpop.f32.mrf.mxu0
          %v6320 = vadd.f32 %v6269, %v6319
          %6321 = vdwg.mxu0
          %s6322 = scalar_lea.vmem [#allocation3], %s2982
          %6323 = vst.msk [vmem:[%s6322] sm:$0xff] %vm606, %v6292
          %6324 = vst.msk [vmem:[%s6322 + $0x8] sm:$0xff] %vm606, %v6296
          %6325 = vst.msk [vmem:[%s6322 + $0x10] sm:$0xff] %vm606, %v6300
          %6326 = vst.msk [vmem:[%s6322 + $0x18] sm:$0xff] %vm606, %v6304
          %6327 = vst.msk [vmem:[%s6322 + $0x20] sm:$0xff] %vm606, %v6308
          %6328 = vst.msk [vmem:[%s6322 + $0x28] sm:$0xff] %vm606, %v6312
          %6329 = vst.msk [vmem:[%s6322 + $0x30] sm:$0xff] %vm606, %v6316
          %6330 = vst.msk [vmem:[%s6322 + $0x38] sm:$0xff] %vm606, %v6320
        $region93: #{swin_block_forward_pallas.1} parent=83 // loop_footer
          %s2981 = sadd.s32 1, %s2977
        $region94: #{swin_block_forward_pallas.1} parent=83 // loop_footer_branch
          %2976 = sbr.rel target = $region90
        $region95: #{swin_block_forward_pallas.1} parent=83 // loop_exit
          _
        loop: start=0, step=1, limit=4
        $region96: #{swin_block_forward_pallas.1} parent=83 // loop_pre_header
          _
        $region97: #{swin_block_forward_pallas.1} parent=83 // loop_header
          %s6332 = sphi 0, %s6336
          %p6333 = scmp.ge.s32.totalorder %s6332, 4
        $region98: #{swin_block_forward_pallas.1} parent=83 // loop_header_branch
          %6335 = sbr.rel (%p6333) target = $region102
        $region99: #{swin_block_forward_pallas.1} parent=83 // loop_body
          %s6337 = smul.u32 %s6332, 128
          %s6338 = scalar_lea.vmem %s530, %s6337
          %v6339 = vld [vmem:[%s6338] sm:$0xff]
          %v6340 = vld [vmem:[%s6338 + $0x8] sm:$0xff]
          %v6341 = vld [vmem:[%s6338 + $0x10] sm:$0xff]
          %v6342 = vld [vmem:[%s6338 + $0x18] sm:$0xff]
          %v6343 = vld [vmem:[%s6338 + $0x20] sm:$0xff]
          %v6344 = vld [vmem:[%s6338 + $0x28] sm:$0xff]
          %v6345 = vld [vmem:[%s6338 + $0x30] sm:$0xff]
          %v6346 = vld [vmem:[%s6338 + $0x38] sm:$0xff]
          %v6347 = vld [vmem:[%s6338 + $0x40] sm:$0xff]
          %v6348 = vld [vmem:[%s6338 + $0x48] sm:$0xff]
          %v6349 = vld [vmem:[%s6338 + $0x50] sm:$0xff]
          %v6350 = vld [vmem:[%s6338 + $0x58] sm:$0xff]
          %v6351 = vld [vmem:[%s6338 + $0x60] sm:$0xff]
          %v6352 = vld [vmem:[%s6338 + $0x68] sm:$0xff]
          %v6353 = vld [vmem:[%s6338 + $0x70] sm:$0xff]
          %v6354 = vld [vmem:[%s6338 + $0x78] sm:$0xff]
          %s6355 = scalar_lea.vmem [#allocation3], %s6337
          %v6356 = vld [vmem:[%s6355] sm:$0xff]
          %v6357 = vld [vmem:[%s6355 + $0x8] sm:$0xff]
          %v6358 = vld [vmem:[%s6355 + $0x10] sm:$0xff]
          %v6359 = vld [vmem:[%s6355 + $0x18] sm:$0xff]
          %v6360 = vld [vmem:[%s6355 + $0x20] sm:$0xff]
          %v6361 = vld [vmem:[%s6355 + $0x28] sm:$0xff]
          %v6362 = vld [vmem:[%s6355 + $0x30] sm:$0xff]
          %v6363 = vld [vmem:[%s6355 + $0x38] sm:$0xff]
          %v6364 = vld [vmem:[%s6355 + $0x40] sm:$0xff]
          %v6365 = vld [vmem:[%s6355 + $0x48] sm:$0xff]
          %v6366 = vld [vmem:[%s6355 + $0x50] sm:$0xff]
          %v6367 = vld [vmem:[%s6355 + $0x58] sm:$0xff]
          %v6368 = vld [vmem:[%s6355 + $0x60] sm:$0xff]
          %v6369 = vld [vmem:[%s6355 + $0x68] sm:$0xff]
          %v6370 = vld [vmem:[%s6355 + $0x70] sm:$0xff]
          %v6371 = vld [vmem:[%s6355 + $0x78] sm:$0xff]
          %v6372 = vld [vmem:[%s7] sm:$0x1]
          %v6374 = vperm.slane %v6372, 0
          %v6376 = vadd.f32 %v6356, %v6374
          %v6377 = vadd.f32 %v6357, %v6374
          %v6378 = vadd.f32 %v6358, %v6374
          %v6379 = vadd.f32 %v6359, %v6374
          %v6380 = vadd.f32 %v6360, %v6374
          %v6381 = vadd.f32 %v6361, %v6374
          %v6382 = vadd.f32 %v6362, %v6374
          %v6383 = vadd.f32 %v6363, %v6374
          %v6384 = vadd.f32 %v6364, %v6374
          %v6385 = vadd.f32 %v6365, %v6374
          %v6386 = vadd.f32 %v6366, %v6374
          %v6387 = vadd.f32 %v6367, %v6374
          %v6388 = vadd.f32 %v6368, %v6374
          %v6389 = vadd.f32 %v6369, %v6374
          %v6390 = vadd.f32 %v6370, %v6374
          %v6391 = vadd.f32 %v6371, %v6374
          %v6392 = vld [vmem:[%s8] sm:$0x1]
          %v6393 = vld [vmem:[%s9] sm:$0x1]
          %v6394 = vsel %vm606, %v6376, 0.0
          %6395 = vadd.xlane.f32.xlu0 %v6394
          %v6396 = vpop.xlane.xlu0 %6395
          %v6397 = vsel %vm606, %v6377, 0.0
          %6398 = vadd.xlane.f32.xlu0 %v6397
          %v6399 = vpop.xlane.xlu0 %6398
          %v6400 = vsel %vm606, %v6378, 0.0
          %6401 = vadd.xlane.f32.xlu0 %v6400
          %v6402 = vpop.xlane.xlu0 %6401
          %v6403 = vsel %vm606, %v6379, 0.0
          %6404 = vadd.xlane.f32.xlu0 %v6403
          %v6405 = vpop.xlane.xlu0 %6404
          %v6406 = vsel %vm606, %v6380, 0.0
          %6407 = vadd.xlane.f32.xlu0 %v6406
          %v6408 = vpop.xlane.xlu0 %6407
          %v6409 = vsel %vm606, %v6381, 0.0
          %6410 = vadd.xlane.f32.xlu0 %v6409
          %v6411 = vpop.xlane.xlu0 %6410
          %v6412 = vsel %vm606, %v6382, 0.0
          %6413 = vadd.xlane.f32.xlu0 %v6412
          %v6414 = vpop.xlane.xlu0 %6413
          %v6415 = vsel %vm606, %v6383, 0.0
          %6416 = vadd.xlane.f32.xlu0 %v6415
          %v6417 = vpop.xlane.xlu0 %6416
          %v6418 = vsel %vm606, %v6384, 0.0
          %6419 = vadd.xlane.f32.xlu0 %v6418
          %v6420 = vpop.xlane.xlu0 %6419
          %v6421 = vsel %vm606, %v6385, 0.0
          %6422 = vadd.xlane.f32.xlu0 %v6421
          %v6423 = vpop.xlane.xlu0 %6422
          %v6424 = vsel %vm606, %v6386, 0.0
          %6425 = vadd.xlane.f32.xlu0 %v6424
          %v6426 = vpop.xlane.xlu0 %6425
          %v6427 = vsel %vm606, %v6387, 0.0
          %6428 = vadd.xlane.f32.xlu0 %v6427
          %v6429 = vpop.xlane.xlu0 %6428
          %v6430 = vsel %vm606, %v6388, 0.0
          %6431 = vadd.xlane.f32.xlu0 %v6430
          %v6432 = vpop.xlane.xlu0 %6431
          %v6433 = vsel %vm606, %v6389, 0.0
          %6434 = vadd.xlane.f32.xlu0 %v6433
          %v6435 = vpop.xlane.xlu0 %6434
          %v6436 = vsel %vm606, %v6390, 0.0
          %6437 = vadd.xlane.f32.xlu0 %v6436
          %v6438 = vpop.xlane.xlu0 %6437
          %v6439 = vsel %vm606, %v6391, 0.0
          %6440 = vadd.xlane.f32.xlu0 %v6439
          %v6441 = vpop.xlane.xlu0 %6440
          %v6442 = vrcp.pop 16.0
          %v6443 = vmul.f32 16.0, %v6442
          %v6444 = vsub.f32 1.0, %v6443
          %v6445 = vmul.f32 %v6442, %v6444
          %v6446 = vadd.f32 %v6442, %v6445
          %vm6447 = vweird.f32 %v6442
          %v6448 = vsel %vm6447, %v6442, %v6446
          %v6449 = vmul.f32 %v6396, %v6448
          %v6450 = vmul.f32 %v6399, %v6448
          %v6451 = vmul.f32 %v6402, %v6448
          %v6452 = vmul.f32 %v6405, %v6448
          %v6453 = vmul.f32 %v6408, %v6448
          %v6454 = vmul.f32 %v6411, %v6448
          %v6455 = vmul.f32 %v6414, %v6448
          %v6456 = vmul.f32 %v6417, %v6448
          %v6457 = vmul.f32 %v6420, %v6448
          %v6458 = vmul.f32 %v6423, %v6448
          %v6459 = vmul.f32 %v6426, %v6448
          %v6460 = vmul.f32 %v6429, %v6448
          %v6461 = vmul.f32 %v6432, %v6448
          %v6462 = vmul.f32 %v6435, %v6448
          %v6463 = vmul.f32 %v6438, %v6448
          %v6464 = vmul.f32 %v6441, %v6448
          %v6465 = vsub.f32 %v6376, %v6449
          %v6466 = vsub.f32 %v6377, %v6450
          %v6467 = vsub.f32 %v6378, %v6451
          %v6468 = vsub.f32 %v6379, %v6452
          %v6469 = vsub.f32 %v6380, %v6453
          %v6470 = vsub.f32 %v6381, %v6454
          %v6471 = vsub.f32 %v6382, %v6455
          %v6472 = vsub.f32 %v6383, %v6456
          %v6473 = vsub.f32 %v6384, %v6457
          %v6474 = vsub.f32 %v6385, %v6458
          %v6475 = vsub.f32 %v6386, %v6459
          %v6476 = vsub.f32 %v6387, %v6460
          %v6477 = vsub.f32 %v6388, %v6461
          %v6478 = vsub.f32 %v6389, %v6462
          %v6479 = vsub.f32 %v6390, %v6463
          %v6480 = vsub.f32 %v6391, %v6464
          %v6481 = vmul.f32 %v6465, %v6465
          %v6482 = vmul.f32 %v6466, %v6466
          %v6483 = vmul.f32 %v6467, %v6467
          %v6484 = vmul.f32 %v6468, %v6468
          %v6485 = vmul.f32 %v6469, %v6469
          %v6486 = vmul.f32 %v6470, %v6470
          %v6487 = vmul.f32 %v6471, %v6471
          %v6488 = vmul.f32 %v6472, %v6472
          %v6489 = vmul.f32 %v6473, %v6473
          %v6490 = vmul.f32 %v6474, %v6474
          %v6491 = vmul.f32 %v6475, %v6475
          %v6492 = vmul.f32 %v6476, %v6476
          %v6493 = vmul.f32 %v6477, %v6477
          %v6494 = vmul.f32 %v6478, %v6478
          %v6495 = vmul.f32 %v6479, %v6479
          %v6496 = vmul.f32 %v6480, %v6480
          %v6497 = vsel %vm606, %v6481, 0.0
          %6498 = vadd.xlane.f32.xlu0 %v6497
          %v6499 = vpop.xlane.xlu0 %6498
          %v6500 = vsel %vm606, %v6482, 0.0
          %6501 = vadd.xlane.f32.xlu0 %v6500
          %v6502 = vpop.xlane.xlu0 %6501
          %v6503 = vsel %vm606, %v6483, 0.0
          %6504 = vadd.xlane.f32.xlu0 %v6503
          %v6505 = vpop.xlane.xlu0 %6504
          %v6506 = vsel %vm606, %v6484, 0.0
          %6507 = vadd.xlane.f32.xlu0 %v6506
          %v6508 = vpop.xlane.xlu0 %6507
          %v6509 = vsel %vm606, %v6485, 0.0
          %6510 = vadd.xlane.f32.xlu0 %v6509
          %v6511 = vpop.xlane.xlu0 %6510
          %v6512 = vsel %vm606, %v6486, 0.0
          %6513 = vadd.xlane.f32.xlu0 %v6512
          %v6514 = vpop.xlane.xlu0 %6513
          %v6515 = vsel %vm606, %v6487, 0.0
          %6516 = vadd.xlane.f32.xlu0 %v6515
          %v6517 = vpop.xlane.xlu0 %6516
          %v6518 = vsel %vm606, %v6488, 0.0
          %6519 = vadd.xlane.f32.xlu0 %v6518
          %v6520 = vpop.xlane.xlu0 %6519
          %v6521 = vsel %vm606, %v6489, 0.0
          %6522 = vadd.xlane.f32.xlu0 %v6521
          %v6523 = vpop.xlane.xlu0 %6522
          %v6524 = vsel %vm606, %v6490, 0.0
          %6525 = vadd.xlane.f32.xlu0 %v6524
          %v6526 = vpop.xlane.xlu0 %6525
          %v6527 = vsel %vm606, %v6491, 0.0
          %6528 = vadd.xlane.f32.xlu0 %v6527
          %v6529 = vpop.xlane.xlu0 %6528
          %v6530 = vsel %vm606, %v6492, 0.0
          %6531 = vadd.xlane.f32.xlu0 %v6530
          %v6532 = vpop.xlane.xlu0 %6531
          %v6533 = vsel %vm606, %v6493, 0.0
          %6534 = vadd.xlane.f32.xlu0 %v6533
          %v6535 = vpop.xlane.xlu0 %6534
          %v6536 = vsel %vm606, %v6494, 0.0
          %6537 = vadd.xlane.f32.xlu0 %v6536
          %v6538 = vpop.xlane.xlu0 %6537
          %v6539 = vsel %vm606, %v6495, 0.0
          %6540 = vadd.xlane.f32.xlu0 %v6539
          %v6541 = vpop.xlane.xlu0 %6540
          %v6542 = vsel %vm606, %v6496, 0.0
          %6543 = vadd.xlane.f32.xlu0 %v6542
          %v6544 = vpop.xlane.xlu0 %6543
          %v6545 = vmul.f32 %v6499, %v6448
          %v6546 = vmul.f32 %v6502, %v6448
          %v6547 = vmul.f32 %v6505, %v6448
          %v6548 = vmul.f32 %v6508, %v6448
          %v6549 = vmul.f32 %v6511, %v6448
          %v6550 = vmul.f32 %v6514, %v6448
          %v6551 = vmul.f32 %v6517, %v6448
          %v6552 = vmul.f32 %v6520, %v6448
          %v6553 = vmul.f32 %v6523, %v6448
          %v6554 = vmul.f32 %v6526, %v6448
          %v6555 = vmul.f32 %v6529, %v6448
          %v6556 = vmul.f32 %v6532, %v6448
          %v6557 = vmul.f32 %v6535, %v6448
          %v6558 = vmul.f32 %v6538, %v6448
          %v6559 = vmul.f32 %v6541, %v6448
          %v6560 = vmul.f32 %v6544, %v6448
          %v6561 = vadd.f32 %v6545, 1e-05
          %v6562 = vadd.f32 %v6546, 1e-05
          %v6563 = vadd.f32 %v6547, 1e-05
          %v6564 = vadd.f32 %v6548, 1e-05
          %v6565 = vadd.f32 %v6549, 1e-05
          %v6566 = vadd.f32 %v6550, 1e-05
          %v6567 = vadd.f32 %v6551, 1e-05
          %v6568 = vadd.f32 %v6552, 1e-05
          %v6569 = vadd.f32 %v6553, 1e-05
          %v6570 = vadd.f32 %v6554, 1e-05
          %v6571 = vadd.f32 %v6555, 1e-05
          %v6572 = vadd.f32 %v6556, 1e-05
          %v6573 = vadd.f32 %v6557, 1e-05
          %v6574 = vadd.f32 %v6558, 1e-05
          %v6575 = vadd.f32 %v6559, 1e-05
          %v6576 = vadd.f32 %v6560, 1e-05
          %v6577 = vrsqrt.pop %v6561
          %v6578 = vmul.f32 %v6577, %v6561
          %v6579 = vmul.f32 %v6578, %v6577
          %v6580 = vmul.f32 0.5, %v6579
          %v6581 = vsub.f32 1.5, %v6580
          %v6582 = vmul.f32 %v6577, %v6581
          %vm6583 = vweird.f32 %v6561
          %vm6584 = vweird.f32 %v6577
          %vm6585 = vmor %vm6583, %vm6584
          %v6586 = vsel %vm6585, %v6577, %v6582
          %v6587 = vrsqrt.pop %v6562
          %v6588 = vmul.f32 %v6587, %v6562
          %v6589 = vmul.f32 %v6588, %v6587
          %v6590 = vmul.f32 0.5, %v6589
          %v6591 = vsub.f32 1.5, %v6590
          %v6592 = vmul.f32 %v6587, %v6591
          %vm6593 = vweird.f32 %v6562
          %vm6594 = vweird.f32 %v6587
          %vm6595 = vmor %vm6593, %vm6594
          %v6596 = vsel %vm6595, %v6587, %v6592
          %v6597 = vrsqrt.pop %v6563
          %v6598 = vmul.f32 %v6597, %v6563
          %v6599 = vmul.f32 %v6598, %v6597
          %v6600 = vmul.f32 0.5, %v6599
          %v6601 = vsub.f32 1.5, %v6600
          %v6602 = vmul.f32 %v6597, %v6601
          %vm6603 = vweird.f32 %v6563
          %vm6604 = vweird.f32 %v6597
          %vm6605 = vmor %vm6603, %vm6604
          %v6606 = vsel %vm6605, %v6597, %v6602
          %v6607 = vrsqrt.pop %v6564
          %v6608 = vmul.f32 %v6607, %v6564
          %v6609 = vmul.f32 %v6608, %v6607
          %v6610 = vmul.f32 0.5, %v6609
          %v6611 = vsub.f32 1.5, %v6610
          %v6612 = vmul.f32 %v6607, %v6611
          %vm6613 = vweird.f32 %v6564
          %vm6614 = vweird.f32 %v6607
          %vm6615 = vmor %vm6613, %vm6614
          %v6616 = vsel %vm6615, %v6607, %v6612
          %v6617 = vrsqrt.pop %v6565
          %v6618 = vmul.f32 %v6617, %v6565
          %v6619 = vmul.f32 %v6618, %v6617
          %v6620 = vmul.f32 0.5, %v6619
          %v6621 = vsub.f32 1.5, %v6620
          %v6622 = vmul.f32 %v6617, %v6621
          %vm6623 = vweird.f32 %v6565
          %vm6624 = vweird.f32 %v6617
          %vm6625 = vmor %vm6623, %vm6624
          %v6626 = vsel %vm6625, %v6617, %v6622
          %v6627 = vrsqrt.pop %v6566
          %v6628 = vmul.f32 %v6627, %v6566
          %v6629 = vmul.f32 %v6628, %v6627
          %v6630 = vmul.f32 0.5, %v6629
          %v6631 = vsub.f32 1.5, %v6630
          %v6632 = vmul.f32 %v6627, %v6631
          %vm6633 = vweird.f32 %v6566
          %vm6634 = vweird.f32 %v6627
          %vm6635 = vmor %vm6633, %vm6634
          %v6636 = vsel %vm6635, %v6627, %v6632
          %v6637 = vrsqrt.pop %v6567
          %v6638 = vmul.f32 %v6637, %v6567
          %v6639 = vmul.f32 %v6638, %v6637
          %v6640 = vmul.f32 0.5, %v6639
          %v6641 = vsub.f32 1.5, %v6640
          %v6642 = vmul.f32 %v6637, %v6641
          %vm6643 = vweird.f32 %v6567
          %vm6644 = vweird.f32 %v6637
          %vm6645 = vmor %vm6643, %vm6644
          %v6646 = vsel %vm6645, %v6637, %v6642
          %v6647 = vrsqrt.pop %v6568
          %v6648 = vmul.f32 %v6647, %v6568
          %v6649 = vmul.f32 %v6648, %v6647
          %v6650 = vmul.f32 0.5, %v6649
          %v6651 = vsub.f32 1.5, %v6650
          %v6652 = vmul.f32 %v6647, %v6651
          %vm6653 = vweird.f32 %v6568
          %vm6654 = vweird.f32 %v6647
          %vm6655 = vmor %vm6653, %vm6654
          %v6656 = vsel %vm6655, %v6647, %v6652
          %v6657 = vrsqrt.pop %v6569
          %v6658 = vmul.f32 %v6657, %v6569
          %v6659 = vmul.f32 %v6658, %v6657
          %v6660 = vmul.f32 0.5, %v6659
          %v6661 = vsub.f32 1.5, %v6660
          %v6662 = vmul.f32 %v6657, %v6661
          %vm6663 = vweird.f32 %v6569
          %vm6664 = vweird.f32 %v6657
          %vm6665 = vmor %vm6663, %vm6664
          %v6666 = vsel %vm6665, %v6657, %v6662
          %v6667 = vrsqrt.pop %v6570
          %v6668 = vmul.f32 %v6667, %v6570
          %v6669 = vmul.f32 %v6668, %v6667
          %v6670 = vmul.f32 0.5, %v6669
          %v6671 = vsub.f32 1.5, %v6670
          %v6672 = vmul.f32 %v6667, %v6671
          %vm6673 = vweird.f32 %v6570
          %vm6674 = vweird.f32 %v6667
          %vm6675 = vmor %vm6673, %vm6674
          %v6676 = vsel %vm6675, %v6667, %v6672
          %v6677 = vrsqrt.pop %v6571
          %v6678 = vmul.f32 %v6677, %v6571
          %v6679 = vmul.f32 %v6678, %v6677
          %v6680 = vmul.f32 0.5, %v6679
          %v6681 = vsub.f32 1.5, %v6680
          %v6682 = vmul.f32 %v6677, %v6681
          %vm6683 = vweird.f32 %v6571
          %vm6684 = vweird.f32 %v6677
          %vm6685 = vmor %vm6683, %vm6684
          %v6686 = vsel %vm6685, %v6677, %v6682
          %v6687 = vrsqrt.pop %v6572
          %v6688 = vmul.f32 %v6687, %v6572
          %v6689 = vmul.f32 %v6688, %v6687
          %v6690 = vmul.f32 0.5, %v6689
          %v6691 = vsub.f32 1.5, %v6690
          %v6692 = vmul.f32 %v6687, %v6691
          %vm6693 = vweird.f32 %v6572
          %vm6694 = vweird.f32 %v6687
          %vm6695 = vmor %vm6693, %vm6694
          %v6696 = vsel %vm6695, %v6687, %v6692
          %v6697 = vrsqrt.pop %v6573
          %v6698 = vmul.f32 %v6697, %v6573
          %v6699 = vmul.f32 %v6698, %v6697
          %v6700 = vmul.f32 0.5, %v6699
          %v6701 = vsub.f32 1.5, %v6700
          %v6702 = vmul.f32 %v6697, %v6701
          %vm6703 = vweird.f32 %v6573
          %vm6704 = vweird.f32 %v6697
          %vm6705 = vmor %vm6703, %vm6704
          %v6706 = vsel %vm6705, %v6697, %v6702
          %v6707 = vrsqrt.pop %v6574
          %v6708 = vmul.f32 %v6707, %v6574
          %v6709 = vmul.f32 %v6708, %v6707
          %v6710 = vmul.f32 0.5, %v6709
          %v6711 = vsub.f32 1.5, %v6710
          %v6712 = vmul.f32 %v6707, %v6711
          %vm6713 = vweird.f32 %v6574
          %vm6714 = vweird.f32 %v6707
          %vm6715 = vmor %vm6713, %vm6714
          %v6716 = vsel %vm6715, %v6707, %v6712
          %v6717 = vrsqrt.pop %v6575
          %v6718 = vmul.f32 %v6717, %v6575
          %v6719 = vmul.f32 %v6718, %v6717
          %v6720 = vmul.f32 0.5, %v6719
          %v6721 = vsub.f32 1.5, %v6720
          %v6722 = vmul.f32 %v6717, %v6721
          %vm6723 = vweird.f32 %v6575
          %vm6724 = vweird.f32 %v6717
          %vm6725 = vmor %vm6723, %vm6724
          %v6726 = vsel %vm6725, %v6717, %v6722
          %v6727 = vrsqrt.pop %v6576
          %v6728 = vmul.f32 %v6727, %v6576
          %v6729 = vmul.f32 %v6728, %v6727
          %v6730 = vmul.f32 0.5, %v6729
          %v6731 = vsub.f32 1.5, %v6730
          %v6732 = vmul.f32 %v6727, %v6731
          %vm6733 = vweird.f32 %v6576
          %vm6734 = vweird.f32 %v6727
          %vm6735 = vmor %vm6733, %vm6734
          %v6736 = vsel %vm6735, %v6727, %v6732
          %v6737 = vmul.f32 %v6465, %v6586
          %v6738 = vmul.f32 %v6466, %v6596
          %v6739 = vmul.f32 %v6467, %v6606
          %v6740 = vmul.f32 %v6468, %v6616
          %v6741 = vmul.f32 %v6469, %v6626
          %v6742 = vmul.f32 %v6470, %v6636
          %v6743 = vmul.f32 %v6471, %v6646
          %v6744 = vmul.f32 %v6472, %v6656
          %v6745 = vmul.f32 %v6473, %v6666
          %v6746 = vmul.f32 %v6474, %v6676
          %v6747 = vmul.f32 %v6475, %v6686
          %v6748 = vmul.f32 %v6476, %v6696
          %v6749 = vmul.f32 %v6477, %v6706
          %v6750 = vmul.f32 %v6478, %v6716
          %v6751 = vmul.f32 %v6479, %v6726
          %v6752 = vmul.f32 %v6480, %v6736
          %v6754 = vperm.slane %v6392, 0
          %v6756 = vmul.f32 %v6737, %v6754
          %v6757 = vmul.f32 %v6738, %v6754
          %v6758 = vmul.f32 %v6739, %v6754
          %v6759 = vmul.f32 %v6740, %v6754
          %v6760 = vmul.f32 %v6741, %v6754
          %v6761 = vmul.f32 %v6742, %v6754
          %v6762 = vmul.f32 %v6743, %v6754
          %v6763 = vmul.f32 %v6744, %v6754
          %v6764 = vmul.f32 %v6745, %v6754
          %v6765 = vmul.f32 %v6746, %v6754
          %v6766 = vmul.f32 %v6747, %v6754
          %v6767 = vmul.f32 %v6748, %v6754
          %v6768 = vmul.f32 %v6749, %v6754
          %v6769 = vmul.f32 %v6750, %v6754
          %v6770 = vmul.f32 %v6751, %v6754
          %v6771 = vmul.f32 %v6752, %v6754
          %v6773 = vperm.slane %v6393, 0
          %v6775 = vadd.f32 %v6756, %v6773
          %v6776 = vadd.f32 %v6757, %v6773
          %v6777 = vadd.f32 %v6758, %v6773
          %v6778 = vadd.f32 %v6759, %v6773
          %v6779 = vadd.f32 %v6760, %v6773
          %v6780 = vadd.f32 %v6761, %v6773
          %v6781 = vadd.f32 %v6762, %v6773
          %v6782 = vadd.f32 %v6763, %v6773
          %v6783 = vadd.f32 %v6764, %v6773
          %v6784 = vadd.f32 %v6765, %v6773
          %v6785 = vadd.f32 %v6766, %v6773
          %v6786 = vadd.f32 %v6767, %v6773
          %v6787 = vadd.f32 %v6768, %v6773
          %v6788 = vadd.f32 %v6769, %v6773
          %v6789 = vadd.f32 %v6770, %v6773
          %v6790 = vadd.f32 %v6771, %v6773
          %v6791 = vadd.f32 %v6339, %v6775
          %v6792 = vadd.f32 %v6340, %v6776
          %v6793 = vadd.f32 %v6341, %v6777
          %v6794 = vadd.f32 %v6342, %v6778
          %v6795 = vadd.f32 %v6343, %v6779
          %v6796 = vadd.f32 %v6344, %v6780
          %v6797 = vadd.f32 %v6345, %v6781
          %v6798 = vadd.f32 %v6346, %v6782
          %v6799 = vadd.f32 %v6347, %v6783
          %v6800 = vadd.f32 %v6348, %v6784
          %v6801 = vadd.f32 %v6349, %v6785
          %v6802 = vadd.f32 %v6350, %v6786
          %v6803 = vadd.f32 %v6351, %v6787
          %v6804 = vadd.f32 %v6352, %v6788
          %v6805 = vadd.f32 %v6353, %v6789
          %v6806 = vadd.f32 %v6354, %v6790
          %v6807 = vld [vmem:[%s10] sm:$0xff]
          %v6808 = vld [vmem:[%s10 + $0x8] sm:$0xff]
          %v6809 = vld [vmem:[%s11] sm:$0x1]
          %v6811 = vperm.slane %v6809, 0
          %v6814 = vsel %vm606, %v6791, 0
          %v6817 = vsel %vm606, %v6792, 0
          %v6820 = vsel %vm606, %v6793, 0
          %v6823 = vsel %vm606, %v6794, 0
          %v6826 = vsel %vm606, %v6795, 0
          %v6829 = vsel %vm606, %v6796, 0
          %v6832 = vsel %vm606, %v6797, 0
          %v6835 = vsel %vm606, %v6798, 0
          %v6838 = vsel %vm606, %v6799, 0
          %v6841 = vsel %vm606, %v6800, 0
          %v6844 = vsel %vm606, %v6801, 0
          %v6847 = vsel %vm606, %v6802, 0
          %v6850 = vsel %vm606, %v6803, 0
          %v6853 = vsel %vm606, %v6804, 0
          %v6856 = vsel %vm606, %v6805, 0
          %v6859 = vsel %vm606, %v6806, 0
          %6861 = vmatpush.msra.mxu0 0.0
          %6862 = vmatpush.msra.mxu0 0.0
          %6863 = vmatpush.msra.mxu0 0.0
          %6864 = vmatpush.msra.mxu0 0.0
          %6865 = vmatpush.msra.mxu0 0.0
          %6866 = vmatpush.msra.mxu0 0.0
          %6867 = vmatpush.msra.mxu0 0.0
          %6868 = vmatpush.msra.mxu0 0.0
          %6869 = vmatpush.msra.mxu0 0.0
          %6870 = vmatpush.msra.mxu0 0.0
          %6871 = vmatpush.msra.mxu0 0.0
          %6872 = vmatpush.msra.mxu0 0.0
          %6873 = vmatpush.msra.mxu0 0.0
          %6874 = vmatpush.msra.mxu0 0.0
          %v6875 = vand.u32 %v6808, 4294901760
          %6876 = vmatpush.msra.mxu0 %v6875
          %v6877 = vand.u32 %v6807, 4294901760
          %6878 = vmatpush.msra.mxu0 %v6877
          %v6879 = vand.u32 %v6814, 4294901760
          %v6880 = vsub.f32 %v6814, %v6879
          %v6881 = vand.u32 %v6880, 4294901760
          %v6882 = vsub.f32 %v6880, %v6881
          %v6883 = vand.u32 %v6882, 4294901760
          %6884 = vmatmul.f32.gmra.mxu0 %v6883
          %v6885 = vpop.f32.mrf.mxu0
          %v6886 = vadd.f32 %v6811, %v6885
          %v6887 = vand.u32 %v6817, 4294901760
          %v6888 = vsub.f32 %v6817, %v6887
          %v6889 = vand.u32 %v6888, 4294901760
          %v6890 = vsub.f32 %v6888, %v6889
          %v6891 = vand.u32 %v6890, 4294901760
          %6892 = vmatmul.f32.gmra.mxu0 %v6891
          %v6893 = vpop.f32.mrf.mxu0
          %v6894 = vadd.f32 %v6811, %v6893
          %v6895 = vand.u32 %v6820, 4294901760
          %v6896 = vsub.f32 %v6820, %v6895
          %v6897 = vand.u32 %v6896, 4294901760
          %v6898 = vsub.f32 %v6896, %v6897
          %v6899 = vand.u32 %v6898, 4294901760
          %6900 = vmatmul.f32.gmra.mxu0 %v6899
          %v6901 = vpop.f32.mrf.mxu0
          %v6902 = vadd.f32 %v6811, %v6901
          %v6903 = vand.u32 %v6823, 4294901760
          %v6904 = vsub.f32 %v6823, %v6903
          %v6905 = vand.u32 %v6904, 4294901760
          %v6906 = vsub.f32 %v6904, %v6905
          %v6907 = vand.u32 %v6906, 4294901760
          %6908 = vmatmul.f32.gmra.mxu0 %v6907
          %v6909 = vpop.f32.mrf.mxu0
          %v6910 = vadd.f32 %v6811, %v6909
          %v6911 = vand.u32 %v6826, 4294901760
          %v6912 = vsub.f32 %v6826, %v6911
          %v6913 = vand.u32 %v6912, 4294901760
          %v6914 = vsub.f32 %v6912, %v6913
          %v6915 = vand.u32 %v6914, 4294901760
          %6916 = vmatmul.f32.gmra.mxu0 %v6915
          %v6917 = vpop.f32.mrf.mxu0
          %v6918 = vadd.f32 %v6811, %v6917
          %v6919 = vand.u32 %v6829, 4294901760
          %v6920 = vsub.f32 %v6829, %v6919
          %v6921 = vand.u32 %v6920, 4294901760
          %v6922 = vsub.f32 %v6920, %v6921
          %v6923 = vand.u32 %v6922, 4294901760
          %6924 = vmatmul.f32.gmra.mxu0 %v6923
          %v6925 = vpop.f32.mrf.mxu0
          %v6926 = vadd.f32 %v6811, %v6925
          %v6927 = vand.u32 %v6832, 4294901760
          %v6928 = vsub.f32 %v6832, %v6927
          %v6929 = vand.u32 %v6928, 4294901760
          %v6930 = vsub.f32 %v6928, %v6929
          %v6931 = vand.u32 %v6930, 4294901760
          %6932 = vmatmul.f32.gmra.mxu0 %v6931
          %v6933 = vpop.f32.mrf.mxu0
          %v6934 = vadd.f32 %v6811, %v6933
          %v6935 = vand.u32 %v6835, 4294901760
          %v6936 = vsub.f32 %v6835, %v6935
          %v6937 = vand.u32 %v6936, 4294901760
          %v6938 = vsub.f32 %v6936, %v6937
          %v6939 = vand.u32 %v6938, 4294901760
          %6940 = vmatmul.f32.gmra.mxu0 %v6939
          %v6941 = vpop.f32.mrf.mxu0
          %v6942 = vadd.f32 %v6811, %v6941
          %v6943 = vand.u32 %v6838, 4294901760
          %v6944 = vsub.f32 %v6838, %v6943
          %v6945 = vand.u32 %v6944, 4294901760
          %v6946 = vsub.f32 %v6944, %v6945
          %v6947 = vand.u32 %v6946, 4294901760
          %6948 = vmatmul.f32.gmra.mxu0 %v6947
          %v6949 = vpop.f32.mrf.mxu0
          %v6950 = vadd.f32 %v6811, %v6949
          %v6951 = vand.u32 %v6841, 4294901760
          %v6952 = vsub.f32 %v6841, %v6951
          %v6953 = vand.u32 %v6952, 4294901760
          %v6954 = vsub.f32 %v6952, %v6953
          %v6955 = vand.u32 %v6954, 4294901760
          %6956 = vmatmul.f32.gmra.mxu0 %v6955
          %v6957 = vpop.f32.mrf.mxu0
          %v6958 = vadd.f32 %v6811, %v6957
          %v6959 = vand.u32 %v6844, 4294901760
          %v6960 = vsub.f32 %v6844, %v6959
          %v6961 = vand.u32 %v6960, 4294901760
          %v6962 = vsub.f32 %v6960, %v6961
          %v6963 = vand.u32 %v6962, 4294901760
          %6964 = vmatmul.f32.gmra.mxu0 %v6963
          %v6965 = vpop.f32.mrf.mxu0
          %v6966 = vadd.f32 %v6811, %v6965
          %v6967 = vand.u32 %v6847, 4294901760
          %v6968 = vsub.f32 %v6847, %v6967
          %v6969 = vand.u32 %v6968, 4294901760
          %v6970 = vsub.f32 %v6968, %v6969
          %v6971 = vand.u32 %v6970, 4294901760
          %6972 = vmatmul.f32.gmra.mxu0 %v6971
          %v6973 = vpop.f32.mrf.mxu0
          %v6974 = vadd.f32 %v6811, %v6973
          %v6975 = vand.u32 %v6850, 4294901760
          %v6976 = vsub.f32 %v6850, %v6975
          %v6977 = vand.u32 %v6976, 4294901760
          %v6978 = vsub.f32 %v6976, %v6977
          %v6979 = vand.u32 %v6978, 4294901760
          %6980 = vmatmul.f32.gmra.mxu0 %v6979
          %v6981 = vpop.f32.mrf.mxu0
          %v6982 = vadd.f32 %v6811, %v6981
          %v6983 = vand.u32 %v6853, 4294901760
          %v6984 = vsub.f32 %v6853, %v6983
          %v6985 = vand.u32 %v6984, 4294901760
          %v6986 = vsub.f32 %v6984, %v6985
          %v6987 = vand.u32 %v6986, 4294901760
          %6988 = vmatmul.f32.gmra.mxu0 %v6987
          %v6989 = vpop.f32.mrf.mxu0
          %v6990 = vadd.f32 %v6811, %v6989
          %v6991 = vand.u32 %v6856, 4294901760
          %v6992 = vsub.f32 %v6856, %v6991
          %v6993 = vand.u32 %v6992, 4294901760
          %v6994 = vsub.f32 %v6992, %v6993
          %v6995 = vand.u32 %v6994, 4294901760
          %6996 = vmatmul.f32.gmra.mxu0 %v6995
          %v6997 = vpop.f32.mrf.mxu0
          %v6998 = vadd.f32 %v6811, %v6997
          %v6999 = vand.u32 %v6859, 4294901760
          %v7000 = vsub.f32 %v6859, %v6999
          %v7001 = vand.u32 %v7000, 4294901760
          %v7002 = vsub.f32 %v7000, %v7001
          %v7003 = vand.u32 %v7002, 4294901760
          %7004 = vmatmul.f32.gmra.mxu0 %v7003
          %v7005 = vpop.f32.mrf.mxu0
          %v7006 = vadd.f32 %v6811, %v7005
          %7007 = vdwg.mxu0
          %7008 = vmatpush.msra.mxu0 0.0
          %7009 = vmatpush.msra.mxu0 0.0
          %7010 = vmatpush.msra.mxu0 0.0
          %7011 = vmatpush.msra.mxu0 0.0
          %7012 = vmatpush.msra.mxu0 0.0
          %7013 = vmatpush.msra.mxu0 0.0
          %7014 = vmatpush.msra.mxu0 0.0
          %7015 = vmatpush.msra.mxu0 0.0
          %7016 = vmatpush.msra.mxu0 0.0
          %7017 = vmatpush.msra.mxu0 0.0
          %7018 = vmatpush.msra.mxu0 0.0
          %7019 = vmatpush.msra.mxu0 0.0
          %7020 = vmatpush.msra.mxu0 0.0
          %7021 = vmatpush.msra.mxu0 0.0
          %v7022 = vand.u32 %v6808, 4294901760
          %v7023 = vsub.f32 %v6808, %v7022
          %v7024 = vand.u32 %v7023, 4294901760
          %v7025 = vsub.f32 %v7023, %v7024
          %v7026 = vand.u32 %v7025, 4294901760
          %7027 = vmatpush.msra.mxu0 %v7026
          %v7028 = vand.u32 %v6807, 4294901760
          %v7029 = vsub.f32 %v6807, %v7028
          %v7030 = vand.u32 %v7029, 4294901760
          %v7031 = vsub.f32 %v7029, %v7030
          %v7032 = vand.u32 %v7031, 4294901760
          %7033 = vmatpush.msra.mxu0 %v7032
          %v7034 = vand.u32 %v6814, 4294901760
          %7035 = vmatmul.f32.gmra.mxu0 %v7034
          %v7036 = vpop.f32.mrf.mxu0
          %v7037 = vadd.f32 %v6886, %v7036
          %v7038 = vand.u32 %v6817, 4294901760
          %7039 = vmatmul.f32.gmra.mxu0 %v7038
          %v7040 = vpop.f32.mrf.mxu0
          %v7041 = vadd.f32 %v6894, %v7040
          %v7042 = vand.u32 %v6820, 4294901760
          %7043 = vmatmul.f32.gmra.mxu0 %v7042
          %v7044 = vpop.f32.mrf.mxu0
          %v7045 = vadd.f32 %v6902, %v7044
          %v7046 = vand.u32 %v6823, 4294901760
          %7047 = vmatmul.f32.gmra.mxu0 %v7046
          %v7048 = vpop.f32.mrf.mxu0
          %v7049 = vadd.f32 %v6910, %v7048
          %v7050 = vand.u32 %v6826, 4294901760
          %7051 = vmatmul.f32.gmra.mxu0 %v7050
          %v7052 = vpop.f32.mrf.mxu0
          %v7053 = vadd.f32 %v6918, %v7052
          %v7054 = vand.u32 %v6829, 4294901760
          %7055 = vmatmul.f32.gmra.mxu0 %v7054
          %v7056 = vpop.f32.mrf.mxu0
          %v7057 = vadd.f32 %v6926, %v7056
          %v7058 = vand.u32 %v6832, 4294901760
          %7059 = vmatmul.f32.gmra.mxu0 %v7058
          %v7060 = vpop.f32.mrf.mxu0
          %v7061 = vadd.f32 %v6934, %v7060
          %v7062 = vand.u32 %v6835, 4294901760
          %7063 = vmatmul.f32.gmra.mxu0 %v7062
          %v7064 = vpop.f32.mrf.mxu0
          %v7065 = vadd.f32 %v6942, %v7064
          %v7066 = vand.u32 %v6838, 4294901760
          %7067 = vmatmul.f32.gmra.mxu0 %v7066
          %v7068 = vpop.f32.mrf.mxu0
          %v7069 = vadd.f32 %v6950, %v7068
          %v7070 = vand.u32 %v6841, 4294901760
          %7071 = vmatmul.f32.gmra.mxu0 %v7070
          %v7072 = vpop.f32.mrf.mxu0
          %v7073 = vadd.f32 %v6958, %v7072
          %v7074 = vand.u32 %v6844, 4294901760
          %7075 = vmatmul.f32.gmra.mxu0 %v7074
          %v7076 = vpop.f32.mrf.mxu0
          %v7077 = vadd.f32 %v6966, %v7076
          %v7078 = vand.u32 %v6847, 4294901760
          %7079 = vmatmul.f32.gmra.mxu0 %v7078
          %v7080 = vpop.f32.mrf.mxu0
          %v7081 = vadd.f32 %v6974, %v7080
          %v7082 = vand.u32 %v6850, 4294901760
          %7083 = vmatmul.f32.gmra.mxu0 %v7082
          %v7084 = vpop.f32.mrf.mxu0
          %v7085 = vadd.f32 %v6982, %v7084
          %v7086 = vand.u32 %v6853, 4294901760
          %7087 = vmatmul.f32.gmra.mxu0 %v7086
          %v7088 = vpop.f32.mrf.mxu0
          %v7089 = vadd.f32 %v6990, %v7088
          %v7090 = vand.u32 %v6856, 4294901760
          %7091 = vmatmul.f32.gmra.mxu0 %v7090
          %v7092 = vpop.f32.mrf.mxu0
          %v7093 = vadd.f32 %v6998, %v7092
          %v7094 = vand.u32 %v6859, 4294901760
          %7095 = vmatmul.f32.gmra.mxu0 %v7094
          %v7096 = vpop.f32.mrf.mxu0
          %v7097 = vadd.f32 %v7006, %v7096
          %7098 = vdwg.mxu0
          %7099 = vmatpush.msra.mxu0 0.0
          %7100 = vmatpush.msra.mxu0 0.0
          %7101 = vmatpush.msra.mxu0 0.0
          %7102 = vmatpush.msra.mxu0 0.0
          %7103 = vmatpush.msra.mxu0 0.0
          %7104 = vmatpush.msra.mxu0 0.0
          %7105 = vmatpush.msra.mxu0 0.0
          %7106 = vmatpush.msra.mxu0 0.0
          %7107 = vmatpush.msra.mxu0 0.0
          %7108 = vmatpush.msra.mxu0 0.0
          %7109 = vmatpush.msra.mxu0 0.0
          %7110 = vmatpush.msra.mxu0 0.0
          %7111 = vmatpush.msra.mxu0 0.0
          %7112 = vmatpush.msra.mxu0 0.0
          %v7113 = vand.u32 %v6808, 4294901760
          %v7114 = vsub.f32 %v6808, %v7113
          %7115 = vmatpush.msra.mxu0 %v7114
          %v7116 = vand.u32 %v6807, 4294901760
          %v7117 = vsub.f32 %v6807, %v7116
          %7118 = vmatpush.msra.mxu0 %v7117
          %v7119 = vand.u32 %v6814, 4294901760
          %v7120 = vsub.f32 %v6814, %v7119
          %7121 = vmatmul.f32.gmra.mxu0 %v7120
          %v7122 = vpop.f32.mrf.mxu0
          %v7123 = vadd.f32 %v7037, %v7122
          %v7124 = vand.u32 %v6817, 4294901760
          %v7125 = vsub.f32 %v6817, %v7124
          %7126 = vmatmul.f32.gmra.mxu0 %v7125
          %v7127 = vpop.f32.mrf.mxu0
          %v7128 = vadd.f32 %v7041, %v7127
          %v7129 = vand.u32 %v6820, 4294901760
          %v7130 = vsub.f32 %v6820, %v7129
          %7131 = vmatmul.f32.gmra.mxu0 %v7130
          %v7132 = vpop.f32.mrf.mxu0
          %v7133 = vadd.f32 %v7045, %v7132
          %v7134 = vand.u32 %v6823, 4294901760
          %v7135 = vsub.f32 %v6823, %v7134
          %7136 = vmatmul.f32.gmra.mxu0 %v7135
          %v7137 = vpop.f32.mrf.mxu0
          %v7138 = vadd.f32 %v7049, %v7137
          %v7139 = vand.u32 %v6826, 4294901760
          %v7140 = vsub.f32 %v6826, %v7139
          %7141 = vmatmul.f32.gmra.mxu0 %v7140
          %v7142 = vpop.f32.mrf.mxu0
          %v7143 = vadd.f32 %v7053, %v7142
          %v7144 = vand.u32 %v6829, 4294901760
          %v7145 = vsub.f32 %v6829, %v7144
          %7146 = vmatmul.f32.gmra.mxu0 %v7145
          %v7147 = vpop.f32.mrf.mxu0
          %v7148 = vadd.f32 %v7057, %v7147
          %v7149 = vand.u32 %v6832, 4294901760
          %v7150 = vsub.f32 %v6832, %v7149
          %7151 = vmatmul.f32.gmra.mxu0 %v7150
          %v7152 = vpop.f32.mrf.mxu0
          %v7153 = vadd.f32 %v7061, %v7152
          %v7154 = vand.u32 %v6835, 4294901760
          %v7155 = vsub.f32 %v6835, %v7154
          %7156 = vmatmul.f32.gmra.mxu0 %v7155
          %v7157 = vpop.f32.mrf.mxu0
          %v7158 = vadd.f32 %v7065, %v7157
          %v7159 = vand.u32 %v6838, 4294901760
          %v7160 = vsub.f32 %v6838, %v7159
          %7161 = vmatmul.f32.gmra.mxu0 %v7160
          %v7162 = vpop.f32.mrf.mxu0
          %v7163 = vadd.f32 %v7069, %v7162
          %v7164 = vand.u32 %v6841, 4294901760
          %v7165 = vsub.f32 %v6841, %v7164
          %7166 = vmatmul.f32.gmra.mxu0 %v7165
          %v7167 = vpop.f32.mrf.mxu0
          %v7168 = vadd.f32 %v7073, %v7167
          %v7169 = vand.u32 %v6844, 4294901760
          %v7170 = vsub.f32 %v6844, %v7169
          %7171 = vmatmul.f32.gmra.mxu0 %v7170
          %v7172 = vpop.f32.mrf.mxu0
          %v7173 = vadd.f32 %v7077, %v7172
          %v7174 = vand.u32 %v6847, 4294901760
          %v7175 = vsub.f32 %v6847, %v7174
          %7176 = vmatmul.f32.gmra.mxu0 %v7175
          %v7177 = vpop.f32.mrf.mxu0
          %v7178 = vadd.f32 %v7081, %v7177
          %v7179 = vand.u32 %v6850, 4294901760
          %v7180 = vsub.f32 %v6850, %v7179
          %7181 = vmatmul.f32.gmra.mxu0 %v7180
          %v7182 = vpop.f32.mrf.mxu0
          %v7183 = vadd.f32 %v7085, %v7182
          %v7184 = vand.u32 %v6853, 4294901760
          %v7185 = vsub.f32 %v6853, %v7184
          %7186 = vmatmul.f32.gmra.mxu0 %v7185
          %v7187 = vpop.f32.mrf.mxu0
          %v7188 = vadd.f32 %v7089, %v7187
          %v7189 = vand.u32 %v6856, 4294901760
          %v7190 = vsub.f32 %v6856, %v7189
          %7191 = vmatmul.f32.gmra.mxu0 %v7190
          %v7192 = vpop.f32.mrf.mxu0
          %v7193 = vadd.f32 %v7093, %v7192
          %v7194 = vand.u32 %v6859, 4294901760
          %v7195 = vsub.f32 %v6859, %v7194
          %7196 = vmatmul.f32.gmra.mxu0 %v7195
          %v7197 = vpop.f32.mrf.mxu0
          %v7198 = vadd.f32 %v7097, %v7197
          %7199 = vdwg.mxu0
          %7200 = vmatpush.msra.mxu0 0.0
          %7201 = vmatpush.msra.mxu0 0.0
          %7202 = vmatpush.msra.mxu0 0.0
          %7203 = vmatpush.msra.mxu0 0.0
          %7204 = vmatpush.msra.mxu0 0.0
          %7205 = vmatpush.msra.mxu0 0.0
          %7206 = vmatpush.msra.mxu0 0.0
          %7207 = vmatpush.msra.mxu0 0.0
          %7208 = vmatpush.msra.mxu0 0.0
          %7209 = vmatpush.msra.mxu0 0.0
          %7210 = vmatpush.msra.mxu0 0.0
          %7211 = vmatpush.msra.mxu0 0.0
          %7212 = vmatpush.msra.mxu0 0.0
          %7213 = vmatpush.msra.mxu0 0.0
          %v7214 = vand.u32 %v6808, 4294901760
          %7215 = vmatpush.msra.mxu0 %v7214
          %v7216 = vand.u32 %v6807, 4294901760
          %7217 = vmatpush.msra.mxu0 %v7216
          %v7218 = vand.u32 %v6814, 4294901760
          %v7219 = vsub.f32 %v6814, %v7218
          %v7220 = vand.u32 %v7219, 4294901760
          %7221 = vmatmul.f32.gmra.mxu0 %v7220
          %v7222 = vpop.f32.mrf.mxu0
          %v7223 = vadd.f32 %v7123, %v7222
          %v7224 = vand.u32 %v6817, 4294901760
          %v7225 = vsub.f32 %v6817, %v7224
          %v7226 = vand.u32 %v7225, 4294901760
          %7227 = vmatmul.f32.gmra.mxu0 %v7226
          %v7228 = vpop.f32.mrf.mxu0
          %v7229 = vadd.f32 %v7128, %v7228
          %v7230 = vand.u32 %v6820, 4294901760
          %v7231 = vsub.f32 %v6820, %v7230
          %v7232 = vand.u32 %v7231, 4294901760
          %7233 = vmatmul.f32.gmra.mxu0 %v7232
          %v7234 = vpop.f32.mrf.mxu0
          %v7235 = vadd.f32 %v7133, %v7234
          %v7236 = vand.u32 %v6823, 4294901760
          %v7237 = vsub.f32 %v6823, %v7236
          %v7238 = vand.u32 %v7237, 4294901760
          %7239 = vmatmul.f32.gmra.mxu0 %v7238
          %v7240 = vpop.f32.mrf.mxu0
          %v7241 = vadd.f32 %v7138, %v7240
          %v7242 = vand.u32 %v6826, 4294901760
          %v7243 = vsub.f32 %v6826, %v7242
          %v7244 = vand.u32 %v7243, 4294901760
          %7245 = vmatmul.f32.gmra.mxu0 %v7244
          %v7246 = vpop.f32.mrf.mxu0
          %v7247 = vadd.f32 %v7143, %v7246
          %v7248 = vand.u32 %v6829, 4294901760
          %v7249 = vsub.f32 %v6829, %v7248
          %v7250 = vand.u32 %v7249, 4294901760
          %7251 = vmatmul.f32.gmra.mxu0 %v7250
          %v7252 = vpop.f32.mrf.mxu0
          %v7253 = vadd.f32 %v7148, %v7252
          %v7254 = vand.u32 %v6832, 4294901760
          %v7255 = vsub.f32 %v6832, %v7254
          %v7256 = vand.u32 %v7255, 4294901760
          %7257 = vmatmul.f32.gmra.mxu0 %v7256
          %v7258 = vpop.f32.mrf.mxu0
          %v7259 = vadd.f32 %v7153, %v7258
          %v7260 = vand.u32 %v6835, 4294901760
          %v7261 = vsub.f32 %v6835, %v7260
          %v7262 = vand.u32 %v7261, 4294901760
          %7263 = vmatmul.f32.gmra.mxu0 %v7262
          %v7264 = vpop.f32.mrf.mxu0
          %v7265 = vadd.f32 %v7158, %v7264
          %v7266 = vand.u32 %v6838, 4294901760
          %v7267 = vsub.f32 %v6838, %v7266
          %v7268 = vand.u32 %v7267, 4294901760
          %7269 = vmatmul.f32.gmra.mxu0 %v7268
          %v7270 = vpop.f32.mrf.mxu0
          %v7271 = vadd.f32 %v7163, %v7270
          %v7272 = vand.u32 %v6841, 4294901760
          %v7273 = vsub.f32 %v6841, %v7272
          %v7274 = vand.u32 %v7273, 4294901760
          %7275 = vmatmul.f32.gmra.mxu0 %v7274
          %v7276 = vpop.f32.mrf.mxu0
          %v7277 = vadd.f32 %v7168, %v7276
          %v7278 = vand.u32 %v6844, 4294901760
          %v7279 = vsub.f32 %v6844, %v7278
          %v7280 = vand.u32 %v7279, 4294901760
          %7281 = vmatmul.f32.gmra.mxu0 %v7280
          %v7282 = vpop.f32.mrf.mxu0
          %v7283 = vadd.f32 %v7173, %v7282
          %v7284 = vand.u32 %v6847, 4294901760
          %v7285 = vsub.f32 %v6847, %v7284
          %v7286 = vand.u32 %v7285, 4294901760
          %7287 = vmatmul.f32.gmra.mxu0 %v7286
          %v7288 = vpop.f32.mrf.mxu0
          %v7289 = vadd.f32 %v7178, %v7288
          %v7290 = vand.u32 %v6850, 4294901760
          %v7291 = vsub.f32 %v6850, %v7290
          %v7292 = vand.u32 %v7291, 4294901760
          %7293 = vmatmul.f32.gmra.mxu0 %v7292
          %v7294 = vpop.f32.mrf.mxu0
          %v7295 = vadd.f32 %v7183, %v7294
          %v7296 = vand.u32 %v6853, 4294901760
          %v7297 = vsub.f32 %v6853, %v7296
          %v7298 = vand.u32 %v7297, 4294901760
          %7299 = vmatmul.f32.gmra.mxu0 %v7298
          %v7300 = vpop.f32.mrf.mxu0
          %v7301 = vadd.f32 %v7188, %v7300
          %v7302 = vand.u32 %v6856, 4294901760
          %v7303 = vsub.f32 %v6856, %v7302
          %v7304 = vand.u32 %v7303, 4294901760
          %7305 = vmatmul.f32.gmra.mxu0 %v7304
          %v7306 = vpop.f32.mrf.mxu0
          %v7307 = vadd.f32 %v7193, %v7306
          %v7308 = vand.u32 %v6859, 4294901760
          %v7309 = vsub.f32 %v6859, %v7308
          %v7310 = vand.u32 %v7309, 4294901760
          %7311 = vmatmul.f32.gmra.mxu0 %v7310
          %v7312 = vpop.f32.mrf.mxu0
          %v7313 = vadd.f32 %v7198, %v7312
          %7314 = vdwg.mxu0
          %7315 = vmatpush.msra.mxu0 0.0
          %7316 = vmatpush.msra.mxu0 0.0
          %7317 = vmatpush.msra.mxu0 0.0
          %7318 = vmatpush.msra.mxu0 0.0
          %7319 = vmatpush.msra.mxu0 0.0
          %7320 = vmatpush.msra.mxu0 0.0
          %7321 = vmatpush.msra.mxu0 0.0
          %7322 = vmatpush.msra.mxu0 0.0
          %7323 = vmatpush.msra.mxu0 0.0
          %7324 = vmatpush.msra.mxu0 0.0
          %7325 = vmatpush.msra.mxu0 0.0
          %7326 = vmatpush.msra.mxu0 0.0
          %7327 = vmatpush.msra.mxu0 0.0
          %7328 = vmatpush.msra.mxu0 0.0
          %v7329 = vand.u32 %v6808, 4294901760
          %v7330 = vsub.f32 %v6808, %v7329
          %v7331 = vand.u32 %v7330, 4294901760
          %7332 = vmatpush.msra.mxu0 %v7331
          %v7333 = vand.u32 %v6807, 4294901760
          %v7334 = vsub.f32 %v6807, %v7333
          %v7335 = vand.u32 %v7334, 4294901760
          %7336 = vmatpush.msra.mxu0 %v7335
          %v7337 = vand.u32 %v6814, 4294901760
          %7338 = vmatmul.f32.gmra.mxu0 %v7337
          %v7339 = vpop.f32.mrf.mxu0
          %v7340 = vadd.f32 %v7223, %v7339
          %v7341 = vand.u32 %v6817, 4294901760
          %7342 = vmatmul.f32.gmra.mxu0 %v7341
          %v7343 = vpop.f32.mrf.mxu0
          %v7344 = vadd.f32 %v7229, %v7343
          %v7345 = vand.u32 %v6820, 4294901760
          %7346 = vmatmul.f32.gmra.mxu0 %v7345
          %v7347 = vpop.f32.mrf.mxu0
          %v7348 = vadd.f32 %v7235, %v7347
          %v7349 = vand.u32 %v6823, 4294901760
          %7350 = vmatmul.f32.gmra.mxu0 %v7349
          %v7351 = vpop.f32.mrf.mxu0
          %v7352 = vadd.f32 %v7241, %v7351
          %v7353 = vand.u32 %v6826, 4294901760
          %7354 = vmatmul.f32.gmra.mxu0 %v7353
          %v7355 = vpop.f32.mrf.mxu0
          %v7356 = vadd.f32 %v7247, %v7355
          %v7357 = vand.u32 %v6829, 4294901760
          %7358 = vmatmul.f32.gmra.mxu0 %v7357
          %v7359 = vpop.f32.mrf.mxu0
          %v7360 = vadd.f32 %v7253, %v7359
          %v7361 = vand.u32 %v6832, 4294901760
          %7362 = vmatmul.f32.gmra.mxu0 %v7361
          %v7363 = vpop.f32.mrf.mxu0
          %v7364 = vadd.f32 %v7259, %v7363
          %v7365 = vand.u32 %v6835, 4294901760
          %7366 = vmatmul.f32.gmra.mxu0 %v7365
          %v7367 = vpop.f32.mrf.mxu0
          %v7368 = vadd.f32 %v7265, %v7367
          %v7369 = vand.u32 %v6838, 4294901760
          %7370 = vmatmul.f32.gmra.mxu0 %v7369
          %v7371 = vpop.f32.mrf.mxu0
          %v7372 = vadd.f32 %v7271, %v7371
          %v7373 = vand.u32 %v6841, 4294901760
          %7374 = vmatmul.f32.gmra.mxu0 %v7373
          %v7375 = vpop.f32.mrf.mxu0
          %v7376 = vadd.f32 %v7277, %v7375
          %v7377 = vand.u32 %v6844, 4294901760
          %7378 = vmatmul.f32.gmra.mxu0 %v7377
          %v7379 = vpop.f32.mrf.mxu0
          %v7380 = vadd.f32 %v7283, %v7379
          %v7381 = vand.u32 %v6847, 4294901760
          %7382 = vmatmul.f32.gmra.mxu0 %v7381
          %v7383 = vpop.f32.mrf.mxu0
          %v7384 = vadd.f32 %v7289, %v7383
          %v7385 = vand.u32 %v6850, 4294901760
          %7386 = vmatmul.f32.gmra.mxu0 %v7385
          %v7387 = vpop.f32.mrf.mxu0
          %v7388 = vadd.f32 %v7295, %v7387
          %v7389 = vand.u32 %v6853, 4294901760
          %7390 = vmatmul.f32.gmra.mxu0 %v7389
          %v7391 = vpop.f32.mrf.mxu0
          %v7392 = vadd.f32 %v7301, %v7391
          %v7393 = vand.u32 %v6856, 4294901760
          %7394 = vmatmul.f32.gmra.mxu0 %v7393
          %v7395 = vpop.f32.mrf.mxu0
          %v7396 = vadd.f32 %v7307, %v7395
          %v7397 = vand.u32 %v6859, 4294901760
          %7398 = vmatmul.f32.gmra.mxu0 %v7397
          %v7399 = vpop.f32.mrf.mxu0
          %v7400 = vadd.f32 %v7313, %v7399
          %7401 = vdwg.mxu0
          %7402 = vmatpush.msra.mxu0 0.0
          %7403 = vmatpush.msra.mxu0 0.0
          %7404 = vmatpush.msra.mxu0 0.0
          %7405 = vmatpush.msra.mxu0 0.0
          %7406 = vmatpush.msra.mxu0 0.0
          %7407 = vmatpush.msra.mxu0 0.0
          %7408 = vmatpush.msra.mxu0 0.0
          %7409 = vmatpush.msra.mxu0 0.0
          %7410 = vmatpush.msra.mxu0 0.0
          %7411 = vmatpush.msra.mxu0 0.0
          %7412 = vmatpush.msra.mxu0 0.0
          %7413 = vmatpush.msra.mxu0 0.0
          %7414 = vmatpush.msra.mxu0 0.0
          %7415 = vmatpush.msra.mxu0 0.0
          %v7416 = vand.u32 %v6808, 4294901760
          %7417 = vmatpush.msra.mxu0 %v7416
          %v7418 = vand.u32 %v6807, 4294901760
          %7419 = vmatpush.msra.mxu0 %v7418
          %v7420 = vand.u32 %v6814, 4294901760
          %7421 = vmatmul.f32.gmra.mxu0 %v7420
          %v7422 = vpop.f32.mrf.mxu0
          %v7423 = vadd.f32 %v7340, %v7422
          %v7424 = vand.u32 %v6817, 4294901760
          %7425 = vmatmul.f32.gmra.mxu0 %v7424
          %v7426 = vpop.f32.mrf.mxu0
          %v7427 = vadd.f32 %v7344, %v7426
          %v7428 = vand.u32 %v6820, 4294901760
          %7429 = vmatmul.f32.gmra.mxu0 %v7428
          %v7430 = vpop.f32.mrf.mxu0
          %v7431 = vadd.f32 %v7348, %v7430
          %v7432 = vand.u32 %v6823, 4294901760
          %7433 = vmatmul.f32.gmra.mxu0 %v7432
          %v7434 = vpop.f32.mrf.mxu0
          %v7435 = vadd.f32 %v7352, %v7434
          %v7436 = vand.u32 %v6826, 4294901760
          %7437 = vmatmul.f32.gmra.mxu0 %v7436
          %v7438 = vpop.f32.mrf.mxu0
          %v7439 = vadd.f32 %v7356, %v7438
          %v7440 = vand.u32 %v6829, 4294901760
          %7441 = vmatmul.f32.gmra.mxu0 %v7440
          %v7442 = vpop.f32.mrf.mxu0
          %v7443 = vadd.f32 %v7360, %v7442
          %v7444 = vand.u32 %v6832, 4294901760
          %7445 = vmatmul.f32.gmra.mxu0 %v7444
          %v7446 = vpop.f32.mrf.mxu0
          %v7447 = vadd.f32 %v7364, %v7446
          %v7448 = vand.u32 %v6835, 4294901760
          %7449 = vmatmul.f32.gmra.mxu0 %v7448
          %v7450 = vpop.f32.mrf.mxu0
          %v7451 = vadd.f32 %v7368, %v7450
          %v7452 = vand.u32 %v6838, 4294901760
          %7453 = vmatmul.f32.gmra.mxu0 %v7452
          %v7454 = vpop.f32.mrf.mxu0
          %v7455 = vadd.f32 %v7372, %v7454
          %v7456 = vand.u32 %v6841, 4294901760
          %7457 = vmatmul.f32.gmra.mxu0 %v7456
          %v7458 = vpop.f32.mrf.mxu0
          %v7459 = vadd.f32 %v7376, %v7458
          %v7460 = vand.u32 %v6844, 4294901760
          %7461 = vmatmul.f32.gmra.mxu0 %v7460
          %v7462 = vpop.f32.mrf.mxu0
          %v7463 = vadd.f32 %v7380, %v7462
          %v7464 = vand.u32 %v6847, 4294901760
          %7465 = vmatmul.f32.gmra.mxu0 %v7464
          %v7466 = vpop.f32.mrf.mxu0
          %v7467 = vadd.f32 %v7384, %v7466
          %v7468 = vand.u32 %v6850, 4294901760
          %7469 = vmatmul.f32.gmra.mxu0 %v7468
          %v7470 = vpop.f32.mrf.mxu0
          %v7471 = vadd.f32 %v7388, %v7470
          %v7472 = vand.u32 %v6853, 4294901760
          %7473 = vmatmul.f32.gmra.mxu0 %v7472
          %v7474 = vpop.f32.mrf.mxu0
          %v7475 = vadd.f32 %v7392, %v7474
          %v7476 = vand.u32 %v6856, 4294901760
          %7477 = vmatmul.f32.gmra.mxu0 %v7476
          %v7478 = vpop.f32.mrf.mxu0
          %v7479 = vadd.f32 %v7396, %v7478
          %v7480 = vand.u32 %v6859, 4294901760
          %7481 = vmatmul.f32.gmra.mxu0 %v7480
          %v7482 = vpop.f32.mrf.mxu0
          %v7483 = vadd.f32 %v7400, %v7482
          %7484 = vdwg.mxu0
          %vm7485 = vcmp.ge.f32.partialorder %v7423, 0.0
          %vm7486 = vcmp.ge.f32.partialorder %v7427, 0.0
          %vm7487 = vcmp.ge.f32.partialorder %v7431, 0.0
          %vm7488 = vcmp.ge.f32.partialorder %v7435, 0.0
          %vm7489 = vcmp.ge.f32.partialorder %v7439, 0.0
          %vm7490 = vcmp.ge.f32.partialorder %v7443, 0.0
          %vm7491 = vcmp.ge.f32.partialorder %v7447, 0.0
          %vm7492 = vcmp.ge.f32.partialorder %v7451, 0.0
          %vm7493 = vcmp.ge.f32.partialorder %v7455, 0.0
          %vm7494 = vcmp.ge.f32.partialorder %v7459, 0.0
          %vm7495 = vcmp.ge.f32.partialorder %v7463, 0.0
          %vm7496 = vcmp.ge.f32.partialorder %v7467, 0.0
          %vm7497 = vcmp.ge.f32.partialorder %v7471, 0.0
          %vm7498 = vcmp.ge.f32.partialorder %v7475, 0.0
          %vm7499 = vcmp.ge.f32.partialorder %v7479, 0.0
          %vm7500 = vcmp.ge.f32.partialorder %v7483, 0.0
          %v7501 = vmul.f32 %v7423, 0.01
          %v7502 = vmul.f32 %v7427, 0.01
          %v7503 = vmul.f32 %v7431, 0.01
          %v7504 = vmul.f32 %v7435, 0.01
          %v7505 = vmul.f32 %v7439, 0.01
          %v7506 = vmul.f32 %v7443, 0.01
          %v7507 = vmul.f32 %v7447, 0.01
          %v7508 = vmul.f32 %v7451, 0.01
          %v7509 = vmul.f32 %v7455, 0.01
          %v7510 = vmul.f32 %v7459, 0.01
          %v7511 = vmul.f32 %v7463, 0.01
          %v7512 = vmul.f32 %v7467, 0.01
          %v7513 = vmul.f32 %v7471, 0.01
          %v7514 = vmul.f32 %v7475, 0.01
          %v7515 = vmul.f32 %v7479, 0.01
          %v7516 = vmul.f32 %v7483, 0.01
          %v7517 = vsel %vm7485, %v7423, %v7501
          %v7518 = vsel %vm7486, %v7427, %v7502
          %v7519 = vsel %vm7487, %v7431, %v7503
          %v7520 = vsel %vm7488, %v7435, %v7504
          %v7521 = vsel %vm7489, %v7439, %v7505
          %v7522 = vsel %vm7490, %v7443, %v7506
          %v7523 = vsel %vm7491, %v7447, %v7507
          %v7524 = vsel %vm7492, %v7451, %v7508
          %v7525 = vsel %vm7493, %v7455, %v7509
          %v7526 = vsel %vm7494, %v7459, %v7510
          %v7527 = vsel %vm7495, %v7463, %v7511
          %v7528 = vsel %vm7496, %v7467, %v7512
          %v7529 = vsel %vm7497, %v7471, %v7513
          %v7530 = vsel %vm7498, %v7475, %v7514
          %v7531 = vsel %vm7499, %v7479, %v7515
          %v7532 = vsel %vm7500, %v7483, %v7516
          %v7533 = vld [vmem:[%s12] sm:$0xff]
          %v7534 = vld [vmem:[%s12 + $0x8] sm:$0xff]
          %v7535 = vld [vmem:[%s12 + $0x10] sm:$0xff]
          %v7536 = vld [vmem:[%s12 + $0x18] sm:$0xff]
          %v7537 = vld [vmem:[%s12 + $0x20] sm:$0xff]
          %v7538 = vld [vmem:[%s12 + $0x28] sm:$0xff]
          %v7539 = vld [vmem:[%s12 + $0x30] sm:$0xff]
          %v7540 = vld [vmem:[%s12 + $0x38] sm:$0xff]
          %v7541 = vld [vmem:[%s13] sm:$0x1]
          %v7543 = vperm.slane %v7541, 0
          %vm7545 = vcmask 523264
          %v7547 = vsel %vm7545, %v7517, 0
          %v7550 = vsel %vm7545, %v7518, 0
          %v7553 = vsel %vm7545, %v7519, 0
          %v7556 = vsel %vm7545, %v7520, 0
          %v7559 = vsel %vm7545, %v7521, 0
          %v7562 = vsel %vm7545, %v7522, 0
          %v7565 = vsel %vm7545, %v7523, 0
          %v7568 = vsel %vm7545, %v7524, 0
          %v7571 = vsel %vm7545, %v7525, 0
          %v7574 = vsel %vm7545, %v7526, 0
          %v7577 = vsel %vm7545, %v7527, 0
          %v7580 = vsel %vm7545, %v7528, 0
          %v7583 = vsel %vm7545, %v7529, 0
          %v7586 = vsel %vm7545, %v7530, 0
          %v7589 = vsel %vm7545, %v7531, 0
          %v7592 = vsel %vm7545, %v7532, 0
          %7594 = vmatpush.msra.mxu0 0.0
          %7595 = vmatpush.msra.mxu0 0.0
          %7596 = vmatpush.msra.mxu0 0.0
          %7597 = vmatpush.msra.mxu0 0.0
          %7598 = vmatpush.msra.mxu0 0.0
          %7599 = vmatpush.msra.mxu0 0.0
          %7600 = vmatpush.msra.mxu0 0.0
          %7601 = vmatpush.msra.mxu0 0.0
          %v7602 = vand.u32 %v7540, 4294901760
          %7603 = vmatpush.msra.mxu0 %v7602
          %v7604 = vand.u32 %v7539, 4294901760
          %7605 = vmatpush.msra.mxu0 %v7604
          %v7606 = vand.u32 %v7538, 4294901760
          %7607 = vmatpush.msra.mxu0 %v7606
          %v7608 = vand.u32 %v7537, 4294901760
          %7609 = vmatpush.msra.mxu0 %v7608
          %v7610 = vand.u32 %v7536, 4294901760
          %7611 = vmatpush.msra.mxu0 %v7610
          %v7612 = vand.u32 %v7535, 4294901760
          %7613 = vmatpush.msra.mxu0 %v7612
          %v7614 = vand.u32 %v7534, 4294901760
          %7615 = vmatpush.msra.mxu0 %v7614
          %v7616 = vand.u32 %v7533, 4294901760
          %7617 = vmatpush.msra.mxu0 %v7616
          %v7618 = vand.u32 %v7547, 4294901760
          %v7619 = vsub.f32 %v7547, %v7618
          %v7620 = vand.u32 %v7619, 4294901760
          %v7621 = vsub.f32 %v7619, %v7620
          %v7622 = vand.u32 %v7621, 4294901760
          %7623 = vmatmul.f32.gmra.mxu0 %v7622
          %v7624 = vpop.f32.mrf.mxu0
          %v7625 = vadd.f32 %v7543, %v7624
          %v7626 = vand.u32 %v7550, 4294901760
          %v7627 = vsub.f32 %v7550, %v7626
          %v7628 = vand.u32 %v7627, 4294901760
          %v7629 = vsub.f32 %v7627, %v7628
          %v7630 = vand.u32 %v7629, 4294901760
          %7631 = vmatmul.f32.gmra.mxu0 %v7630
          %v7632 = vpop.f32.mrf.mxu0
          %v7633 = vadd.f32 %v7543, %v7632
          %v7634 = vand.u32 %v7553, 4294901760
          %v7635 = vsub.f32 %v7553, %v7634
          %v7636 = vand.u32 %v7635, 4294901760
          %v7637 = vsub.f32 %v7635, %v7636
          %v7638 = vand.u32 %v7637, 4294901760
          %7639 = vmatmul.f32.gmra.mxu0 %v7638
          %v7640 = vpop.f32.mrf.mxu0
          %v7641 = vadd.f32 %v7543, %v7640
          %v7642 = vand.u32 %v7556, 4294901760
          %v7643 = vsub.f32 %v7556, %v7642
          %v7644 = vand.u32 %v7643, 4294901760
          %v7645 = vsub.f32 %v7643, %v7644
          %v7646 = vand.u32 %v7645, 4294901760
          %7647 = vmatmul.f32.gmra.mxu0 %v7646
          %v7648 = vpop.f32.mrf.mxu0
          %v7649 = vadd.f32 %v7543, %v7648
          %v7650 = vand.u32 %v7559, 4294901760
          %v7651 = vsub.f32 %v7559, %v7650
          %v7652 = vand.u32 %v7651, 4294901760
          %v7653 = vsub.f32 %v7651, %v7652
          %v7654 = vand.u32 %v7653, 4294901760
          %7655 = vmatmul.f32.gmra.mxu0 %v7654
          %v7656 = vpop.f32.mrf.mxu0
          %v7657 = vadd.f32 %v7543, %v7656
          %v7658 = vand.u32 %v7562, 4294901760
          %v7659 = vsub.f32 %v7562, %v7658
          %v7660 = vand.u32 %v7659, 4294901760
          %v7661 = vsub.f32 %v7659, %v7660
          %v7662 = vand.u32 %v7661, 4294901760
          %7663 = vmatmul.f32.gmra.mxu0 %v7662
          %v7664 = vpop.f32.mrf.mxu0
          %v7665 = vadd.f32 %v7543, %v7664
          %v7666 = vand.u32 %v7565, 4294901760
          %v7667 = vsub.f32 %v7565, %v7666
          %v7668 = vand.u32 %v7667, 4294901760
          %v7669 = vsub.f32 %v7667, %v7668
          %v7670 = vand.u32 %v7669, 4294901760
          %7671 = vmatmul.f32.gmra.mxu0 %v7670
          %v7672 = vpop.f32.mrf.mxu0
          %v7673 = vadd.f32 %v7543, %v7672
          %v7674 = vand.u32 %v7568, 4294901760
          %v7675 = vsub.f32 %v7568, %v7674
          %v7676 = vand.u32 %v7675, 4294901760
          %v7677 = vsub.f32 %v7675, %v7676
          %v7678 = vand.u32 %v7677, 4294901760
          %7679 = vmatmul.f32.gmra.mxu0 %v7678
          %v7680 = vpop.f32.mrf.mxu0
          %v7681 = vadd.f32 %v7543, %v7680
          %v7682 = vand.u32 %v7571, 4294901760
          %v7683 = vsub.f32 %v7571, %v7682
          %v7684 = vand.u32 %v7683, 4294901760
          %v7685 = vsub.f32 %v7683, %v7684
          %v7686 = vand.u32 %v7685, 4294901760
          %7687 = vmatmul.f32.gmra.mxu0 %v7686
          %v7688 = vpop.f32.mrf.mxu0
          %v7689 = vadd.f32 %v7543, %v7688
          %v7690 = vand.u32 %v7574, 4294901760
          %v7691 = vsub.f32 %v7574, %v7690
          %v7692 = vand.u32 %v7691, 4294901760
          %v7693 = vsub.f32 %v7691, %v7692
          %v7694 = vand.u32 %v7693, 4294901760
          %7695 = vmatmul.f32.gmra.mxu0 %v7694
          %v7696 = vpop.f32.mrf.mxu0
          %v7697 = vadd.f32 %v7543, %v7696
          %v7698 = vand.u32 %v7577, 4294901760
          %v7699 = vsub.f32 %v7577, %v7698
          %v7700 = vand.u32 %v7699, 4294901760
          %v7701 = vsub.f32 %v7699, %v7700
          %v7702 = vand.u32 %v7701, 4294901760
          %7703 = vmatmul.f32.gmra.mxu0 %v7702
          %v7704 = vpop.f32.mrf.mxu0
          %v7705 = vadd.f32 %v7543, %v7704
          %v7706 = vand.u32 %v7580, 4294901760
          %v7707 = vsub.f32 %v7580, %v7706
          %v7708 = vand.u32 %v7707, 4294901760
          %v7709 = vsub.f32 %v7707, %v7708
          %v7710 = vand.u32 %v7709, 4294901760
          %7711 = vmatmul.f32.gmra.mxu0 %v7710
          %v7712 = vpop.f32.mrf.mxu0
          %v7713 = vadd.f32 %v7543, %v7712
          %v7714 = vand.u32 %v7583, 4294901760
          %v7715 = vsub.f32 %v7583, %v7714
          %v7716 = vand.u32 %v7715, 4294901760
          %v7717 = vsub.f32 %v7715, %v7716
          %v7718 = vand.u32 %v7717, 4294901760
          %7719 = vmatmul.f32.gmra.mxu0 %v7718
          %v7720 = vpop.f32.mrf.mxu0
          %v7721 = vadd.f32 %v7543, %v7720
          %v7722 = vand.u32 %v7586, 4294901760
          %v7723 = vsub.f32 %v7586, %v7722
          %v7724 = vand.u32 %v7723, 4294901760
          %v7725 = vsub.f32 %v7723, %v7724
          %v7726 = vand.u32 %v7725, 4294901760
          %7727 = vmatmul.f32.gmra.mxu0 %v7726
          %v7728 = vpop.f32.mrf.mxu0
          %v7729 = vadd.f32 %v7543, %v7728
          %v7730 = vand.u32 %v7589, 4294901760
          %v7731 = vsub.f32 %v7589, %v7730
          %v7732 = vand.u32 %v7731, 4294901760
          %v7733 = vsub.f32 %v7731, %v7732
          %v7734 = vand.u32 %v7733, 4294901760
          %7735 = vmatmul.f32.gmra.mxu0 %v7734
          %v7736 = vpop.f32.mrf.mxu0
          %v7737 = vadd.f32 %v7543, %v7736
          %v7738 = vand.u32 %v7592, 4294901760
          %v7739 = vsub.f32 %v7592, %v7738
          %v7740 = vand.u32 %v7739, 4294901760
          %v7741 = vsub.f32 %v7739, %v7740
          %v7742 = vand.u32 %v7741, 4294901760
          %7743 = vmatmul.f32.gmra.mxu0 %v7742
          %v7744 = vpop.f32.mrf.mxu0
          %v7745 = vadd.f32 %v7543, %v7744
          %7746 = vdwg.mxu0
          %7747 = vmatpush.msra.mxu0 0.0
          %7748 = vmatpush.msra.mxu0 0.0
          %7749 = vmatpush.msra.mxu0 0.0
          %7750 = vmatpush.msra.mxu0 0.0
          %7751 = vmatpush.msra.mxu0 0.0
          %7752 = vmatpush.msra.mxu0 0.0
          %7753 = vmatpush.msra.mxu0 0.0
          %7754 = vmatpush.msra.mxu0 0.0
          %v7755 = vand.u32 %v7540, 4294901760
          %v7756 = vsub.f32 %v7540, %v7755
          %v7757 = vand.u32 %v7756, 4294901760
          %v7758 = vsub.f32 %v7756, %v7757
          %v7759 = vand.u32 %v7758, 4294901760
          %7760 = vmatpush.msra.mxu0 %v7759
          %v7761 = vand.u32 %v7539, 4294901760
          %v7762 = vsub.f32 %v7539, %v7761
          %v7763 = vand.u32 %v7762, 4294901760
          %v7764 = vsub.f32 %v7762, %v7763
          %v7765 = vand.u32 %v7764, 4294901760
          %7766 = vmatpush.msra.mxu0 %v7765
          %v7767 = vand.u32 %v7538, 4294901760
          %v7768 = vsub.f32 %v7538, %v7767
          %v7769 = vand.u32 %v7768, 4294901760
          %v7770 = vsub.f32 %v7768, %v7769
          %v7771 = vand.u32 %v7770, 4294901760
          %7772 = vmatpush.msra.mxu0 %v7771
          %v7773 = vand.u32 %v7537, 4294901760
          %v7774 = vsub.f32 %v7537, %v7773
          %v7775 = vand.u32 %v7774, 4294901760
          %v7776 = vsub.f32 %v7774, %v7775
          %v7777 = vand.u32 %v7776, 4294901760
          %7778 = vmatpush.msra.mxu0 %v7777
          %v7779 = vand.u32 %v7536, 4294901760
          %v7780 = vsub.f32 %v7536, %v7779
          %v7781 = vand.u32 %v7780, 4294901760
          %v7782 = vsub.f32 %v7780, %v7781
          %v7783 = vand.u32 %v7782, 4294901760
          %7784 = vmatpush.msra.mxu0 %v7783
          %v7785 = vand.u32 %v7535, 4294901760
          %v7786 = vsub.f32 %v7535, %v7785
          %v7787 = vand.u32 %v7786, 4294901760
          %v7788 = vsub.f32 %v7786, %v7787
          %v7789 = vand.u32 %v7788, 4294901760
          %7790 = vmatpush.msra.mxu0 %v7789
          %v7791 = vand.u32 %v7534, 4294901760
          %v7792 = vsub.f32 %v7534, %v7791
          %v7793 = vand.u32 %v7792, 4294901760
          %v7794 = vsub.f32 %v7792, %v7793
          %v7795 = vand.u32 %v7794, 4294901760
          %7796 = vmatpush.msra.mxu0 %v7795
          %v7797 = vand.u32 %v7533, 4294901760
          %v7798 = vsub.f32 %v7533, %v7797
          %v7799 = vand.u32 %v7798, 4294901760
          %v7800 = vsub.f32 %v7798, %v7799
          %v7801 = vand.u32 %v7800, 4294901760
          %7802 = vmatpush.msra.mxu0 %v7801
          %v7803 = vand.u32 %v7547, 4294901760
          %7804 = vmatmul.f32.gmra.mxu0 %v7803
          %v7805 = vpop.f32.mrf.mxu0
          %v7806 = vadd.f32 %v7625, %v7805
          %v7807 = vand.u32 %v7550, 4294901760
          %7808 = vmatmul.f32.gmra.mxu0 %v7807
          %v7809 = vpop.f32.mrf.mxu0
          %v7810 = vadd.f32 %v7633, %v7809
          %v7811 = vand.u32 %v7553, 4294901760
          %7812 = vmatmul.f32.gmra.mxu0 %v7811
          %v7813 = vpop.f32.mrf.mxu0
          %v7814 = vadd.f32 %v7641, %v7813
          %v7815 = vand.u32 %v7556, 4294901760
          %7816 = vmatmul.f32.gmra.mxu0 %v7815
          %v7817 = vpop.f32.mrf.mxu0
          %v7818 = vadd.f32 %v7649, %v7817
          %v7819 = vand.u32 %v7559, 4294901760
          %7820 = vmatmul.f32.gmra.mxu0 %v7819
          %v7821 = vpop.f32.mrf.mxu0
          %v7822 = vadd.f32 %v7657, %v7821
          %v7823 = vand.u32 %v7562, 4294901760
          %7824 = vmatmul.f32.gmra.mxu0 %v7823
          %v7825 = vpop.f32.mrf.mxu0
          %v7826 = vadd.f32 %v7665, %v7825
          %v7827 = vand.u32 %v7565, 4294901760
          %7828 = vmatmul.f32.gmra.mxu0 %v7827
          %v7829 = vpop.f32.mrf.mxu0
          %v7830 = vadd.f32 %v7673, %v7829
          %v7831 = vand.u32 %v7568, 4294901760
          %7832 = vmatmul.f32.gmra.mxu0 %v7831
          %v7833 = vpop.f32.mrf.mxu0
          %v7834 = vadd.f32 %v7681, %v7833
          %v7835 = vand.u32 %v7571, 4294901760
          %7836 = vmatmul.f32.gmra.mxu0 %v7835
          %v7837 = vpop.f32.mrf.mxu0
          %v7838 = vadd.f32 %v7689, %v7837
          %v7839 = vand.u32 %v7574, 4294901760
          %7840 = vmatmul.f32.gmra.mxu0 %v7839
          %v7841 = vpop.f32.mrf.mxu0
          %v7842 = vadd.f32 %v7697, %v7841
          %v7843 = vand.u32 %v7577, 4294901760
          %7844 = vmatmul.f32.gmra.mxu0 %v7843
          %v7845 = vpop.f32.mrf.mxu0
          %v7846 = vadd.f32 %v7705, %v7845
          %v7847 = vand.u32 %v7580, 4294901760
          %7848 = vmatmul.f32.gmra.mxu0 %v7847
          %v7849 = vpop.f32.mrf.mxu0
          %v7850 = vadd.f32 %v7713, %v7849
          %v7851 = vand.u32 %v7583, 4294901760
          %7852 = vmatmul.f32.gmra.mxu0 %v7851
          %v7853 = vpop.f32.mrf.mxu0
          %v7854 = vadd.f32 %v7721, %v7853
          %v7855 = vand.u32 %v7586, 4294901760
          %7856 = vmatmul.f32.gmra.mxu0 %v7855
          %v7857 = vpop.f32.mrf.mxu0
          %v7858 = vadd.f32 %v7729, %v7857
          %v7859 = vand.u32 %v7589, 4294901760
          %7860 = vmatmul.f32.gmra.mxu0 %v7859
          %v7861 = vpop.f32.mrf.mxu0
          %v7862 = vadd.f32 %v7737, %v7861
          %v7863 = vand.u32 %v7592, 4294901760
          %7864 = vmatmul.f32.gmra.mxu0 %v7863
          %v7865 = vpop.f32.mrf.mxu0
          %v7866 = vadd.f32 %v7745, %v7865
          %7867 = vdwg.mxu0
          %7868 = vmatpush.msra.mxu0 0.0
          %7869 = vmatpush.msra.mxu0 0.0
          %7870 = vmatpush.msra.mxu0 0.0
          %7871 = vmatpush.msra.mxu0 0.0
          %7872 = vmatpush.msra.mxu0 0.0
          %7873 = vmatpush.msra.mxu0 0.0
          %7874 = vmatpush.msra.mxu0 0.0
          %7875 = vmatpush.msra.mxu0 0.0
          %v7876 = vand.u32 %v7540, 4294901760
          %v7877 = vsub.f32 %v7540, %v7876
          %7878 = vmatpush.msra.mxu0 %v7877
          %v7879 = vand.u32 %v7539, 4294901760
          %v7880 = vsub.f32 %v7539, %v7879
          %7881 = vmatpush.msra.mxu0 %v7880
          %v7882 = vand.u32 %v7538, 4294901760
          %v7883 = vsub.f32 %v7538, %v7882
          %7884 = vmatpush.msra.mxu0 %v7883
          %v7885 = vand.u32 %v7537, 4294901760
          %v7886 = vsub.f32 %v7537, %v7885
          %7887 = vmatpush.msra.mxu0 %v7886
          %v7888 = vand.u32 %v7536, 4294901760
          %v7889 = vsub.f32 %v7536, %v7888
          %7890 = vmatpush.msra.mxu0 %v7889
          %v7891 = vand.u32 %v7535, 4294901760
          %v7892 = vsub.f32 %v7535, %v7891
          %7893 = vmatpush.msra.mxu0 %v7892
          %v7894 = vand.u32 %v7534, 4294901760
          %v7895 = vsub.f32 %v7534, %v7894
          %7896 = vmatpush.msra.mxu0 %v7895
          %v7897 = vand.u32 %v7533, 4294901760
          %v7898 = vsub.f32 %v7533, %v7897
          %7899 = vmatpush.msra.mxu0 %v7898
          %v7900 = vand.u32 %v7547, 4294901760
          %v7901 = vsub.f32 %v7547, %v7900
          %7902 = vmatmul.f32.gmra.mxu0 %v7901
          %v7903 = vpop.f32.mrf.mxu0
          %v7904 = vadd.f32 %v7806, %v7903
          %v7905 = vand.u32 %v7550, 4294901760
          %v7906 = vsub.f32 %v7550, %v7905
          %7907 = vmatmul.f32.gmra.mxu0 %v7906
          %v7908 = vpop.f32.mrf.mxu0
          %v7909 = vadd.f32 %v7810, %v7908
          %v7910 = vand.u32 %v7553, 4294901760
          %v7911 = vsub.f32 %v7553, %v7910
          %7912 = vmatmul.f32.gmra.mxu0 %v7911
          %v7913 = vpop.f32.mrf.mxu0
          %v7914 = vadd.f32 %v7814, %v7913
          %v7915 = vand.u32 %v7556, 4294901760
          %v7916 = vsub.f32 %v7556, %v7915
          %7917 = vmatmul.f32.gmra.mxu0 %v7916
          %v7918 = vpop.f32.mrf.mxu0
          %v7919 = vadd.f32 %v7818, %v7918
          %v7920 = vand.u32 %v7559, 4294901760
          %v7921 = vsub.f32 %v7559, %v7920
          %7922 = vmatmul.f32.gmra.mxu0 %v7921
          %v7923 = vpop.f32.mrf.mxu0
          %v7924 = vadd.f32 %v7822, %v7923
          %v7925 = vand.u32 %v7562, 4294901760
          %v7926 = vsub.f32 %v7562, %v7925
          %7927 = vmatmul.f32.gmra.mxu0 %v7926
          %v7928 = vpop.f32.mrf.mxu0
          %v7929 = vadd.f32 %v7826, %v7928
          %v7930 = vand.u32 %v7565, 4294901760
          %v7931 = vsub.f32 %v7565, %v7930
          %7932 = vmatmul.f32.gmra.mxu0 %v7931
          %v7933 = vpop.f32.mrf.mxu0
          %v7934 = vadd.f32 %v7830, %v7933
          %v7935 = vand.u32 %v7568, 4294901760
          %v7936 = vsub.f32 %v7568, %v7935
          %7937 = vmatmul.f32.gmra.mxu0 %v7936
          %v7938 = vpop.f32.mrf.mxu0
          %v7939 = vadd.f32 %v7834, %v7938
          %v7940 = vand.u32 %v7571, 4294901760
          %v7941 = vsub.f32 %v7571, %v7940
          %7942 = vmatmul.f32.gmra.mxu0 %v7941
          %v7943 = vpop.f32.mrf.mxu0
          %v7944 = vadd.f32 %v7838, %v7943
          %v7945 = vand.u32 %v7574, 4294901760
          %v7946 = vsub.f32 %v7574, %v7945
          %7947 = vmatmul.f32.gmra.mxu0 %v7946
          %v7948 = vpop.f32.mrf.mxu0
          %v7949 = vadd.f32 %v7842, %v7948
          %v7950 = vand.u32 %v7577, 4294901760
          %v7951 = vsub.f32 %v7577, %v7950
          %7952 = vmatmul.f32.gmra.mxu0 %v7951
          %v7953 = vpop.f32.mrf.mxu0
          %v7954 = vadd.f32 %v7846, %v7953
          %v7955 = vand.u32 %v7580, 4294901760
          %v7956 = vsub.f32 %v7580, %v7955
          %7957 = vmatmul.f32.gmra.mxu0 %v7956
          %v7958 = vpop.f32.mrf.mxu0
          %v7959 = vadd.f32 %v7850, %v7958
          %v7960 = vand.u32 %v7583, 4294901760
          %v7961 = vsub.f32 %v7583, %v7960
          %7962 = vmatmul.f32.gmra.mxu0 %v7961
          %v7963 = vpop.f32.mrf.mxu0
          %v7964 = vadd.f32 %v7854, %v7963
          %v7965 = vand.u32 %v7586, 4294901760
          %v7966 = vsub.f32 %v7586, %v7965
          %7967 = vmatmul.f32.gmra.mxu0 %v7966
          %v7968 = vpop.f32.mrf.mxu0
          %v7969 = vadd.f32 %v7858, %v7968
          %v7970 = vand.u32 %v7589, 4294901760
          %v7971 = vsub.f32 %v7589, %v7970
          %7972 = vmatmul.f32.gmra.mxu0 %v7971
          %v7973 = vpop.f32.mrf.mxu0
          %v7974 = vadd.f32 %v7862, %v7973
          %v7975 = vand.u32 %v7592, 4294901760
          %v7976 = vsub.f32 %v7592, %v7975
          %7977 = vmatmul.f32.gmra.mxu0 %v7976
          %v7978 = vpop.f32.mrf.mxu0
          %v7979 = vadd.f32 %v7866, %v7978
          %7980 = vdwg.mxu0
          %7981 = vmatpush.msra.mxu0 0.0
          %7982 = vmatpush.msra.mxu0 0.0
          %7983 = vmatpush.msra.mxu0 0.0
          %7984 = vmatpush.msra.mxu0 0.0
          %7985 = vmatpush.msra.mxu0 0.0
          %7986 = vmatpush.msra.mxu0 0.0
          %7987 = vmatpush.msra.mxu0 0.0
          %7988 = vmatpush.msra.mxu0 0.0
          %v7989 = vand.u32 %v7540, 4294901760
          %7990 = vmatpush.msra.mxu0 %v7989
          %v7991 = vand.u32 %v7539, 4294901760
          %7992 = vmatpush.msra.mxu0 %v7991
          %v7993 = vand.u32 %v7538, 4294901760
          %7994 = vmatpush.msra.mxu0 %v7993
          %v7995 = vand.u32 %v7537, 4294901760
          %7996 = vmatpush.msra.mxu0 %v7995
          %v7997 = vand.u32 %v7536, 4294901760
          %7998 = vmatpush.msra.mxu0 %v7997
          %v7999 = vand.u32 %v7535, 4294901760
          %8000 = vmatpush.msra.mxu0 %v7999
          %v8001 = vand.u32 %v7534, 4294901760
          %8002 = vmatpush.msra.mxu0 %v8001
          %v8003 = vand.u32 %v7533, 4294901760
          %8004 = vmatpush.msra.mxu0 %v8003
          %v8005 = vand.u32 %v7547, 4294901760
          %v8006 = vsub.f32 %v7547, %v8005
          %v8007 = vand.u32 %v8006, 4294901760
          %8008 = vmatmul.f32.gmra.mxu0 %v8007
          %v8009 = vpop.f32.mrf.mxu0
          %v8010 = vadd.f32 %v7904, %v8009
          %v8011 = vand.u32 %v7550, 4294901760
          %v8012 = vsub.f32 %v7550, %v8011
          %v8013 = vand.u32 %v8012, 4294901760
          %8014 = vmatmul.f32.gmra.mxu0 %v8013
          %v8015 = vpop.f32.mrf.mxu0
          %v8016 = vadd.f32 %v7909, %v8015
          %v8017 = vand.u32 %v7553, 4294901760
          %v8018 = vsub.f32 %v7553, %v8017
          %v8019 = vand.u32 %v8018, 4294901760
          %8020 = vmatmul.f32.gmra.mxu0 %v8019
          %v8021 = vpop.f32.mrf.mxu0
          %v8022 = vadd.f32 %v7914, %v8021
          %v8023 = vand.u32 %v7556, 4294901760
          %v8024 = vsub.f32 %v7556, %v8023
          %v8025 = vand.u32 %v8024, 4294901760
          %8026 = vmatmul.f32.gmra.mxu0 %v8025
          %v8027 = vpop.f32.mrf.mxu0
          %v8028 = vadd.f32 %v7919, %v8027
          %v8029 = vand.u32 %v7559, 4294901760
          %v8030 = vsub.f32 %v7559, %v8029
          %v8031 = vand.u32 %v8030, 4294901760
          %8032 = vmatmul.f32.gmra.mxu0 %v8031
          %v8033 = vpop.f32.mrf.mxu0
          %v8034 = vadd.f32 %v7924, %v8033
          %v8035 = vand.u32 %v7562, 4294901760
          %v8036 = vsub.f32 %v7562, %v8035
          %v8037 = vand.u32 %v8036, 4294901760
          %8038 = vmatmul.f32.gmra.mxu0 %v8037
          %v8039 = vpop.f32.mrf.mxu0
          %v8040 = vadd.f32 %v7929, %v8039
          %v8041 = vand.u32 %v7565, 4294901760
          %v8042 = vsub.f32 %v7565, %v8041
          %v8043 = vand.u32 %v8042, 4294901760
          %8044 = vmatmul.f32.gmra.mxu0 %v8043
          %v8045 = vpop.f32.mrf.mxu0
          %v8046 = vadd.f32 %v7934, %v8045
          %v8047 = vand.u32 %v7568, 4294901760
          %v8048 = vsub.f32 %v7568, %v8047
          %v8049 = vand.u32 %v8048, 4294901760
          %8050 = vmatmul.f32.gmra.mxu0 %v8049
          %v8051 = vpop.f32.mrf.mxu0
          %v8052 = vadd.f32 %v7939, %v8051
          %v8053 = vand.u32 %v7571, 4294901760
          %v8054 = vsub.f32 %v7571, %v8053
          %v8055 = vand.u32 %v8054, 4294901760
          %8056 = vmatmul.f32.gmra.mxu0 %v8055
          %v8057 = vpop.f32.mrf.mxu0
          %v8058 = vadd.f32 %v7944, %v8057
          %v8059 = vand.u32 %v7574, 4294901760
          %v8060 = vsub.f32 %v7574, %v8059
          %v8061 = vand.u32 %v8060, 4294901760
          %8062 = vmatmul.f32.gmra.mxu0 %v8061
          %v8063 = vpop.f32.mrf.mxu0
          %v8064 = vadd.f32 %v7949, %v8063
          %v8065 = vand.u32 %v7577, 4294901760
          %v8066 = vsub.f32 %v7577, %v8065
          %v8067 = vand.u32 %v8066, 4294901760
          %8068 = vmatmul.f32.gmra.mxu0 %v8067
          %v8069 = vpop.f32.mrf.mxu0
          %v8070 = vadd.f32 %v7954, %v8069
          %v8071 = vand.u32 %v7580, 4294901760
          %v8072 = vsub.f32 %v7580, %v8071
          %v8073 = vand.u32 %v8072, 4294901760
          %8074 = vmatmul.f32.gmra.mxu0 %v8073
          %v8075 = vpop.f32.mrf.mxu0
          %v8076 = vadd.f32 %v7959, %v8075
          %v8077 = vand.u32 %v7583, 4294901760
          %v8078 = vsub.f32 %v7583, %v8077
          %v8079 = vand.u32 %v8078, 4294901760
          %8080 = vmatmul.f32.gmra.mxu0 %v8079
          %v8081 = vpop.f32.mrf.mxu0
          %v8082 = vadd.f32 %v7964, %v8081
          %v8083 = vand.u32 %v7586, 4294901760
          %v8084 = vsub.f32 %v7586, %v8083
          %v8085 = vand.u32 %v8084, 4294901760
          %8086 = vmatmul.f32.gmra.mxu0 %v8085
          %v8087 = vpop.f32.mrf.mxu0
          %v8088 = vadd.f32 %v7969, %v8087
          %v8089 = vand.u32 %v7589, 4294901760
          %v8090 = vsub.f32 %v7589, %v8089
          %v8091 = vand.u32 %v8090, 4294901760
          %8092 = vmatmul.f32.gmra.mxu0 %v8091
          %v8093 = vpop.f32.mrf.mxu0
          %v8094 = vadd.f32 %v7974, %v8093
          %v8095 = vand.u32 %v7592, 4294901760
          %v8096 = vsub.f32 %v7592, %v8095
          %v8097 = vand.u32 %v8096, 4294901760
          %8098 = vmatmul.f32.gmra.mxu0 %v8097
          %v8099 = vpop.f32.mrf.mxu0
          %v8100 = vadd.f32 %v7979, %v8099
          %8101 = vdwg.mxu0
          %8102 = vmatpush.msra.mxu0 0.0
          %8103 = vmatpush.msra.mxu0 0.0
          %8104 = vmatpush.msra.mxu0 0.0
          %8105 = vmatpush.msra.mxu0 0.0
          %8106 = vmatpush.msra.mxu0 0.0
          %8107 = vmatpush.msra.mxu0 0.0
          %8108 = vmatpush.msra.mxu0 0.0
          %8109 = vmatpush.msra.mxu0 0.0
          %v8110 = vand.u32 %v7540, 4294901760
          %v8111 = vsub.f32 %v7540, %v8110
          %v8112 = vand.u32 %v8111, 4294901760
          %8113 = vmatpush.msra.mxu0 %v8112
          %v8114 = vand.u32 %v7539, 4294901760
          %v8115 = vsub.f32 %v7539, %v8114
          %v8116 = vand.u32 %v8115, 4294901760
          %8117 = vmatpush.msra.mxu0 %v8116
          %v8118 = vand.u32 %v7538, 4294901760
          %v8119 = vsub.f32 %v7538, %v8118
          %v8120 = vand.u32 %v8119, 4294901760
          %8121 = vmatpush.msra.mxu0 %v8120
          %v8122 = vand.u32 %v7537, 4294901760
          %v8123 = vsub.f32 %v7537, %v8122
          %v8124 = vand.u32 %v8123, 4294901760
          %8125 = vmatpush.msra.mxu0 %v8124
          %v8126 = vand.u32 %v7536, 4294901760
          %v8127 = vsub.f32 %v7536, %v8126
          %v8128 = vand.u32 %v8127, 4294901760
          %8129 = vmatpush.msra.mxu0 %v8128
          %v8130 = vand.u32 %v7535, 4294901760
          %v8131 = vsub.f32 %v7535, %v8130
          %v8132 = vand.u32 %v8131, 4294901760
          %8133 = vmatpush.msra.mxu0 %v8132
          %v8134 = vand.u32 %v7534, 4294901760
          %v8135 = vsub.f32 %v7534, %v8134
          %v8136 = vand.u32 %v8135, 4294901760
          %8137 = vmatpush.msra.mxu0 %v8136
          %v8138 = vand.u32 %v7533, 4294901760
          %v8139 = vsub.f32 %v7533, %v8138
          %v8140 = vand.u32 %v8139, 4294901760
          %8141 = vmatpush.msra.mxu0 %v8140
          %v8142 = vand.u32 %v7547, 4294901760
          %8143 = vmatmul.f32.gmra.mxu0 %v8142
          %v8144 = vpop.f32.mrf.mxu0
          %v8145 = vadd.f32 %v8010, %v8144
          %v8146 = vand.u32 %v7550, 4294901760
          %8147 = vmatmul.f32.gmra.mxu0 %v8146
          %v8148 = vpop.f32.mrf.mxu0
          %v8149 = vadd.f32 %v8016, %v8148
          %v8150 = vand.u32 %v7553, 4294901760
          %8151 = vmatmul.f32.gmra.mxu0 %v8150
          %v8152 = vpop.f32.mrf.mxu0
          %v8153 = vadd.f32 %v8022, %v8152
          %v8154 = vand.u32 %v7556, 4294901760
          %8155 = vmatmul.f32.gmra.mxu0 %v8154
          %v8156 = vpop.f32.mrf.mxu0
          %v8157 = vadd.f32 %v8028, %v8156
          %v8158 = vand.u32 %v7559, 4294901760
          %8159 = vmatmul.f32.gmra.mxu0 %v8158
          %v8160 = vpop.f32.mrf.mxu0
          %v8161 = vadd.f32 %v8034, %v8160
          %v8162 = vand.u32 %v7562, 4294901760
          %8163 = vmatmul.f32.gmra.mxu0 %v8162
          %v8164 = vpop.f32.mrf.mxu0
          %v8165 = vadd.f32 %v8040, %v8164
          %v8166 = vand.u32 %v7565, 4294901760
          %8167 = vmatmul.f32.gmra.mxu0 %v8166
          %v8168 = vpop.f32.mrf.mxu0
          %v8169 = vadd.f32 %v8046, %v8168
          %v8170 = vand.u32 %v7568, 4294901760
          %8171 = vmatmul.f32.gmra.mxu0 %v8170
          %v8172 = vpop.f32.mrf.mxu0
          %v8173 = vadd.f32 %v8052, %v8172
          %v8174 = vand.u32 %v7571, 4294901760
          %8175 = vmatmul.f32.gmra.mxu0 %v8174
          %v8176 = vpop.f32.mrf.mxu0
          %v8177 = vadd.f32 %v8058, %v8176
          %v8178 = vand.u32 %v7574, 4294901760
          %8179 = vmatmul.f32.gmra.mxu0 %v8178
          %v8180 = vpop.f32.mrf.mxu0
          %v8181 = vadd.f32 %v8064, %v8180
          %v8182 = vand.u32 %v7577, 4294901760
          %8183 = vmatmul.f32.gmra.mxu0 %v8182
          %v8184 = vpop.f32.mrf.mxu0
          %v8185 = vadd.f32 %v8070, %v8184
          %v8186 = vand.u32 %v7580, 4294901760
          %8187 = vmatmul.f32.gmra.mxu0 %v8186
          %v8188 = vpop.f32.mrf.mxu0
          %v8189 = vadd.f32 %v8076, %v8188
          %v8190 = vand.u32 %v7583, 4294901760
          %8191 = vmatmul.f32.gmra.mxu0 %v8190
          %v8192 = vpop.f32.mrf.mxu0
          %v8193 = vadd.f32 %v8082, %v8192
          %v8194 = vand.u32 %v7586, 4294901760
          %8195 = vmatmul.f32.gmra.mxu0 %v8194
          %v8196 = vpop.f32.mrf.mxu0
          %v8197 = vadd.f32 %v8088, %v8196
          %v8198 = vand.u32 %v7589, 4294901760
          %8199 = vmatmul.f32.gmra.mxu0 %v8198
          %v8200 = vpop.f32.mrf.mxu0
          %v8201 = vadd.f32 %v8094, %v8200
          %v8202 = vand.u32 %v7592, 4294901760
          %8203 = vmatmul.f32.gmra.mxu0 %v8202
          %v8204 = vpop.f32.mrf.mxu0
          %v8205 = vadd.f32 %v8100, %v8204
          %8206 = vdwg.mxu0
          %8207 = vmatpush.msra.mxu0 0.0
          %8208 = vmatpush.msra.mxu0 0.0
          %8209 = vmatpush.msra.mxu0 0.0
          %8210 = vmatpush.msra.mxu0 0.0
          %8211 = vmatpush.msra.mxu0 0.0
          %8212 = vmatpush.msra.mxu0 0.0
          %8213 = vmatpush.msra.mxu0 0.0
          %8214 = vmatpush.msra.mxu0 0.0
          %v8215 = vand.u32 %v7540, 4294901760
          %8216 = vmatpush.msra.mxu0 %v8215
          %v8217 = vand.u32 %v7539, 4294901760
          %8218 = vmatpush.msra.mxu0 %v8217
          %v8219 = vand.u32 %v7538, 4294901760
          %8220 = vmatpush.msra.mxu0 %v8219
          %v8221 = vand.u32 %v7537, 4294901760
          %8222 = vmatpush.msra.mxu0 %v8221
          %v8223 = vand.u32 %v7536, 4294901760
          %8224 = vmatpush.msra.mxu0 %v8223
          %v8225 = vand.u32 %v7535, 4294901760
          %8226 = vmatpush.msra.mxu0 %v8225
          %v8227 = vand.u32 %v7534, 4294901760
          %8228 = vmatpush.msra.mxu0 %v8227
          %v8229 = vand.u32 %v7533, 4294901760
          %8230 = vmatpush.msra.mxu0 %v8229
          %v8231 = vand.u32 %v7547, 4294901760
          %8232 = vmatmul.f32.gmra.mxu0 %v8231
          %v8233 = vpop.f32.mrf.mxu0
          %v8234 = vadd.f32 %v8145, %v8233
          %v8235 = vand.u32 %v7550, 4294901760
          %8236 = vmatmul.f32.gmra.mxu0 %v8235
          %v8237 = vpop.f32.mrf.mxu0
          %v8238 = vadd.f32 %v8149, %v8237
          %v8239 = vand.u32 %v7553, 4294901760
          %8240 = vmatmul.f32.gmra.mxu0 %v8239
          %v8241 = vpop.f32.mrf.mxu0
          %v8242 = vadd.f32 %v8153, %v8241
          %v8243 = vand.u32 %v7556, 4294901760
          %8244 = vmatmul.f32.gmra.mxu0 %v8243
          %v8245 = vpop.f32.mrf.mxu0
          %v8246 = vadd.f32 %v8157, %v8245
          %v8247 = vand.u32 %v7559, 4294901760
          %8248 = vmatmul.f32.gmra.mxu0 %v8247
          %v8249 = vpop.f32.mrf.mxu0
          %v8250 = vadd.f32 %v8161, %v8249
          %v8251 = vand.u32 %v7562, 4294901760
          %8252 = vmatmul.f32.gmra.mxu0 %v8251
          %v8253 = vpop.f32.mrf.mxu0
          %v8254 = vadd.f32 %v8165, %v8253
          %v8255 = vand.u32 %v7565, 4294901760
          %8256 = vmatmul.f32.gmra.mxu0 %v8255
          %v8257 = vpop.f32.mrf.mxu0
          %v8258 = vadd.f32 %v8169, %v8257
          %v8259 = vand.u32 %v7568, 4294901760
          %8260 = vmatmul.f32.gmra.mxu0 %v8259
          %v8261 = vpop.f32.mrf.mxu0
          %v8262 = vadd.f32 %v8173, %v8261
          %v8263 = vand.u32 %v7571, 4294901760
          %8264 = vmatmul.f32.gmra.mxu0 %v8263
          %v8265 = vpop.f32.mrf.mxu0
          %v8266 = vadd.f32 %v8177, %v8265
          %v8267 = vand.u32 %v7574, 4294901760
          %8268 = vmatmul.f32.gmra.mxu0 %v8267
          %v8269 = vpop.f32.mrf.mxu0
          %v8270 = vadd.f32 %v8181, %v8269
          %v8271 = vand.u32 %v7577, 4294901760
          %8272 = vmatmul.f32.gmra.mxu0 %v8271
          %v8273 = vpop.f32.mrf.mxu0
          %v8274 = vadd.f32 %v8185, %v8273
          %v8275 = vand.u32 %v7580, 4294901760
          %8276 = vmatmul.f32.gmra.mxu0 %v8275
          %v8277 = vpop.f32.mrf.mxu0
          %v8278 = vadd.f32 %v8189, %v8277
          %v8279 = vand.u32 %v7583, 4294901760
          %8280 = vmatmul.f32.gmra.mxu0 %v8279
          %v8281 = vpop.f32.mrf.mxu0
          %v8282 = vadd.f32 %v8193, %v8281
          %v8283 = vand.u32 %v7586, 4294901760
          %8284 = vmatmul.f32.gmra.mxu0 %v8283
          %v8285 = vpop.f32.mrf.mxu0
          %v8286 = vadd.f32 %v8197, %v8285
          %v8287 = vand.u32 %v7589, 4294901760
          %8288 = vmatmul.f32.gmra.mxu0 %v8287
          %v8289 = vpop.f32.mrf.mxu0
          %v8290 = vadd.f32 %v8201, %v8289
          %v8291 = vand.u32 %v7592, 4294901760
          %8292 = vmatmul.f32.gmra.mxu0 %v8291
          %v8293 = vpop.f32.mrf.mxu0
          %v8294 = vadd.f32 %v8205, %v8293
          %8295 = vdwg.mxu0
          %v8296 = vld [vmem:[%s14] sm:$0x1]
          %v8297 = vld [vmem:[%s15] sm:$0x1]
          %v8298 = vsel %vm606, %v8234, 0.0
          %8299 = vadd.xlane.f32.xlu0 %v8298
          %v8300 = vpop.xlane.xlu0 %8299
          %v8301 = vsel %vm606, %v8238, 0.0
          %8302 = vadd.xlane.f32.xlu0 %v8301
          %v8303 = vpop.xlane.xlu0 %8302
          %v8304 = vsel %vm606, %v8242, 0.0
          %8305 = vadd.xlane.f32.xlu0 %v8304
          %v8306 = vpop.xlane.xlu0 %8305
          %v8307 = vsel %vm606, %v8246, 0.0
          %8308 = vadd.xlane.f32.xlu0 %v8307
          %v8309 = vpop.xlane.xlu0 %8308
          %v8310 = vsel %vm606, %v8250, 0.0
          %8311 = vadd.xlane.f32.xlu0 %v8310
          %v8312 = vpop.xlane.xlu0 %8311
          %v8313 = vsel %vm606, %v8254, 0.0
          %8314 = vadd.xlane.f32.xlu0 %v8313
          %v8315 = vpop.xlane.xlu0 %8314
          %v8316 = vsel %vm606, %v8258, 0.0
          %8317 = vadd.xlane.f32.xlu0 %v8316
          %v8318 = vpop.xlane.xlu0 %8317
          %v8319 = vsel %vm606, %v8262, 0.0
          %8320 = vadd.xlane.f32.xlu0 %v8319
          %v8321 = vpop.xlane.xlu0 %8320
          %v8322 = vsel %vm606, %v8266, 0.0
          %8323 = vadd.xlane.f32.xlu0 %v8322
          %v8324 = vpop.xlane.xlu0 %8323
          %v8325 = vsel %vm606, %v8270, 0.0
          %8326 = vadd.xlane.f32.xlu0 %v8325
          %v8327 = vpop.xlane.xlu0 %8326
          %v8328 = vsel %vm606, %v8274, 0.0
          %8329 = vadd.xlane.f32.xlu0 %v8328
          %v8330 = vpop.xlane.xlu0 %8329
          %v8331 = vsel %vm606, %v8278, 0.0
          %8332 = vadd.xlane.f32.xlu0 %v8331
          %v8333 = vpop.xlane.xlu0 %8332
          %v8334 = vsel %vm606, %v8282, 0.0
          %8335 = vadd.xlane.f32.xlu0 %v8334
          %v8336 = vpop.xlane.xlu0 %8335
          %v8337 = vsel %vm606, %v8286, 0.0
          %8338 = vadd.xlane.f32.xlu0 %v8337
          %v8339 = vpop.xlane.xlu0 %8338
          %v8340 = vsel %vm606, %v8290, 0.0
          %8341 = vadd.xlane.f32.xlu0 %v8340
          %v8342 = vpop.xlane.xlu0 %8341
          %v8343 = vsel %vm606, %v8294, 0.0
          %8344 = vadd.xlane.f32.xlu0 %v8343
          %v8345 = vpop.xlane.xlu0 %8344
          %v8346 = vmul.f32 %v8300, %v6448
          %v8347 = vmul.f32 %v8303, %v6448
          %v8348 = vmul.f32 %v8306, %v6448
          %v8349 = vmul.f32 %v8309, %v6448
          %v8350 = vmul.f32 %v8312, %v6448
          %v8351 = vmul.f32 %v8315, %v6448
          %v8352 = vmul.f32 %v8318, %v6448
          %v8353 = vmul.f32 %v8321, %v6448
          %v8354 = vmul.f32 %v8324, %v6448
          %v8355 = vmul.f32 %v8327, %v6448
          %v8356 = vmul.f32 %v8330, %v6448
          %v8357 = vmul.f32 %v8333, %v6448
          %v8358 = vmul.f32 %v8336, %v6448
          %v8359 = vmul.f32 %v8339, %v6448
          %v8360 = vmul.f32 %v8342, %v6448
          %v8361 = vmul.f32 %v8345, %v6448
          %v8362 = vsub.f32 %v8234, %v8346
          %v8363 = vsub.f32 %v8238, %v8347
          %v8364 = vsub.f32 %v8242, %v8348
          %v8365 = vsub.f32 %v8246, %v8349
          %v8366 = vsub.f32 %v8250, %v8350
          %v8367 = vsub.f32 %v8254, %v8351
          %v8368 = vsub.f32 %v8258, %v8352
          %v8369 = vsub.f32 %v8262, %v8353
          %v8370 = vsub.f32 %v8266, %v8354
          %v8371 = vsub.f32 %v8270, %v8355
          %v8372 = vsub.f32 %v8274, %v8356
          %v8373 = vsub.f32 %v8278, %v8357
          %v8374 = vsub.f32 %v8282, %v8358
          %v8375 = vsub.f32 %v8286, %v8359
          %v8376 = vsub.f32 %v8290, %v8360
          %v8377 = vsub.f32 %v8294, %v8361
          %v8378 = vmul.f32 %v8362, %v8362
          %v8379 = vmul.f32 %v8363, %v8363
          %v8380 = vmul.f32 %v8364, %v8364
          %v8381 = vmul.f32 %v8365, %v8365
          %v8382 = vmul.f32 %v8366, %v8366
          %v8383 = vmul.f32 %v8367, %v8367
          %v8384 = vmul.f32 %v8368, %v8368
          %v8385 = vmul.f32 %v8369, %v8369
          %v8386 = vmul.f32 %v8370, %v8370
          %v8387 = vmul.f32 %v8371, %v8371
          %v8388 = vmul.f32 %v8372, %v8372
          %v8389 = vmul.f32 %v8373, %v8373
          %v8390 = vmul.f32 %v8374, %v8374
          %v8391 = vmul.f32 %v8375, %v8375
          %v8392 = vmul.f32 %v8376, %v8376
          %v8393 = vmul.f32 %v8377, %v8377
          %v8394 = vsel %vm606, %v8378, 0.0
          %8395 = vadd.xlane.f32.xlu0 %v8394
          %v8396 = vpop.xlane.xlu0 %8395
          %v8397 = vsel %vm606, %v8379, 0.0
          %8398 = vadd.xlane.f32.xlu0 %v8397
          %v8399 = vpop.xlane.xlu0 %8398
          %v8400 = vsel %vm606, %v8380, 0.0
          %8401 = vadd.xlane.f32.xlu0 %v8400
          %v8402 = vpop.xlane.xlu0 %8401
          %v8403 = vsel %vm606, %v8381, 0.0
          %8404 = vadd.xlane.f32.xlu0 %v8403
          %v8405 = vpop.xlane.xlu0 %8404
          %v8406 = vsel %vm606, %v8382, 0.0
          %8407 = vadd.xlane.f32.xlu0 %v8406
          %v8408 = vpop.xlane.xlu0 %8407
          %v8409 = vsel %vm606, %v8383, 0.0
          %8410 = vadd.xlane.f32.xlu0 %v8409
          %v8411 = vpop.xlane.xlu0 %8410
          %v8412 = vsel %vm606, %v8384, 0.0
          %8413 = vadd.xlane.f32.xlu0 %v8412
          %v8414 = vpop.xlane.xlu0 %8413
          %v8415 = vsel %vm606, %v8385, 0.0
          %8416 = vadd.xlane.f32.xlu0 %v8415
          %v8417 = vpop.xlane.xlu0 %8416
          %v8418 = vsel %vm606, %v8386, 0.0
          %8419 = vadd.xlane.f32.xlu0 %v8418
          %v8420 = vpop.xlane.xlu0 %8419
          %v8421 = vsel %vm606, %v8387, 0.0
          %8422 = vadd.xlane.f32.xlu0 %v8421
          %v8423 = vpop.xlane.xlu0 %8422
          %v8424 = vsel %vm606, %v8388, 0.0
          %8425 = vadd.xlane.f32.xlu0 %v8424
          %v8426 = vpop.xlane.xlu0 %8425
          %v8427 = vsel %vm606, %v8389, 0.0
          %8428 = vadd.xlane.f32.xlu0 %v8427
          %v8429 = vpop.xlane.xlu0 %8428
          %v8430 = vsel %vm606, %v8390, 0.0
          %8431 = vadd.xlane.f32.xlu0 %v8430
          %v8432 = vpop.xlane.xlu0 %8431
          %v8433 = vsel %vm606, %v8391, 0.0
          %8434 = vadd.xlane.f32.xlu0 %v8433
          %v8435 = vpop.xlane.xlu0 %8434
          %v8436 = vsel %vm606, %v8392, 0.0
          %8437 = vadd.xlane.f32.xlu0 %v8436
          %v8438 = vpop.xlane.xlu0 %8437
          %v8439 = vsel %vm606, %v8393, 0.0
          %8440 = vadd.xlane.f32.xlu0 %v8439
          %v8441 = vpop.xlane.xlu0 %8440
          %v8442 = vmul.f32 %v8396, %v6448
          %v8443 = vmul.f32 %v8399, %v6448
          %v8444 = vmul.f32 %v8402, %v6448
          %v8445 = vmul.f32 %v8405, %v6448
          %v8446 = vmul.f32 %v8408, %v6448
          %v8447 = vmul.f32 %v8411, %v6448
          %v8448 = vmul.f32 %v8414, %v6448
          %v8449 = vmul.f32 %v8417, %v6448
          %v8450 = vmul.f32 %v8420, %v6448
          %v8451 = vmul.f32 %v8423, %v6448
          %v8452 = vmul.f32 %v8426, %v6448
          %v8453 = vmul.f32 %v8429, %v6448
          %v8454 = vmul.f32 %v8432, %v6448
          %v8455 = vmul.f32 %v8435, %v6448
          %v8456 = vmul.f32 %v8438, %v6448
          %v8457 = vmul.f32 %v8441, %v6448
          %v8458 = vadd.f32 %v8442, 1e-05
          %v8459 = vadd.f32 %v8443, 1e-05
          %v8460 = vadd.f32 %v8444, 1e-05
          %v8461 = vadd.f32 %v8445, 1e-05
          %v8462 = vadd.f32 %v8446, 1e-05
          %v8463 = vadd.f32 %v8447, 1e-05
          %v8464 = vadd.f32 %v8448, 1e-05
          %v8465 = vadd.f32 %v8449, 1e-05
          %v8466 = vadd.f32 %v8450, 1e-05
          %v8467 = vadd.f32 %v8451, 1e-05
          %v8468 = vadd.f32 %v8452, 1e-05
          %v8469 = vadd.f32 %v8453, 1e-05
          %v8470 = vadd.f32 %v8454, 1e-05
          %v8471 = vadd.f32 %v8455, 1e-05
          %v8472 = vadd.f32 %v8456, 1e-05
          %v8473 = vadd.f32 %v8457, 1e-05
          %v8474 = vrsqrt.pop %v8458
          %v8475 = vmul.f32 %v8474, %v8458
          %v8476 = vmul.f32 %v8475, %v8474
          %v8477 = vmul.f32 0.5, %v8476
          %v8478 = vsub.f32 1.5, %v8477
          %v8479 = vmul.f32 %v8474, %v8478
          %vm8480 = vweird.f32 %v8458
          %vm8481 = vweird.f32 %v8474
          %vm8482 = vmor %vm8480, %vm8481
          %v8483 = vsel %vm8482, %v8474, %v8479
          %v8484 = vrsqrt.pop %v8459
          %v8485 = vmul.f32 %v8484, %v8459
          %v8486 = vmul.f32 %v8485, %v8484
          %v8487 = vmul.f32 0.5, %v8486
          %v8488 = vsub.f32 1.5, %v8487
          %v8489 = vmul.f32 %v8484, %v8488
          %vm8490 = vweird.f32 %v8459
          %vm8491 = vweird.f32 %v8484
          %vm8492 = vmor %vm8490, %vm8491
          %v8493 = vsel %vm8492, %v8484, %v8489
          %v8494 = vrsqrt.pop %v8460
          %v8495 = vmul.f32 %v8494, %v8460
          %v8496 = vmul.f32 %v8495, %v8494
          %v8497 = vmul.f32 0.5, %v8496
          %v8498 = vsub.f32 1.5, %v8497
          %v8499 = vmul.f32 %v8494, %v8498
          %vm8500 = vweird.f32 %v8460
          %vm8501 = vweird.f32 %v8494
          %vm8502 = vmor %vm8500, %vm8501
          %v8503 = vsel %vm8502, %v8494, %v8499
          %v8504 = vrsqrt.pop %v8461
          %v8505 = vmul.f32 %v8504, %v8461
          %v8506 = vmul.f32 %v8505, %v8504
          %v8507 = vmul.f32 0.5, %v8506
          %v8508 = vsub.f32 1.5, %v8507
          %v8509 = vmul.f32 %v8504, %v8508
          %vm8510 = vweird.f32 %v8461
          %vm8511 = vweird.f32 %v8504
          %vm8512 = vmor %vm8510, %vm8511
          %v8513 = vsel %vm8512, %v8504, %v8509
          %v8514 = vrsqrt.pop %v8462
          %v8515 = vmul.f32 %v8514, %v8462
          %v8516 = vmul.f32 %v8515, %v8514
          %v8517 = vmul.f32 0.5, %v8516
          %v8518 = vsub.f32 1.5, %v8517
          %v8519 = vmul.f32 %v8514, %v8518
          %vm8520 = vweird.f32 %v8462
          %vm8521 = vweird.f32 %v8514
          %vm8522 = vmor %vm8520, %vm8521
          %v8523 = vsel %vm8522, %v8514, %v8519
          %v8524 = vrsqrt.pop %v8463
          %v8525 = vmul.f32 %v8524, %v8463
          %v8526 = vmul.f32 %v8525, %v8524
          %v8527 = vmul.f32 0.5, %v8526
          %v8528 = vsub.f32 1.5, %v8527
          %v8529 = vmul.f32 %v8524, %v8528
          %vm8530 = vweird.f32 %v8463
          %vm8531 = vweird.f32 %v8524
          %vm8532 = vmor %vm8530, %vm8531
          %v8533 = vsel %vm8532, %v8524, %v8529
          %v8534 = vrsqrt.pop %v8464
          %v8535 = vmul.f32 %v8534, %v8464
          %v8536 = vmul.f32 %v8535, %v8534
          %v8537 = vmul.f32 0.5, %v8536
          %v8538 = vsub.f32 1.5, %v8537
          %v8539 = vmul.f32 %v8534, %v8538
          %vm8540 = vweird.f32 %v8464
          %vm8541 = vweird.f32 %v8534
          %vm8542 = vmor %vm8540, %vm8541
          %v8543 = vsel %vm8542, %v8534, %v8539
          %v8544 = vrsqrt.pop %v8465
          %v8545 = vmul.f32 %v8544, %v8465
          %v8546 = vmul.f32 %v8545, %v8544
          %v8547 = vmul.f32 0.5, %v8546
          %v8548 = vsub.f32 1.5, %v8547
          %v8549 = vmul.f32 %v8544, %v8548
          %vm8550 = vweird.f32 %v8465
          %vm8551 = vweird.f32 %v8544
          %vm8552 = vmor %vm8550, %vm8551
          %v8553 = vsel %vm8552, %v8544, %v8549
          %v8554 = vrsqrt.pop %v8466
          %v8555 = vmul.f32 %v8554, %v8466
          %v8556 = vmul.f32 %v8555, %v8554
          %v8557 = vmul.f32 0.5, %v8556
          %v8558 = vsub.f32 1.5, %v8557
          %v8559 = vmul.f32 %v8554, %v8558
          %vm8560 = vweird.f32 %v8466
          %vm8561 = vweird.f32 %v8554
          %vm8562 = vmor %vm8560, %vm8561
          %v8563 = vsel %vm8562, %v8554, %v8559
          %v8564 = vrsqrt.pop %v8467
          %v8565 = vmul.f32 %v8564, %v8467
          %v8566 = vmul.f32 %v8565, %v8564
          %v8567 = vmul.f32 0.5, %v8566
          %v8568 = vsub.f32 1.5, %v8567
          %v8569 = vmul.f32 %v8564, %v8568
          %vm8570 = vweird.f32 %v8467
          %vm8571 = vweird.f32 %v8564
          %vm8572 = vmor %vm8570, %vm8571
          %v8573 = vsel %vm8572, %v8564, %v8569
          %v8574 = vrsqrt.pop %v8468
          %v8575 = vmul.f32 %v8574, %v8468
          %v8576 = vmul.f32 %v8575, %v8574
          %v8577 = vmul.f32 0.5, %v8576
          %v8578 = vsub.f32 1.5, %v8577
          %v8579 = vmul.f32 %v8574, %v8578
          %vm8580 = vweird.f32 %v8468
          %vm8581 = vweird.f32 %v8574
          %vm8582 = vmor %vm8580, %vm8581
          %v8583 = vsel %vm8582, %v8574, %v8579
          %v8584 = vrsqrt.pop %v8469
          %v8585 = vmul.f32 %v8584, %v8469
          %v8586 = vmul.f32 %v8585, %v8584
          %v8587 = vmul.f32 0.5, %v8586
          %v8588 = vsub.f32 1.5, %v8587
          %v8589 = vmul.f32 %v8584, %v8588
          %vm8590 = vweird.f32 %v8469
          %vm8591 = vweird.f32 %v8584
          %vm8592 = vmor %vm8590, %vm8591
          %v8593 = vsel %vm8592, %v8584, %v8589
          %v8594 = vrsqrt.pop %v8470
          %v8595 = vmul.f32 %v8594, %v8470
          %v8596 = vmul.f32 %v8595, %v8594
          %v8597 = vmul.f32 0.5, %v8596
          %v8598 = vsub.f32 1.5, %v8597
          %v8599 = vmul.f32 %v8594, %v8598
          %vm8600 = vweird.f32 %v8470
          %vm8601 = vweird.f32 %v8594
          %vm8602 = vmor %vm8600, %vm8601
          %v8603 = vsel %vm8602, %v8594, %v8599
          %v8604 = vrsqrt.pop %v8471
          %v8605 = vmul.f32 %v8604, %v8471
          %v8606 = vmul.f32 %v8605, %v8604
          %v8607 = vmul.f32 0.5, %v8606
          %v8608 = vsub.f32 1.5, %v8607
          %v8609 = vmul.f32 %v8604, %v8608
          %vm8610 = vweird.f32 %v8471
          %vm8611 = vweird.f32 %v8604
          %vm8612 = vmor %vm8610, %vm8611
          %v8613 = vsel %vm8612, %v8604, %v8609
          %v8614 = vrsqrt.pop %v8472
          %v8615 = vmul.f32 %v8614, %v8472
          %v8616 = vmul.f32 %v8615, %v8614
          %v8617 = vmul.f32 0.5, %v8616
          %v8618 = vsub.f32 1.5, %v8617
          %v8619 = vmul.f32 %v8614, %v8618
          %vm8620 = vweird.f32 %v8472
          %vm8621 = vweird.f32 %v8614
          %vm8622 = vmor %vm8620, %vm8621
          %v8623 = vsel %vm8622, %v8614, %v8619
          %v8624 = vrsqrt.pop %v8473
          %v8625 = vmul.f32 %v8624, %v8473
          %v8626 = vmul.f32 %v8625, %v8624
          %v8627 = vmul.f32 0.5, %v8626
          %v8628 = vsub.f32 1.5, %v8627
          %v8629 = vmul.f32 %v8624, %v8628
          %vm8630 = vweird.f32 %v8473
          %vm8631 = vweird.f32 %v8624
          %vm8632 = vmor %vm8630, %vm8631
          %v8633 = vsel %vm8632, %v8624, %v8629
          %v8634 = vmul.f32 %v8362, %v8483
          %v8635 = vmul.f32 %v8363, %v8493
          %v8636 = vmul.f32 %v8364, %v8503
          %v8637 = vmul.f32 %v8365, %v8513
          %v8638 = vmul.f32 %v8366, %v8523
          %v8639 = vmul.f32 %v8367, %v8533
          %v8640 = vmul.f32 %v8368, %v8543
          %v8641 = vmul.f32 %v8369, %v8553
          %v8642 = vmul.f32 %v8370, %v8563
          %v8643 = vmul.f32 %v8371, %v8573
          %v8644 = vmul.f32 %v8372, %v8583
          %v8645 = vmul.f32 %v8373, %v8593
          %v8646 = vmul.f32 %v8374, %v8603
          %v8647 = vmul.f32 %v8375, %v8613
          %v8648 = vmul.f32 %v8376, %v8623
          %v8649 = vmul.f32 %v8377, %v8633
          %v8651 = vperm.slane %v8296, 0
          %v8653 = vmul.f32 %v8634, %v8651
          %v8654 = vmul.f32 %v8635, %v8651
          %v8655 = vmul.f32 %v8636, %v8651
          %v8656 = vmul.f32 %v8637, %v8651
          %v8657 = vmul.f32 %v8638, %v8651
          %v8658 = vmul.f32 %v8639, %v8651
          %v8659 = vmul.f32 %v8640, %v8651
          %v8660 = vmul.f32 %v8641, %v8651
          %v8661 = vmul.f32 %v8642, %v8651
          %v8662 = vmul.f32 %v8643, %v8651
          %v8663 = vmul.f32 %v8644, %v8651
          %v8664 = vmul.f32 %v8645, %v8651
          %v8665 = vmul.f32 %v8646, %v8651
          %v8666 = vmul.f32 %v8647, %v8651
          %v8667 = vmul.f32 %v8648, %v8651
          %v8668 = vmul.f32 %v8649, %v8651
          %v8670 = vperm.slane %v8297, 0
          %v8672 = vadd.f32 %v8653, %v8670
          %v8673 = vadd.f32 %v8654, %v8670
          %v8674 = vadd.f32 %v8655, %v8670
          %v8675 = vadd.f32 %v8656, %v8670
          %v8676 = vadd.f32 %v8657, %v8670
          %v8677 = vadd.f32 %v8658, %v8670
          %v8678 = vadd.f32 %v8659, %v8670
          %v8679 = vadd.f32 %v8660, %v8670
          %v8680 = vadd.f32 %v8661, %v8670
          %v8681 = vadd.f32 %v8662, %v8670
          %v8682 = vadd.f32 %v8663, %v8670
          %v8683 = vadd.f32 %v8664, %v8670
          %v8684 = vadd.f32 %v8665, %v8670
          %v8685 = vadd.f32 %v8666, %v8670
          %v8686 = vadd.f32 %v8667, %v8670
          %v8687 = vadd.f32 %v8668, %v8670
          %v8688 = vadd.f32 %v6791, %v8672
          %v8689 = vadd.f32 %v6792, %v8673
          %v8690 = vadd.f32 %v6793, %v8674
          %v8691 = vadd.f32 %v6794, %v8675
          %v8692 = vadd.f32 %v6795, %v8676
          %v8693 = vadd.f32 %v6796, %v8677
          %v8694 = vadd.f32 %v6797, %v8678
          %v8695 = vadd.f32 %v6798, %v8679
          %v8696 = vadd.f32 %v6799, %v8680
          %v8697 = vadd.f32 %v6800, %v8681
          %v8698 = vadd.f32 %v6801, %v8682
          %v8699 = vadd.f32 %v6802, %v8683
          %v8700 = vadd.f32 %v6803, %v8684
          %v8701 = vadd.f32 %v6804, %v8685
          %v8702 = vadd.f32 %v6805, %v8686
          %v8703 = vadd.f32 %v6806, %v8687
          %s8704 = scalar_lea.vmem %s535, %s6337
          %8705 = vst.msk [vmem:[%s8704] sm:$0xff] %vm606, %v8688
          %8706 = vst.msk [vmem:[%s8704 + $0x8] sm:$0xff] %vm606, %v8689
          %8707 = vst.msk [vmem:[%s8704 + $0x10] sm:$0xff] %vm606, %v8690
          %8708 = vst.msk [vmem:[%s8704 + $0x18] sm:$0xff] %vm606, %v8691
          %8709 = vst.msk [vmem:[%s8704 + $0x20] sm:$0xff] %vm606, %v8692
          %8710 = vst.msk [vmem:[%s8704 + $0x28] sm:$0xff] %vm606, %v8693
          %8711 = vst.msk [vmem:[%s8704 + $0x30] sm:$0xff] %vm606, %v8694
          %8712 = vst.msk [vmem:[%s8704 + $0x38] sm:$0xff] %vm606, %v8695
          %8713 = vst.msk [vmem:[%s8704 + $0x40] sm:$0xff] %vm606, %v8696
          %8714 = vst.msk [vmem:[%s8704 + $0x48] sm:$0xff] %vm606, %v8697
          %8715 = vst.msk [vmem:[%s8704 + $0x50] sm:$0xff] %vm606, %v8698
          %8716 = vst.msk [vmem:[%s8704 + $0x58] sm:$0xff] %vm606, %v8699
          %8717 = vst.msk [vmem:[%s8704 + $0x60] sm:$0xff] %vm606, %v8700
          %8718 = vst.msk [vmem:[%s8704 + $0x68] sm:$0xff] %vm606, %v8701
          %8719 = vst.msk [vmem:[%s8704 + $0x70] sm:$0xff] %vm606, %v8702
          %8720 = vst.msk [vmem:[%s8704 + $0x78] sm:$0xff] %vm606, %v8703
        $region100: #{swin_block_forward_pallas.1} parent=83 // loop_footer
          %s6336 = sadd.s32 1, %s6332
        $region101: #{swin_block_forward_pallas.1} parent=83 // loop_footer_branch
          %6331 = sbr.rel target = $region97
        $region102: #{swin_block_forward_pallas.1} parent=83 // loop_exit
          _
        %p8721 = scmp.lt.s32.totalorder %s28, 1
        %s8722 = scalar_select %p8721, %s28, 1
        %s8723 = smul.addr %s8722, 64
        %s8724 = smul.addr %s8723, 8
        %s8725 = scalar_lea.vmem %s16, %s8724
        // Predicated region
        $region103: #{swin_block_forward_pallas.1} parent=83 // pred_check
          %p8726 = pneg %p387
        $region104: #{swin_block_forward_pallas.1} parent=83 // pred_check_branch
          %8728 = sbr.rel (%p8726) target = $region106
        $region105: #{swin_block_forward_pallas.1} parent=83 // pred_region
          _
        $region106: #{swin_block_forward_pallas.1} parent=83 // pred_fallthru
          _
      $region84: #{swin_block_forward_pallas.1} parent=5 // pred_fallthru
        _
      %p8729 = scmp.le.s32.totalorder 2, %s23
      // Predicated region
      $region107: #{swin_block_forward_pallas.1} parent=5 // pred_check
        %p8730 = pneg %p8729
      $region108: #{swin_block_forward_pallas.1} parent=5 // pred_check_branch
        %8732 = sbr.rel (%p8730) target = $region110
      $region109: #{swin_block_forward_pallas.1} parent=5 // pred_region
        %s8733 = ssub.s32 %s23, 2
        // Predicated region
        $region111: #{swin_block_forward_pallas.1} parent=109 // pred_check
          %p8734 = pneg %p393
        $region112: #{swin_block_forward_pallas.1} parent=109 // pred_check_branch
          %8736 = sbr.rel (%p8734) target = $region114
        $region113: #{swin_block_forward_pallas.1} parent=109 // pred_region
          %p8737 = scmp.lt.s32.totalorder %s29, 1
          %s8738 = scalar_select %p8737, %s29, 1
          %s8739 = smul.addr %s8738, 64
          %s8740 = smul.addr %s8739, 8
          %s8741 = scalar_lea.vmem %s16, %s8740
        $region114: #{swin_block_forward_pallas.1} parent=109 // pred_fallthru
          _
      $region110: #{swin_block_forward_pallas.1} parent=5 // pred_fallthru
        _
    $region6: #{swin_block_forward_pallas.1} parent=1 // loop_footer
      %s27 = sadd.s32 1, %s23
    $region7: #{swin_block_forward_pallas.1} parent=1 // loop_footer_branch
      %22 = sbr.rel target = $region3
    $region8: #{swin_block_forward_pallas.1} parent=1 // loop_exit
      _
    %8742 = vsyncpa [#allocation5], 1
    %s8743 = scalar_lea.sflag [#allocation5], 1
    %8744 = vsyncpa %s8743, 1

</llo_original>
